<compile_context>
chip_gen: v7x
topology: tpu7x:2x2x1
jax: 0.10.0
libtpu: 0.0.40
codegen_flags: <defaults>
</compile_context>

<pallas_src>
import functools

import jax
import jax.numpy as jnp
from jax import lax
from jax.experimental import pallas as pl
from jax.experimental.pallas import tpu as pltpu

EPS = 1e-5
PRIMITIVES = ("none", "skip_connect", "conv_1x1_bn", "conv_3x3_bn")


# ---------------------------------------------------------------------------
# ONE fused Pallas kernel for the whole 4-layer group_explore forward.
# ---------------------------------------------------------------------------
def _fused_net_kernel(*refs, plan, n_p2, NH, WC):
    """refs (all whole-array VMEM), in order:
         x0_taps (NH, 3*WC) bf16   KH-stacked, H-padded x0 (built in the wrapper)
         x0_flat (NH, WC)   f32    x0 for skip_connect adds
         sup     (NH, NH)   f32    0/1 "row h-1" shift matrix (zero at h==0)
         sdn     (NH, NH)   f32    0/1 "row h+1" shift matrix (zero at h==H-1)
         p2[k]   (2*ncol_k, 2*ncol_k) f32, k < n_p2   BN pool+broadcast (incl. 1/cnt)
         per conv group: rhs (3*WC, ncol) bf16, gb (2, ncol) f32 (gamma / beta rows)
         out     (NH, WC)   f32
       plan: static; per layer (conv_groups, adds),
             conv_groups = tuple of (state_idx, ncv, p2_slot), adds = tuple of state_idx."""
    out_ref = refs[-1]
    x0_taps = refs[0][...]
    sup = refs[2][...]
    sdn = refs[3][...]
    p2_refs = refs[4:4 + n_p2]
    widx = 4 + n_p2

    states = [refs[1][...]]        # f32 (NH, WC) activation per state
    taps = [x0_taps]               # bf16 (NH, 3*WC) KH-stacked conv LHS per state

    def build_taps(y):
        # X[h-1] / X[h] / X[h+1] stacked along lanes; H-shifts via tiny 0/1 matmuls
        # (no unaligned sublane slices), single bf16 cast.
        up = jnp.dot(sup, y, preferred_element_type=jnp.float32)
        dn = jnp.dot(sdn, y, preferred_element_type=jnp.float32)
        return jnp.concatenate([up, y, dn], axis=-1).astype(jnp.bfloat16)

    for conv_groups, adds in plan:
        total = jnp.zeros((NH, WC), jnp.float32)
        for (si, ncv, p_slot) in conv_groups:
            rhs_ref, gb_ref = refs[widx], refs[widx + 1]
            widx += 2
            if taps[si] is None:
                taps[si] = build_taps(states[si])
            ncol = ncv * WC
            # One lane-dense, K=3*WC-deep MXU matmul per group (all KH taps + all
            # convs sharing this input, Cout-concatenated).
            acc = jnp.dot(taps[si], rhs_ref[...],
                          preferred_element_type=jnp.float32)          # (NH, ncol)
            # BatchNorm2d training-mode batch stats (biased var), single pass:
            # [col_sum | col_sumsq] @ blockdiag(P, P) -> [mean | E[x^2]] per column.
            sboth = jnp.concatenate(
                [jnp.sum(acc, axis=0, keepdims=True),
                 jnp.sum(acc * acc, axis=0, keepdims=True)], axis=-1)   # (1, 2*ncol)
            stats = jnp.dot(sboth, p2_refs[p_slot][...],
                            preferred_element_type=jnp.float32)         # (1, 2*ncol)
            mean, ex2 = stats[:, :ncol], stats[:, ncol:]
            var = jnp.maximum(ex2 - mean * mean, 0.0)   # clamp f32 cancellation -> no NaN
            scale = lax.rsqrt(var + EPS) * gb_ref[0:1, :]
            shift = gb_ref[1:2, :] - mean * scale
            y = acc * scale + shift                      # single FMA pass
            for g in range(ncv):                         # fold Cout-batched convs
                total = total + y[:, g * WC:(g + 1) * WC]
        for si in adds:                                  # skip_connect / residual adds
            total = total + states[si]
        states.append(jnp.tanh(total))
        taps.append(None)

    out_ref[...] = states[-1]


# ---------------------------------------------------------------------------
# Host-side operand builders
# ---------------------------------------------------------------------------
def _band_rhs(w, W):
    """Fold KW taps + 'same' W-padding of a stride-1 (KH,KW,Cin,Cout) conv weight into
    a banded (KH*W*Cin, W*Cout) matmul RHS (KH stacked along K).
    TODO(synk): O(W^2) in memory / MXU FLOPs -- fine at W=16, switch to per-tap
    rolled-LHS matmuls (pltpu.roll by +-Cin) for production W."""
    KH, KW, Cin, Cout = w.shape
    pad = (KW - 1) // 2
    wi = jnp.arange(W)[:, None]
    wo = jnp.arange(W)[None, :]
    taps = jnp.stack([(wi == wo + (kw - pad)).astype(w.dtype) for kw in range(KW)],
                     axis=0)                                   # (KW, Win, Wout)
    rhs = jnp.einsum('hkio,kab->haibo', w, taps)               # (KH, Win, Cin, Wout, Cout)
    return rhs.reshape(KH * W * Cin, W * Cout)


def _to_3x3(w):
    """Zero-pad a 1x1 conv weight to 3x3 so all convs on one input share one group."""
    return w if w.shape[0] == 3 else jnp.pad(w, ((1, 1), (1, 1), (0, 0), (0, 0)))


def _group_operands(ws, gs, bs, W):
    rhs = jnp.concatenate([_band_rhs(_to_3x3(w), W) for w in ws],
                          axis=-1).astype(jnp.bfloat16)         # (3*W*Cin, ncv*W*Cout)
    gcol = jnp.concatenate([jnp.tile(g, W) for g in gs])
    bcol = jnp.concatenate([jnp.tile(b, W) for b in bs])
    gb = jnp.stack([gcol, bcol], axis=0).astype(jnp.float32)     # (2, ncv*W*Cout)
    return rhs, gb


def _bn_pool_matrix(ncv, W, Cout, cnt):
    """blockdiag(P, P) with P[j,j'] = 1/cnt iff columns j, j' belong to the same BN
    channel under the (ncv, W, Cout) column layout."""
    ncol = ncv * W * Cout
    j = jnp.arange(ncol)
    ch = (j // (W * Cout)) * Cout + (j % Cout)
    P = (ch[:, None] == ch[None, :]).astype(jnp.float32) * (1.0 / cnt)
    return jnp.kron(jnp.eye(2, dtype=jnp.float32), P)            # (2*ncol, 2*ncol)


# ---------------------------------------------------------------------------
# Parameter init (deterministic, synthetic)
# ---------------------------------------------------------------------------
def init_conv_bn_params(key, cin, cout, ksize):
    w = 0.1 * jax.random.normal(key, (ksize, ksize, cin, cout), jnp.float32)
    gamma = jnp.ones((cout,), jnp.float32)   # BatchNorm2d default weight
    beta = jnp.zeros((cout,), jnp.float32)   # BatchNorm2d default bias
    return (w, gamma, beta)


def init_params(key, in_planes, out_planes, expansion=1, steps=4):
    ks = jax.random.split(key, 6)
    params = {
        "conv0": init_conv_bn_params(ks[0], in_planes, out_planes, 3),
        "conv1": init_conv_bn_params(ks[1], out_planes, out_planes, 3),
        "conv2": init_conv_bn_params(ks[2], out_planes, out_planes, 3),
        "conv3": init_conv_bn_params(ks[3], out_planes, out_planes, 3),
        "downsample": init_conv_bn_params(ks[4], in_planes, out_planes * expansion, 1),
    }
    num_ops = sum(1 + i for i in range(steps))  # = 10
    ops = []
    for i in range(num_ops):
        opk = jax.random.fold_in(ks[5], i)
        k1, k3 = jax.random.split(opk)
        ops.append({
            "conv_1x1_bn": init_conv_bn_params(k1, out_planes, out_planes, 1),
            "conv_3x3_bn": init_conv_bn_params(k3, out_planes, out_planes, 3),
        })
    params["ops"] = ops
    return params


# ---------------------------------------------------------------------------
# MixedOp gate sampling: index ~ Multinomial(softmax(arch_weights), 1)
# (binarize_path.forward) — one vectorized draw, one device->host transfer.
# TODO(synk): binarize_path / reduce_memory custom backward passes are training-only
# autograd machinery and are not implemented (forward pass only).
# ---------------------------------------------------------------------------
def sample_gate_indices(key, arch_weights):
    idx = jax.random.categorical(key, arch_weights, axis=-1)
    return tuple(int(i) for i in jax.device_get(idx))


# ---------------------------------------------------------------------------
# group_explore forward (first=True, stride=1, expansion=1); gate indices static.
# ---------------------------------------------------------------------------
@functools.partial(jax.jit, static_argnums=(2,))
def group_explore_forward(x_nchw, params, idxs):
    N, Cin, H, W = x_nchw.shape
    Cout = params["conv0"][0].shape[-1]
    assert Cin == Cout, "first=True MixedOp path assumes in_planes == out_planes"
    WC = W * Cout
    NH = N * H
    cnt = float(N * H * W)

    # NCHW -> lane-dense flat (N*H, W*C) layout.
    x0 = jnp.transpose(x_nchw, (0, 2, 3, 1)).astype(jnp.float32)    # (N,H,W,C)
    x0_flat = x0.reshape(NH, WC)
    # KH-stacked, H-padded, bf16 conv LHS for every conv consuming x0
    # (built once in the wrapper: sublane-aligned reads, single cast).
    x0p = jnp.pad(x0.reshape(N, H, WC), ((0, 0), (1, 1), (0, 0)))
    x0_taps = jnp.concatenate([x0p[:, kh:kh + H, :] for kh in range(3)],
                              axis=-1).reshape(NH, 3 * WC).astype(jnp.bfloat16)

    # 0/1 H-shift matrices for building taps of in-kernel intermediates.
    r = jnp.arange(NH)
    sup = ((r[:, None] - 1 == r[None, :]) & (r[:, None] % H != 0)).astype(jnp.float32)
    sdn = ((r[:, None] + 1 == r[None, :]) & (r[:, None] % H != H - 1)).astype(jnp.float32)

    # ---- static plan (gate indices are static) + operand list -----------------
    # states: 0 = x0, 1 = x1, 2 = x_b1l0 (identity1), 3 = x_b1l1.
    fixed_convs = [
        [(0, params["conv0"])],
        [(1, params["conv1"]), (0, params["downsample"])],
        [(2, params["conv2"])],
        [(3, params["conv3"])],
    ]
    residual_adds = [(), (), (), (2,)]           # layer3 adds identity1 (= state 2)
    n_states = (1, 2, 3, 4)

    plan, group_inputs, p2_slots, p2_list = [], [], {}, []
    offset = 0
    for layer in range(4):
        per_state = {}                            # keyed on stable state index

        def _add_conv(si, w, g, b, per_state=per_state):
            per_state.setdefault(si, ([], [], []))
            per_state[si][0].append(w)
            per_state[si][1].append(g)
            per_state[si][2].append(b)

        for si, (w, g, b) in fixed_convs[layer]:
            _add_conv(si, w, g, b)
        adds = list(residual_adds[layer])
        for j in range(n_states[layer]):
            prim = PRIMITIVES[idxs[offset + j]]
            if prim == "none":
                continue                          # pruned: contributes nothing
            if prim == "skip_connect":
                adds.append(j)                    # folded into the add list
                continue
            w, g, b = params["ops"][offset + j][prim]
            _add_conv(j, w, g, b)
        offset += n_states[layer]

        groups = []
        for si in sorted(per_state):
            ws, gs, bs = per_state[si]
            ncv = len(ws)
            if ncv not in p2_slots:               # dedupe BN pooling matrices
                p2_slots[ncv] = len(p2_list)
                p2_list.append(_bn_pool_matrix(ncv, W, Cout, cnt))
            rhs, gb = _group_operands(ws, gs, bs, W)
            group_inputs += [rhs, gb]
            groups.append((si, ncv, p2_slots[ncv]))
        plan.append((tuple(groups), tuple(adds)))

    inputs = [x0_taps, x0_flat, sup, sdn] + p2_list + group_inputs
    kernel = functools.partial(_fused_net_kernel, plan=tuple(plan),
                               n_p2=len(p2_list), NH=NH, WC=WC)
    # TODO(synk): for production feature-map sizes add a grid over (N / H-row blocks)
    # with dimension_semantics=("parallel", ...) and a two-pass BN so both v7x
    # TensorCores are used within its 64 MiB VMEM; at these toy sizes a single
    # lane-dense block per layer, chained inside one call, is optimal.
    out_flat = pl.pallas_call(
        kernel,
        out_shape=jax.ShapeDtypeStruct((NH, WC), jnp.float32),
        in_specs=[pl.BlockSpec(memory_space=pltpu.MemorySpace.VMEM)] * len(inputs),
        out_specs=pl.BlockSpec(memory_space=pltpu.MemorySpace.VMEM),
        compiler_params=pltpu.CompilerParams(vmem_limit_bytes=32 * 1024 * 1024),
    )(*inputs)

    # flat (N*H, W*C) -> NCHW
    return jnp.transpose(out_flat.reshape(N, H, W, Cout), (0, 3, 1, 2))


# ---------------------------------------------------------------------------
if __name__ == "__main__":
    key = jax.random.PRNGKey(0)
    k_x, k_arch, k_params, k_gate = jax.random.split(key, 4)

    # first=True => MixedOps are (out_planes -> out_planes, stride=1); pick in==out.
    # W*C = 16*8 = 128 keeps the flat activation layout exactly lane-dense.
    N, C, H, W = 2, 8, 16, 16
    in_planes = out_planes = C
    expansion = 1
    num_mixed_ops = sum(1 + i for i in range(4))  # 10

    x = jax.random.normal(k_x, (N, C, H, W), jnp.float32)
    group_arch_weights = jax.random.normal(
        k_arch, (num_mixed_ops, len(PRIMITIVES)), jnp.float32)
    params = init_params(k_params, in_planes, out_planes, expansion)

    idxs = sample_gate_indices(k_gate, group_arch_weights)
    out = group_explore_forward(x, params, idxs)
    out = jax.block_until_ready(out)
    assert out.shape == (N, out_planes * expansion, H, W)
    print("KERNEL_OK")
</pallas_src>

<mosaic_0001>
module attributes {stable_mosaic.version = 11 : i64} {
  func.func @_fused_net_kernel(%arg0: memref<32x384xbf16, #tpu.memory_space<vmem>>, %arg1: memref<32x128xf32, #tpu.memory_space<vmem>>, %arg2: memref<32x32xf32, #tpu.memory_space<vmem>>, %arg3: memref<32x32xf32, #tpu.memory_space<vmem>>, %arg4: memref<512x512xf32, #tpu.memory_space<vmem>>, %arg5: memref<256x256xf32, #tpu.memory_space<vmem>>, %arg6: memref<384x256xbf16, #tpu.memory_space<vmem>>, %arg7: memref<2x256xf32, #tpu.memory_space<vmem>>, %arg8: memref<384x256xbf16, #tpu.memory_space<vmem>>, %arg9: memref<2x256xf32, #tpu.memory_space<vmem>>, %arg10: memref<384x128xbf16, #tpu.memory_space<vmem>>, %arg11: memref<2x128xf32, #tpu.memory_space<vmem>>, %arg12: memref<384x128xbf16, #tpu.memory_space<vmem>>, %arg13: memref<2x128xf32, #tpu.memory_space<vmem>>, %arg14: memref<384x128xbf16, #tpu.memory_space<vmem>>, %arg15: memref<2x128xf32, #tpu.memory_space<vmem>>, %arg16: memref<384x128xbf16, #tpu.memory_space<vmem>>, %arg17: memref<2x128xf32, #tpu.memory_space<vmem>>, %arg18: memref<384x128xbf16, #tpu.memory_space<vmem>>, %arg19: memref<2x128xf32, #tpu.memory_space<vmem>>, %arg20: memref<384x128xbf16, #tpu.memory_space<vmem>>, %arg21: memref<2x128xf32, #tpu.memory_space<vmem>>, %arg22: memref<384x256xbf16, #tpu.memory_space<vmem>>, %arg23: memref<2x256xf32, #tpu.memory_space<vmem>>, %arg24: memref<32x128xf32, #tpu.memory_space<vmem>>) attributes {dimension_semantics = [], scalar_prefetch = 0 : i64, scratch_operands = 0 : i64, tpu.core_type = #tpu.core_type<tc>} {
    %c0 = arith.constant 0 : index
    %c0_0 = arith.constant 0 : index
    %0 = vector.load %arg0[%c0, %c0_0] : memref<32x384xbf16, #tpu.memory_space<vmem>>, vector<32x384xbf16>
    %c0_1 = arith.constant 0 : index
    %c0_2 = arith.constant 0 : index
    %1 = vector.load %arg2[%c0_1, %c0_2] : memref<32x32xf32, #tpu.memory_space<vmem>>, vector<32x32xf32>
    %c0_3 = arith.constant 0 : index
    %c0_4 = arith.constant 0 : index
    %2 = vector.load %arg3[%c0_3, %c0_4] : memref<32x32xf32, #tpu.memory_space<vmem>>, vector<32x32xf32>
    %cst = arith.constant 0.000000e+00 : f32
    %3 = vector.broadcast %cst : f32 to vector<32x128xf32>
    %c0_5 = arith.constant 0 : index
    %c0_6 = arith.constant 0 : index
    %4 = vector.load %arg6[%c0_5, %c0_6] : memref<384x256xbf16, #tpu.memory_space<vmem>>, vector<384x256xbf16>
    %cst_7 = arith.constant dense<0.000000e+00> : vector<32x256xf32>
    %5 = tpu.matmul %0, %4, %cst_7 {dimension_numbers = #tpu.dot_dimension_numbers<[1], [0], [0], [1], [0, 0, 1, 1], [], []>} : vector<32x384xbf16>, vector<384x256xbf16>, vector<32x256xf32> -> vector<32x256xf32>
    %cst_8 = arith.constant dense<0.000000e+00> : vector<256xf32>
    %6 = vector.multi_reduction <add>, %5, %cst_8 [0] : vector<32x256xf32> to vector<256xf32>
    %7 = vector.shape_cast %6 : vector<256xf32> to vector<1x256xf32>
    %8 = arith.mulf %5, %5 : vector<32x256xf32>
    %cst_9 = arith.constant dense<0.000000e+00> : vector<256xf32>
    %9 = vector.multi_reduction <add>, %8, %cst_9 [0] : vector<32x256xf32> to vector<256xf32>
    %10 = vector.shape_cast %9 : vector<256xf32> to vector<1x256xf32>
    %11 = tpu.concatenate %7, %10 in 1 : vector<1x256xf32>, vector<1x256xf32> -> vector<1x512xf32>
    %c0_10 = arith.constant 0 : index
    %c0_11 = arith.constant 0 : index
    %12 = vector.load %arg4[%c0_10, %c0_11] : memref<512x512xf32, #tpu.memory_space<vmem>>, vector<512x512xf32>
    %cst_12 = arith.constant dense<0.000000e+00> : vector<1x512xf32>
    %13 = tpu.matmul %11, %12, %cst_12 {dimension_numbers = #tpu.dot_dimension_numbers<[1], [0], [0], [1], [0, 0, 1, 1], [], []>} : vector<1x512xf32>, vector<512x512xf32>, vector<1x512xf32> -> vector<1x512xf32>
    %14 = vector.extract_strided_slice %13 {offsets = [0, 0], sizes = [1, 256], strides = [1, 1]} : vector<1x512xf32> to vector<1x256xf32>
    %15 = vector.extract_strided_slice %13 {offsets = [0, 256], sizes = [1, 256], strides = [1, 1]} : vector<1x512xf32> to vector<1x256xf32>
    %16 = arith.mulf %14, %14 : vector<1x256xf32>
    %17 = arith.subf %15, %16 : vector<1x256xf32>
    %cst_13 = arith.constant 0.000000e+00 : f32
    %18 = vector.broadcast %cst_13 : f32 to vector<1x256xf32>
    %19 = arith.maximumf %17, %18 : vector<1x256xf32>
    %cst_14 = arith.constant 9.99999974E-6 : f32
    %20 = vector.broadcast %cst_14 : f32 to vector<1x256xf32>
    %21 = arith.addf %19, %20 : vector<1x256xf32>
    %22 = math.rsqrt %21 : vector<1x256xf32>
    %c0_15 = arith.constant 0 : index
    %c0_16 = arith.constant 0 : index
    %23 = vector.load %arg7[%c0_15, %c0_16] : memref<2x256xf32, #tpu.memory_space<vmem>>, vector<1x256xf32>
    %24 = arith.mulf %22, %23 : vector<1x256xf32>
    %c1 = arith.constant 1 : index
    %c0_17 = arith.constant 0 : index
    %25 = vector.load %arg7[%c1, %c0_17] : memref<2x256xf32, #tpu.memory_space<vmem>>, vector<1x256xf32>
    %26 = arith.mulf %14, %24 : vector<1x256xf32>
    %27 = arith.subf %25, %26 : vector<1x256xf32>
    %28 = vector.broadcast %24 : vector<1x256xf32> to vector<32x256xf32>
    %29 = arith.mulf %5, %28 : vector<32x256xf32>
    %30 = vector.broadcast %27 : vector<1x256xf32> to vector<32x256xf32>
    %31 = arith.addf %29, %30 : vector<32x256xf32>
    %32 = vector.extract_strided_slice %31 {offsets = [0, 0], sizes = [32, 128], strides = [1, 1]} : vector<32x256xf32> to vector<32x128xf32>
    %33 = arith.addf %3, %32 : vector<32x128xf32>
    %34 = vector.extract_strided_slice %31 {offsets = [0, 128], sizes = [32, 128], strides = [1, 1]} : vector<32x256xf32> to vector<32x128xf32>
    %35 = arith.addf %33, %34 : vector<32x128xf32>
    %36 = math.tanh %35 : vector<32x128xf32>
    %cst_18 = arith.constant 0.000000e+00 : f32
    %37 = vector.broadcast %cst_18 : f32 to vector<32x128xf32>
    %c0_19 = arith.constant 0 : index
    %c0_20 = arith.constant 0 : index
    %38 = vector.load %arg8[%c0_19, %c0_20] : memref<384x256xbf16, #tpu.memory_space<vmem>>, vector<384x256xbf16>
    %cst_21 = arith.constant dense<0.000000e+00> : vector<32x256xf32>
    %39 = tpu.matmul %0, %38, %cst_21 {dimension_numbers = #tpu.dot_dimension_numbers<[1], [0], [0], [1], [0, 0, 1, 1], [], []>} : vector<32x384xbf16>, vector<384x256xbf16>, vector<32x256xf32> -> vector<32x256xf32>
    %cst_22 = arith.constant dense<0.000000e+00> : vector<256xf32>
    %40 = vector.multi_reduction <add>, %39, %cst_22 [0] : vector<32x256xf32> to vector<256xf32>
    %41 = vector.shape_cast %40 : vector<256xf32> to vector<1x256xf32>
    %42 = arith.mulf %39, %39 : vector<32x256xf32>
    %cst_23 = arith.constant dense<0.000000e+00> : vector<256xf32>
    %43 = vector.multi_reduction <add>, %42, %cst_23 [0] : vector<32x256xf32> to vector<256xf32>
    %44 = vector.shape_cast %43 : vector<256xf32> to vector<1x256xf32>
    %45 = tpu.concatenate %41, %44 in 1 : vector<1x256xf32>, vector<1x256xf32> -> vector<1x512xf32>
    %c0_24 = arith.constant 0 : index
    %c0_25 = arith.constant 0 : index
    %46 = vector.load %arg4[%c0_24, %c0_25] : memref<512x512xf32, #tpu.memory_space<vmem>>, vector<512x512xf32>
    %cst_26 = arith.constant dense<0.000000e+00> : vector<1x512xf32>
    %47 = tpu.matmul %45, %46, %cst_26 {dimension_numbers = #tpu.dot_dimension_numbers<[1], [0], [0], [1], [0, 0, 1, 1], [], []>} : vector<1x512xf32>, vector<512x512xf32>, vector<1x512xf32> -> vector<1x512xf32>
    %48 = vector.extract_strided_slice %47 {offsets = [0, 0], sizes = [1, 256], strides = [1, 1]} : vector<1x512xf32> to vector<1x256xf32>
    %49 = vector.extract_strided_slice %47 {offsets = [0, 256], sizes = [1, 256], strides = [1, 1]} : vector<1x512xf32> to vector<1x256xf32>
    %50 = arith.mulf %48, %48 : vector<1x256xf32>
    %51 = arith.subf %49, %50 : vector<1x256xf32>
    %cst_27 = arith.constant 0.000000e+00 : f32
    %52 = vector.broadcast %cst_27 : f32 to vector<1x256xf32>
    %53 = arith.maximumf %51, %52 : vector<1x256xf32>
    %cst_28 = arith.constant 9.99999974E-6 : f32
    %54 = vector.broadcast %cst_28 : f32 to vector<1x256xf32>
    %55 = arith.addf %53, %54 : vector<1x256xf32>
    %56 = math.rsqrt %55 : vector<1x256xf32>
    %c0_29 = arith.constant 0 : index
    %c0_30 = arith.constant 0 : index
    %57 = vector.load %arg9[%c0_29, %c0_30] : memref<2x256xf32, #tpu.memory_space<vmem>>, vector<1x256xf32>
    %58 = arith.mulf %56, %57 : vector<1x256xf32>
    %c1_31 = arith.constant 1 : index
    %c0_32 = arith.constant 0 : index
    %59 = vector.load %arg9[%c1_31, %c0_32] : memref<2x256xf32, #tpu.memory_space<vmem>>, vector<1x256xf32>
    %60 = arith.mulf %48, %58 : vector<1x256xf32>
    %61 = arith.subf %59, %60 : vector<1x256xf32>
    %62 = vector.broadcast %58 : vector<1x256xf32> to vector<32x256xf32>
    %63 = arith.mulf %39, %62 : vector<32x256xf32>
    %64 = vector.broadcast %61 : vector<1x256xf32> to vector<32x256xf32>
    %65 = arith.addf %63, %64 : vector<32x256xf32>
    %66 = vector.extract_strided_slice %65 {offsets = [0, 0], sizes = [32, 128], strides = [1, 1]} : vector<32x256xf32> to vector<32x128xf32>
    %67 = arith.addf %37, %66 : vector<32x128xf32>
    %68 = vector.extract_strided_slice %65 {offsets = [0, 128], sizes = [32, 128], strides = [1, 1]} : vector<32x256xf32> to vector<32x128xf32>
    %69 = arith.addf %67, %68 : vector<32x128xf32>
    %cst_33 = arith.constant dense<0.000000e+00> : vector<32x128xf32>
    %70 = tpu.matmul %1, %36, %cst_33 {dimension_numbers = #tpu.dot_dimension_numbers<[1], [0], [0], [1], [0, 0, 1, 1], [], []>} : vector<32x32xf32>, vector<32x128xf32>, vector<32x128xf32> -> vector<32x128xf32>
    %cst_34 = arith.constant dense<0.000000e+00> : vector<32x128xf32>
    %71 = tpu.matmul %2, %36, %cst_34 {dimension_numbers = #tpu.dot_dimension_numbers<[1], [0], [0], [1], [0, 0, 1, 1], [], []>} : vector<32x32xf32>, vector<32x128xf32>, vector<32x128xf32> -> vector<32x128xf32>
    %72 = tpu.concatenate %70, %36, %71 in 1 : vector<32x128xf32>, vector<32x128xf32>, vector<32x128xf32> -> vector<32x384xf32>
    %73 = arith.truncf %72 : vector<32x384xf32> to vector<32x384xbf16>
    %c0_35 = arith.constant 0 : index
    %c0_36 = arith.constant 0 : index
    %74 = vector.load %arg10[%c0_35, %c0_36] : memref<384x128xbf16, #tpu.memory_space<vmem>>, vector<384x128xbf16>
    %cst_37 = arith.constant dense<0.000000e+00> : vector<32x128xf32>
    %75 = tpu.matmul %73, %74, %cst_37 {dimension_numbers = #tpu.dot_dimension_numbers<[1], [0], [0], [1], [0, 0, 1, 1], [], []>} : vector<32x384xbf16>, vector<384x128xbf16>, vector<32x128xf32> -> vector<32x128xf32>
    %cst_38 = arith.constant dense<0.000000e+00> : vector<128xf32>
    %76 = vector.multi_reduction <add>, %75, %cst_38 [0] : vector<32x128xf32> to vector<128xf32>
    %77 = vector.shape_cast %76 : vector<128xf32> to vector<1x128xf32>
    %78 = arith.mulf %75, %75 : vector<32x128xf32>
    %cst_39 = arith.constant dense<0.000000e+00> : vector<128xf32>
    %79 = vector.multi_reduction <add>, %78, %cst_39 [0] : vector<32x128xf32> to vector<128xf32>
    %80 = vector.shape_cast %79 : vector<128xf32> to vector<1x128xf32>
    %81 = tpu.concatenate %77, %80 in 1 : vector<1x128xf32>, vector<1x128xf32> -> vector<1x256xf32>
    %c0_40 = arith.constant 0 : index
    %c0_41 = arith.constant 0 : index
    %82 = vector.load %arg5[%c0_40, %c0_41] : memref<256x256xf32, #tpu.memory_space<vmem>>, vector<256x256xf32>
    %cst_42 = arith.constant dense<0.000000e+00> : vector<1x256xf32>
    %83 = tpu.matmul %81, %82, %cst_42 {dimension_numbers = #tpu.dot_dimension_numbers<[1], [0], [0], [1], [0, 0, 1, 1], [], []>} : vector<1x256xf32>, vector<256x256xf32>, vector<1x256xf32> -> vector<1x256xf32>
    %84 = vector.extract_strided_slice %83 {offsets = [0, 0], sizes = [1, 128], strides = [1, 1]} : vector<1x256xf32> to vector<1x128xf32>
    %85 = vector.extract_strided_slice %83 {offsets = [0, 128], sizes = [1, 128], strides = [1, 1]} : vector<1x256xf32> to vector<1x128xf32>
    %86 = arith.mulf %84, %84 : vector<1x128xf32>
    %87 = arith.subf %85, %86 : vector<1x128xf32>
    %cst_43 = arith.constant 0.000000e+00 : f32
    %88 = vector.broadcast %cst_43 : f32 to vector<1x128xf32>
    %89 = arith.maximumf %87, %88 : vector<1x128xf32>
    %cst_44 = arith.constant 9.99999974E-6 : f32
    %90 = vector.broadcast %cst_44 : f32 to vector<1x128xf32>
    %91 = arith.addf %89, %90 : vector<1x128xf32>
    %92 = math.rsqrt %91 : vector<1x128xf32>
    %c0_45 = arith.constant 0 : index
    %c0_46 = arith.constant 0 : index
    %93 = vector.load %arg11[%c0_45, %c0_46] : memref<2x128xf32, #tpu.memory_space<vmem>>, vector<1x128xf32>
    %94 = arith.mulf %92, %93 : vector<1x128xf32>
    %c1_47 = arith.constant 1 : index
    %c0_48 = arith.constant 0 : index
    %95 = vector.load %arg11[%c1_47, %c0_48] : memref<2x128xf32, #tpu.memory_space<vmem>>, vector<1x128xf32>
    %96 = arith.mulf %84, %94 : vector<1x128xf32>
    %97 = arith.subf %95, %96 : vector<1x128xf32>
    %98 = vector.broadcast %94 : vector<1x128xf32> to vector<32x128xf32>
    %99 = arith.mulf %75, %98 : vector<32x128xf32>
    %100 = vector.broadcast %97 : vector<1x128xf32> to vector<32x128xf32>
    %101 = arith.addf %99, %100 : vector<32x128xf32>
    %102 = arith.addf %69, %101 : vector<32x128xf32>
    %103 = arith.addf %102, %36 : vector<32x128xf32>
    %104 = math.tanh %103 : vector<32x128xf32>
    %cst_49 = arith.constant 0.000000e+00 : f32
    %105 = vector.broadcast %cst_49 : f32 to vector<32x128xf32>
    %c0_50 = arith.constant 0 : index
    %c0_51 = arith.constant 0 : index
    %106 = vector.load %arg12[%c0_50, %c0_51] : memref<384x128xbf16, #tpu.memory_space<vmem>>, vector<384x128xbf16>
    %cst_52 = arith.constant dense<0.000000e+00> : vector<32x128xf32>
    %107 = tpu.matmul %0, %106, %cst_52 {dimension_numbers = #tpu.dot_dimension_numbers<[1], [0], [0], [1], [0, 0, 1, 1], [], []>} : vector<32x384xbf16>, vector<384x128xbf16>, vector<32x128xf32> -> vector<32x128xf32>
    %cst_53 = arith.constant dense<0.000000e+00> : vector<128xf32>
    %108 = vector.multi_reduction <add>, %107, %cst_53 [0] : vector<32x128xf32> to vector<128xf32>
    %109 = vector.shape_cast %108 : vector<128xf32> to vector<1x128xf32>
    %110 = arith.mulf %107, %107 : vector<32x128xf32>
    %cst_54 = arith.constant dense<0.000000e+00> : vector<128xf32>
    %111 = vector.multi_reduction <add>, %110, %cst_54 [0] : vector<32x128xf32> to vector<128xf32>
    %112 = vector.shape_cast %111 : vector<128xf32> to vector<1x128xf32>
    %113 = tpu.concatenate %109, %112 in 1 : vector<1x128xf32>, vector<1x128xf32> -> vector<1x256xf32>
    %c0_55 = arith.constant 0 : index
    %c0_56 = arith.constant 0 : index
    %114 = vector.load %arg5[%c0_55, %c0_56] : memref<256x256xf32, #tpu.memory_space<vmem>>, vector<256x256xf32>
    %cst_57 = arith.constant dense<0.000000e+00> : vector<1x256xf32>
    %115 = tpu.matmul %113, %114, %cst_57 {dimension_numbers = #tpu.dot_dimension_numbers<[1], [0], [0], [1], [0, 0, 1, 1], [], []>} : vector<1x256xf32>, vector<256x256xf32>, vector<1x256xf32> -> vector<1x256xf32>
    %116 = vector.extract_strided_slice %115 {offsets = [0, 0], sizes = [1, 128], strides = [1, 1]} : vector<1x256xf32> to vector<1x128xf32>
    %117 = vector.extract_strided_slice %115 {offsets = [0, 128], sizes = [1, 128], strides = [1, 1]} : vector<1x256xf32> to vector<1x128xf32>
    %118 = arith.mulf %116, %116 : vector<1x128xf32>
    %119 = arith.subf %117, %118 : vector<1x128xf32>
    %cst_58 = arith.constant 0.000000e+00 : f32
    %120 = vector.broadcast %cst_58 : f32 to vector<1x128xf32>
    %121 = arith.maximumf %119, %120 : vector<1x128xf32>
    %cst_59 = arith.constant 9.99999974E-6 : f32
    %122 = vector.broadcast %cst_59 : f32 to vector<1x128xf32>
    %123 = arith.addf %121, %122 : vector<1x128xf32>
    %124 = math.rsqrt %123 : vector<1x128xf32>
    %c0_60 = arith.constant 0 : index
    %c0_61 = arith.constant 0 : index
    %125 = vector.load %arg13[%c0_60, %c0_61] : memref<2x128xf32, #tpu.memory_space<vmem>>, vector<1x128xf32>
    %126 = arith.mulf %124, %125 : vector<1x128xf32>
    %c1_62 = arith.constant 1 : index
    %c0_63 = arith.constant 0 : index
    %127 = vector.load %arg13[%c1_62, %c0_63] : memref<2x128xf32, #tpu.memory_space<vmem>>, vector<1x128xf32>
    %128 = arith.mulf %116, %126 : vector<1x128xf32>
    %129 = arith.subf %127, %128 : vector<1x128xf32>
    %130 = vector.broadcast %126 : vector<1x128xf32> to vector<32x128xf32>
    %131 = arith.mulf %107, %130 : vector<32x128xf32>
    %132 = vector.broadcast %129 : vector<1x128xf32> to vector<32x128xf32>
    %133 = arith.addf %131, %132 : vector<32x128xf32>
    %134 = arith.addf %105, %133 : vector<32x128xf32>
    %c0_64 = arith.constant 0 : index
    %c0_65 = arith.constant 0 : index
    %135 = vector.load %arg14[%c0_64, %c0_65] : memref<384x128xbf16, #tpu.memory_space<vmem>>, vector<384x128xbf16>
    %cst_66 = arith.constant dense<0.000000e+00> : vector<32x128xf32>
    %136 = tpu.matmul %73, %135, %cst_66 {dimension_numbers = #tpu.dot_dimension_numbers<[1], [0], [0], [1], [0, 0, 1, 1], [], []>} : vector<32x384xbf16>, vector<384x128xbf16>, vector<32x128xf32> -> vector<32x128xf32>
    %cst_67 = arith.constant dense<0.000000e+00> : vector<128xf32>
    %137 = vector.multi_reduction <add>, %136, %cst_67 [0] : vector<32x128xf32> to vector<128xf32>
    %138 = vector.shape_cast %137 : vector<128xf32> to vector<1x128xf32>
    %139 = arith.mulf %136, %136 : vector<32x128xf32>
    %cst_68 = arith.constant dense<0.000000e+00> : vector<128xf32>
    %140 = vector.multi_reduction <add>, %139, %cst_68 [0] : vector<32x128xf32> to vector<128xf32>
    %141 = vector.shape_cast %140 : vector<128xf32> to vector<1x128xf32>
    %142 = tpu.concatenate %138, %141 in 1 : vector<1x128xf32>, vector<1x128xf32> -> vector<1x256xf32>
    %c0_69 = arith.constant 0 : index
    %c0_70 = arith.constant 0 : index
    %143 = vector.load %arg5[%c0_69, %c0_70] : memref<256x256xf32, #tpu.memory_space<vmem>>, vector<256x256xf32>
    %cst_71 = arith.constant dense<0.000000e+00> : vector<1x256xf32>
    %144 = tpu.matmul %142, %143, %cst_71 {dimension_numbers = #tpu.dot_dimension_numbers<[1], [0], [0], [1], [0, 0, 1, 1], [], []>} : vector<1x256xf32>, vector<256x256xf32>, vector<1x256xf32> -> vector<1x256xf32>
    %145 = vector.extract_strided_slice %144 {offsets = [0, 0], sizes = [1, 128], strides = [1, 1]} : vector<1x256xf32> to vector<1x128xf32>
    %146 = vector.extract_strided_slice %144 {offsets = [0, 128], sizes = [1, 128], strides = [1, 1]} : vector<1x256xf32> to vector<1x128xf32>
    %147 = arith.mulf %145, %145 : vector<1x128xf32>
    %148 = arith.subf %146, %147 : vector<1x128xf32>
    %cst_72 = arith.constant 0.000000e+00 : f32
    %149 = vector.broadcast %cst_72 : f32 to vector<1x128xf32>
    %150 = arith.maximumf %148, %149 : vector<1x128xf32>
    %cst_73 = arith.constant 9.99999974E-6 : f32
    %151 = vector.broadcast %cst_73 : f32 to vector<1x128xf32>
    %152 = arith.addf %150, %151 : vector<1x128xf32>
    %153 = math.rsqrt %152 : vector<1x128xf32>
    %c0_74 = arith.constant 0 : index
    %c0_75 = arith.constant 0 : index
    %154 = vector.load %arg15[%c0_74, %c0_75] : memref<2x128xf32, #tpu.memory_space<vmem>>, vector<1x128xf32>
    %155 = arith.mulf %153, %154 : vector<1x128xf32>
    %c1_76 = arith.constant 1 : index
    %c0_77 = arith.constant 0 : index
    %156 = vector.load %arg15[%c1_76, %c0_77] : memref<2x128xf32, #tpu.memory_space<vmem>>, vector<1x128xf32>
    %157 = arith.mulf %145, %155 : vector<1x128xf32>
    %158 = arith.subf %156, %157 : vector<1x128xf32>
    %159 = vector.broadcast %155 : vector<1x128xf32> to vector<32x128xf32>
    %160 = arith.mulf %136, %159 : vector<32x128xf32>
    %161 = vector.broadcast %158 : vector<1x128xf32> to vector<32x128xf32>
    %162 = arith.addf %160, %161 : vector<32x128xf32>
    %163 = arith.addf %134, %162 : vector<32x128xf32>
    %cst_78 = arith.constant dense<0.000000e+00> : vector<32x128xf32>
    %164 = tpu.matmul %1, %104, %cst_78 {dimension_numbers = #tpu.dot_dimension_numbers<[1], [0], [0], [1], [0, 0, 1, 1], [], []>} : vector<32x32xf32>, vector<32x128xf32>, vector<32x128xf32> -> vector<32x128xf32>
    %cst_79 = arith.constant dense<0.000000e+00> : vector<32x128xf32>
    %165 = tpu.matmul %2, %104, %cst_79 {dimension_numbers = #tpu.dot_dimension_numbers<[1], [0], [0], [1], [0, 0, 1, 1], [], []>} : vector<32x32xf32>, vector<32x128xf32>, vector<32x128xf32> -> vector<32x128xf32>
    %166 = tpu.concatenate %164, %104, %165 in 1 : vector<32x128xf32>, vector<32x128xf32>, vector<32x128xf32> -> vector<32x384xf32>
    %167 = arith.truncf %166 : vector<32x384xf32> to vector<32x384xbf16>
    %c0_80 = arith.constant 0 : index
    %c0_81 = arith.constant 0 : index
    %168 = vector.load %arg16[%c0_80, %c0_81] : memref<384x128xbf16, #tpu.memory_space<vmem>>, vector<384x128xbf16>
    %cst_82 = arith.constant dense<0.000000e+00> : vector<32x128xf32>
    %169 = tpu.matmul %167, %168, %cst_82 {dimension_numbers = #tpu.dot_dimension_numbers<[1], [0], [0], [1], [0, 0, 1, 1], [], []>} : vector<32x384xbf16>, vector<384x128xbf16>, vector<32x128xf32> -> vector<32x128xf32>
    %cst_83 = arith.constant dense<0.000000e+00> : vector<128xf32>
    %170 = vector.multi_reduction <add>, %169, %cst_83 [0] : vector<32x128xf32> to vector<128xf32>
    %171 = vector.shape_cast %170 : vector<128xf32> to vector<1x128xf32>
    %172 = arith.mulf %169, %169 : vector<32x128xf32>
    %cst_84 = arith.constant dense<0.000000e+00> : vector<128xf32>
    %173 = vector.multi_reduction <add>, %172, %cst_84 [0] : vector<32x128xf32> to vector<128xf32>
    %174 = vector.shape_cast %173 : vector<128xf32> to vector<1x128xf32>
    %175 = tpu.concatenate %171, %174 in 1 : vector<1x128xf32>, vector<1x128xf32> -> vector<1x256xf32>
    %c0_85 = arith.constant 0 : index
    %c0_86 = arith.constant 0 : index
    %176 = vector.load %arg5[%c0_85, %c0_86] : memref<256x256xf32, #tpu.memory_space<vmem>>, vector<256x256xf32>
    %cst_87 = arith.constant dense<0.000000e+00> : vector<1x256xf32>
    %177 = tpu.matmul %175, %176, %cst_87 {dimension_numbers = #tpu.dot_dimension_numbers<[1], [0], [0], [1], [0, 0, 1, 1], [], []>} : vector<1x256xf32>, vector<256x256xf32>, vector<1x256xf32> -> vector<1x256xf32>
    %178 = vector.extract_strided_slice %177 {offsets = [0, 0], sizes = [1, 128], strides = [1, 1]} : vector<1x256xf32> to vector<1x128xf32>
    %179 = vector.extract_strided_slice %177 {offsets = [0, 128], sizes = [1, 128], strides = [1, 1]} : vector<1x256xf32> to vector<1x128xf32>
    %180 = arith.mulf %178, %178 : vector<1x128xf32>
    %181 = arith.subf %179, %180 : vector<1x128xf32>
    %cst_88 = arith.constant 0.000000e+00 : f32
    %182 = vector.broadcast %cst_88 : f32 to vector<1x128xf32>
    %183 = arith.maximumf %181, %182 : vector<1x128xf32>
    %cst_89 = arith.constant 9.99999974E-6 : f32
    %184 = vector.broadcast %cst_89 : f32 to vector<1x128xf32>
    %185 = arith.addf %183, %184 : vector<1x128xf32>
    %186 = math.rsqrt %185 : vector<1x128xf32>
    %c0_90 = arith.constant 0 : index
    %c0_91 = arith.constant 0 : index
    %187 = vector.load %arg17[%c0_90, %c0_91] : memref<2x128xf32, #tpu.memory_space<vmem>>, vector<1x128xf32>
    %188 = arith.mulf %186, %187 : vector<1x128xf32>
    %c1_92 = arith.constant 1 : index
    %c0_93 = arith.constant 0 : index
    %189 = vector.load %arg17[%c1_92, %c0_93] : memref<2x128xf32, #tpu.memory_space<vmem>>, vector<1x128xf32>
    %190 = arith.mulf %178, %188 : vector<1x128xf32>
    %191 = arith.subf %189, %190 : vector<1x128xf32>
    %192 = vector.broadcast %188 : vector<1x128xf32> to vector<32x128xf32>
    %193 = arith.mulf %169, %192 : vector<32x128xf32>
    %194 = vector.broadcast %191 : vector<1x128xf32> to vector<32x128xf32>
    %195 = arith.addf %193, %194 : vector<32x128xf32>
    %196 = arith.addf %163, %195 : vector<32x128xf32>
    %197 = math.tanh %196 : vector<32x128xf32>
    %cst_94 = arith.constant 0.000000e+00 : f32
    %198 = vector.broadcast %cst_94 : f32 to vector<32x128xf32>
    %c0_95 = arith.constant 0 : index
    %c0_96 = arith.constant 0 : index
    %199 = vector.load %arg18[%c0_95, %c0_96] : memref<384x128xbf16, #tpu.memory_space<vmem>>, vector<384x128xbf16>
    %cst_97 = arith.constant dense<0.000000e+00> : vector<32x128xf32>
    %200 = tpu.matmul %0, %199, %cst_97 {dimension_numbers = #tpu.dot_dimension_numbers<[1], [0], [0], [1], [0, 0, 1, 1], [], []>} : vector<32x384xbf16>, vector<384x128xbf16>, vector<32x128xf32> -> vector<32x128xf32>
    %cst_98 = arith.constant dense<0.000000e+00> : vector<128xf32>
    %201 = vector.multi_reduction <add>, %200, %cst_98 [0] : vector<32x128xf32> to vector<128xf32>
    %202 = vector.shape_cast %201 : vector<128xf32> to vector<1x128xf32>
    %203 = arith.mulf %200, %200 : vector<32x128xf32>
    %cst_99 = arith.constant dense<0.000000e+00> : vector<128xf32>
    %204 = vector.multi_reduction <add>, %203, %cst_99 [0] : vector<32x128xf32> to vector<128xf32>
    %205 = vector.shape_cast %204 : vector<128xf32> to vector<1x128xf32>
    %206 = tpu.concatenate %202, %205 in 1 : vector<1x128xf32>, vector<1x128xf32> -> vector<1x256xf32>
    %c0_100 = arith.constant 0 : index
    %c0_101 = arith.constant 0 : index
    %207 = vector.load %arg5[%c0_100, %c0_101] : memref<256x256xf32, #tpu.memory_space<vmem>>, vector<256x256xf32>
    %cst_102 = arith.constant dense<0.000000e+00> : vector<1x256xf32>
    %208 = tpu.matmul %206, %207, %cst_102 {dimension_numbers = #tpu.dot_dimension_numbers<[1], [0], [0], [1], [0, 0, 1, 1], [], []>} : vector<1x256xf32>, vector<256x256xf32>, vector<1x256xf32> -> vector<1x256xf32>
    %209 = vector.extract_strided_slice %208 {offsets = [0, 0], sizes = [1, 128], strides = [1, 1]} : vector<1x256xf32> to vector<1x128xf32>
    %210 = vector.extract_strided_slice %208 {offsets = [0, 128], sizes = [1, 128], strides = [1, 1]} : vector<1x256xf32> to vector<1x128xf32>
    %211 = arith.mulf %209, %209 : vector<1x128xf32>
    %212 = arith.subf %210, %211 : vector<1x128xf32>
    %cst_103 = arith.constant 0.000000e+00 : f32
    %213 = vector.broadcast %cst_103 : f32 to vector<1x128xf32>
    %214 = arith.maximumf %212, %213 : vector<1x128xf32>
    %cst_104 = arith.constant 9.99999974E-6 : f32
    %215 = vector.broadcast %cst_104 : f32 to vector<1x128xf32>
    %216 = arith.addf %214, %215 : vector<1x128xf32>
    %217 = math.rsqrt %216 : vector<1x128xf32>
    %c0_105 = arith.constant 0 : index
    %c0_106 = arith.constant 0 : index
    %218 = vector.load %arg19[%c0_105, %c0_106] : memref<2x128xf32, #tpu.memory_space<vmem>>, vector<1x128xf32>
    %219 = arith.mulf %217, %218 : vector<1x128xf32>
    %c1_107 = arith.constant 1 : index
    %c0_108 = arith.constant 0 : index
    %220 = vector.load %arg19[%c1_107, %c0_108] : memref<2x128xf32, #tpu.memory_space<vmem>>, vector<1x128xf32>
    %221 = arith.mulf %209, %219 : vector<1x128xf32>
    %222 = arith.subf %220, %221 : vector<1x128xf32>
    %223 = vector.broadcast %219 : vector<1x128xf32> to vector<32x128xf32>
    %224 = arith.mulf %200, %223 : vector<32x128xf32>
    %225 = vector.broadcast %222 : vector<1x128xf32> to vector<32x128xf32>
    %226 = arith.addf %224, %225 : vector<32x128xf32>
    %227 = arith.addf %198, %226 : vector<32x128xf32>
    %c0_109 = arith.constant 0 : index
    %c0_110 = arith.constant 0 : index
    %228 = vector.load %arg20[%c0_109, %c0_110] : memref<384x128xbf16, #tpu.memory_space<vmem>>, vector<384x128xbf16>
    %cst_111 = arith.constant dense<0.000000e+00> : vector<32x128xf32>
    %229 = tpu.matmul %167, %228, %cst_111 {dimension_numbers = #tpu.dot_dimension_numbers<[1], [0], [0], [1], [0, 0, 1, 1], [], []>} : vector<32x384xbf16>, vector<384x128xbf16>, vector<32x128xf32> -> vector<32x128xf32>
    %cst_112 = arith.constant dense<0.000000e+00> : vector<128xf32>
    %230 = vector.multi_reduction <add>, %229, %cst_112 [0] : vector<32x128xf32> to vector<128xf32>
    %231 = vector.shape_cast %230 : vector<128xf32> to vector<1x128xf32>
    %232 = arith.mulf %229, %229 : vector<32x128xf32>
    %cst_113 = arith.constant dense<0.000000e+00> : vector<128xf32>
    %233 = vector.multi_reduction <add>, %232, %cst_113 [0] : vector<32x128xf32> to vector<128xf32>
    %234 = vector.shape_cast %233 : vector<128xf32> to vector<1x128xf32>
    %235 = tpu.concatenate %231, %234 in 1 : vector<1x128xf32>, vector<1x128xf32> -> vector<1x256xf32>
    %c0_114 = arith.constant 0 : index
    %c0_115 = arith.constant 0 : index
    %236 = vector.load %arg5[%c0_114, %c0_115] : memref<256x256xf32, #tpu.memory_space<vmem>>, vector<256x256xf32>
    %cst_116 = arith.constant dense<0.000000e+00> : vector<1x256xf32>
    %237 = tpu.matmul %235, %236, %cst_116 {dimension_numbers = #tpu.dot_dimension_numbers<[1], [0], [0], [1], [0, 0, 1, 1], [], []>} : vector<1x256xf32>, vector<256x256xf32>, vector<1x256xf32> -> vector<1x256xf32>
    %238 = vector.extract_strided_slice %237 {offsets = [0, 0], sizes = [1, 128], strides = [1, 1]} : vector<1x256xf32> to vector<1x128xf32>
    %239 = vector.extract_strided_slice %237 {offsets = [0, 128], sizes = [1, 128], strides = [1, 1]} : vector<1x256xf32> to vector<1x128xf32>
    %240 = arith.mulf %238, %238 : vector<1x128xf32>
    %241 = arith.subf %239, %240 : vector<1x128xf32>
    %cst_117 = arith.constant 0.000000e+00 : f32
    %242 = vector.broadcast %cst_117 : f32 to vector<1x128xf32>
    %243 = arith.maximumf %241, %242 : vector<1x128xf32>
    %cst_118 = arith.constant 9.99999974E-6 : f32
    %244 = vector.broadcast %cst_118 : f32 to vector<1x128xf32>
    %245 = arith.addf %243, %244 : vector<1x128xf32>
    %246 = math.rsqrt %245 : vector<1x128xf32>
    %c0_119 = arith.constant 0 : index
    %c0_120 = arith.constant 0 : index
    %247 = vector.load %arg21[%c0_119, %c0_120] : memref<2x128xf32, #tpu.memory_space<vmem>>, vector<1x128xf32>
    %248 = arith.mulf %246, %247 : vector<1x128xf32>
    %c1_121 = arith.constant 1 : index
    %c0_122 = arith.constant 0 : index
    %249 = vector.load %arg21[%c1_121, %c0_122] : memref<2x128xf32, #tpu.memory_space<vmem>>, vector<1x128xf32>
    %250 = arith.mulf %238, %248 : vector<1x128xf32>
    %251 = arith.subf %249, %250 : vector<1x128xf32>
    %252 = vector.broadcast %248 : vector<1x128xf32> to vector<32x128xf32>
    %253 = arith.mulf %229, %252 : vector<32x128xf32>
    %254 = vector.broadcast %251 : vector<1x128xf32> to vector<32x128xf32>
    %255 = arith.addf %253, %254 : vector<32x128xf32>
    %256 = arith.addf %227, %255 : vector<32x128xf32>
    %cst_123 = arith.constant dense<0.000000e+00> : vector<32x128xf32>
    %257 = tpu.matmul %1, %197, %cst_123 {dimension_numbers = #tpu.dot_dimension_numbers<[1], [0], [0], [1], [0, 0, 1, 1], [], []>} : vector<32x32xf32>, vector<32x128xf32>, vector<32x128xf32> -> vector<32x128xf32>
    %cst_124 = arith.constant dense<0.000000e+00> : vector<32x128xf32>
    %258 = tpu.matmul %2, %197, %cst_124 {dimension_numbers = #tpu.dot_dimension_numbers<[1], [0], [0], [1], [0, 0, 1, 1], [], []>} : vector<32x32xf32>, vector<32x128xf32>, vector<32x128xf32> -> vector<32x128xf32>
    %259 = tpu.concatenate %257, %197, %258 in 1 : vector<32x128xf32>, vector<32x128xf32>, vector<32x128xf32> -> vector<32x384xf32>
    %260 = arith.truncf %259 : vector<32x384xf32> to vector<32x384xbf16>
    %c0_125 = arith.constant 0 : index
    %c0_126 = arith.constant 0 : index
    %261 = vector.load %arg22[%c0_125, %c0_126] : memref<384x256xbf16, #tpu.memory_space<vmem>>, vector<384x256xbf16>
    %cst_127 = arith.constant dense<0.000000e+00> : vector<32x256xf32>
    %262 = tpu.matmul %260, %261, %cst_127 {dimension_numbers = #tpu.dot_dimension_numbers<[1], [0], [0], [1], [0, 0, 1, 1], [], []>} : vector<32x384xbf16>, vector<384x256xbf16>, vector<32x256xf32> -> vector<32x256xf32>
    %cst_128 = arith.constant dense<0.000000e+00> : vector<256xf32>
    %263 = vector.multi_reduction <add>, %262, %cst_128 [0] : vector<32x256xf32> to vector<256xf32>
    %264 = vector.shape_cast %263 : vector<256xf32> to vector<1x256xf32>
    %265 = arith.mulf %262, %262 : vector<32x256xf32>
    %cst_129 = arith.constant dense<0.000000e+00> : vector<256xf32>
    %266 = vector.multi_reduction <add>, %265, %cst_129 [0] : vector<32x256xf32> to vector<256xf32>
    %267 = vector.shape_cast %266 : vector<256xf32> to vector<1x256xf32>
    %268 = tpu.concatenate %264, %267 in 1 : vector<1x256xf32>, vector<1x256xf32> -> vector<1x512xf32>
    %c0_130 = arith.constant 0 : index
    %c0_131 = arith.constant 0 : index
    %269 = vector.load %arg4[%c0_130, %c0_131] : memref<512x512xf32, #tpu.memory_space<vmem>>, vector<512x512xf32>
    %cst_132 = arith.constant dense<0.000000e+00> : vector<1x512xf32>
    %270 = tpu.matmul %268, %269, %cst_132 {dimension_numbers = #tpu.dot_dimension_numbers<[1], [0], [0], [1], [0, 0, 1, 1], [], []>} : vector<1x512xf32>, vector<512x512xf32>, vector<1x512xf32> -> vector<1x512xf32>
    %271 = vector.extract_strided_slice %270 {offsets = [0, 0], sizes = [1, 256], strides = [1, 1]} : vector<1x512xf32> to vector<1x256xf32>
    %272 = vector.extract_strided_slice %270 {offsets = [0, 256], sizes = [1, 256], strides = [1, 1]} : vector<1x512xf32> to vector<1x256xf32>
    %273 = arith.mulf %271, %271 : vector<1x256xf32>
    %274 = arith.subf %272, %273 : vector<1x256xf32>
    %cst_133 = arith.constant 0.000000e+00 : f32
    %275 = vector.broadcast %cst_133 : f32 to vector<1x256xf32>
    %276 = arith.maximumf %274, %275 : vector<1x256xf32>
    %cst_134 = arith.constant 9.99999974E-6 : f32
    %277 = vector.broadcast %cst_134 : f32 to vector<1x256xf32>
    %278 = arith.addf %276, %277 : vector<1x256xf32>
    %279 = math.rsqrt %278 : vector<1x256xf32>
    %c0_135 = arith.constant 0 : index
    %c0_136 = arith.constant 0 : index
    %280 = vector.load %arg23[%c0_135, %c0_136] : memref<2x256xf32, #tpu.memory_space<vmem>>, vector<1x256xf32>
    %281 = arith.mulf %279, %280 : vector<1x256xf32>
    %c1_137 = arith.constant 1 : index
    %c0_138 = arith.constant 0 : index
    %282 = vector.load %arg23[%c1_137, %c0_138] : memref<2x256xf32, #tpu.memory_space<vmem>>, vector<1x256xf32>
    %283 = arith.mulf %271, %281 : vector<1x256xf32>
    %284 = arith.subf %282, %283 : vector<1x256xf32>
    %285 = vector.broadcast %281 : vector<1x256xf32> to vector<32x256xf32>
    %286 = arith.mulf %262, %285 : vector<32x256xf32>
    %287 = vector.broadcast %284 : vector<1x256xf32> to vector<32x256xf32>
    %288 = arith.addf %286, %287 : vector<32x256xf32>
    %289 = vector.extract_strided_slice %288 {offsets = [0, 0], sizes = [32, 128], strides = [1, 1]} : vector<32x256xf32> to vector<32x128xf32>
    %290 = arith.addf %256, %289 : vector<32x128xf32>
    %291 = vector.extract_strided_slice %288 {offsets = [0, 128], sizes = [32, 128], strides = [1, 1]} : vector<32x256xf32> to vector<32x128xf32>
    %292 = arith.addf %290, %291 : vector<32x128xf32>
    %293 = arith.addf %292, %104 : vector<32x128xf32>
    %294 = arith.addf %293, %36 : vector<32x128xf32>
    %295 = math.tanh %294 : vector<32x128xf32>
    %c0_139 = arith.constant 0 : index
    %c0_140 = arith.constant 0 : index
    %296 = vector.load %arg24[%c0_139, %c0_140] : memref<32x128xf32, #tpu.memory_space<vmem>>, vector<32x128xf32>
    tpu.vector_store %arg24[%c0_139, %c0_140], %295 {strides = array<i32>} : memref<32x128xf32, #tpu.memory_space<vmem>>, vector<32x128xf32>,
    return
  }
}

</mosaic_0001>

<llo_original>
// kernel: tile.123
$region0: #{tile.123}
  #allocation0 [shape = 's32[1]{0}', space=sflag, size = 0x4, scoped, tag = 'scoped memory for tile.123']
  %s0 = inlined_call_operand.vmem [shape: f32[8], index: 0, kind: input, shape index: {}]
  %s1 = inlined_call_operand.vmem [shape: f32[16,8], index: 1, kind: output, shape index: {}]
  // Predicated region
  $region2: #{tile.123} parent=0 // pred_check
    _
  $region3: #{tile.123} parent=0 // pred_check_branch
    %3 = sbr.rel (0) target = $region5
  $region4: #{tile.123} parent=0 // pred_region
    _
  $region5: #{tile.123} parent=0 // pred_fallthru
    _
  %v4 = vld [vmem:[%s0] ss:$0 sm:$0xff]
  %5 = vst [vmem:[%s1] sm:$0xff] %v4
  %s6 = scalar_lea.vmem %s1, 8
  %7 = vst [vmem:[%s6] sm:$0xff] %v4

// kernel: tile.124
$region0: #{tile.124}
  %s0 = inlined_call_operand.vmem [shape: f32[16,8], index: 0, kind: input, shape index: {}]
  %s1 = inlined_call_operand.vmem [shape: f32[128], index: 1, kind: output, shape index: {}]
  $region1: #{tile.124} parent=0
    #allocation0 [shape = 'u8[4096]{0}', space=vmem, size = 0x1000, scoped, tag = 'scoped mem for output reshape']
    %v2 = vld [vmem:[%s0] sm:$0x1]
    %vm3 = vcmask 64512
    %4 = vst.msk [vmem:[#allocation0] sm:$0x1] %vm3, %v2
    %s5 = scalar_lea.vmem %s0, 15
    %v6 = vld [vmem:[%s5] sm:$0x1]
    %7 = vrot.lane.b32.xlu0 %v6, 120
    %v8 = vpop.permute.xlu0 %7
    %vm9 = vcmask 1048512
    %10 = vst.msk [vmem:[#allocation0] sm:$0x1] %vm9, %v8
    %s11 = scalar_lea.vmem %s0, 14
    %v12 = vld [vmem:[%s11] sm:$0x1]
    %13 = vrot.lane.b32.xlu0 %v12, 112
    %v14 = vpop.permute.xlu0 %13
    %vm15 = vcmask 982912
    %16 = vst.msk [vmem:[#allocation0] sm:$0x1] %vm15, %v14
    %s17 = scalar_lea.vmem %s0, 13
    %v18 = vld [vmem:[%s17] sm:$0x1]
    %19 = vrot.lane.b32.xlu0 %v18, 104
    %v20 = vpop.permute.xlu0 %19
    %vm21 = vcmask 917312
    %22 = vst.msk [vmem:[#allocation0] sm:$0x1] %vm21, %v20
    %s23 = scalar_lea.vmem %s0, 12
    %v24 = vld [vmem:[%s23] sm:$0x1]
    %25 = vrot.lane.b32.xlu0 %v24, 96
    %v26 = vpop.permute.xlu0 %25
    %vm27 = vcmask 851712
    %28 = vst.msk [vmem:[#allocation0] sm:$0x1] %vm27, %v26
    %s29 = scalar_lea.vmem %s0, 11
    %v30 = vld [vmem:[%s29] sm:$0x1]
    %31 = vrot.lane.b32.xlu0 %v30, 88
    %v32 = vpop.permute.xlu0 %31
    %vm33 = vcmask 786112
    %34 = vst.msk [vmem:[#allocation0] sm:$0x1] %vm33, %v32
    %s35 = scalar_lea.vmem %s0, 10
    %v36 = vld [vmem:[%s35] sm:$0x1]
    %37 = vrot.lane.b32.xlu0 %v36, 80
    %v38 = vpop.permute.xlu0 %37
    %vm39 = vcmask 720512
    %40 = vst.msk [vmem:[#allocation0] sm:$0x1] %vm39, %v38
    %s41 = scalar_lea.vmem %s0, 9
    %v42 = vld [vmem:[%s41] sm:$0x1]
    %43 = vrot.lane.b32.xlu0 %v42, 72
    %v44 = vpop.permute.xlu0 %43
    %vm45 = vcmask 654912
    %46 = vst.msk [vmem:[#allocation0] sm:$0x1] %vm45, %v44
    %s47 = scalar_lea.vmem %s0, 8
    %v48 = vld [vmem:[%s47] sm:$0x1]
    %49 = vrot.lane.b32.xlu0 %v48, 64
    %v50 = vpop.permute.xlu0 %49
    %vm51 = vcmask 589312
    %52 = vst.msk [vmem:[#allocation0] sm:$0x1] %vm51, %v50
    %s53 = scalar_lea.vmem %s0, 7
    %v54 = vld [vmem:[%s53] sm:$0x1]
    %55 = vrot.lane.b32.xlu0 %v54, 56
    %v56 = vpop.permute.xlu0 %55
    %vm57 = vcmask 523712
    %58 = vst.msk [vmem:[#allocation0] sm:$0x1] %vm57, %v56
    %s59 = scalar_lea.vmem %s0, 6
    %v60 = vld [vmem:[%s59] sm:$0x1]
    %61 = vrot.lane.b32.xlu0 %v60, 48
    %v62 = vpop.permute.xlu0 %61
    %vm63 = vcmask 458112
    %64 = vst.msk [vmem:[#allocation0] sm:$0x1] %vm63, %v62
    %s65 = scalar_lea.vmem %s0, 5
    %v66 = vld [vmem:[%s65] sm:$0x1]
    %67 = vrot.lane.b32.xlu0 %v66, 40
    %v68 = vpop.permute.xlu0 %67
    %vm69 = vcmask 392512
    %70 = vst.msk [vmem:[#allocation0] sm:$0x1] %vm69, %v68
    %s71 = scalar_lea.vmem %s0, 4
    %v72 = vld [vmem:[%s71] sm:$0x1]
    %73 = vrot.lane.b32.xlu0 %v72, 32
    %v74 = vpop.permute.xlu0 %73
    %vm75 = vcmask 326912
    %76 = vst.msk [vmem:[#allocation0] sm:$0x1] %vm75, %v74
    %s77 = scalar_lea.vmem %s0, 3
    %v78 = vld [vmem:[%s77] sm:$0x1]
    %79 = vrot.lane.b32.xlu0 %v78, 24
    %v80 = vpop.permute.xlu0 %79
    %vm81 = vcmask 261312
    %82 = vst.msk [vmem:[#allocation0] sm:$0x1] %vm81, %v80
    %s83 = scalar_lea.vmem %s0, 2
    %v84 = vld [vmem:[%s83] sm:$0x1]
    %85 = vrot.lane.b32.xlu0 %v84, 16
    %v86 = vpop.permute.xlu0 %85
    %vm87 = vcmask 195712
    %88 = vst.msk [vmem:[#allocation0] sm:$0x1] %vm87, %v86
    %s89 = scalar_lea.vmem %s0, 1
    %v90 = vld [vmem:[%s89] sm:$0x1]
    %91 = vrot.lane.b32.xlu0 %v90, 8
    %v92 = vpop.permute.xlu0 %91
    %vm93 = vcmask 130112
    %94 = vst.msk [vmem:[#allocation0] sm:$0x1] %vm93, %v92
    %s96 = sshllo.u32 0, 1
    %v98 = vld [vmem:[#allocation0] sm:%s96]
    %s99 = sshllo.u32 0, 1
    %100 = vst [vmem:[%s1] sm:%s99] %v98

// kernel: tile.188
$region0: #{tile.188}
  %s0 = inlined_call_operand.vmem [shape: f32[16,8], index: 0, kind: input, shape index: {}]
  %s1 = inlined_call_operand.vmem [shape: f32[1,128], index: 1, kind: output, shape index: {}]
  $region1: #{tile.188} parent=0
    #allocation0 [shape = 'u8[4096]{0}', space=vmem, size = 0x1000, scoped, tag = 'scoped mem for output reshape']
    %v2 = vld [vmem:[%s0] sm:$0x1]
    %vm3 = vcmask 64512
    %4 = vst.msk [vmem:[#allocation0] sm:$0x1] %vm3, %v2
    %s5 = scalar_lea.vmem %s0, 15
    %v6 = vld [vmem:[%s5] sm:$0x1]
    %7 = vrot.lane.b32.xlu0 %v6, 120
    %v8 = vpop.permute.xlu0 %7
    %vm9 = vcmask 1048512
    %10 = vst.msk [vmem:[#allocation0] sm:$0x1] %vm9, %v8
    %s11 = scalar_lea.vmem %s0, 14
    %v12 = vld [vmem:[%s11] sm:$0x1]
    %13 = vrot.lane.b32.xlu0 %v12, 112
    %v14 = vpop.permute.xlu0 %13
    %vm15 = vcmask 982912
    %16 = vst.msk [vmem:[#allocation0] sm:$0x1] %vm15, %v14
    %s17 = scalar_lea.vmem %s0, 13
    %v18 = vld [vmem:[%s17] sm:$0x1]
    %19 = vrot.lane.b32.xlu0 %v18, 104
    %v20 = vpop.permute.xlu0 %19
    %vm21 = vcmask 917312
    %22 = vst.msk [vmem:[#allocation0] sm:$0x1] %vm21, %v20
    %s23 = scalar_lea.vmem %s0, 12
    %v24 = vld [vmem:[%s23] sm:$0x1]
    %25 = vrot.lane.b32.xlu0 %v24, 96
    %v26 = vpop.permute.xlu0 %25
    %vm27 = vcmask 851712
    %28 = vst.msk [vmem:[#allocation0] sm:$0x1] %vm27, %v26
    %s29 = scalar_lea.vmem %s0, 11
    %v30 = vld [vmem:[%s29] sm:$0x1]
    %31 = vrot.lane.b32.xlu0 %v30, 88
    %v32 = vpop.permute.xlu0 %31
    %vm33 = vcmask 786112
    %34 = vst.msk [vmem:[#allocation0] sm:$0x1] %vm33, %v32
    %s35 = scalar_lea.vmem %s0, 10
    %v36 = vld [vmem:[%s35] sm:$0x1]
    %37 = vrot.lane.b32.xlu0 %v36, 80
    %v38 = vpop.permute.xlu0 %37
    %vm39 = vcmask 720512
    %40 = vst.msk [vmem:[#allocation0] sm:$0x1] %vm39, %v38
    %s41 = scalar_lea.vmem %s0, 9
    %v42 = vld [vmem:[%s41] sm:$0x1]
    %43 = vrot.lane.b32.xlu0 %v42, 72
    %v44 = vpop.permute.xlu0 %43
    %vm45 = vcmask 654912
    %46 = vst.msk [vmem:[#allocation0] sm:$0x1] %vm45, %v44
    %s47 = scalar_lea.vmem %s0, 8
    %v48 = vld [vmem:[%s47] sm:$0x1]
    %49 = vrot.lane.b32.xlu0 %v48, 64
    %v50 = vpop.permute.xlu0 %49
    %vm51 = vcmask 589312
    %52 = vst.msk [vmem:[#allocation0] sm:$0x1] %vm51, %v50
    %s53 = scalar_lea.vmem %s0, 7
    %v54 = vld [vmem:[%s53] sm:$0x1]
    %55 = vrot.lane.b32.xlu0 %v54, 56
    %v56 = vpop.permute.xlu0 %55
    %vm57 = vcmask 523712
    %58 = vst.msk [vmem:[#allocation0] sm:$0x1] %vm57, %v56
    %s59 = scalar_lea.vmem %s0, 6
    %v60 = vld [vmem:[%s59] sm:$0x1]
    %61 = vrot.lane.b32.xlu0 %v60, 48
    %v62 = vpop.permute.xlu0 %61
    %vm63 = vcmask 458112
    %64 = vst.msk [vmem:[#allocation0] sm:$0x1] %vm63, %v62
    %s65 = scalar_lea.vmem %s0, 5
    %v66 = vld [vmem:[%s65] sm:$0x1]
    %67 = vrot.lane.b32.xlu0 %v66, 40
    %v68 = vpop.permute.xlu0 %67
    %vm69 = vcmask 392512
    %70 = vst.msk [vmem:[#allocation0] sm:$0x1] %vm69, %v68
    %s71 = scalar_lea.vmem %s0, 4
    %v72 = vld [vmem:[%s71] sm:$0x1]
    %73 = vrot.lane.b32.xlu0 %v72, 32
    %v74 = vpop.permute.xlu0 %73
    %vm75 = vcmask 326912
    %76 = vst.msk [vmem:[#allocation0] sm:$0x1] %vm75, %v74
    %s77 = scalar_lea.vmem %s0, 3
    %v78 = vld [vmem:[%s77] sm:$0x1]
    %79 = vrot.lane.b32.xlu0 %v78, 24
    %v80 = vpop.permute.xlu0 %79
    %vm81 = vcmask 261312
    %82 = vst.msk [vmem:[#allocation0] sm:$0x1] %vm81, %v80
    %s83 = scalar_lea.vmem %s0, 2
    %v84 = vld [vmem:[%s83] sm:$0x1]
    %85 = vrot.lane.b32.xlu0 %v84, 16
    %v86 = vpop.permute.xlu0 %85
    %vm87 = vcmask 195712
    %88 = vst.msk [vmem:[#allocation0] sm:$0x1] %vm87, %v86
    %s89 = scalar_lea.vmem %s0, 1
    %v90 = vld [vmem:[%s89] sm:$0x1]
    %91 = vrot.lane.b32.xlu0 %v90, 8
    %v92 = vpop.permute.xlu0 %91
    %vm93 = vcmask 130112
    %94 = vst.msk [vmem:[#allocation0] sm:$0x1] %vm93, %v92
    %s96 = sshllo.u32 0, 1
    %v98 = vld [vmem:[#allocation0] sm:%s96]
    %s99 = sshllo.u32 0, 1
    %100 = vst [vmem:[%s1] sm:%s99] %v98

// kernel: group_explore_forward.1
$region0: #{group_explore_forward.1}
  #allocation0 [shape = 'u32[]', space=smem, size = 0x4, offset = 0x4, fixed_abs, tag = 'smem constant byte address 0x4 - core index']
  #allocation1 [shape = 'u32[144,128]{1,0:T(1,128)}', space=vmem, size = 0x12000, scoped, tag = 'internal scratch']
  %s0 = inlined_call_operand.vmem [shape: bf16[32,384], index: 0, kind: input, shape index: {}]
  %s1 = inlined_call_operand.vmem [shape: f32[32,128], index: 1, kind: input, shape index: {}]
  %s2 = inlined_call_operand.vmem [shape: f32[32,32], index: 2, kind: input, shape index: {}]
  %s3 = inlined_call_operand.vmem [shape: f32[32,32], index: 3, kind: input, shape index: {}]
  %s4 = inlined_call_operand.vmem [shape: f32[512,512], index: 4, kind: input, shape index: {}]
  %s5 = inlined_call_operand.vmem [shape: f32[256,256], index: 5, kind: input, shape index: {}]
  %s6 = inlined_call_operand.vmem [shape: bf16[384,256], index: 6, kind: input, shape index: {}]
  %s7 = inlined_call_operand.vmem [shape: f32[2,256], index: 7, kind: input, shape index: {}]
  %s8 = inlined_call_operand.vmem [shape: bf16[384,256], index: 8, kind: input, shape index: {}]
  %s9 = inlined_call_operand.vmem [shape: f32[2,256], index: 9, kind: input, shape index: {}]
  %s10 = inlined_call_operand.vmem [shape: bf16[384,128], index: 10, kind: input, shape index: {}]
  %s11 = inlined_call_operand.vmem [shape: f32[2,128], index: 11, kind: input, shape index: {}]
  %s12 = inlined_call_operand.vmem [shape: bf16[384,128], index: 12, kind: input, shape index: {}]
  %s13 = inlined_call_operand.vmem [shape: f32[2,128], index: 13, kind: input, shape index: {}]
  %s14 = inlined_call_operand.vmem [shape: bf16[384,128], index: 14, kind: input, shape index: {}]
  %s15 = inlined_call_operand.vmem [shape: f32[2,128], index: 15, kind: input, shape index: {}]
  %s16 = inlined_call_operand.vmem [shape: bf16[384,128], index: 16, kind: input, shape index: {}]
  %s17 = inlined_call_operand.vmem [shape: f32[2,128], index: 17, kind: input, shape index: {}]
  %s18 = inlined_call_operand.vmem [shape: bf16[384,128], index: 18, kind: input, shape index: {}]
  %s19 = inlined_call_operand.vmem [shape: f32[2,128], index: 19, kind: input, shape index: {}]
  %s20 = inlined_call_operand.vmem [shape: bf16[384,128], index: 20, kind: input, shape index: {}]
  %s21 = inlined_call_operand.vmem [shape: f32[2,128], index: 21, kind: input, shape index: {}]
  %s22 = inlined_call_operand.vmem [shape: bf16[384,256], index: 22, kind: input, shape index: {}]
  %s23 = inlined_call_operand.vmem [shape: f32[2,256], index: 23, kind: input, shape index: {}]
  %s24 = inlined_call_operand.vmem [shape: f32[32,128], index: 24, kind: output, shape index: {}]
  %s25 = sld [smem:[#allocation0]]
  $region106: #{group_explore_forward.1} parent=0
    _
  %s27 = ssub.s32 1, %s25
  %s28 = scalar_select 0, %s27, %s25
  // Predicated region
  $region2: #{group_explore_forward.1} parent=0 // pred_check
    _
  $region3: #{group_explore_forward.1} parent=0 // pred_check_branch
    %30 = sbr.rel (0) target = $region5
  $region4: #{group_explore_forward.1} parent=0 // pred_region
    _
  $region5: #{group_explore_forward.1} parent=0 // pred_fallthru
    _
  // Predicated region
  $region6: #{group_explore_forward.1} parent=0 // pred_check
    _
  $region7: #{group_explore_forward.1} parent=0 // pred_check_branch
    %32 = sbr.rel (0) target = $region9
  $region8: #{group_explore_forward.1} parent=0 // pred_region
    _
  $region9: #{group_explore_forward.1} parent=0 // pred_fallthru
    _
  // Predicated region
  $region10: #{group_explore_forward.1} parent=0 // pred_check
    _
  $region11: #{group_explore_forward.1} parent=0 // pred_check_branch
    %34 = sbr.rel (0) target = $region13
  $region12: #{group_explore_forward.1} parent=0 // pred_region
    _
  $region13: #{group_explore_forward.1} parent=0 // pred_fallthru
    _
  // Predicated region
  $region14: #{group_explore_forward.1} parent=0 // pred_check
    _
  $region15: #{group_explore_forward.1} parent=0 // pred_check_branch
    %36 = sbr.rel (0) target = $region17
  $region16: #{group_explore_forward.1} parent=0 // pred_region
    _
  $region17: #{group_explore_forward.1} parent=0 // pred_fallthru
    _
  // Predicated region
  $region18: #{group_explore_forward.1} parent=0 // pred_check
    _
  $region19: #{group_explore_forward.1} parent=0 // pred_check_branch
    %38 = sbr.rel (0) target = $region21
  $region20: #{group_explore_forward.1} parent=0 // pred_region
    _
  $region21: #{group_explore_forward.1} parent=0 // pred_fallthru
    _
  // Predicated region
  $region22: #{group_explore_forward.1} parent=0 // pred_check
    _
  $region23: #{group_explore_forward.1} parent=0 // pred_check_branch
    %40 = sbr.rel (0) target = $region25
  $region24: #{group_explore_forward.1} parent=0 // pred_region
    _
  $region25: #{group_explore_forward.1} parent=0 // pred_fallthru
    _
  // Predicated region
  $region26: #{group_explore_forward.1} parent=0 // pred_check
    _
  $region27: #{group_explore_forward.1} parent=0 // pred_check_branch
    %42 = sbr.rel (0) target = $region29
  $region28: #{group_explore_forward.1} parent=0 // pred_region
    _
  $region29: #{group_explore_forward.1} parent=0 // pred_fallthru
    _
  // Predicated region
  $region30: #{group_explore_forward.1} parent=0 // pred_check
    _
  $region31: #{group_explore_forward.1} parent=0 // pred_check_branch
    %44 = sbr.rel (0) target = $region33
  $region32: #{group_explore_forward.1} parent=0 // pred_region
    _
  $region33: #{group_explore_forward.1} parent=0 // pred_fallthru
    _
  // Predicated region
  $region34: #{group_explore_forward.1} parent=0 // pred_check
    _
  $region35: #{group_explore_forward.1} parent=0 // pred_check_branch
    %46 = sbr.rel (0) target = $region37
  $region36: #{group_explore_forward.1} parent=0 // pred_region
    _
  $region37: #{group_explore_forward.1} parent=0 // pred_fallthru
    _
  // Predicated region
  $region38: #{group_explore_forward.1} parent=0 // pred_check
    _
  $region39: #{group_explore_forward.1} parent=0 // pred_check_branch
    %48 = sbr.rel (0) target = $region41
  $region40: #{group_explore_forward.1} parent=0 // pred_region
    _
  $region41: #{group_explore_forward.1} parent=0 // pred_fallthru
    _
  // Predicated region
  $region42: #{group_explore_forward.1} parent=0 // pred_check
    _
  $region43: #{group_explore_forward.1} parent=0 // pred_check_branch
    %50 = sbr.rel (0) target = $region45
  $region44: #{group_explore_forward.1} parent=0 // pred_region
    _
  $region45: #{group_explore_forward.1} parent=0 // pred_fallthru
    _
  // Predicated region
  $region46: #{group_explore_forward.1} parent=0 // pred_check
    _
  $region47: #{group_explore_forward.1} parent=0 // pred_check_branch
    %52 = sbr.rel (0) target = $region49
  $region48: #{group_explore_forward.1} parent=0 // pred_region
    _
  $region49: #{group_explore_forward.1} parent=0 // pred_fallthru
    _
  // Predicated region
  $region50: #{group_explore_forward.1} parent=0 // pred_check
    _
  $region51: #{group_explore_forward.1} parent=0 // pred_check_branch
    %54 = sbr.rel (0) target = $region53
  $region52: #{group_explore_forward.1} parent=0 // pred_region
    _
  $region53: #{group_explore_forward.1} parent=0 // pred_fallthru
    _
  // Predicated region
  $region54: #{group_explore_forward.1} parent=0 // pred_check
    _
  $region55: #{group_explore_forward.1} parent=0 // pred_check_branch
    %56 = sbr.rel (0) target = $region57
  $region56: #{group_explore_forward.1} parent=0 // pred_region
    _
  $region57: #{group_explore_forward.1} parent=0 // pred_fallthru
    _
  // Predicated region
  $region58: #{group_explore_forward.1} parent=0 // pred_check
    _
  $region59: #{group_explore_forward.1} parent=0 // pred_check_branch
    %58 = sbr.rel (0) target = $region61
  $region60: #{group_explore_forward.1} parent=0 // pred_region
    _
  $region61: #{group_explore_forward.1} parent=0 // pred_fallthru
    _
  // Predicated region
  $region62: #{group_explore_forward.1} parent=0 // pred_check
    _
  $region63: #{group_explore_forward.1} parent=0 // pred_check_branch
    %60 = sbr.rel (0) target = $region65
  $region64: #{group_explore_forward.1} parent=0 // pred_region
    _
  $region65: #{group_explore_forward.1} parent=0 // pred_fallthru
    _
  // Predicated region
  $region66: #{group_explore_forward.1} parent=0 // pred_check
    _
  $region67: #{group_explore_forward.1} parent=0 // pred_check_branch
    %62 = sbr.rel (0) target = $region69
  $region68: #{group_explore_forward.1} parent=0 // pred_region
    _
  $region69: #{group_explore_forward.1} parent=0 // pred_fallthru
    _
  // Predicated region
  $region70: #{group_explore_forward.1} parent=0 // pred_check
    _
  $region71: #{group_explore_forward.1} parent=0 // pred_check_branch
    %64 = sbr.rel (0) target = $region73
  $region72: #{group_explore_forward.1} parent=0 // pred_region
    _
  $region73: #{group_explore_forward.1} parent=0 // pred_fallthru
    _
  // Predicated region
  $region74: #{group_explore_forward.1} parent=0 // pred_check
    _
  $region75: #{group_explore_forward.1} parent=0 // pred_check_branch
    %66 = sbr.rel (0) target = $region77
  $region76: #{group_explore_forward.1} parent=0 // pred_region
    _
  $region77: #{group_explore_forward.1} parent=0 // pred_fallthru
    _
  // Predicated region
  $region78: #{group_explore_forward.1} parent=0 // pred_check
    _
  $region79: #{group_explore_forward.1} parent=0 // pred_check_branch
    %68 = sbr.rel (0) target = $region81
  $region80: #{group_explore_forward.1} parent=0 // pred_region
    _
  $region81: #{group_explore_forward.1} parent=0 // pred_fallthru
    _
  // Predicated region
  $region82: #{group_explore_forward.1} parent=0 // pred_check
    _
  $region83: #{group_explore_forward.1} parent=0 // pred_check_branch
    %70 = sbr.rel (0) target = $region85
  $region84: #{group_explore_forward.1} parent=0 // pred_region
    _
  $region85: #{group_explore_forward.1} parent=0 // pred_fallthru
    _
  // Predicated region
  $region86: #{group_explore_forward.1} parent=0 // pred_check
    _
  $region87: #{group_explore_forward.1} parent=0 // pred_check_branch
    %72 = sbr.rel (0) target = $region89
  $region88: #{group_explore_forward.1} parent=0 // pred_region
    _
  $region89: #{group_explore_forward.1} parent=0 // pred_fallthru
    _
  // Predicated region
  $region90: #{group_explore_forward.1} parent=0 // pred_check
    _
  $region91: #{group_explore_forward.1} parent=0 // pred_check_branch
    %74 = sbr.rel (0) target = $region93
  $region92: #{group_explore_forward.1} parent=0 // pred_region
    _
  $region93: #{group_explore_forward.1} parent=0 // pred_fallthru
    _
  // Predicated region
  $region94: #{group_explore_forward.1} parent=0 // pred_check
    _
  $region95: #{group_explore_forward.1} parent=0 // pred_check_branch
    %76 = sbr.rel (0) target = $region97
  $region96: #{group_explore_forward.1} parent=0 // pred_region
    _
  $region97: #{group_explore_forward.1} parent=0 // pred_fallthru
    _
  %v78 = vld [vmem:[%s0] sm:$0xff]
  %v79 = vld [vmem:[%s0 + $0x8] sm:$0xf]
  %v80 = vld [vmem:[%s0 + $0xc] sm:$0xff]
  %v81 = vld [vmem:[%s0 + $0x14] sm:$0xf]
  %v82 = vld [vmem:[%s0 + $0x18] sm:$0xff]
  %v83 = vld [vmem:[%s0 + $0x20] sm:$0xf]
  %v84 = vld [vmem:[%s0 + $0x24] sm:$0xff]
  %v85 = vld [vmem:[%s0 + $0x2c] sm:$0xf]
  %v86 = vld [vmem:[%s2] sm:$0xff]
  %v87 = vld [vmem:[%s2 + $0x8] sm:$0xff]
  %v88 = vld [vmem:[%s2 + $0x10] sm:$0xff]
  %v89 = vld [vmem:[%s2 + $0x18] sm:$0xff]
  %v90 = vld [vmem:[%s3] sm:$0xff]
  %v91 = vld [vmem:[%s3 + $0x8] sm:$0xff]
  %v92 = vld [vmem:[%s3 + $0x10] sm:$0xff]
  %v93 = vld [vmem:[%s3 + $0x18] sm:$0xff]
  %v94 = vld [vmem:[%s6] sm:$0xff]
  %v95 = vld [vmem:[%s6 + $0x8] sm:$0xff]
  %v96 = vld [vmem:[%s6 + $0x10] sm:$0xff]
  %v97 = vld [vmem:[%s6 + $0x18] sm:$0xff]
  %v98 = vld [vmem:[%s6 + $0x20] sm:$0xff]
  %v99 = vld [vmem:[%s6 + $0x28] sm:$0xff]
  %v100 = vld [vmem:[%s6 + $0x30] sm:$0xff]
  %v101 = vld [vmem:[%s6 + $0x38] sm:$0xff]
  %v102 = vld [vmem:[%s6 + $0x40] sm:$0xff]
  %v103 = vld [vmem:[%s6 + $0x48] sm:$0xff]
  %v104 = vld [vmem:[%s6 + $0x50] sm:$0xff]
  %v105 = vld [vmem:[%s6 + $0x58] sm:$0xff]
  %v106 = vld [vmem:[%s6 + $0x60] sm:$0xff]
  %v107 = vld [vmem:[%s6 + $0x68] sm:$0xff]
  %v108 = vld [vmem:[%s6 + $0x70] sm:$0xff]
  %v109 = vld [vmem:[%s6 + $0x78] sm:$0xff]
  %v110 = vld [vmem:[%s6 + $0x80] sm:$0xff]
  %v111 = vld [vmem:[%s6 + $0x88] sm:$0xff]
  %v112 = vld [vmem:[%s6 + $0x90] sm:$0xff]
  %v113 = vld [vmem:[%s6 + $0x98] sm:$0xff]
  %v114 = vld [vmem:[%s6 + $0xa0] sm:$0xff]
  %v115 = vld [vmem:[%s6 + $0xa8] sm:$0xff]
  %v116 = vld [vmem:[%s6 + $0xb0] sm:$0xff]
  %v117 = vld [vmem:[%s6 + $0xb8] sm:$0xff]
  %v118 = vld [vmem:[%s6 + $0xc0] sm:$0xff]
  %v119 = vld [vmem:[%s6 + $0xc8] sm:$0xff]
  %v120 = vld [vmem:[%s6 + $0xd0] sm:$0xff]
  %v121 = vld [vmem:[%s6 + $0xd8] sm:$0xff]
  %v122 = vld [vmem:[%s6 + $0xe0] sm:$0xff]
  %v123 = vld [vmem:[%s6 + $0xe8] sm:$0xff]
  %v124 = vld [vmem:[%s6 + $0xf0] sm:$0xff]
  %v125 = vld [vmem:[%s6 + $0xf8] sm:$0xff]
  %v126 = vld [vmem:[%s6 + $0x100] sm:$0xff]
  %v127 = vld [vmem:[%s6 + $0x108] sm:$0xff]
  %v128 = vld [vmem:[%s6 + $0x110] sm:$0xff]
  %v129 = vld [vmem:[%s6 + $0x118] sm:$0xff]
  %v130 = vld [vmem:[%s6 + $0x120] sm:$0xff]
  %v131 = vld [vmem:[%s6 + $0x128] sm:$0xff]
  %v132 = vld [vmem:[%s6 + $0x130] sm:$0xff]
  %v133 = vld [vmem:[%s6 + $0x138] sm:$0xff]
  %v134 = vld [vmem:[%s6 + $0x140] sm:$0xff]
  %v135 = vld [vmem:[%s6 + $0x148] sm:$0xff]
  %v136 = vld [vmem:[%s6 + $0x150] sm:$0xff]
  %v137 = vld [vmem:[%s6 + $0x158] sm:$0xff]
  %v138 = vld [vmem:[%s6 + $0x160] sm:$0xff]
  %v139 = vld [vmem:[%s6 + $0x168] sm:$0xff]
  %v140 = vld [vmem:[%s6 + $0x170] sm:$0xff]
  %v141 = vld [vmem:[%s6 + $0x178] sm:$0xff]
  %v150 = vunpack.c.l.b16 %v78
  %v151 = vunpack.c.h.b16 %v78
  %v152 = vunpack.c.l.b16 %v79
  %v153 = vunpack.c.l.b16 %v80
  %v154 = vunpack.c.h.b16 %v80
  %v155 = vunpack.c.l.b16 %v81
  %v156 = vunpack.c.l.b16 %v82
  %v157 = vunpack.c.h.b16 %v82
  %v158 = vunpack.c.l.b16 %v83
  %v159 = vunpack.c.l.b16 %v84
  %v160 = vunpack.c.h.b16 %v84
  %v161 = vunpack.c.l.b16 %v85
  %v162 = vpack.c.b16 %v153, %v150
  %v163 = vpack.c.b16 %v154, %v151
  %v164 = vpack.c.b16 %v155, %v152
  %v165 = vpack.c.b16 %v159, %v156
  %v166 = vpack.c.b16 %v160, %v157
  %v167 = vpack.c.b16 %v161, %v158
  %v222 = vunpack.c.l.b16 %v94
  %v223 = vunpack.c.h.b16 %v94
  %v224 = vunpack.c.l.b16 %v95
  %v225 = vunpack.c.h.b16 %v95
  %v226 = vunpack.c.l.b16 %v96
  %v227 = vunpack.c.h.b16 %v96
  %v228 = vunpack.c.l.b16 %v97
  %v229 = vunpack.c.h.b16 %v97
  %v230 = vunpack.c.l.b16 %v98
  %v231 = vunpack.c.h.b16 %v98
  %v232 = vunpack.c.l.b16 %v99
  %v233 = vunpack.c.h.b16 %v99
  %v234 = vunpack.c.l.b16 %v100
  %v235 = vunpack.c.h.b16 %v100
  %v236 = vunpack.c.l.b16 %v101
  %v237 = vunpack.c.h.b16 %v101
  %v238 = vunpack.c.l.b16 %v102
  %v239 = vunpack.c.h.b16 %v102
  %v240 = vunpack.c.l.b16 %v103
  %v241 = vunpack.c.h.b16 %v103
  %v242 = vunpack.c.l.b16 %v104
  %v243 = vunpack.c.h.b16 %v104
  %v244 = vunpack.c.l.b16 %v105
  %v245 = vunpack.c.h.b16 %v105
  %v246 = vunpack.c.l.b16 %v106
  %v247 = vunpack.c.h.b16 %v106
  %v248 = vunpack.c.l.b16 %v107
  %v249 = vunpack.c.h.b16 %v107
  %v250 = vunpack.c.l.b16 %v108
  %v251 = vunpack.c.h.b16 %v108
  %v252 = vunpack.c.l.b16 %v109
  %v253 = vunpack.c.h.b16 %v109
  %v254 = vunpack.c.l.b16 %v110
  %v255 = vunpack.c.h.b16 %v110
  %v256 = vunpack.c.l.b16 %v111
  %v257 = vunpack.c.h.b16 %v111
  %v258 = vunpack.c.l.b16 %v112
  %v259 = vunpack.c.h.b16 %v112
  %v260 = vunpack.c.l.b16 %v113
  %v261 = vunpack.c.h.b16 %v113
  %v262 = vunpack.c.l.b16 %v114
  %v263 = vunpack.c.h.b16 %v114
  %v264 = vunpack.c.l.b16 %v115
  %v265 = vunpack.c.h.b16 %v115
  %v266 = vunpack.c.l.b16 %v116
  %v267 = vunpack.c.h.b16 %v116
  %v268 = vunpack.c.l.b16 %v117
  %v269 = vunpack.c.h.b16 %v117
  %v270 = vunpack.c.l.b16 %v118
  %v271 = vunpack.c.h.b16 %v118
  %v272 = vunpack.c.l.b16 %v119
  %v273 = vunpack.c.h.b16 %v119
  %v274 = vunpack.c.l.b16 %v120
  %v275 = vunpack.c.h.b16 %v120
  %v276 = vunpack.c.l.b16 %v121
  %v277 = vunpack.c.h.b16 %v121
  %v278 = vunpack.c.l.b16 %v122
  %v279 = vunpack.c.h.b16 %v122
  %v280 = vunpack.c.l.b16 %v123
  %v281 = vunpack.c.h.b16 %v123
  %v282 = vunpack.c.l.b16 %v124
  %v283 = vunpack.c.h.b16 %v124
  %v284 = vunpack.c.l.b16 %v125
  %v285 = vunpack.c.h.b16 %v125
  %v286 = vunpack.c.l.b16 %v126
  %v287 = vunpack.c.h.b16 %v126
  %v288 = vunpack.c.l.b16 %v127
  %v289 = vunpack.c.h.b16 %v127
  %v290 = vunpack.c.l.b16 %v128
  %v291 = vunpack.c.h.b16 %v128
  %v292 = vunpack.c.l.b16 %v129
  %v293 = vunpack.c.h.b16 %v129
  %v294 = vunpack.c.l.b16 %v130
  %v295 = vunpack.c.h.b16 %v130
  %v296 = vunpack.c.l.b16 %v131
  %v297 = vunpack.c.h.b16 %v131
  %v298 = vunpack.c.l.b16 %v132
  %v299 = vunpack.c.h.b16 %v132
  %v300 = vunpack.c.l.b16 %v133
  %v301 = vunpack.c.h.b16 %v133
  %v302 = vunpack.c.l.b16 %v134
  %v303 = vunpack.c.h.b16 %v134
  %v304 = vunpack.c.l.b16 %v135
  %v305 = vunpack.c.h.b16 %v135
  %v306 = vunpack.c.l.b16 %v136
  %v307 = vunpack.c.h.b16 %v136
  %v308 = vunpack.c.l.b16 %v137
  %v309 = vunpack.c.h.b16 %v137
  %v310 = vunpack.c.l.b16 %v138
  %v311 = vunpack.c.h.b16 %v138
  %v312 = vunpack.c.l.b16 %v139
  %v313 = vunpack.c.h.b16 %v139
  %v314 = vunpack.c.l.b16 %v140
  %v315 = vunpack.c.h.b16 %v140
  %v316 = vunpack.c.l.b16 %v141
  %v317 = vunpack.c.h.b16 %v141
  %v318 = vpack.c.b16 %v224, %v222
  %v319 = vpack.c.b16 %v225, %v223
  %v320 = vpack.c.b16 %v228, %v226
  %v321 = vpack.c.b16 %v229, %v227
  %v322 = vpack.c.b16 %v232, %v230
  %v323 = vpack.c.b16 %v233, %v231
  %v324 = vpack.c.b16 %v236, %v234
  %v325 = vpack.c.b16 %v237, %v235
  %v326 = vpack.c.b16 %v240, %v238
  %v327 = vpack.c.b16 %v241, %v239
  %v328 = vpack.c.b16 %v244, %v242
  %v329 = vpack.c.b16 %v245, %v243
  %v330 = vpack.c.b16 %v248, %v246
  %v331 = vpack.c.b16 %v249, %v247
  %v332 = vpack.c.b16 %v252, %v250
  %v333 = vpack.c.b16 %v253, %v251
  %v334 = vpack.c.b16 %v256, %v254
  %v335 = vpack.c.b16 %v257, %v255
  %v336 = vpack.c.b16 %v260, %v258
  %v337 = vpack.c.b16 %v261, %v259
  %v338 = vpack.c.b16 %v264, %v262
  %v339 = vpack.c.b16 %v265, %v263
  %v340 = vpack.c.b16 %v268, %v266
  %v341 = vpack.c.b16 %v269, %v267
  %v342 = vpack.c.b16 %v272, %v270
  %v343 = vpack.c.b16 %v273, %v271
  %v344 = vpack.c.b16 %v276, %v274
  %v345 = vpack.c.b16 %v277, %v275
  %v346 = vpack.c.b16 %v280, %v278
  %v347 = vpack.c.b16 %v281, %v279
  %v348 = vpack.c.b16 %v284, %v282
  %v349 = vpack.c.b16 %v285, %v283
  %v350 = vpack.c.b16 %v288, %v286
  %v351 = vpack.c.b16 %v289, %v287
  %v352 = vpack.c.b16 %v292, %v290
  %v353 = vpack.c.b16 %v293, %v291
  %v354 = vpack.c.b16 %v296, %v294
  %v355 = vpack.c.b16 %v297, %v295
  %v356 = vpack.c.b16 %v300, %v298
  %v357 = vpack.c.b16 %v301, %v299
  %v358 = vpack.c.b16 %v304, %v302
  %v359 = vpack.c.b16 %v305, %v303
  %v360 = vpack.c.b16 %v308, %v306
  %v361 = vpack.c.b16 %v309, %v307
  %v362 = vpack.c.b16 %v312, %v310
  %v363 = vpack.c.b16 %v313, %v311
  %v364 = vpack.c.b16 %v316, %v314
  %v365 = vpack.c.b16 %v317, %v315
  %414 = vmatprep.subr.bf16.mxu0 %v319
  %415 = vmatpush1.bf16.msra.mxu0 %v318
  %416 = vmatprep.subr.bf16.mxu0 %v321
  %417 = vmatpush1.bf16.msra.mxu0 %v320
  %418 = vmatprep.subr.bf16.mxu0 %v323
  %419 = vmatpush1.bf16.msra.mxu0 %v322
  %420 = vmatprep.subr.bf16.mxu0 %v325
  %421 = vmatpush1.bf16.msra.mxu0 %v324
  %422 = vmatprep.subr.bf16.mxu0 %v327
  %423 = vmatpush1.bf16.msra.mxu0 %v326
  %424 = vmatprep.subr.bf16.mxu0 %v329
  %425 = vmatpush1.bf16.msra.mxu0 %v328
  %426 = vmatprep.subr.bf16.mxu0 %v331
  %427 = vmatpush1.bf16.msra.mxu0 %v330
  %428 = vmatprep.subr.bf16.mxu0 %v333
  %429 = vmatpush1.bf16.msra.mxu0 %v332
  %430 = vmatprep.subr.bf16.mxu0 %v335
  %431 = vmatpush1.bf16.msra.mxu0 %v334
  %432 = vmatprep.subr.bf16.mxu0 %v337
  %433 = vmatpush1.bf16.msra.mxu0 %v336
  %434 = vmatprep.subr.bf16.mxu0 %v339
  %435 = vmatpush1.bf16.msra.mxu0 %v338
  %436 = vmatprep.subr.bf16.mxu0 %v341
  %437 = vmatpush1.bf16.msra.mxu0 %v340
  %438 = vmatprep.subr.bf16.mxu0 %v343
  %439 = vmatpush1.bf16.msra.mxu0 %v342
  %440 = vmatprep.subr.bf16.mxu0 %v345
  %441 = vmatpush1.bf16.msra.mxu0 %v344
  %442 = vmatprep.subr.bf16.mxu0 %v347
  %443 = vmatpush1.bf16.msra.mxu0 %v346
  %444 = vmatprep.subr.bf16.mxu0 %v349
  %445 = vmatpush1.bf16.msra.mxu0 %v348
  %446 = vmatprep.mubr.bf16.mxu0 %v163
  %447 = vmatmul.mubr.bf16.gmra.mrb[0].mxu0 %v162
  %v448 = vpop.f32.mrb[0].mxu0
  %v449 = vadd.f32 0.0, %v448
  %v450 = vpop.f32.mrb[0].mxu0
  %v451 = vadd.f32 0.0, %v450
  %v452 = vpop.f32.mrb[0].mxu0
  %v453 = vadd.f32 0.0, %v452
  %v454 = vpop.f32.mrb[0].mxu0
  %v455 = vadd.f32 0.0, %v454
  %456 = vmatprep.mubr.bf16.mxu0 %v166
  %457 = vmatmul.mubr.bf16.gmra.mrb[0].mxu0 %v165
  %v458 = vpop.f32.mrb[0].mxu0
  %v459 = vadd.f32 0.0, %v458
  %v460 = vpop.f32.mrb[0].mxu0
  %v461 = vadd.f32 0.0, %v460
  %v462 = vpop.f32.mrb[0].mxu0
  %v463 = vadd.f32 0.0, %v462
  %v464 = vpop.f32.mrb[0].mxu0
  %v465 = vadd.f32 0.0, %v464
  %466 = vdwg.mxu0
  %467 = vmatprep.subr.bf16.mxu0 %v351
  %468 = vmatpush1.bf16.msra.mxu0 %v350
  %469 = vmatprep.subr.bf16.mxu0 %v353
  %470 = vmatpush1.bf16.msra.mxu0 %v352
  %471 = vmatprep.subr.bf16.mxu0 %v355
  %472 = vmatpush1.bf16.msra.mxu0 %v354
  %473 = vmatprep.subr.bf16.mxu0 %v357
  %474 = vmatpush1.bf16.msra.mxu0 %v356
  %475 = vmatprep.subr.bf16.mxu0 %v359
  %476 = vmatpush1.bf16.msra.mxu0 %v358
  %477 = vmatprep.subr.bf16.mxu0 %v361
  %478 = vmatpush1.bf16.msra.mxu0 %v360
  %479 = vmatprep.subr.bf16.mxu0 %v363
  %480 = vmatpush1.bf16.msra.mxu0 %v362
  %481 = vmatprep.subr.bf16.mxu0 %v365
  %482 = vmatpush1.bf16.msra.mxu0 %v364
  %483 = vmatprep.subr.bf16.mxu0 0
  %484 = vmatpush1.bf16.msra.mxu0 0
  %485 = vmatprep.subr.bf16.mxu0 0
  %486 = vmatpush1.bf16.msra.mxu0 0
  %487 = vmatprep.subr.bf16.mxu0 0
  %488 = vmatpush1.bf16.msra.mxu0 0
  %489 = vmatprep.subr.bf16.mxu0 0
  %490 = vmatpush1.bf16.msra.mxu0 0
  %491 = vmatprep.subr.bf16.mxu0 0
  %492 = vmatpush1.bf16.msra.mxu0 0
  %493 = vmatprep.subr.bf16.mxu0 0
  %494 = vmatpush1.bf16.msra.mxu0 0
  %495 = vmatprep.subr.bf16.mxu0 0
  %496 = vmatpush1.bf16.msra.mxu0 0
  %497 = vmatprep.subr.bf16.mxu0 0
  %498 = vmatpush1.bf16.msra.mxu0 0
  %499 = vmatprep.mubr.bf16.mxu0 0
  %500 = vmatmul.mubr.bf16.gmra.mrb[0].mxu0 %v164
  %v501 = vpop.f32.mrb[0].mxu0
  %v502 = vadd.f32 %v449, %v501
  %v503 = vpop.f32.mrb[0].mxu0
  %v504 = vadd.f32 %v451, %v503
  %v505 = vpop.f32.mrb[0].mxu0
  %v506 = vadd.f32 %v453, %v505
  %v507 = vpop.f32.mrb[0].mxu0
  %v508 = vadd.f32 %v455, %v507
  %509 = vmatprep.mubr.bf16.mxu0 0
  %510 = vmatmul.mubr.bf16.gmra.mrb[0].mxu0 %v167
  %v511 = vpop.f32.mrb[0].mxu0
  %v512 = vadd.f32 %v459, %v511
  %v513 = vpop.f32.mrb[0].mxu0
  %v514 = vadd.f32 %v461, %v513
  %v515 = vpop.f32.mrb[0].mxu0
  %v516 = vadd.f32 %v463, %v515
  %v517 = vpop.f32.mrb[0].mxu0
  %v518 = vadd.f32 %v465, %v517
  %519 = vdwg.mxu0
  %v520 = vadd.f32 %v502, %v506
  %v521 = vadd.f32 %v520, %v512
  %v522 = vadd.f32 %v521, %v516
  %v523 = vrot.slane %v522, 4
  %v524 = vadd.f32 %v522, %v523
  %v525 = vrot.slane %v524, 2
  %v526 = vadd.f32 %v524, %v525
  %v527 = vrot.slane %v526, 1
  %v528 = vadd.f32 %v526, %v527
  %v529 = vadd.f32 %v504, %v508
  %v530 = vadd.f32 %v529, %v514
  %v531 = vadd.f32 %v530, %v518
  %v532 = vrot.slane %v531, 4
  %v533 = vadd.f32 %v531, %v532
  %v534 = vrot.slane %v533, 2
  %v535 = vadd.f32 %v533, %v534
  %v536 = vrot.slane %v535, 1
  %v537 = vadd.f32 %v535, %v536
  %v538 = vmul.f32 %v502, %v502
  %v539 = vmul.f32 %v504, %v504
  %v540 = vmul.f32 %v506, %v506
  %v541 = vmul.f32 %v508, %v508
  %v542 = vmul.f32 %v512, %v512
  %v543 = vmul.f32 %v514, %v514
  %v544 = vmul.f32 %v516, %v516
  %v545 = vmul.f32 %v518, %v518
  %v546 = vadd.f32 %v538, %v540
  %v547 = vadd.f32 %v546, %v542
  %v548 = vadd.f32 %v547, %v544
  %v549 = vrot.slane %v548, 4
  %v550 = vadd.f32 %v548, %v549
  %v551 = vrot.slane %v550, 2
  %v552 = vadd.f32 %v550, %v551
  %v553 = vrot.slane %v552, 1
  %v554 = vadd.f32 %v552, %v553
  %v555 = vadd.f32 %v539, %v541
  %v556 = vadd.f32 %v555, %v543
  %v557 = vadd.f32 %v556, %v545
  %v558 = vrot.slane %v557, 4
  %v559 = vadd.f32 %v557, %v558
  %v560 = vrot.slane %v559, 2
  %v561 = vadd.f32 %v559, %v560
  %v562 = vrot.slane %v561, 1
  %v563 = vadd.f32 %v561, %v562
  %v564 = vld [vmem:[%s4] sm:$0xff]
  %v565 = vld [vmem:[%s4 + $0x8] sm:$0xff]
  %v566 = vld [vmem:[%s4 + $0x10] sm:$0xff]
  %v567 = vld [vmem:[%s4 + $0x18] sm:$0xff]
  %v568 = vld [vmem:[%s4 + $0x20] sm:$0xff]
  %v569 = vld [vmem:[%s4 + $0x28] sm:$0xff]
  %v570 = vld [vmem:[%s4 + $0x30] sm:$0xff]
  %v571 = vld [vmem:[%s4 + $0x38] sm:$0xff]
  %v572 = vld [vmem:[%s4 + $0x40] sm:$0xff]
  %v573 = vld [vmem:[%s4 + $0x48] sm:$0xff]
  %v574 = vld [vmem:[%s4 + $0x50] sm:$0xff]
  %v575 = vld [vmem:[%s4 + $0x58] sm:$0xff]
  %v576 = vld [vmem:[%s4 + $0x60] sm:$0xff]
  %v577 = vld [vmem:[%s4 + $0x68] sm:$0xff]
  %v578 = vld [vmem:[%s4 + $0x70] sm:$0xff]
  %v579 = vld [vmem:[%s4 + $0x78] sm:$0xff]
  %v580 = vld [vmem:[%s4 + $0x80] sm:$0xff]
  %v581 = vld [vmem:[%s4 + $0x88] sm:$0xff]
  %v582 = vld [vmem:[%s4 + $0x90] sm:$0xff]
  %v583 = vld [vmem:[%s4 + $0x98] sm:$0xff]
  %v584 = vld [vmem:[%s4 + $0xa0] sm:$0xff]
  %v585 = vld [vmem:[%s4 + $0xa8] sm:$0xff]
  %v586 = vld [vmem:[%s4 + $0xb0] sm:$0xff]
  %v587 = vld [vmem:[%s4 + $0xb8] sm:$0xff]
  %v588 = vld [vmem:[%s4 + $0xc0] sm:$0xff]
  %v589 = vld [vmem:[%s4 + $0xc8] sm:$0xff]
  %v590 = vld [vmem:[%s4 + $0xd0] sm:$0xff]
  %v591 = vld [vmem:[%s4 + $0xd8] sm:$0xff]
  %v592 = vld [vmem:[%s4 + $0xe0] sm:$0xff]
  %v593 = vld [vmem:[%s4 + $0xe8] sm:$0xff]
  %v594 = vld [vmem:[%s4 + $0xf0] sm:$0xff]
  %v595 = vld [vmem:[%s4 + $0xf8] sm:$0xff]
  %v596 = vld [vmem:[%s4 + $0x100] sm:$0xff]
  %v597 = vld [vmem:[%s4 + $0x108] sm:$0xff]
  %v598 = vld [vmem:[%s4 + $0x110] sm:$0xff]
  %v599 = vld [vmem:[%s4 + $0x118] sm:$0xff]
  %v600 = vld [vmem:[%s4 + $0x120] sm:$0xff]
  %v601 = vld [vmem:[%s4 + $0x128] sm:$0xff]
  %v602 = vld [vmem:[%s4 + $0x130] sm:$0xff]
  %v603 = vld [vmem:[%s4 + $0x138] sm:$0xff]
  %v604 = vld [vmem:[%s4 + $0x140] sm:$0xff]
  %v605 = vld [vmem:[%s4 + $0x148] sm:$0xff]
  %v606 = vld [vmem:[%s4 + $0x150] sm:$0xff]
  %v607 = vld [vmem:[%s4 + $0x158] sm:$0xff]
  %v608 = vld [vmem:[%s4 + $0x160] sm:$0xff]
  %v609 = vld [vmem:[%s4 + $0x168] sm:$0xff]
  %v610 = vld [vmem:[%s4 + $0x170] sm:$0xff]
  %v611 = vld [vmem:[%s4 + $0x178] sm:$0xff]
  %v612 = vld [vmem:[%s4 + $0x180] sm:$0xff]
  %v613 = vld [vmem:[%s4 + $0x188] sm:$0xff]
  %v614 = vld [vmem:[%s4 + $0x190] sm:$0xff]
  %v615 = vld [vmem:[%s4 + $0x198] sm:$0xff]
  %v616 = vld [vmem:[%s4 + $0x1a0] sm:$0xff]
  %v617 = vld [vmem:[%s4 + $0x1a8] sm:$0xff]
  %v618 = vld [vmem:[%s4 + $0x1b0] sm:$0xff]
  %v619 = vld [vmem:[%s4 + $0x1b8] sm:$0xff]
  %v620 = vld [vmem:[%s4 + $0x1c0] sm:$0xff]
  %v621 = vld [vmem:[%s4 + $0x1c8] sm:$0xff]
  %v622 = vld [vmem:[%s4 + $0x1d0] sm:$0xff]
  %v623 = vld [vmem:[%s4 + $0x1d8] sm:$0xff]
  %v624 = vld [vmem:[%s4 + $0x1e0] sm:$0xff]
  %v625 = vld [vmem:[%s4 + $0x1e8] sm:$0xff]
  %v626 = vld [vmem:[%s4 + $0x1f0] sm:$0xff]
  %v627 = vld [vmem:[%s4 + $0x1f8] sm:$0xff]
  %v628 = vld [vmem:[%s4 + $0x200] sm:$0xff]
  %v629 = vld [vmem:[%s4 + $0x208] sm:$0xff]
  %v630 = vld [vmem:[%s4 + $0x210] sm:$0xff]
  %v631 = vld [vmem:[%s4 + $0x218] sm:$0xff]
  %v632 = vld [vmem:[%s4 + $0x220] sm:$0xff]
  %v633 = vld [vmem:[%s4 + $0x228] sm:$0xff]
  %v634 = vld [vmem:[%s4 + $0x230] sm:$0xff]
  %v635 = vld [vmem:[%s4 + $0x238] sm:$0xff]
  %v636 = vld [vmem:[%s4 + $0x240] sm:$0xff]
  %v637 = vld [vmem:[%s4 + $0x248] sm:$0xff]
  %v638 = vld [vmem:[%s4 + $0x250] sm:$0xff]
  %v639 = vld [vmem:[%s4 + $0x258] sm:$0xff]
  %v640 = vld [vmem:[%s4 + $0x260] sm:$0xff]
  %v641 = vld [vmem:[%s4 + $0x268] sm:$0xff]
  %v642 = vld [vmem:[%s4 + $0x270] sm:$0xff]
  %v643 = vld [vmem:[%s4 + $0x278] sm:$0xff]
  %v644 = vld [vmem:[%s4 + $0x280] sm:$0xff]
  %v645 = vld [vmem:[%s4 + $0x288] sm:$0xff]
  %v646 = vld [vmem:[%s4 + $0x290] sm:$0xff]
  %v647 = vld [vmem:[%s4 + $0x298] sm:$0xff]
  %v648 = vld [vmem:[%s4 + $0x2a0] sm:$0xff]
  %v649 = vld [vmem:[%s4 + $0x2a8] sm:$0xff]
  %v650 = vld [vmem:[%s4 + $0x2b0] sm:$0xff]
  %v651 = vld [vmem:[%s4 + $0x2b8] sm:$0xff]
  %v652 = vld [vmem:[%s4 + $0x2c0] sm:$0xff]
  %v653 = vld [vmem:[%s4 + $0x2c8] sm:$0xff]
  %v654 = vld [vmem:[%s4 + $0x2d0] sm:$0xff]
  %v655 = vld [vmem:[%s4 + $0x2d8] sm:$0xff]
  %v656 = vld [vmem:[%s4 + $0x2e0] sm:$0xff]
  %v657 = vld [vmem:[%s4 + $0x2e8] sm:$0xff]
  %v658 = vld [vmem:[%s4 + $0x2f0] sm:$0xff]
  %v659 = vld [vmem:[%s4 + $0x2f8] sm:$0xff]
  %v660 = vld [vmem:[%s4 + $0x300] sm:$0xff]
  %v661 = vld [vmem:[%s4 + $0x308] sm:$0xff]
  %v662 = vld [vmem:[%s4 + $0x310] sm:$0xff]
  %v663 = vld [vmem:[%s4 + $0x318] sm:$0xff]
  %v664 = vld [vmem:[%s4 + $0x320] sm:$0xff]
  %v665 = vld [vmem:[%s4 + $0x328] sm:$0xff]
  %v666 = vld [vmem:[%s4 + $0x330] sm:$0xff]
  %v667 = vld [vmem:[%s4 + $0x338] sm:$0xff]
  %v668 = vld [vmem:[%s4 + $0x340] sm:$0xff]
  %v669 = vld [vmem:[%s4 + $0x348] sm:$0xff]
  %v670 = vld [vmem:[%s4 + $0x350] sm:$0xff]
  %v671 = vld [vmem:[%s4 + $0x358] sm:$0xff]
  %v672 = vld [vmem:[%s4 + $0x360] sm:$0xff]
  %v673 = vld [vmem:[%s4 + $0x368] sm:$0xff]
  %v674 = vld [vmem:[%s4 + $0x370] sm:$0xff]
  %v675 = vld [vmem:[%s4 + $0x378] sm:$0xff]
  %v676 = vld [vmem:[%s4 + $0x380] sm:$0xff]
  %v677 = vld [vmem:[%s4 + $0x388] sm:$0xff]
  %v678 = vld [vmem:[%s4 + $0x390] sm:$0xff]
  %v679 = vld [vmem:[%s4 + $0x398] sm:$0xff]
  %v680 = vld [vmem:[%s4 + $0x3a0] sm:$0xff]
  %v681 = vld [vmem:[%s4 + $0x3a8] sm:$0xff]
  %v682 = vld [vmem:[%s4 + $0x3b0] sm:$0xff]
  %v683 = vld [vmem:[%s4 + $0x3b8] sm:$0xff]
  %v684 = vld [vmem:[%s4 + $0x3c0] sm:$0xff]
  %v685 = vld [vmem:[%s4 + $0x3c8] sm:$0xff]
  %v686 = vld [vmem:[%s4 + $0x3d0] sm:$0xff]
  %v687 = vld [vmem:[%s4 + $0x3d8] sm:$0xff]
  %v688 = vld [vmem:[%s4 + $0x3e0] sm:$0xff]
  %v689 = vld [vmem:[%s4 + $0x3e8] sm:$0xff]
  %v690 = vld [vmem:[%s4 + $0x3f0] sm:$0xff]
  %v691 = vld [vmem:[%s4 + $0x3f8] sm:$0xff]
  %v692 = vld [vmem:[%s4 + $0x400] sm:$0xff]
  %v693 = vld [vmem:[%s4 + $0x408] sm:$0xff]
  %v694 = vld [vmem:[%s4 + $0x410] sm:$0xff]
  %v695 = vld [vmem:[%s4 + $0x418] sm:$0xff]
  %v696 = vld [vmem:[%s4 + $0x420] sm:$0xff]
  %v697 = vld [vmem:[%s4 + $0x428] sm:$0xff]
  %v698 = vld [vmem:[%s4 + $0x430] sm:$0xff]
  %v699 = vld [vmem:[%s4 + $0x438] sm:$0xff]
  %v700 = vld [vmem:[%s4 + $0x440] sm:$0xff]
  %v701 = vld [vmem:[%s4 + $0x448] sm:$0xff]
  %v702 = vld [vmem:[%s4 + $0x450] sm:$0xff]
  %v703 = vld [vmem:[%s4 + $0x458] sm:$0xff]
  %v704 = vld [vmem:[%s4 + $0x460] sm:$0xff]
  %v705 = vld [vmem:[%s4 + $0x468] sm:$0xff]
  %v706 = vld [vmem:[%s4 + $0x470] sm:$0xff]
  %v707 = vld [vmem:[%s4 + $0x478] sm:$0xff]
  %v708 = vld [vmem:[%s4 + $0x480] sm:$0xff]
  %v709 = vld [vmem:[%s4 + $0x488] sm:$0xff]
  %v710 = vld [vmem:[%s4 + $0x490] sm:$0xff]
  %v711 = vld [vmem:[%s4 + $0x498] sm:$0xff]
  %v712 = vld [vmem:[%s4 + $0x4a0] sm:$0xff]
  %v713 = vld [vmem:[%s4 + $0x4a8] sm:$0xff]
  %v714 = vld [vmem:[%s4 + $0x4b0] sm:$0xff]
  %v715 = vld [vmem:[%s4 + $0x4b8] sm:$0xff]
  %v716 = vld [vmem:[%s4 + $0x4c0] sm:$0xff]
  %v717 = vld [vmem:[%s4 + $0x4c8] sm:$0xff]
  %v718 = vld [vmem:[%s4 + $0x4d0] sm:$0xff]
  %v719 = vld [vmem:[%s4 + $0x4d8] sm:$0xff]
  %v720 = vld [vmem:[%s4 + $0x4e0] sm:$0xff]
  %v721 = vld [vmem:[%s4 + $0x4e8] sm:$0xff]
  %v722 = vld [vmem:[%s4 + $0x4f0] sm:$0xff]
  %v723 = vld [vmem:[%s4 + $0x4f8] sm:$0xff]
  %v724 = vld [vmem:[%s4 + $0x500] sm:$0xff]
  %v725 = vld [vmem:[%s4 + $0x508] sm:$0xff]
  %v726 = vld [vmem:[%s4 + $0x510] sm:$0xff]
  %v727 = vld [vmem:[%s4 + $0x518] sm:$0xff]
  %v728 = vld [vmem:[%s4 + $0x520] sm:$0xff]
  %v729 = vld [vmem:[%s4 + $0x528] sm:$0xff]
  %v730 = vld [vmem:[%s4 + $0x530] sm:$0xff]
  %v731 = vld [vmem:[%s4 + $0x538] sm:$0xff]
  %v732 = vld [vmem:[%s4 + $0x540] sm:$0xff]
  %v733 = vld [vmem:[%s4 + $0x548] sm:$0xff]
  %v734 = vld [vmem:[%s4 + $0x550] sm:$0xff]
  %v735 = vld [vmem:[%s4 + $0x558] sm:$0xff]
  %v736 = vld [vmem:[%s4 + $0x560] sm:$0xff]
  %v737 = vld [vmem:[%s4 + $0x568] sm:$0xff]
  %v738 = vld [vmem:[%s4 + $0x570] sm:$0xff]
  %v739 = vld [vmem:[%s4 + $0x578] sm:$0xff]
  %v740 = vld [vmem:[%s4 + $0x580] sm:$0xff]
  %v741 = vld [vmem:[%s4 + $0x588] sm:$0xff]
  %v742 = vld [vmem:[%s4 + $0x590] sm:$0xff]
  %v743 = vld [vmem:[%s4 + $0x598] sm:$0xff]
  %v744 = vld [vmem:[%s4 + $0x5a0] sm:$0xff]
  %v745 = vld [vmem:[%s4 + $0x5a8] sm:$0xff]
  %v746 = vld [vmem:[%s4 + $0x5b0] sm:$0xff]
  %v747 = vld [vmem:[%s4 + $0x5b8] sm:$0xff]
  %v748 = vld [vmem:[%s4 + $0x5c0] sm:$0xff]
  %v749 = vld [vmem:[%s4 + $0x5c8] sm:$0xff]
  %v750 = vld [vmem:[%s4 + $0x5d0] sm:$0xff]
  %v751 = vld [vmem:[%s4 + $0x5d8] sm:$0xff]
  %v752 = vld [vmem:[%s4 + $0x5e0] sm:$0xff]
  %v753 = vld [vmem:[%s4 + $0x5e8] sm:$0xff]
  %v754 = vld [vmem:[%s4 + $0x5f0] sm:$0xff]
  %v755 = vld [vmem:[%s4 + $0x5f8] sm:$0xff]
  %v756 = vld [vmem:[%s4 + $0x600] sm:$0xff]
  %v757 = vld [vmem:[%s4 + $0x608] sm:$0xff]
  %v758 = vld [vmem:[%s4 + $0x610] sm:$0xff]
  %v759 = vld [vmem:[%s4 + $0x618] sm:$0xff]
  %v760 = vld [vmem:[%s4 + $0x620] sm:$0xff]
  %v761 = vld [vmem:[%s4 + $0x628] sm:$0xff]
  %v762 = vld [vmem:[%s4 + $0x630] sm:$0xff]
  %v763 = vld [vmem:[%s4 + $0x638] sm:$0xff]
  %v764 = vld [vmem:[%s4 + $0x640] sm:$0xff]
  %v765 = vld [vmem:[%s4 + $0x648] sm:$0xff]
  %v766 = vld [vmem:[%s4 + $0x650] sm:$0xff]
  %v767 = vld [vmem:[%s4 + $0x658] sm:$0xff]
  %v768 = vld [vmem:[%s4 + $0x660] sm:$0xff]
  %v769 = vld [vmem:[%s4 + $0x668] sm:$0xff]
  %v770 = vld [vmem:[%s4 + $0x670] sm:$0xff]
  %v771 = vld [vmem:[%s4 + $0x678] sm:$0xff]
  %v772 = vld [vmem:[%s4 + $0x680] sm:$0xff]
  %v773 = vld [vmem:[%s4 + $0x688] sm:$0xff]
  %v774 = vld [vmem:[%s4 + $0x690] sm:$0xff]
  %v775 = vld [vmem:[%s4 + $0x698] sm:$0xff]
  %v776 = vld [vmem:[%s4 + $0x6a0] sm:$0xff]
  %v777 = vld [vmem:[%s4 + $0x6a8] sm:$0xff]
  %v778 = vld [vmem:[%s4 + $0x6b0] sm:$0xff]
  %v779 = vld [vmem:[%s4 + $0x6b8] sm:$0xff]
  %v780 = vld [vmem:[%s4 + $0x6c0] sm:$0xff]
  %v781 = vld [vmem:[%s4 + $0x6c8] sm:$0xff]
  %v782 = vld [vmem:[%s4 + $0x6d0] sm:$0xff]
  %v783 = vld [vmem:[%s4 + $0x6d8] sm:$0xff]
  %v784 = vld [vmem:[%s4 + $0x6e0] sm:$0xff]
  %v785 = vld [vmem:[%s4 + $0x6e8] sm:$0xff]
  %v786 = vld [vmem:[%s4 + $0x6f0] sm:$0xff]
  %v787 = vld [vmem:[%s4 + $0x6f8] sm:$0xff]
  %v788 = vld [vmem:[%s4 + $0x700] sm:$0xff]
  %v789 = vld [vmem:[%s4 + $0x708] sm:$0xff]
  %v790 = vld [vmem:[%s4 + $0x710] sm:$0xff]
  %v791 = vld [vmem:[%s4 + $0x718] sm:$0xff]
  %v792 = vld [vmem:[%s4 + $0x720] sm:$0xff]
  %v793 = vld [vmem:[%s4 + $0x728] sm:$0xff]
  %v794 = vld [vmem:[%s4 + $0x730] sm:$0xff]
  %v795 = vld [vmem:[%s4 + $0x738] sm:$0xff]
  %v796 = vld [vmem:[%s4 + $0x740] sm:$0xff]
  %v797 = vld [vmem:[%s4 + $0x748] sm:$0xff]
  %v798 = vld [vmem:[%s4 + $0x750] sm:$0xff]
  %v799 = vld [vmem:[%s4 + $0x758] sm:$0xff]
  %v800 = vld [vmem:[%s4 + $0x760] sm:$0xff]
  %v801 = vld [vmem:[%s4 + $0x768] sm:$0xff]
  %v802 = vld [vmem:[%s4 + $0x770] sm:$0xff]
  %v803 = vld [vmem:[%s4 + $0x778] sm:$0xff]
  %v804 = vld [vmem:[%s4 + $0x780] sm:$0xff]
  %v805 = vld [vmem:[%s4 + $0x788] sm:$0xff]
  %v806 = vld [vmem:[%s4 + $0x790] sm:$0xff]
  %v807 = vld [vmem:[%s4 + $0x798] sm:$0xff]
  %v808 = vld [vmem:[%s4 + $0x7a0] sm:$0xff]
  %v809 = vld [vmem:[%s4 + $0x7a8] sm:$0xff]
  %v810 = vld [vmem:[%s4 + $0x7b0] sm:$0xff]
  %v811 = vld [vmem:[%s4 + $0x7b8] sm:$0xff]
  %v812 = vld [vmem:[%s4 + $0x7c0] sm:$0xff]
  %v813 = vld [vmem:[%s4 + $0x7c8] sm:$0xff]
  %v814 = vld [vmem:[%s4 + $0x7d0] sm:$0xff]
  %v815 = vld [vmem:[%s4 + $0x7d8] sm:$0xff]
  %v816 = vld [vmem:[%s4 + $0x7e0] sm:$0xff]
  %v817 = vld [vmem:[%s4 + $0x7e8] sm:$0xff]
  %v818 = vld [vmem:[%s4 + $0x7f0] sm:$0xff]
  %v819 = vld [vmem:[%s4 + $0x7f8] sm:$0xff]
  %820 = vmatprep.subr.mxu0 %v565
  %821 = vmatpush1.msra.mxu0 %v564
  %822 = vmatprep.subr.mxu0 %v569
  %823 = vmatpush1.msra.mxu0 %v568
  %824 = vmatprep.subr.mxu0 %v573
  %825 = vmatpush1.msra.mxu0 %v572
  %826 = vmatprep.subr.mxu0 %v577
  %827 = vmatpush1.msra.mxu0 %v576
  %828 = vmatprep.subr.mxu0 %v581
  %829 = vmatpush1.msra.mxu0 %v580
  %830 = vmatprep.subr.mxu0 %v585
  %831 = vmatpush1.msra.mxu0 %v584
  %832 = vmatprep.subr.mxu0 %v589
  %833 = vmatpush1.msra.mxu0 %v588
  %834 = vmatprep.subr.mxu0 %v593
  %835 = vmatpush1.msra.mxu0 %v592
  %836 = vmatprep.subr.mxu0 %v597
  %837 = vmatpush1.msra.mxu0 %v596
  %838 = vmatprep.subr.mxu0 %v601
  %839 = vmatpush1.msra.mxu0 %v600
  %840 = vmatprep.subr.mxu0 %v605
  %841 = vmatpush1.msra.mxu0 %v604
  %842 = vmatprep.subr.mxu0 %v609
  %843 = vmatpush1.msra.mxu0 %v608
  %844 = vmatprep.subr.mxu0 %v613
  %845 = vmatpush1.msra.mxu0 %v612
  %846 = vmatprep.subr.mxu0 %v617
  %847 = vmatpush1.msra.mxu0 %v616
  %848 = vmatprep.subr.mxu0 %v621
  %849 = vmatpush1.msra.mxu0 %v620
  %850 = vmatprep.subr.mxu0 %v625
  %851 = vmatpush1.msra.mxu0 %v624
  %852 = vmatprep.subr.mxu0 %v629
  %853 = vmatpush1.msra.mxu0 %v628
  %854 = vmatprep.subr.mxu0 %v633
  %855 = vmatpush1.msra.mxu0 %v632
  %856 = vmatprep.subr.mxu0 %v637
  %857 = vmatpush1.msra.mxu0 %v636
  %858 = vmatprep.subr.mxu0 %v641
  %859 = vmatpush1.msra.mxu0 %v640
  %860 = vmatprep.subr.mxu0 %v645
  %861 = vmatpush1.msra.mxu0 %v644
  %862 = vmatprep.subr.mxu0 %v649
  %863 = vmatpush1.msra.mxu0 %v648
  %864 = vmatprep.subr.mxu0 %v653
  %865 = vmatpush1.msra.mxu0 %v652
  %866 = vmatprep.subr.mxu0 %v657
  %867 = vmatpush1.msra.mxu0 %v656
  %868 = vmatprep.subr.mxu0 %v661
  %869 = vmatpush1.msra.mxu0 %v660
  %870 = vmatprep.subr.mxu0 %v665
  %871 = vmatpush1.msra.mxu0 %v664
  %872 = vmatprep.subr.mxu0 %v669
  %873 = vmatpush1.msra.mxu0 %v668
  %874 = vmatprep.subr.mxu0 %v673
  %875 = vmatpush1.msra.mxu0 %v672
  %876 = vmatprep.subr.mxu0 %v677
  %877 = vmatpush1.msra.mxu0 %v676
  %878 = vmatprep.subr.mxu0 %v681
  %879 = vmatpush1.msra.mxu0 %v680
  %880 = vmatprep.subr.mxu0 %v685
  %881 = vmatpush1.msra.mxu0 %v684
  %882 = vmatprep.subr.mxu0 %v689
  %883 = vmatpush1.msra.mxu0 %v688
  %884 = vmatprep.mubr.f32.mxu0 %v537
  %885 = vmatmul.mubr.f32.gmra.mrb[0].mxu0 %v528
  %v886 = vpop.f32.mrb[0].mxu0
  %v887 = vadd.f32 0.0, %v886
  %v888 = vpop.f32.mrb[0].mxu0
  %v889 = vadd.f32 0.0, %v888
  %890 = vdwg.mxu0
  %891 = vmatprep.subr.mxu0 %v693
  %892 = vmatpush1.msra.mxu0 %v692
  %893 = vmatprep.subr.mxu0 %v697
  %894 = vmatpush1.msra.mxu0 %v696
  %895 = vmatprep.subr.mxu0 %v701
  %896 = vmatpush1.msra.mxu0 %v700
  %897 = vmatprep.subr.mxu0 %v705
  %898 = vmatpush1.msra.mxu0 %v704
  %899 = vmatprep.subr.mxu0 %v709
  %900 = vmatpush1.msra.mxu0 %v708
  %901 = vmatprep.subr.mxu0 %v713
  %902 = vmatpush1.msra.mxu0 %v712
  %903 = vmatprep.subr.mxu0 %v717
  %904 = vmatpush1.msra.mxu0 %v716
  %905 = vmatprep.subr.mxu0 %v721
  %906 = vmatpush1.msra.mxu0 %v720
  %907 = vmatprep.subr.mxu0 %v725
  %908 = vmatpush1.msra.mxu0 %v724
  %909 = vmatprep.subr.mxu0 %v729
  %910 = vmatpush1.msra.mxu0 %v728
  %911 = vmatprep.subr.mxu0 %v733
  %912 = vmatpush1.msra.mxu0 %v732
  %913 = vmatprep.subr.mxu0 %v737
  %914 = vmatpush1.msra.mxu0 %v736
  %915 = vmatprep.subr.mxu0 %v741
  %916 = vmatpush1.msra.mxu0 %v740
  %917 = vmatprep.subr.mxu0 %v745
  %918 = vmatpush1.msra.mxu0 %v744
  %919 = vmatprep.subr.mxu0 %v749
  %920 = vmatpush1.msra.mxu0 %v748
  %921 = vmatprep.subr.mxu0 %v753
  %922 = vmatpush1.msra.mxu0 %v752
  %923 = vmatprep.subr.mxu0 %v757
  %924 = vmatpush1.msra.mxu0 %v756
  %925 = vmatprep.subr.mxu0 %v761
  %926 = vmatpush1.msra.mxu0 %v760
  %927 = vmatprep.subr.mxu0 %v765
  %928 = vmatpush1.msra.mxu0 %v764
  %929 = vmatprep.subr.mxu0 %v769
  %930 = vmatpush1.msra.mxu0 %v768
  %931 = vmatprep.subr.mxu0 %v773
  %932 = vmatpush1.msra.mxu0 %v772
  %933 = vmatprep.subr.mxu0 %v777
  %934 = vmatpush1.msra.mxu0 %v776
  %935 = vmatprep.subr.mxu0 %v781
  %936 = vmatpush1.msra.mxu0 %v780
  %937 = vmatprep.subr.mxu0 %v785
  %938 = vmatpush1.msra.mxu0 %v784
  %939 = vmatprep.subr.mxu0 %v789
  %940 = vmatpush1.msra.mxu0 %v788
  %941 = vmatprep.subr.mxu0 %v793
  %942 = vmatpush1.msra.mxu0 %v792
  %943 = vmatprep.subr.mxu0 %v797
  %944 = vmatpush1.msra.mxu0 %v796
  %945 = vmatprep.subr.mxu0 %v801
  %946 = vmatpush1.msra.mxu0 %v800
  %947 = vmatprep.subr.mxu0 %v805
  %948 = vmatpush1.msra.mxu0 %v804
  %949 = vmatprep.subr.mxu0 %v809
  %950 = vmatpush1.msra.mxu0 %v808
  %951 = vmatprep.subr.mxu0 %v813
  %952 = vmatpush1.msra.mxu0 %v812
  %953 = vmatprep.subr.mxu0 %v817
  %954 = vmatpush1.msra.mxu0 %v816
  %955 = vmatprep.mubr.f32.mxu0 %v563
  %956 = vmatmul.mubr.f32.gmra.mrb[0].mxu0 %v554
  %v957 = vpop.f32.mrb[0].mxu0
  %v958 = vadd.f32 %v887, %v957
  %v959 = vpop.f32.mrb[0].mxu0
  %v960 = vadd.f32 %v889, %v959
  %961 = vdwg.mxu0
  %962 = vmatprep.subr.mxu0 %v567
  %963 = vmatpush1.msra.mxu0 %v566
  %964 = vmatprep.subr.mxu0 %v571
  %965 = vmatpush1.msra.mxu0 %v570
  %966 = vmatprep.subr.mxu0 %v575
  %967 = vmatpush1.msra.mxu0 %v574
  %968 = vmatprep.subr.mxu0 %v579
  %969 = vmatpush1.msra.mxu0 %v578
  %970 = vmatprep.subr.mxu0 %v583
  %971 = vmatpush1.msra.mxu0 %v582
  %972 = vmatprep.subr.mxu0 %v587
  %973 = vmatpush1.msra.mxu0 %v586
  %974 = vmatprep.subr.mxu0 %v591
  %975 = vmatpush1.msra.mxu0 %v590
  %976 = vmatprep.subr.mxu0 %v595
  %977 = vmatpush1.msra.mxu0 %v594
  %978 = vmatprep.subr.mxu0 %v599
  %979 = vmatpush1.msra.mxu0 %v598
  %980 = vmatprep.subr.mxu0 %v603
  %981 = vmatpush1.msra.mxu0 %v602
  %982 = vmatprep.subr.mxu0 %v607
  %983 = vmatpush1.msra.mxu0 %v606
  %984 = vmatprep.subr.mxu0 %v611
  %985 = vmatpush1.msra.mxu0 %v610
  %986 = vmatprep.subr.mxu0 %v615
  %987 = vmatpush1.msra.mxu0 %v614
  %988 = vmatprep.subr.mxu0 %v619
  %989 = vmatpush1.msra.mxu0 %v618
  %990 = vmatprep.subr.mxu0 %v623
  %991 = vmatpush1.msra.mxu0 %v622
  %992 = vmatprep.subr.mxu0 %v627
  %993 = vmatpush1.msra.mxu0 %v626
  %994 = vmatprep.subr.mxu0 %v631
  %995 = vmatpush1.msra.mxu0 %v630
  %996 = vmatprep.subr.mxu0 %v635
  %997 = vmatpush1.msra.mxu0 %v634
  %998 = vmatprep.subr.mxu0 %v639
  %999 = vmatpush1.msra.mxu0 %v638
  %1000 = vmatprep.subr.mxu0 %v643
  %1001 = vmatpush1.msra.mxu0 %v642
  %1002 = vmatprep.subr.mxu0 %v647
  %1003 = vmatpush1.msra.mxu0 %v646
  %1004 = vmatprep.subr.mxu0 %v651
  %1005 = vmatpush1.msra.mxu0 %v650
  %1006 = vmatprep.subr.mxu0 %v655
  %1007 = vmatpush1.msra.mxu0 %v654
  %1008 = vmatprep.subr.mxu0 %v659
  %1009 = vmatpush1.msra.mxu0 %v658
  %1010 = vmatprep.subr.mxu0 %v663
  %1011 = vmatpush1.msra.mxu0 %v662
  %1012 = vmatprep.subr.mxu0 %v667
  %1013 = vmatpush1.msra.mxu0 %v666
  %1014 = vmatprep.subr.mxu0 %v671
  %1015 = vmatpush1.msra.mxu0 %v670
  %1016 = vmatprep.subr.mxu0 %v675
  %1017 = vmatpush1.msra.mxu0 %v674
  %1018 = vmatprep.subr.mxu0 %v679
  %1019 = vmatpush1.msra.mxu0 %v678
  %1020 = vmatprep.subr.mxu0 %v683
  %1021 = vmatpush1.msra.mxu0 %v682
  %1022 = vmatprep.subr.mxu0 %v687
  %1023 = vmatpush1.msra.mxu0 %v686
  %1024 = vmatprep.subr.mxu0 %v691
  %1025 = vmatpush1.msra.mxu0 %v690
  %1026 = vmatprep.mubr.f32.mxu0 %v537
  %1027 = vmatmul.mubr.f32.gmra.mrb[0].mxu0 %v528
  %v1028 = vpop.f32.mrb[0].mxu0
  %v1029 = vadd.f32 0.0, %v1028
  %v1030 = vpop.f32.mrb[0].mxu0
  %v1031 = vadd.f32 0.0, %v1030
  %1032 = vdwg.mxu0
  %1033 = vmatprep.subr.mxu0 %v695
  %1034 = vmatpush1.msra.mxu0 %v694
  %1035 = vmatprep.subr.mxu0 %v699
  %1036 = vmatpush1.msra.mxu0 %v698
  %1037 = vmatprep.subr.mxu0 %v703
  %1038 = vmatpush1.msra.mxu0 %v702
  %1039 = vmatprep.subr.mxu0 %v707
  %1040 = vmatpush1.msra.mxu0 %v706
  %1041 = vmatprep.subr.mxu0 %v711
  %1042 = vmatpush1.msra.mxu0 %v710
  %1043 = vmatprep.subr.mxu0 %v715
  %1044 = vmatpush1.msra.mxu0 %v714
  %1045 = vmatprep.subr.mxu0 %v719
  %1046 = vmatpush1.msra.mxu0 %v718
  %1047 = vmatprep.subr.mxu0 %v723
  %1048 = vmatpush1.msra.mxu0 %v722
  %1049 = vmatprep.subr.mxu0 %v727
  %1050 = vmatpush1.msra.mxu0 %v726
  %1051 = vmatprep.subr.mxu0 %v731
  %1052 = vmatpush1.msra.mxu0 %v730
  %1053 = vmatprep.subr.mxu0 %v735
  %1054 = vmatpush1.msra.mxu0 %v734
  %1055 = vmatprep.subr.mxu0 %v739
  %1056 = vmatpush1.msra.mxu0 %v738
  %1057 = vmatprep.subr.mxu0 %v743
  %1058 = vmatpush1.msra.mxu0 %v742
  %1059 = vmatprep.subr.mxu0 %v747
  %1060 = vmatpush1.msra.mxu0 %v746
  %1061 = vmatprep.subr.mxu0 %v751
  %1062 = vmatpush1.msra.mxu0 %v750
  %1063 = vmatprep.subr.mxu0 %v755
  %1064 = vmatpush1.msra.mxu0 %v754
  %1065 = vmatprep.subr.mxu0 %v759
  %1066 = vmatpush1.msra.mxu0 %v758
  %1067 = vmatprep.subr.mxu0 %v763
  %1068 = vmatpush1.msra.mxu0 %v762
  %1069 = vmatprep.subr.mxu0 %v767
  %1070 = vmatpush1.msra.mxu0 %v766
  %1071 = vmatprep.subr.mxu0 %v771
  %1072 = vmatpush1.msra.mxu0 %v770
  %1073 = vmatprep.subr.mxu0 %v775
  %1074 = vmatpush1.msra.mxu0 %v774
  %1075 = vmatprep.subr.mxu0 %v779
  %1076 = vmatpush1.msra.mxu0 %v778
  %1077 = vmatprep.subr.mxu0 %v783
  %1078 = vmatpush1.msra.mxu0 %v782
  %1079 = vmatprep.subr.mxu0 %v787
  %1080 = vmatpush1.msra.mxu0 %v786
  %1081 = vmatprep.subr.mxu0 %v791
  %1082 = vmatpush1.msra.mxu0 %v790
  %1083 = vmatprep.subr.mxu0 %v795
  %1084 = vmatpush1.msra.mxu0 %v794
  %1085 = vmatprep.subr.mxu0 %v799
  %1086 = vmatpush1.msra.mxu0 %v798
  %1087 = vmatprep.subr.mxu0 %v803
  %1088 = vmatpush1.msra.mxu0 %v802
  %1089 = vmatprep.subr.mxu0 %v807
  %1090 = vmatpush1.msra.mxu0 %v806
  %1091 = vmatprep.subr.mxu0 %v811
  %1092 = vmatpush1.msra.mxu0 %v810
  %1093 = vmatprep.subr.mxu0 %v815
  %1094 = vmatpush1.msra.mxu0 %v814
  %1095 = vmatprep.subr.mxu0 %v819
  %1096 = vmatpush1.msra.mxu0 %v818
  %1097 = vmatprep.mubr.f32.mxu0 %v563
  %1098 = vmatmul.mubr.f32.gmra.mrb[0].mxu0 %v554
  %v1099 = vpop.f32.mrb[0].mxu0
  %v1100 = vadd.f32 %v1029, %v1099
  %v1101 = vpop.f32.mrb[0].mxu0
  %v1102 = vadd.f32 %v1031, %v1101
  %1103 = vdwg.mxu0
  %v1104 = vmul.f32 %v958, %v958
  %v1105 = vmul.f32 %v960, %v960
  %v1106 = vsub.f32 %v1100, %v1104
  %v1107 = vsub.f32 %v1102, %v1105
  %v1108 = vmax.f32 %v1106, 0.0
  %v1109 = vmax.f32 %v1107, 0.0
  %v1110 = vadd.f32 %v1108, 1e-05
  %v1111 = vadd.f32 %v1109, 1e-05
  %v1112 = vrsqrt.pop %v1110
  %v1113 = vrsqrt.pop %v1111
  %v1114 = vld [vmem:[%s7] ss:$2 sm:$0x3]
  %v1116 = vlaneseq
  %v1117 = vshrl.u32 %v1116, 7
  %v1118 = vsub.s32 0, %v1117
  %v1119 = vrot.slane %v1114, %v1118
  %v1120 = vlaneseq
  %v1121 = vshrl.u32 %v1120, 7
  %v1122 = vsub.s32 1, %v1121
  %v1123 = vrot.slane %v1114, %v1122
  %v1126 = vmul.f32 %v1112, %v1119
  %v1127 = vmul.f32 %v1113, %v1123
  %s1128 = scalar_lea.vmem %s7, 1
  %v1129 = vld [vmem:[%s1128] ss:$2 sm:$0x3]
  %v1130 = vmul.f32 %v958, %v1126
  %v1131 = vmul.f32 %v960, %v1127
  %v1134 = vcombine.low %v1130, %v1131
  %v1136 = vunpack.c.l.s4 1966171168
  %v1137 = vunpack.c.0.s8 %v1136
  %v1138 = vlaneseq
  %v1139 = vshrl.u32 %v1138, 7
  %v1140 = vsub.s32 %v1137, %v1139
  %v1141 = vrot.slane %v1134, %v1140
  %v1143 = vunpack.c.l.s4 1966171168
  %v1144 = vunpack.c.0.s8 %v1143
  %v1145 = vlaneseq
  %v1146 = vshrl.u32 %v1145, 7
  %v1147 = vsub.s32 %v1144, %v1146
  %v1148 = vrot.slane %v1141, %v1147
  %v1150 = vsub.f32 %v1129, %v1148
  %v1151 = vlaneseq
  %v1152 = vshrl.u32 %v1151, 7
  %v1153 = vsub.s32 0, %v1152
  %v1154 = vrot.slane %v1126, %v1153
  %v1155 = vlaneseq
  %v1156 = vshrl.u32 %v1155, 7
  %v1157 = vsub.s32 0, %v1156
  %v1158 = vrot.slane %v1127, %v1157
  %v1159 = vmul.f32 %v502, %v1154
  %v1160 = vmul.f32 %v504, %v1158
  %v1161 = vmul.f32 %v506, %v1154
  %v1162 = vmul.f32 %v508, %v1158
  %v1163 = vmul.f32 %v512, %v1154
  %v1164 = vmul.f32 %v514, %v1158
  %v1165 = vmul.f32 %v516, %v1154
  %v1166 = vmul.f32 %v518, %v1158
  %v1168 = vlaneseq
  %v1169 = vshrl.u32 %v1168, 7
  %v1170 = vsub.s32 0, %v1169
  %v1171 = vrot.slane %v1150, %v1170
  %v1172 = vlaneseq
  %v1173 = vshrl.u32 %v1172, 7
  %v1174 = vsub.s32 1, %v1173
  %v1175 = vrot.slane %v1150, %v1174
  %v1178 = vadd.f32 %v1159, %v1171
  %v1179 = vadd.f32 %v1160, %v1175
  %v1180 = vadd.f32 %v1161, %v1171
  %v1181 = vadd.f32 %v1162, %v1175
  %v1182 = vadd.f32 %v1163, %v1171
  %v1183 = vadd.f32 %v1164, %v1175
  %v1184 = vadd.f32 %v1165, %v1171
  %v1185 = vadd.f32 %v1166, %v1175
  %v1186 = vadd.f32 %v1178, 0.0
  %v1187 = vadd.f32 %v1180, 0.0
  %v1188 = vadd.f32 %v1182, 0.0
  %v1189 = vadd.f32 %v1184, 0.0
  %v1190 = vadd.f32 %v1186, %v1179
  %v1191 = vadd.f32 %v1187, %v1181
  %v1192 = vadd.f32 %v1188, %v1183
  %v1193 = vadd.f32 %v1189, %v1185
  %v1194 = vtanh.pop %v1190
  %v1195 = vtanh.pop %v1191
  %v1196 = vtanh.pop %v1192
  %v1197 = vtanh.pop %v1193
  %v1198 = vld [vmem:[%s8] sm:$0xff]
  %v1199 = vld [vmem:[%s8 + $0x8] sm:$0xff]
  %v1200 = vld [vmem:[%s8 + $0x10] sm:$0xff]
  %v1201 = vld [vmem:[%s8 + $0x18] sm:$0xff]
  %v1202 = vld [vmem:[%s8 + $0x20] sm:$0xff]
  %v1203 = vld [vmem:[%s8 + $0x28] sm:$0xff]
  %v1204 = vld [vmem:[%s8 + $0x30] sm:$0xff]
  %v1205 = vld [vmem:[%s8 + $0x38] sm:$0xff]
  %v1206 = vld [vmem:[%s8 + $0x40] sm:$0xff]
  %v1207 = vld [vmem:[%s8 + $0x48] sm:$0xff]
  %v1208 = vld [vmem:[%s8 + $0x50] sm:$0xff]
  %v1209 = vld [vmem:[%s8 + $0x58] sm:$0xff]
  %v1210 = vld [vmem:[%s8 + $0x60] sm:$0xff]
  %v1211 = vld [vmem:[%s8 + $0x68] sm:$0xff]
  %v1212 = vld [vmem:[%s8 + $0x70] sm:$0xff]
  %v1213 = vld [vmem:[%s8 + $0x78] sm:$0xff]
  %v1214 = vld [vmem:[%s8 + $0x80] sm:$0xff]
  %v1215 = vld [vmem:[%s8 + $0x88] sm:$0xff]
  %v1216 = vld [vmem:[%s8 + $0x90] sm:$0xff]
  %v1217 = vld [vmem:[%s8 + $0x98] sm:$0xff]
  %v1218 = vld [vmem:[%s8 + $0xa0] sm:$0xff]
  %v1219 = vld [vmem:[%s8 + $0xa8] sm:$0xff]
  %v1220 = vld [vmem:[%s8 + $0xb0] sm:$0xff]
  %v1221 = vld [vmem:[%s8 + $0xb8] sm:$0xff]
  %v1222 = vld [vmem:[%s8 + $0xc0] sm:$0xff]
  %v1223 = vld [vmem:[%s8 + $0xc8] sm:$0xff]
  %v1224 = vld [vmem:[%s8 + $0xd0] sm:$0xff]
  %v1225 = vld [vmem:[%s8 + $0xd8] sm:$0xff]
  %v1226 = vld [vmem:[%s8 + $0xe0] sm:$0xff]
  %v1227 = vld [vmem:[%s8 + $0xe8] sm:$0xff]
  %v1228 = vld [vmem:[%s8 + $0xf0] sm:$0xff]
  %v1229 = vld [vmem:[%s8 + $0xf8] sm:$0xff]
  %v1230 = vld [vmem:[%s8 + $0x100] sm:$0xff]
  %v1231 = vld [vmem:[%s8 + $0x108] sm:$0xff]
  %v1232 = vld [vmem:[%s8 + $0x110] sm:$0xff]
  %v1233 = vld [vmem:[%s8 + $0x118] sm:$0xff]
  %v1234 = vld [vmem:[%s8 + $0x120] sm:$0xff]
  %v1235 = vld [vmem:[%s8 + $0x128] sm:$0xff]
  %v1236 = vld [vmem:[%s8 + $0x130] sm:$0xff]
  %v1237 = vld [vmem:[%s8 + $0x138] sm:$0xff]
  %v1238 = vld [vmem:[%s8 + $0x140] sm:$0xff]
  %v1239 = vld [vmem:[%s8 + $0x148] sm:$0xff]
  %v1240 = vld [vmem:[%s8 + $0x150] sm:$0xff]
  %v1241 = vld [vmem:[%s8 + $0x158] sm:$0xff]
  %v1242 = vld [vmem:[%s8 + $0x160] sm:$0xff]
  %v1243 = vld [vmem:[%s8 + $0x168] sm:$0xff]
  %v1244 = vld [vmem:[%s8 + $0x170] sm:$0xff]
  %v1245 = vld [vmem:[%s8 + $0x178] sm:$0xff]
  %v1294 = vunpack.c.l.b16 %v1198
  %v1295 = vunpack.c.h.b16 %v1198
  %v1296 = vunpack.c.l.b16 %v1199
  %v1297 = vunpack.c.h.b16 %v1199
  %v1298 = vunpack.c.l.b16 %v1200
  %v1299 = vunpack.c.h.b16 %v1200
  %v1300 = vunpack.c.l.b16 %v1201
  %v1301 = vunpack.c.h.b16 %v1201
  %v1302 = vunpack.c.l.b16 %v1202
  %v1303 = vunpack.c.h.b16 %v1202
  %v1304 = vunpack.c.l.b16 %v1203
  %v1305 = vunpack.c.h.b16 %v1203
  %v1306 = vunpack.c.l.b16 %v1204
  %v1307 = vunpack.c.h.b16 %v1204
  %v1308 = vunpack.c.l.b16 %v1205
  %v1309 = vunpack.c.h.b16 %v1205
  %v1310 = vunpack.c.l.b16 %v1206
  %v1311 = vunpack.c.h.b16 %v1206
  %v1312 = vunpack.c.l.b16 %v1207
  %v1313 = vunpack.c.h.b16 %v1207
  %v1314 = vunpack.c.l.b16 %v1208
  %v1315 = vunpack.c.h.b16 %v1208
  %v1316 = vunpack.c.l.b16 %v1209
  %v1317 = vunpack.c.h.b16 %v1209
  %v1318 = vunpack.c.l.b16 %v1210
  %v1319 = vunpack.c.h.b16 %v1210
  %v1320 = vunpack.c.l.b16 %v1211
  %v1321 = vunpack.c.h.b16 %v1211
  %v1322 = vunpack.c.l.b16 %v1212
  %v1323 = vunpack.c.h.b16 %v1212
  %v1324 = vunpack.c.l.b16 %v1213
  %v1325 = vunpack.c.h.b16 %v1213
  %v1326 = vunpack.c.l.b16 %v1214
  %v1327 = vunpack.c.h.b16 %v1214
  %v1328 = vunpack.c.l.b16 %v1215
  %v1329 = vunpack.c.h.b16 %v1215
  %v1330 = vunpack.c.l.b16 %v1216
  %v1331 = vunpack.c.h.b16 %v1216
  %v1332 = vunpack.c.l.b16 %v1217
  %v1333 = vunpack.c.h.b16 %v1217
  %v1334 = vunpack.c.l.b16 %v1218
  %v1335 = vunpack.c.h.b16 %v1218
  %v1336 = vunpack.c.l.b16 %v1219
  %v1337 = vunpack.c.h.b16 %v1219
  %v1338 = vunpack.c.l.b16 %v1220
  %v1339 = vunpack.c.h.b16 %v1220
  %v1340 = vunpack.c.l.b16 %v1221
  %v1341 = vunpack.c.h.b16 %v1221
  %v1342 = vunpack.c.l.b16 %v1222
  %v1343 = vunpack.c.h.b16 %v1222
  %v1344 = vunpack.c.l.b16 %v1223
  %v1345 = vunpack.c.h.b16 %v1223
  %v1346 = vunpack.c.l.b16 %v1224
  %v1347 = vunpack.c.h.b16 %v1224
  %v1348 = vunpack.c.l.b16 %v1225
  %v1349 = vunpack.c.h.b16 %v1225
  %v1350 = vunpack.c.l.b16 %v1226
  %v1351 = vunpack.c.h.b16 %v1226
  %v1352 = vunpack.c.l.b16 %v1227
  %v1353 = vunpack.c.h.b16 %v1227
  %v1354 = vunpack.c.l.b16 %v1228
  %v1355 = vunpack.c.h.b16 %v1228
  %v1356 = vunpack.c.l.b16 %v1229
  %v1357 = vunpack.c.h.b16 %v1229
  %v1358 = vunpack.c.l.b16 %v1230
  %v1359 = vunpack.c.h.b16 %v1230
  %v1360 = vunpack.c.l.b16 %v1231
  %v1361 = vunpack.c.h.b16 %v1231
  %v1362 = vunpack.c.l.b16 %v1232
  %v1363 = vunpack.c.h.b16 %v1232
  %v1364 = vunpack.c.l.b16 %v1233
  %v1365 = vunpack.c.h.b16 %v1233
  %v1366 = vunpack.c.l.b16 %v1234
  %v1367 = vunpack.c.h.b16 %v1234
  %v1368 = vunpack.c.l.b16 %v1235
  %v1369 = vunpack.c.h.b16 %v1235
  %v1370 = vunpack.c.l.b16 %v1236
  %v1371 = vunpack.c.h.b16 %v1236
  %v1372 = vunpack.c.l.b16 %v1237
  %v1373 = vunpack.c.h.b16 %v1237
  %v1374 = vunpack.c.l.b16 %v1238
  %v1375 = vunpack.c.h.b16 %v1238
  %v1376 = vunpack.c.l.b16 %v1239
  %v1377 = vunpack.c.h.b16 %v1239
  %v1378 = vunpack.c.l.b16 %v1240
  %v1379 = vunpack.c.h.b16 %v1240
  %v1380 = vunpack.c.l.b16 %v1241
  %v1381 = vunpack.c.h.b16 %v1241
  %v1382 = vunpack.c.l.b16 %v1242
  %v1383 = vunpack.c.h.b16 %v1242
  %v1384 = vunpack.c.l.b16 %v1243
  %v1385 = vunpack.c.h.b16 %v1243
  %v1386 = vunpack.c.l.b16 %v1244
  %v1387 = vunpack.c.h.b16 %v1244
  %v1388 = vunpack.c.l.b16 %v1245
  %v1389 = vunpack.c.h.b16 %v1245
  %v1390 = vpack.c.b16 %v1296, %v1294
  %v1391 = vpack.c.b16 %v1297, %v1295
  %v1392 = vpack.c.b16 %v1300, %v1298
  %v1393 = vpack.c.b16 %v1301, %v1299
  %v1394 = vpack.c.b16 %v1304, %v1302
  %v1395 = vpack.c.b16 %v1305, %v1303
  %v1396 = vpack.c.b16 %v1308, %v1306
  %v1397 = vpack.c.b16 %v1309, %v1307
  %v1398 = vpack.c.b16 %v1312, %v1310
  %v1399 = vpack.c.b16 %v1313, %v1311
  %v1400 = vpack.c.b16 %v1316, %v1314
  %v1401 = vpack.c.b16 %v1317, %v1315
  %v1402 = vpack.c.b16 %v1320, %v1318
  %v1403 = vpack.c.b16 %v1321, %v1319
  %v1404 = vpack.c.b16 %v1324, %v1322
  %v1405 = vpack.c.b16 %v1325, %v1323
  %v1406 = vpack.c.b16 %v1328, %v1326
  %v1407 = vpack.c.b16 %v1329, %v1327
  %v1408 = vpack.c.b16 %v1332, %v1330
  %v1409 = vpack.c.b16 %v1333, %v1331
  %v1410 = vpack.c.b16 %v1336, %v1334
  %v1411 = vpack.c.b16 %v1337, %v1335
  %v1412 = vpack.c.b16 %v1340, %v1338
  %v1413 = vpack.c.b16 %v1341, %v1339
  %v1414 = vpack.c.b16 %v1344, %v1342
  %v1415 = vpack.c.b16 %v1345, %v1343
  %v1416 = vpack.c.b16 %v1348, %v1346
  %v1417 = vpack.c.b16 %v1349, %v1347
  %v1418 = vpack.c.b16 %v1352, %v1350
  %v1419 = vpack.c.b16 %v1353, %v1351
  %v1420 = vpack.c.b16 %v1356, %v1354
  %v1421 = vpack.c.b16 %v1357, %v1355
  %v1422 = vpack.c.b16 %v1360, %v1358
  %v1423 = vpack.c.b16 %v1361, %v1359
  %v1424 = vpack.c.b16 %v1364, %v1362
  %v1425 = vpack.c.b16 %v1365, %v1363
  %v1426 = vpack.c.b16 %v1368, %v1366
  %v1427 = vpack.c.b16 %v1369, %v1367
  %v1428 = vpack.c.b16 %v1372, %v1370
  %v1429 = vpack.c.b16 %v1373, %v1371
  %v1430 = vpack.c.b16 %v1376, %v1374
  %v1431 = vpack.c.b16 %v1377, %v1375
  %v1432 = vpack.c.b16 %v1380, %v1378
  %v1433 = vpack.c.b16 %v1381, %v1379
  %v1434 = vpack.c.b16 %v1384, %v1382
  %v1435 = vpack.c.b16 %v1385, %v1383
  %v1436 = vpack.c.b16 %v1388, %v1386
  %v1437 = vpack.c.b16 %v1389, %v1387
  %1486 = vmatprep.subr.bf16.mxu0 %v1391
  %1487 = vmatpush1.bf16.msra.mxu0 %v1390
  %1488 = vmatprep.subr.bf16.mxu0 %v1393
  %1489 = vmatpush1.bf16.msra.mxu0 %v1392
  %1490 = vmatprep.subr.bf16.mxu0 %v1395
  %1491 = vmatpush1.bf16.msra.mxu0 %v1394
  %1492 = vmatprep.subr.bf16.mxu0 %v1397
  %1493 = vmatpush1.bf16.msra.mxu0 %v1396
  %1494 = vmatprep.subr.bf16.mxu0 %v1399
  %1495 = vmatpush1.bf16.msra.mxu0 %v1398
  %1496 = vmatprep.subr.bf16.mxu0 %v1401
  %1497 = vmatpush1.bf16.msra.mxu0 %v1400
  %1498 = vmatprep.subr.bf16.mxu0 %v1403
  %1499 = vmatpush1.bf16.msra.mxu0 %v1402
  %1500 = vmatprep.subr.bf16.mxu0 %v1405
  %1501 = vmatpush1.bf16.msra.mxu0 %v1404
  %1502 = vmatprep.subr.bf16.mxu0 %v1407
  %1503 = vmatpush1.bf16.msra.mxu0 %v1406
  %1504 = vmatprep.subr.bf16.mxu0 %v1409
  %1505 = vmatpush1.bf16.msra.mxu0 %v1408
  %1506 = vmatprep.subr.bf16.mxu0 %v1411
  %1507 = vmatpush1.bf16.msra.mxu0 %v1410
  %1508 = vmatprep.subr.bf16.mxu0 %v1413
  %1509 = vmatpush1.bf16.msra.mxu0 %v1412
  %1510 = vmatprep.subr.bf16.mxu0 %v1415
  %1511 = vmatpush1.bf16.msra.mxu0 %v1414
  %1512 = vmatprep.subr.bf16.mxu0 %v1417
  %1513 = vmatpush1.bf16.msra.mxu0 %v1416
  %1514 = vmatprep.subr.bf16.mxu0 %v1419
  %1515 = vmatpush1.bf16.msra.mxu0 %v1418
  %1516 = vmatprep.subr.bf16.mxu0 %v1421
  %1517 = vmatpush1.bf16.msra.mxu0 %v1420
  %1518 = vmatprep.mubr.bf16.mxu0 %v163
  %1519 = vmatmul.mubr.bf16.gmra.mrb[0].mxu0 %v162
  %v1520 = vpop.f32.mrb[0].mxu0
  %v1521 = vadd.f32 0.0, %v1520
  %v1522 = vpop.f32.mrb[0].mxu0
  %v1523 = vadd.f32 0.0, %v1522
  %v1524 = vpop.f32.mrb[0].mxu0
  %v1525 = vadd.f32 0.0, %v1524
  %v1526 = vpop.f32.mrb[0].mxu0
  %v1527 = vadd.f32 0.0, %v1526
  %1528 = vmatprep.mubr.bf16.mxu0 %v166
  %1529 = vmatmul.mubr.bf16.gmra.mrb[0].mxu0 %v165
  %v1530 = vpop.f32.mrb[0].mxu0
  %v1531 = vadd.f32 0.0, %v1530
  %v1532 = vpop.f32.mrb[0].mxu0
  %v1533 = vadd.f32 0.0, %v1532
  %v1534 = vpop.f32.mrb[0].mxu0
  %v1535 = vadd.f32 0.0, %v1534
  %v1536 = vpop.f32.mrb[0].mxu0
  %v1537 = vadd.f32 0.0, %v1536
  %1538 = vdwg.mxu0
  %1539 = vmatprep.subr.bf16.mxu0 %v1423
  %1540 = vmatpush1.bf16.msra.mxu0 %v1422
  %1541 = vmatprep.subr.bf16.mxu0 %v1425
  %1542 = vmatpush1.bf16.msra.mxu0 %v1424
  %1543 = vmatprep.subr.bf16.mxu0 %v1427
  %1544 = vmatpush1.bf16.msra.mxu0 %v1426
  %1545 = vmatprep.subr.bf16.mxu0 %v1429
  %1546 = vmatpush1.bf16.msra.mxu0 %v1428
  %1547 = vmatprep.subr.bf16.mxu0 %v1431
  %1548 = vmatpush1.bf16.msra.mxu0 %v1430
  %1549 = vmatprep.subr.bf16.mxu0 %v1433
  %1550 = vmatpush1.bf16.msra.mxu0 %v1432
  %1551 = vmatprep.subr.bf16.mxu0 %v1435
  %1552 = vmatpush1.bf16.msra.mxu0 %v1434
  %1553 = vmatprep.subr.bf16.mxu0 %v1437
  %1554 = vmatpush1.bf16.msra.mxu0 %v1436
  %1555 = vmatprep.subr.bf16.mxu0 0
  %1556 = vmatpush1.bf16.msra.mxu0 0
  %1557 = vmatprep.subr.bf16.mxu0 0
  %1558 = vmatpush1.bf16.msra.mxu0 0
  %1559 = vmatprep.subr.bf16.mxu0 0
  %1560 = vmatpush1.bf16.msra.mxu0 0
  %1561 = vmatprep.subr.bf16.mxu0 0
  %1562 = vmatpush1.bf16.msra.mxu0 0
  %1563 = vmatprep.subr.bf16.mxu0 0
  %1564 = vmatpush1.bf16.msra.mxu0 0
  %1565 = vmatprep.subr.bf16.mxu0 0
  %1566 = vmatpush1.bf16.msra.mxu0 0
  %1567 = vmatprep.subr.bf16.mxu0 0
  %1568 = vmatpush1.bf16.msra.mxu0 0
  %1569 = vmatprep.subr.bf16.mxu0 0
  %1570 = vmatpush1.bf16.msra.mxu0 0
  %1571 = vmatprep.mubr.bf16.mxu0 0
  %1572 = vmatmul.mubr.bf16.gmra.mrb[0].mxu0 %v164
  %v1573 = vpop.f32.mrb[0].mxu0
  %v1574 = vadd.f32 %v1521, %v1573
  %v1575 = vpop.f32.mrb[0].mxu0
  %v1576 = vadd.f32 %v1523, %v1575
  %v1577 = vpop.f32.mrb[0].mxu0
  %v1578 = vadd.f32 %v1525, %v1577
  %v1579 = vpop.f32.mrb[0].mxu0
  %v1580 = vadd.f32 %v1527, %v1579
  %1581 = vmatprep.mubr.bf16.mxu0 0
  %1582 = vmatmul.mubr.bf16.gmra.mrb[0].mxu0 %v167
  %v1583 = vpop.f32.mrb[0].mxu0
  %v1584 = vadd.f32 %v1531, %v1583
  %v1585 = vpop.f32.mrb[0].mxu0
  %v1586 = vadd.f32 %v1533, %v1585
  %v1587 = vpop.f32.mrb[0].mxu0
  %v1588 = vadd.f32 %v1535, %v1587
  %v1589 = vpop.f32.mrb[0].mxu0
  %v1590 = vadd.f32 %v1537, %v1589
  %1591 = vdwg.mxu0
  %v1592 = vadd.f32 %v1574, %v1578
  %v1593 = vadd.f32 %v1592, %v1584
  %v1594 = vadd.f32 %v1593, %v1588
  %v1595 = vrot.slane %v1594, 4
  %v1596 = vadd.f32 %v1594, %v1595
  %v1597 = vrot.slane %v1596, 2
  %v1598 = vadd.f32 %v1596, %v1597
  %v1599 = vrot.slane %v1598, 1
  %v1600 = vadd.f32 %v1598, %v1599
  %v1601 = vadd.f32 %v1576, %v1580
  %v1602 = vadd.f32 %v1601, %v1586
  %v1603 = vadd.f32 %v1602, %v1590
  %v1604 = vrot.slane %v1603, 4
  %v1605 = vadd.f32 %v1603, %v1604
  %v1606 = vrot.slane %v1605, 2
  %v1607 = vadd.f32 %v1605, %v1606
  %v1608 = vrot.slane %v1607, 1
  %v1609 = vadd.f32 %v1607, %v1608
  %v1610 = vmul.f32 %v1574, %v1574
  %v1611 = vmul.f32 %v1576, %v1576
  %v1612 = vmul.f32 %v1578, %v1578
  %v1613 = vmul.f32 %v1580, %v1580
  %v1614 = vmul.f32 %v1584, %v1584
  %v1615 = vmul.f32 %v1586, %v1586
  %v1616 = vmul.f32 %v1588, %v1588
  %v1617 = vmul.f32 %v1590, %v1590
  %v1618 = vadd.f32 %v1610, %v1612
  %v1619 = vadd.f32 %v1618, %v1614
  %v1620 = vadd.f32 %v1619, %v1616
  %v1621 = vrot.slane %v1620, 4
  %v1622 = vadd.f32 %v1620, %v1621
  %v1623 = vrot.slane %v1622, 2
  %v1624 = vadd.f32 %v1622, %v1623
  %v1625 = vrot.slane %v1624, 1
  %v1626 = vadd.f32 %v1624, %v1625
  %v1627 = vadd.f32 %v1611, %v1613
  %v1628 = vadd.f32 %v1627, %v1615
  %v1629 = vadd.f32 %v1628, %v1617
  %v1630 = vrot.slane %v1629, 4
  %v1631 = vadd.f32 %v1629, %v1630
  %v1632 = vrot.slane %v1631, 2
  %v1633 = vadd.f32 %v1631, %v1632
  %v1634 = vrot.slane %v1633, 1
  %v1635 = vadd.f32 %v1633, %v1634
  %1636 = vmatprep.subr.mxu0 %v565
  %1637 = vmatpush1.msra.mxu0 %v564
  %1638 = vmatprep.subr.mxu0 %v569
  %1639 = vmatpush1.msra.mxu0 %v568
  %1640 = vmatprep.subr.mxu0 %v573
  %1641 = vmatpush1.msra.mxu0 %v572
  %1642 = vmatprep.subr.mxu0 %v577
  %1643 = vmatpush1.msra.mxu0 %v576
  %1644 = vmatprep.subr.mxu0 %v581
  %1645 = vmatpush1.msra.mxu0 %v580
  %1646 = vmatprep.subr.mxu0 %v585
  %1647 = vmatpush1.msra.mxu0 %v584
  %1648 = vmatprep.subr.mxu0 %v589
  %1649 = vmatpush1.msra.mxu0 %v588
  %1650 = vmatprep.subr.mxu0 %v593
  %1651 = vmatpush1.msra.mxu0 %v592
  %1652 = vmatprep.subr.mxu0 %v597
  %1653 = vmatpush1.msra.mxu0 %v596
  %1654 = vmatprep.subr.mxu0 %v601
  %1655 = vmatpush1.msra.mxu0 %v600
  %1656 = vmatprep.subr.mxu0 %v605
  %1657 = vmatpush1.msra.mxu0 %v604
  %1658 = vmatprep.subr.mxu0 %v609
  %1659 = vmatpush1.msra.mxu0 %v608
  %1660 = vmatprep.subr.mxu0 %v613
  %1661 = vmatpush1.msra.mxu0 %v612
  %1662 = vmatprep.subr.mxu0 %v617
  %1663 = vmatpush1.msra.mxu0 %v616
  %1664 = vmatprep.subr.mxu0 %v621
  %1665 = vmatpush1.msra.mxu0 %v620
  %1666 = vmatprep.subr.mxu0 %v625
  %1667 = vmatpush1.msra.mxu0 %v624
  %1668 = vmatprep.subr.mxu0 %v629
  %1669 = vmatpush1.msra.mxu0 %v628
  %1670 = vmatprep.subr.mxu0 %v633
  %1671 = vmatpush1.msra.mxu0 %v632
  %1672 = vmatprep.subr.mxu0 %v637
  %1673 = vmatpush1.msra.mxu0 %v636
  %1674 = vmatprep.subr.mxu0 %v641
  %1675 = vmatpush1.msra.mxu0 %v640
  %1676 = vmatprep.subr.mxu0 %v645
  %1677 = vmatpush1.msra.mxu0 %v644
  %1678 = vmatprep.subr.mxu0 %v649
  %1679 = vmatpush1.msra.mxu0 %v648
  %1680 = vmatprep.subr.mxu0 %v653
  %1681 = vmatpush1.msra.mxu0 %v652
  %1682 = vmatprep.subr.mxu0 %v657
  %1683 = vmatpush1.msra.mxu0 %v656
  %1684 = vmatprep.subr.mxu0 %v661
  %1685 = vmatpush1.msra.mxu0 %v660
  %1686 = vmatprep.subr.mxu0 %v665
  %1687 = vmatpush1.msra.mxu0 %v664
  %1688 = vmatprep.subr.mxu0 %v669
  %1689 = vmatpush1.msra.mxu0 %v668
  %1690 = vmatprep.subr.mxu0 %v673
  %1691 = vmatpush1.msra.mxu0 %v672
  %1692 = vmatprep.subr.mxu0 %v677
  %1693 = vmatpush1.msra.mxu0 %v676
  %1694 = vmatprep.subr.mxu0 %v681
  %1695 = vmatpush1.msra.mxu0 %v680
  %1696 = vmatprep.subr.mxu0 %v685
  %1697 = vmatpush1.msra.mxu0 %v684
  %1698 = vmatprep.subr.mxu0 %v689
  %1699 = vmatpush1.msra.mxu0 %v688
  %1700 = vmatprep.mubr.f32.mxu0 %v1609
  %1701 = vmatmul.mubr.f32.gmra.mrb[0].mxu0 %v1600
  %v1702 = vpop.f32.mrb[0].mxu0
  %v1703 = vadd.f32 0.0, %v1702
  %v1704 = vpop.f32.mrb[0].mxu0
  %v1705 = vadd.f32 0.0, %v1704
  %1706 = vdwg.mxu0
  %1707 = vmatprep.subr.mxu0 %v693
  %1708 = vmatpush1.msra.mxu0 %v692
  %1709 = vmatprep.subr.mxu0 %v697
  %1710 = vmatpush1.msra.mxu0 %v696
  %1711 = vmatprep.subr.mxu0 %v701
  %1712 = vmatpush1.msra.mxu0 %v700
  %1713 = vmatprep.subr.mxu0 %v705
  %1714 = vmatpush1.msra.mxu0 %v704
  %1715 = vmatprep.subr.mxu0 %v709
  %1716 = vmatpush1.msra.mxu0 %v708
  %1717 = vmatprep.subr.mxu0 %v713
  %1718 = vmatpush1.msra.mxu0 %v712
  %1719 = vmatprep.subr.mxu0 %v717
  %1720 = vmatpush1.msra.mxu0 %v716
  %1721 = vmatprep.subr.mxu0 %v721
  %1722 = vmatpush1.msra.mxu0 %v720
  %1723 = vmatprep.subr.mxu0 %v725
  %1724 = vmatpush1.msra.mxu0 %v724
  %1725 = vmatprep.subr.mxu0 %v729
  %1726 = vmatpush1.msra.mxu0 %v728
  %1727 = vmatprep.subr.mxu0 %v733
  %1728 = vmatpush1.msra.mxu0 %v732
  %1729 = vmatprep.subr.mxu0 %v737
  %1730 = vmatpush1.msra.mxu0 %v736
  %1731 = vmatprep.subr.mxu0 %v741
  %1732 = vmatpush1.msra.mxu0 %v740
  %1733 = vmatprep.subr.mxu0 %v745
  %1734 = vmatpush1.msra.mxu0 %v744
  %1735 = vmatprep.subr.mxu0 %v749
  %1736 = vmatpush1.msra.mxu0 %v748
  %1737 = vmatprep.subr.mxu0 %v753
  %1738 = vmatpush1.msra.mxu0 %v752
  %1739 = vmatprep.subr.mxu0 %v757
  %1740 = vmatpush1.msra.mxu0 %v756
  %1741 = vmatprep.subr.mxu0 %v761
  %1742 = vmatpush1.msra.mxu0 %v760
  %1743 = vmatprep.subr.mxu0 %v765
  %1744 = vmatpush1.msra.mxu0 %v764
  %1745 = vmatprep.subr.mxu0 %v769
  %1746 = vmatpush1.msra.mxu0 %v768
  %1747 = vmatprep.subr.mxu0 %v773
  %1748 = vmatpush1.msra.mxu0 %v772
  %1749 = vmatprep.subr.mxu0 %v777
  %1750 = vmatpush1.msra.mxu0 %v776
  %1751 = vmatprep.subr.mxu0 %v781
  %1752 = vmatpush1.msra.mxu0 %v780
  %1753 = vmatprep.subr.mxu0 %v785
  %1754 = vmatpush1.msra.mxu0 %v784
  %1755 = vmatprep.subr.mxu0 %v789
  %1756 = vmatpush1.msra.mxu0 %v788
  %1757 = vmatprep.subr.mxu0 %v793
  %1758 = vmatpush1.msra.mxu0 %v792
  %1759 = vmatprep.subr.mxu0 %v797
  %1760 = vmatpush1.msra.mxu0 %v796
  %1761 = vmatprep.subr.mxu0 %v801
  %1762 = vmatpush1.msra.mxu0 %v800
  %1763 = vmatprep.subr.mxu0 %v805
  %1764 = vmatpush1.msra.mxu0 %v804
  %1765 = vmatprep.subr.mxu0 %v809
  %1766 = vmatpush1.msra.mxu0 %v808
  %1767 = vmatprep.subr.mxu0 %v813
  %1768 = vmatpush1.msra.mxu0 %v812
  %1769 = vmatprep.subr.mxu0 %v817
  %1770 = vmatpush1.msra.mxu0 %v816
  %1771 = vmatprep.mubr.f32.mxu0 %v1635
  %1772 = vmatmul.mubr.f32.gmra.mrb[0].mxu0 %v1626
  %v1773 = vpop.f32.mrb[0].mxu0
  %v1774 = vadd.f32 %v1703, %v1773
  %v1775 = vpop.f32.mrb[0].mxu0
  %v1776 = vadd.f32 %v1705, %v1775
  %1777 = vdwg.mxu0
  %1778 = vmatprep.subr.mxu0 %v567
  %1779 = vmatpush1.msra.mxu0 %v566
  %1780 = vmatprep.subr.mxu0 %v571
  %1781 = vmatpush1.msra.mxu0 %v570
  %1782 = vmatprep.subr.mxu0 %v575
  %1783 = vmatpush1.msra.mxu0 %v574
  %1784 = vmatprep.subr.mxu0 %v579
  %1785 = vmatpush1.msra.mxu0 %v578
  %1786 = vmatprep.subr.mxu0 %v583
  %1787 = vmatpush1.msra.mxu0 %v582
  %1788 = vmatprep.subr.mxu0 %v587
  %1789 = vmatpush1.msra.mxu0 %v586
  %1790 = vmatprep.subr.mxu0 %v591
  %1791 = vmatpush1.msra.mxu0 %v590
  %1792 = vmatprep.subr.mxu0 %v595
  %1793 = vmatpush1.msra.mxu0 %v594
  %1794 = vmatprep.subr.mxu0 %v599
  %1795 = vmatpush1.msra.mxu0 %v598
  %1796 = vmatprep.subr.mxu0 %v603
  %1797 = vmatpush1.msra.mxu0 %v602
  %1798 = vmatprep.subr.mxu0 %v607
  %1799 = vmatpush1.msra.mxu0 %v606
  %1800 = vmatprep.subr.mxu0 %v611
  %1801 = vmatpush1.msra.mxu0 %v610
  %1802 = vmatprep.subr.mxu0 %v615
  %1803 = vmatpush1.msra.mxu0 %v614
  %1804 = vmatprep.subr.mxu0 %v619
  %1805 = vmatpush1.msra.mxu0 %v618
  %1806 = vmatprep.subr.mxu0 %v623
  %1807 = vmatpush1.msra.mxu0 %v622
  %1808 = vmatprep.subr.mxu0 %v627
  %1809 = vmatpush1.msra.mxu0 %v626
  %1810 = vmatprep.subr.mxu0 %v631
  %1811 = vmatpush1.msra.mxu0 %v630
  %1812 = vmatprep.subr.mxu0 %v635
  %1813 = vmatpush1.msra.mxu0 %v634
  %1814 = vmatprep.subr.mxu0 %v639
  %1815 = vmatpush1.msra.mxu0 %v638
  %1816 = vmatprep.subr.mxu0 %v643
  %1817 = vmatpush1.msra.mxu0 %v642
  %1818 = vmatprep.subr.mxu0 %v647
  %1819 = vmatpush1.msra.mxu0 %v646
  %1820 = vmatprep.subr.mxu0 %v651
  %1821 = vmatpush1.msra.mxu0 %v650
  %1822 = vmatprep.subr.mxu0 %v655
  %1823 = vmatpush1.msra.mxu0 %v654
  %1824 = vmatprep.subr.mxu0 %v659
  %1825 = vmatpush1.msra.mxu0 %v658
  %1826 = vmatprep.subr.mxu0 %v663
  %1827 = vmatpush1.msra.mxu0 %v662
  %1828 = vmatprep.subr.mxu0 %v667
  %1829 = vmatpush1.msra.mxu0 %v666
  %1830 = vmatprep.subr.mxu0 %v671
  %1831 = vmatpush1.msra.mxu0 %v670
  %1832 = vmatprep.subr.mxu0 %v675
  %1833 = vmatpush1.msra.mxu0 %v674
  %1834 = vmatprep.subr.mxu0 %v679
  %1835 = vmatpush1.msra.mxu0 %v678
  %1836 = vmatprep.subr.mxu0 %v683
  %1837 = vmatpush1.msra.mxu0 %v682
  %1838 = vmatprep.subr.mxu0 %v687
  %1839 = vmatpush1.msra.mxu0 %v686
  %1840 = vmatprep.subr.mxu0 %v691
  %1841 = vmatpush1.msra.mxu0 %v690
  %1842 = vmatprep.mubr.f32.mxu0 %v1609
  %1843 = vmatmul.mubr.f32.gmra.mrb[0].mxu0 %v1600
  %v1844 = vpop.f32.mrb[0].mxu0
  %v1845 = vadd.f32 0.0, %v1844
  %v1846 = vpop.f32.mrb[0].mxu0
  %v1847 = vadd.f32 0.0, %v1846
  %1848 = vdwg.mxu0
  %1849 = vmatprep.subr.mxu0 %v695
  %1850 = vmatpush1.msra.mxu0 %v694
  %1851 = vmatprep.subr.mxu0 %v699
  %1852 = vmatpush1.msra.mxu0 %v698
  %1853 = vmatprep.subr.mxu0 %v703
  %1854 = vmatpush1.msra.mxu0 %v702
  %1855 = vmatprep.subr.mxu0 %v707
  %1856 = vmatpush1.msra.mxu0 %v706
  %1857 = vmatprep.subr.mxu0 %v711
  %1858 = vmatpush1.msra.mxu0 %v710
  %1859 = vmatprep.subr.mxu0 %v715
  %1860 = vmatpush1.msra.mxu0 %v714
  %1861 = vmatprep.subr.mxu0 %v719
  %1862 = vmatpush1.msra.mxu0 %v718
  %1863 = vmatprep.subr.mxu0 %v723
  %1864 = vmatpush1.msra.mxu0 %v722
  %1865 = vmatprep.subr.mxu0 %v727
  %1866 = vmatpush1.msra.mxu0 %v726
  %1867 = vmatprep.subr.mxu0 %v731
  %1868 = vmatpush1.msra.mxu0 %v730
  %1869 = vmatprep.subr.mxu0 %v735
  %1870 = vmatpush1.msra.mxu0 %v734
  %1871 = vmatprep.subr.mxu0 %v739
  %1872 = vmatpush1.msra.mxu0 %v738
  %1873 = vmatprep.subr.mxu0 %v743
  %1874 = vmatpush1.msra.mxu0 %v742
  %1875 = vmatprep.subr.mxu0 %v747
  %1876 = vmatpush1.msra.mxu0 %v746
  %1877 = vmatprep.subr.mxu0 %v751
  %1878 = vmatpush1.msra.mxu0 %v750
  %1879 = vmatprep.subr.mxu0 %v755
  %1880 = vmatpush1.msra.mxu0 %v754
  %1881 = vmatprep.subr.mxu0 %v759
  %1882 = vmatpush1.msra.mxu0 %v758
  %1883 = vmatprep.subr.mxu0 %v763
  %1884 = vmatpush1.msra.mxu0 %v762
  %1885 = vmatprep.subr.mxu0 %v767
  %1886 = vmatpush1.msra.mxu0 %v766
  %1887 = vmatprep.subr.mxu0 %v771
  %1888 = vmatpush1.msra.mxu0 %v770
  %1889 = vmatprep.subr.mxu0 %v775
  %1890 = vmatpush1.msra.mxu0 %v774
  %1891 = vmatprep.subr.mxu0 %v779
  %1892 = vmatpush1.msra.mxu0 %v778
  %1893 = vmatprep.subr.mxu0 %v783
  %1894 = vmatpush1.msra.mxu0 %v782
  %1895 = vmatprep.subr.mxu0 %v787
  %1896 = vmatpush1.msra.mxu0 %v786
  %1897 = vmatprep.subr.mxu0 %v791
  %1898 = vmatpush1.msra.mxu0 %v790
  %1899 = vmatprep.subr.mxu0 %v795
  %1900 = vmatpush1.msra.mxu0 %v794
  %1901 = vmatprep.subr.mxu0 %v799
  %1902 = vmatpush1.msra.mxu0 %v798
  %1903 = vmatprep.subr.mxu0 %v803
  %1904 = vmatpush1.msra.mxu0 %v802
  %1905 = vmatprep.subr.mxu0 %v807
  %1906 = vmatpush1.msra.mxu0 %v806
  %1907 = vmatprep.subr.mxu0 %v811
  %1908 = vmatpush1.msra.mxu0 %v810
  %1909 = vmatprep.subr.mxu0 %v815
  %1910 = vmatpush1.msra.mxu0 %v814
  %1911 = vmatprep.subr.mxu0 %v819
  %1912 = vmatpush1.msra.mxu0 %v818
  %1913 = vmatprep.mubr.f32.mxu0 %v1635
  %1914 = vmatmul.mubr.f32.gmra.mrb[0].mxu0 %v1626
  %v1915 = vpop.f32.mrb[0].mxu0
  %v1916 = vadd.f32 %v1845, %v1915
  %v1917 = vpop.f32.mrb[0].mxu0
  %v1918 = vadd.f32 %v1847, %v1917
  %1919 = vdwg.mxu0
  %v1920 = vmul.f32 %v1774, %v1774
  %v1921 = vmul.f32 %v1776, %v1776
  %v1922 = vsub.f32 %v1916, %v1920
  %v1923 = vsub.f32 %v1918, %v1921
  %v1924 = vmax.f32 %v1922, 0.0
  %v1925 = vmax.f32 %v1923, 0.0
  %v1926 = vadd.f32 %v1924, 1e-05
  %v1927 = vadd.f32 %v1925, 1e-05
  %v1928 = vrsqrt.pop %v1926
  %v1929 = vrsqrt.pop %v1927
  %v1930 = vld [vmem:[%s9] ss:$2 sm:$0x3]
  %v1932 = vlaneseq
  %v1933 = vshrl.u32 %v1932, 7
  %v1934 = vsub.s32 0, %v1933
  %v1935 = vrot.slane %v1930, %v1934
  %v1936 = vlaneseq
  %v1937 = vshrl.u32 %v1936, 7
  %v1938 = vsub.s32 1, %v1937
  %v1939 = vrot.slane %v1930, %v1938
  %v1942 = vmul.f32 %v1928, %v1935
  %v1943 = vmul.f32 %v1929, %v1939
  %s1944 = scalar_lea.vmem %s9, 1
  %v1945 = vld [vmem:[%s1944] ss:$2 sm:$0x3]
  %v1946 = vmul.f32 %v1774, %v1942
  %v1947 = vmul.f32 %v1776, %v1943
  %v1950 = vcombine.low %v1946, %v1947
  %v1952 = vunpack.c.l.s4 1966171168
  %v1953 = vunpack.c.0.s8 %v1952
  %v1954 = vlaneseq
  %v1955 = vshrl.u32 %v1954, 7
  %v1956 = vsub.s32 %v1953, %v1955
  %v1957 = vrot.slane %v1950, %v1956
  %v1959 = vunpack.c.l.s4 1966171168
  %v1960 = vunpack.c.0.s8 %v1959
  %v1961 = vlaneseq
  %v1962 = vshrl.u32 %v1961, 7
  %v1963 = vsub.s32 %v1960, %v1962
  %v1964 = vrot.slane %v1957, %v1963
  %v1966 = vsub.f32 %v1945, %v1964
  %v1967 = vlaneseq
  %v1968 = vshrl.u32 %v1967, 7
  %v1969 = vsub.s32 0, %v1968
  %v1970 = vrot.slane %v1942, %v1969
  %v1971 = vlaneseq
  %v1972 = vshrl.u32 %v1971, 7
  %v1973 = vsub.s32 0, %v1972
  %v1974 = vrot.slane %v1943, %v1973
  %v1975 = vmul.f32 %v1574, %v1970
  %v1976 = vmul.f32 %v1576, %v1974
  %v1977 = vmul.f32 %v1578, %v1970
  %v1978 = vmul.f32 %v1580, %v1974
  %v1979 = vmul.f32 %v1584, %v1970
  %v1980 = vmul.f32 %v1586, %v1974
  %v1981 = vmul.f32 %v1588, %v1970
  %v1982 = vmul.f32 %v1590, %v1974
  %v1984 = vlaneseq
  %v1985 = vshrl.u32 %v1984, 7
  %v1986 = vsub.s32 0, %v1985
  %v1987 = vrot.slane %v1966, %v1986
  %v1988 = vlaneseq
  %v1989 = vshrl.u32 %v1988, 7
  %v1990 = vsub.s32 1, %v1989
  %v1991 = vrot.slane %v1966, %v1990
  %v1994 = vadd.f32 %v1975, %v1987
  %v1995 = vadd.f32 %v1976, %v1991
  %v1996 = vadd.f32 %v1977, %v1987
  %v1997 = vadd.f32 %v1978, %v1991
  %v1998 = vadd.f32 %v1979, %v1987
  %v1999 = vadd.f32 %v1980, %v1991
  %v2000 = vadd.f32 %v1981, %v1987
  %v2001 = vadd.f32 %v1982, %v1991
  %v2002 = vadd.f32 %v1994, 0.0
  %v2003 = vadd.f32 %v1996, 0.0
  %v2004 = vadd.f32 %v1998, 0.0
  %v2005 = vadd.f32 %v2000, 0.0
  %v2006 = vadd.f32 %v2002, %v1995
  %v2007 = vadd.f32 %v2003, %v1997
  %v2008 = vadd.f32 %v2004, %v1999
  %v2009 = vadd.f32 %v2005, %v2001
  %vm2010 = vcmask 261120
  %v2012 = vsel %vm2010, %v86, 0
  %v2015 = vsel %vm2010, %v87, 0
  %v2018 = vsel %vm2010, %v88, 0
  %v2021 = vsel %vm2010, %v89, 0
  %2023 = vmatprep.subr.mxu0 0.0
  %2024 = vmatpush1.msra.mxu0 %v1194
  %2025 = vmatprep.subr.mxu0 0.0
  %2026 = vmatpush1.msra.mxu0 %v1195
  %2027 = vmatprep.subr.mxu0 0.0
  %2028 = vmatpush1.msra.mxu0 %v1196
  %2029 = vmatprep.subr.mxu0 0.0
  %2030 = vmatpush1.msra.mxu0 %v1197
  %2031 = vmatprep.subr.mxu0 0.0
  %2032 = vmatpush1.msra.mxu0 0.0
  %2033 = vmatprep.subr.mxu0 0.0
  %2034 = vmatpush1.msra.mxu0 0.0
  %2035 = vmatprep.subr.mxu0 0.0
  %2036 = vmatpush1.msra.mxu0 0.0
  %2037 = vmatprep.subr.mxu0 0.0
  %2038 = vmatpush1.msra.mxu0 0.0
  %2039 = vmatprep.subr.mxu0 0.0
  %2040 = vmatpush1.msra.mxu0 0.0
  %2041 = vmatprep.subr.mxu0 0.0
  %2042 = vmatpush1.msra.mxu0 0.0
  %2043 = vmatprep.subr.mxu0 0.0
  %2044 = vmatpush1.msra.mxu0 0.0
  %2045 = vmatprep.subr.mxu0 0.0
  %2046 = vmatpush1.msra.mxu0 0.0
  %2047 = vmatprep.subr.mxu0 0.0
  %2048 = vmatpush1.msra.mxu0 0.0
  %2049 = vmatprep.subr.mxu0 0.0
  %2050 = vmatpush1.msra.mxu0 0.0
  %2051 = vmatprep.subr.mxu0 0.0
  %2052 = vmatpush1.msra.mxu0 0.0
  %2053 = vmatprep.subr.mxu0 0.0
  %2054 = vmatpush1.msra.mxu0 0.0
  %2055 = vmatprep.subr.mxu0 0.0
  %2056 = vmatpush1.msra.mxu0 0.0
  %2057 = vmatprep.subr.mxu0 0.0
  %2058 = vmatpush1.msra.mxu0 0.0
  %2059 = vmatprep.subr.mxu0 0.0
  %2060 = vmatpush1.msra.mxu0 0.0
  %2061 = vmatprep.subr.mxu0 0.0
  %2062 = vmatpush1.msra.mxu0 0.0
  %2063 = vmatprep.subr.mxu0 0.0
  %2064 = vmatpush1.msra.mxu0 0.0
  %2065 = vmatprep.subr.mxu0 0.0
  %2066 = vmatpush1.msra.mxu0 0.0
  %2067 = vmatprep.subr.mxu0 0.0
  %2068 = vmatpush1.msra.mxu0 0.0
  %2069 = vmatprep.subr.mxu0 0.0
  %2070 = vmatpush1.msra.mxu0 0.0
  %2071 = vmatprep.subr.mxu0 0.0
  %2072 = vmatpush1.msra.mxu0 0.0
  %2073 = vmatprep.subr.mxu0 0.0
  %2074 = vmatpush1.msra.mxu0 0.0
  %2075 = vmatprep.subr.mxu0 0.0
  %2076 = vmatpush1.msra.mxu0 0.0
  %2077 = vmatprep.subr.mxu0 0.0
  %2078 = vmatpush1.msra.mxu0 0.0
  %2079 = vmatprep.subr.mxu0 0.0
  %2080 = vmatpush1.msra.mxu0 0.0
  %2081 = vmatprep.subr.mxu0 0.0
  %2082 = vmatpush1.msra.mxu0 0.0
  %2083 = vmatprep.subr.mxu0 0.0
  %2084 = vmatpush1.msra.mxu0 0.0
  %2085 = vmatprep.subr.mxu0 0.0
  %2086 = vmatpush1.msra.mxu0 0.0
  %2087 = vmatprep.mubr.f32.mxu0 0.0
  %2088 = vmatmul.mubr.f32.gmra.mrb[0].mxu0 %v2012
  %v2089 = vpop.f32.mrb[0].mxu0
  %v2090 = vadd.f32 0.0, %v2089
  %v2091 = vpop.f32.mrb[0].mxu0
  %2092 = vmatprep.mubr.f32.mxu0 0.0
  %2093 = vmatmul.mubr.f32.gmra.mrb[0].mxu0 %v2015
  %v2094 = vpop.f32.mrb[0].mxu0
  %v2095 = vadd.f32 0.0, %v2094
  %v2096 = vpop.f32.mrb[0].mxu0
  %2097 = vmatprep.mubr.f32.mxu0 0.0
  %2098 = vmatmul.mubr.f32.gmra.mrb[0].mxu0 %v2018
  %v2099 = vpop.f32.mrb[0].mxu0
  %v2100 = vadd.f32 0.0, %v2099
  %v2101 = vpop.f32.mrb[0].mxu0
  %2102 = vmatprep.mubr.f32.mxu0 0.0
  %2103 = vmatmul.mubr.f32.gmra.mrb[0].mxu0 %v2021
  %v2104 = vpop.f32.mrb[0].mxu0
  %v2105 = vadd.f32 0.0, %v2104
  %v2106 = vpop.f32.mrb[0].mxu0
  %2107 = vdwg.mxu0
  %v2109 = vsel %vm2010, %v90, 0
  %v2112 = vsel %vm2010, %v91, 0
  %v2115 = vsel %vm2010, %v92, 0
  %v2118 = vsel %vm2010, %v93, 0
  %2120 = vmatprep.subr.mxu0 0.0
  %2121 = vmatpush1.msra.mxu0 %v1194
  %2122 = vmatprep.subr.mxu0 0.0
  %2123 = vmatpush1.msra.mxu0 %v1195
  %2124 = vmatprep.subr.mxu0 0.0
  %2125 = vmatpush1.msra.mxu0 %v1196
  %2126 = vmatprep.subr.mxu0 0.0
  %2127 = vmatpush1.msra.mxu0 %v1197
  %2128 = vmatprep.subr.mxu0 0.0
  %2129 = vmatpush1.msra.mxu0 0.0
  %2130 = vmatprep.subr.mxu0 0.0
  %2131 = vmatpush1.msra.mxu0 0.0
  %2132 = vmatprep.subr.mxu0 0.0
  %2133 = vmatpush1.msra.mxu0 0.0
  %2134 = vmatprep.subr.mxu0 0.0
  %2135 = vmatpush1.msra.mxu0 0.0
  %2136 = vmatprep.subr.mxu0 0.0
  %2137 = vmatpush1.msra.mxu0 0.0
  %2138 = vmatprep.subr.mxu0 0.0
  %2139 = vmatpush1.msra.mxu0 0.0
  %2140 = vmatprep.subr.mxu0 0.0
  %2141 = vmatpush1.msra.mxu0 0.0
  %2142 = vmatprep.subr.mxu0 0.0
  %2143 = vmatpush1.msra.mxu0 0.0
  %2144 = vmatprep.subr.mxu0 0.0
  %2145 = vmatpush1.msra.mxu0 0.0
  %2146 = vmatprep.subr.mxu0 0.0
  %2147 = vmatpush1.msra.mxu0 0.0
  %2148 = vmatprep.subr.mxu0 0.0
  %2149 = vmatpush1.msra.mxu0 0.0
  %2150 = vmatprep.subr.mxu0 0.0
  %2151 = vmatpush1.msra.mxu0 0.0
  %2152 = vmatprep.subr.mxu0 0.0
  %2153 = vmatpush1.msra.mxu0 0.0
  %2154 = vmatprep.subr.mxu0 0.0
  %2155 = vmatpush1.msra.mxu0 0.0
  %2156 = vmatprep.subr.mxu0 0.0
  %2157 = vmatpush1.msra.mxu0 0.0
  %2158 = vmatprep.subr.mxu0 0.0
  %2159 = vmatpush1.msra.mxu0 0.0
  %2160 = vmatprep.subr.mxu0 0.0
  %2161 = vmatpush1.msra.mxu0 0.0
  %2162 = vmatprep.subr.mxu0 0.0
  %2163 = vmatpush1.msra.mxu0 0.0
  %2164 = vmatprep.subr.mxu0 0.0
  %2165 = vmatpush1.msra.mxu0 0.0
  %2166 = vmatprep.subr.mxu0 0.0
  %2167 = vmatpush1.msra.mxu0 0.0
  %2168 = vmatprep.subr.mxu0 0.0
  %2169 = vmatpush1.msra.mxu0 0.0
  %2170 = vmatprep.subr.mxu0 0.0
  %2171 = vmatpush1.msra.mxu0 0.0
  %2172 = vmatprep.subr.mxu0 0.0
  %2173 = vmatpush1.msra.mxu0 0.0
  %2174 = vmatprep.subr.mxu0 0.0
  %2175 = vmatpush1.msra.mxu0 0.0
  %2176 = vmatprep.subr.mxu0 0.0
  %2177 = vmatpush1.msra.mxu0 0.0
  %2178 = vmatprep.subr.mxu0 0.0
  %2179 = vmatpush1.msra.mxu0 0.0
  %2180 = vmatprep.subr.mxu0 0.0
  %2181 = vmatpush1.msra.mxu0 0.0
  %2182 = vmatprep.subr.mxu0 0.0
  %2183 = vmatpush1.msra.mxu0 0.0
  %2184 = vmatprep.mubr.f32.mxu0 0.0
  %2185 = vmatmul.mubr.f32.gmra.mrb[0].mxu0 %v2109
  %v2186 = vpop.f32.mrb[0].mxu0
  %v2187 = vadd.f32 0.0, %v2186
  %v2188 = vpop.f32.mrb[0].mxu0
  %2189 = vmatprep.mubr.f32.mxu0 0.0
  %2190 = vmatmul.mubr.f32.gmra.mrb[0].mxu0 %v2112
  %v2191 = vpop.f32.mrb[0].mxu0
  %v2192 = vadd.f32 0.0, %v2191
  %v2193 = vpop.f32.mrb[0].mxu0
  %2194 = vmatprep.mubr.f32.mxu0 0.0
  %2195 = vmatmul.mubr.f32.gmra.mrb[0].mxu0 %v2115
  %v2196 = vpop.f32.mrb[0].mxu0
  %v2197 = vadd.f32 0.0, %v2196
  %v2198 = vpop.f32.mrb[0].mxu0
  %2199 = vmatprep.mubr.f32.mxu0 0.0
  %2200 = vmatmul.mubr.f32.gmra.mrb[0].mxu0 %v2118
  %v2201 = vpop.f32.mrb[0].mxu0
  %v2202 = vadd.f32 0.0, %v2201
  %v2203 = vpop.f32.mrb[0].mxu0
  %2204 = vdwg.mxu0
  %v2205 = vpack.c.bf16 %v2095, %v2090
  %v2206 = vpack.c.bf16 %v1195, %v1194
  %v2207 = vpack.c.bf16 %v2192, %v2187
  %v2208 = vpack.c.bf16 %v2105, %v2100
  %v2209 = vpack.c.bf16 %v1197, %v1196
  %v2210 = vpack.c.bf16 %v2202, %v2197
  %v2211 = vld [vmem:[%s10] sm:$0xf]
  %v2212 = vld [vmem:[%s10 + $0x4] sm:$0xf]
  %v2213 = vld [vmem:[%s10 + $0x8] sm:$0xf]
  %v2214 = vld [vmem:[%s10 + $0xc] sm:$0xf]
  %v2215 = vld [vmem:[%s10 + $0x10] sm:$0xf]
  %v2216 = vld [vmem:[%s10 + $0x14] sm:$0xf]
  %v2217 = vld [vmem:[%s10 + $0x18] sm:$0xf]
  %v2218 = vld [vmem:[%s10 + $0x1c] sm:$0xf]
  %v2219 = vld [vmem:[%s10 + $0x20] sm:$0xf]
  %v2220 = vld [vmem:[%s10 + $0x24] sm:$0xf]
  %v2221 = vld [vmem:[%s10 + $0x28] sm:$0xf]
  %v2222 = vld [vmem:[%s10 + $0x2c] sm:$0xf]
  %v2223 = vld [vmem:[%s10 + $0x30] sm:$0xf]
  %v2224 = vld [vmem:[%s10 + $0x34] sm:$0xf]
  %v2225 = vld [vmem:[%s10 + $0x38] sm:$0xf]
  %v2226 = vld [vmem:[%s10 + $0x3c] sm:$0xf]
  %v2227 = vld [vmem:[%s10 + $0x40] sm:$0xf]
  %v2228 = vld [vmem:[%s10 + $0x44] sm:$0xf]
  %v2229 = vld [vmem:[%s10 + $0x48] sm:$0xf]
  %v2230 = vld [vmem:[%s10 + $0x4c] sm:$0xf]
  %v2231 = vld [vmem:[%s10 + $0x50] sm:$0xf]
  %v2232 = vld [vmem:[%s10 + $0x54] sm:$0xf]
  %v2233 = vld [vmem:[%s10 + $0x58] sm:$0xf]
  %v2234 = vld [vmem:[%s10 + $0x5c] sm:$0xf]
  %v2235 = vld [vmem:[%s10 + $0x60] sm:$0xf]
  %v2236 = vld [vmem:[%s10 + $0x64] sm:$0xf]
  %v2237 = vld [vmem:[%s10 + $0x68] sm:$0xf]
  %v2238 = vld [vmem:[%s10 + $0x6c] sm:$0xf]
  %v2239 = vld [vmem:[%s10 + $0x70] sm:$0xf]
  %v2240 = vld [vmem:[%s10 + $0x74] sm:$0xf]
  %v2241 = vld [vmem:[%s10 + $0x78] sm:$0xf]
  %v2242 = vld [vmem:[%s10 + $0x7c] sm:$0xf]
  %v2243 = vld [vmem:[%s10 + $0x80] sm:$0xf]
  %v2244 = vld [vmem:[%s10 + $0x84] sm:$0xf]
  %v2245 = vld [vmem:[%s10 + $0x88] sm:$0xf]
  %v2246 = vld [vmem:[%s10 + $0x8c] sm:$0xf]
  %v2247 = vld [vmem:[%s10 + $0x90] sm:$0xf]
  %v2248 = vld [vmem:[%s10 + $0x94] sm:$0xf]
  %v2249 = vld [vmem:[%s10 + $0x98] sm:$0xf]
  %v2250 = vld [vmem:[%s10 + $0x9c] sm:$0xf]
  %v2251 = vld [vmem:[%s10 + $0xa0] sm:$0xf]
  %v2252 = vld [vmem:[%s10 + $0xa4] sm:$0xf]
  %v2253 = vld [vmem:[%s10 + $0xa8] sm:$0xf]
  %v2254 = vld [vmem:[%s10 + $0xac] sm:$0xf]
  %v2255 = vld [vmem:[%s10 + $0xb0] sm:$0xf]
  %v2256 = vld [vmem:[%s10 + $0xb4] sm:$0xf]
  %v2257 = vld [vmem:[%s10 + $0xb8] sm:$0xf]
  %v2258 = vld [vmem:[%s10 + $0xbc] sm:$0xf]
  %v2307 = vunpack.c.l.b16 %v2211
  %v2308 = vunpack.c.l.b16 %v2212
  %v2309 = vunpack.c.l.b16 %v2213
  %v2310 = vunpack.c.l.b16 %v2214
  %v2311 = vunpack.c.l.b16 %v2215
  %v2312 = vunpack.c.l.b16 %v2216
  %v2313 = vunpack.c.l.b16 %v2217
  %v2314 = vunpack.c.l.b16 %v2218
  %v2315 = vunpack.c.l.b16 %v2219
  %v2316 = vunpack.c.l.b16 %v2220
  %v2317 = vunpack.c.l.b16 %v2221
  %v2318 = vunpack.c.l.b16 %v2222
  %v2319 = vunpack.c.l.b16 %v2223
  %v2320 = vunpack.c.l.b16 %v2224
  %v2321 = vunpack.c.l.b16 %v2225
  %v2322 = vunpack.c.l.b16 %v2226
  %v2323 = vunpack.c.l.b16 %v2227
  %v2324 = vunpack.c.l.b16 %v2228
  %v2325 = vunpack.c.l.b16 %v2229
  %v2326 = vunpack.c.l.b16 %v2230
  %v2327 = vunpack.c.l.b16 %v2231
  %v2328 = vunpack.c.l.b16 %v2232
  %v2329 = vunpack.c.l.b16 %v2233
  %v2330 = vunpack.c.l.b16 %v2234
  %v2331 = vunpack.c.l.b16 %v2235
  %v2332 = vunpack.c.l.b16 %v2236
  %v2333 = vunpack.c.l.b16 %v2237
  %v2334 = vunpack.c.l.b16 %v2238
  %v2335 = vunpack.c.l.b16 %v2239
  %v2336 = vunpack.c.l.b16 %v2240
  %v2337 = vunpack.c.l.b16 %v2241
  %v2338 = vunpack.c.l.b16 %v2242
  %v2339 = vunpack.c.l.b16 %v2243
  %v2340 = vunpack.c.l.b16 %v2244
  %v2341 = vunpack.c.l.b16 %v2245
  %v2342 = vunpack.c.l.b16 %v2246
  %v2343 = vunpack.c.l.b16 %v2247
  %v2344 = vunpack.c.l.b16 %v2248
  %v2345 = vunpack.c.l.b16 %v2249
  %v2346 = vunpack.c.l.b16 %v2250
  %v2347 = vunpack.c.l.b16 %v2251
  %v2348 = vunpack.c.l.b16 %v2252
  %v2349 = vunpack.c.l.b16 %v2253
  %v2350 = vunpack.c.l.b16 %v2254
  %v2351 = vunpack.c.l.b16 %v2255
  %v2352 = vunpack.c.l.b16 %v2256
  %v2353 = vunpack.c.l.b16 %v2257
  %v2354 = vunpack.c.l.b16 %v2258
  %v2355 = vpack.c.b16 %v2308, %v2307
  %v2356 = vpack.c.b16 %v2310, %v2309
  %v2357 = vpack.c.b16 %v2312, %v2311
  %v2358 = vpack.c.b16 %v2314, %v2313
  %v2359 = vpack.c.b16 %v2316, %v2315
  %v2360 = vpack.c.b16 %v2318, %v2317
  %v2361 = vpack.c.b16 %v2320, %v2319
  %v2362 = vpack.c.b16 %v2322, %v2321
  %v2363 = vpack.c.b16 %v2324, %v2323
  %v2364 = vpack.c.b16 %v2326, %v2325
  %v2365 = vpack.c.b16 %v2328, %v2327
  %v2366 = vpack.c.b16 %v2330, %v2329
  %v2367 = vpack.c.b16 %v2332, %v2331
  %v2368 = vpack.c.b16 %v2334, %v2333
  %v2369 = vpack.c.b16 %v2336, %v2335
  %v2370 = vpack.c.b16 %v2338, %v2337
  %v2371 = vpack.c.b16 %v2340, %v2339
  %v2372 = vpack.c.b16 %v2342, %v2341
  %v2373 = vpack.c.b16 %v2344, %v2343
  %v2374 = vpack.c.b16 %v2346, %v2345
  %v2375 = vpack.c.b16 %v2348, %v2347
  %v2376 = vpack.c.b16 %v2350, %v2349
  %v2377 = vpack.c.b16 %v2352, %v2351
  %v2378 = vpack.c.b16 %v2354, %v2353
  %2403 = vmatprep.subr.bf16.mxu0 0
  %2404 = vmatpush1.bf16.msra.mxu0 %v2355
  %2405 = vmatprep.subr.bf16.mxu0 0
  %2406 = vmatpush1.bf16.msra.mxu0 %v2356
  %2407 = vmatprep.subr.bf16.mxu0 0
  %2408 = vmatpush1.bf16.msra.mxu0 %v2357
  %2409 = vmatprep.subr.bf16.mxu0 0
  %2410 = vmatpush1.bf16.msra.mxu0 %v2358
  %2411 = vmatprep.subr.bf16.mxu0 0
  %2412 = vmatpush1.bf16.msra.mxu0 %v2359
  %2413 = vmatprep.subr.bf16.mxu0 0
  %2414 = vmatpush1.bf16.msra.mxu0 %v2360
  %2415 = vmatprep.subr.bf16.mxu0 0
  %2416 = vmatpush1.bf16.msra.mxu0 %v2361
  %2417 = vmatprep.subr.bf16.mxu0 0
  %2418 = vmatpush1.bf16.msra.mxu0 %v2362
  %2419 = vmatprep.subr.bf16.mxu0 0
  %2420 = vmatpush1.bf16.msra.mxu0 %v2363
  %2421 = vmatprep.subr.bf16.mxu0 0
  %2422 = vmatpush1.bf16.msra.mxu0 %v2364
  %2423 = vmatprep.subr.bf16.mxu0 0
  %2424 = vmatpush1.bf16.msra.mxu0 %v2365
  %2425 = vmatprep.subr.bf16.mxu0 0
  %2426 = vmatpush1.bf16.msra.mxu0 %v2366
  %2427 = vmatprep.subr.bf16.mxu0 0
  %2428 = vmatpush1.bf16.msra.mxu0 %v2367
  %2429 = vmatprep.subr.bf16.mxu0 0
  %2430 = vmatpush1.bf16.msra.mxu0 %v2368
  %2431 = vmatprep.subr.bf16.mxu0 0
  %2432 = vmatpush1.bf16.msra.mxu0 %v2369
  %2433 = vmatprep.subr.bf16.mxu0 0
  %2434 = vmatpush1.bf16.msra.mxu0 %v2370
  %2435 = vmatprep.mubr.bf16.mxu0 %v2206
  %2436 = vmatmul.mubr.bf16.gmra.mrb[0].mxu0 %v2205
  %v2437 = vpop.f32.mrb[0].mxu0
  %v2438 = vadd.f32 0.0, %v2437
  %v2439 = vpop.f32.mrb[0].mxu0
  %v2440 = vpop.f32.mrb[0].mxu0
  %v2441 = vadd.f32 0.0, %v2440
  %v2442 = vpop.f32.mrb[0].mxu0
  %2443 = vmatprep.mubr.bf16.mxu0 %v2209
  %2444 = vmatmul.mubr.bf16.gmra.mrb[0].mxu0 %v2208
  %v2445 = vpop.f32.mrb[0].mxu0
  %v2446 = vadd.f32 0.0, %v2445
  %v2447 = vpop.f32.mrb[0].mxu0
  %v2448 = vpop.f32.mrb[0].mxu0
  %v2449 = vadd.f32 0.0, %v2448
  %v2450 = vpop.f32.mrb[0].mxu0
  %2451 = vdwg.mxu0
  %2452 = vmatprep.subr.bf16.mxu0 0
  %2453 = vmatpush1.bf16.msra.mxu0 %v2371
  %2454 = vmatprep.subr.bf16.mxu0 0
  %2455 = vmatpush1.bf16.msra.mxu0 %v2372
  %2456 = vmatprep.subr.bf16.mxu0 0
  %2457 = vmatpush1.bf16.msra.mxu0 %v2373
  %2458 = vmatprep.subr.bf16.mxu0 0
  %2459 = vmatpush1.bf16.msra.mxu0 %v2374
  %2460 = vmatprep.subr.bf16.mxu0 0
  %2461 = vmatpush1.bf16.msra.mxu0 %v2375
  %2462 = vmatprep.subr.bf16.mxu0 0
  %2463 = vmatpush1.bf16.msra.mxu0 %v2376
  %2464 = vmatprep.subr.bf16.mxu0 0
  %2465 = vmatpush1.bf16.msra.mxu0 %v2377
  %2466 = vmatprep.subr.bf16.mxu0 0
  %2467 = vmatpush1.bf16.msra.mxu0 %v2378
  %2468 = vmatprep.subr.bf16.mxu0 0
  %2469 = vmatpush1.bf16.msra.mxu0 0
  %2470 = vmatprep.subr.bf16.mxu0 0
  %2471 = vmatpush1.bf16.msra.mxu0 0
  %2472 = vmatprep.subr.bf16.mxu0 0
  %2473 = vmatpush1.bf16.msra.mxu0 0
  %2474 = vmatprep.subr.bf16.mxu0 0
  %2475 = vmatpush1.bf16.msra.mxu0 0
  %2476 = vmatprep.subr.bf16.mxu0 0
  %2477 = vmatpush1.bf16.msra.mxu0 0
  %2478 = vmatprep.subr.bf16.mxu0 0
  %2479 = vmatpush1.bf16.msra.mxu0 0
  %2480 = vmatprep.subr.bf16.mxu0 0
  %2481 = vmatpush1.bf16.msra.mxu0 0
  %2482 = vmatprep.subr.bf16.mxu0 0
  %2483 = vmatpush1.bf16.msra.mxu0 0
  %2484 = vmatprep.mubr.bf16.mxu0 0
  %2485 = vmatmul.mubr.bf16.gmra.mrb[0].mxu0 %v2207
  %v2486 = vpop.f32.mrb[0].mxu0
  %v2487 = vadd.f32 %v2438, %v2486
  %v2488 = vpop.f32.mrb[0].mxu0
  %v2489 = vpop.f32.mrb[0].mxu0
  %v2490 = vadd.f32 %v2441, %v2489
  %v2491 = vpop.f32.mrb[0].mxu0
  %2492 = vmatprep.mubr.bf16.mxu0 0
  %2493 = vmatmul.mubr.bf16.gmra.mrb[0].mxu0 %v2210
  %v2494 = vpop.f32.mrb[0].mxu0
  %v2495 = vadd.f32 %v2446, %v2494
  %v2496 = vpop.f32.mrb[0].mxu0
  %v2497 = vpop.f32.mrb[0].mxu0
  %v2498 = vadd.f32 %v2449, %v2497
  %v2499 = vpop.f32.mrb[0].mxu0
  %2500 = vdwg.mxu0
  %v2501 = vadd.f32 %v2487, %v2490
  %v2502 = vadd.f32 %v2501, %v2495
  %v2503 = vadd.f32 %v2502, %v2498
  %v2504 = vrot.slane %v2503, 4
  %v2505 = vadd.f32 %v2503, %v2504
  %v2506 = vrot.slane %v2505, 2
  %v2507 = vadd.f32 %v2505, %v2506
  %v2508 = vrot.slane %v2507, 1
  %v2509 = vadd.f32 %v2507, %v2508
  %v2510 = vmul.f32 %v2487, %v2487
  %v2511 = vmul.f32 %v2490, %v2490
  %v2512 = vmul.f32 %v2495, %v2495
  %v2513 = vmul.f32 %v2498, %v2498
  %v2514 = vadd.f32 %v2510, %v2511
  %v2515 = vadd.f32 %v2514, %v2512
  %v2516 = vadd.f32 %v2515, %v2513
  %v2517 = vrot.slane %v2516, 4
  %v2518 = vadd.f32 %v2516, %v2517
  %v2519 = vrot.slane %v2518, 2
  %v2520 = vadd.f32 %v2518, %v2519
  %v2521 = vrot.slane %v2520, 1
  %v2522 = vadd.f32 %v2520, %v2521
  %v2523 = vld [vmem:[%s5] sm:$0xff]
  %v2524 = vld [vmem:[%s5 + $0x8] sm:$0xff]
  %v2525 = vld [vmem:[%s5 + $0x10] sm:$0xff]
  %v2526 = vld [vmem:[%s5 + $0x18] sm:$0xff]
  %v2527 = vld [vmem:[%s5 + $0x20] sm:$0xff]
  %v2528 = vld [vmem:[%s5 + $0x28] sm:$0xff]
  %v2529 = vld [vmem:[%s5 + $0x30] sm:$0xff]
  %v2530 = vld [vmem:[%s5 + $0x38] sm:$0xff]
  %v2531 = vld [vmem:[%s5 + $0x40] sm:$0xff]
  %v2532 = vld [vmem:[%s5 + $0x48] sm:$0xff]
  %v2533 = vld [vmem:[%s5 + $0x50] sm:$0xff]
  %v2534 = vld [vmem:[%s5 + $0x58] sm:$0xff]
  %v2535 = vld [vmem:[%s5 + $0x60] sm:$0xff]
  %v2536 = vld [vmem:[%s5 + $0x68] sm:$0xff]
  %v2537 = vld [vmem:[%s5 + $0x70] sm:$0xff]
  %v2538 = vld [vmem:[%s5 + $0x78] sm:$0xff]
  %v2539 = vld [vmem:[%s5 + $0x80] sm:$0xff]
  %v2540 = vld [vmem:[%s5 + $0x88] sm:$0xff]
  %v2541 = vld [vmem:[%s5 + $0x90] sm:$0xff]
  %v2542 = vld [vmem:[%s5 + $0x98] sm:$0xff]
  %v2543 = vld [vmem:[%s5 + $0xa0] sm:$0xff]
  %v2544 = vld [vmem:[%s5 + $0xa8] sm:$0xff]
  %v2545 = vld [vmem:[%s5 + $0xb0] sm:$0xff]
  %v2546 = vld [vmem:[%s5 + $0xb8] sm:$0xff]
  %v2547 = vld [vmem:[%s5 + $0xc0] sm:$0xff]
  %v2548 = vld [vmem:[%s5 + $0xc8] sm:$0xff]
  %v2549 = vld [vmem:[%s5 + $0xd0] sm:$0xff]
  %v2550 = vld [vmem:[%s5 + $0xd8] sm:$0xff]
  %v2551 = vld [vmem:[%s5 + $0xe0] sm:$0xff]
  %v2552 = vld [vmem:[%s5 + $0xe8] sm:$0xff]
  %v2553 = vld [vmem:[%s5 + $0xf0] sm:$0xff]
  %v2554 = vld [vmem:[%s5 + $0xf8] sm:$0xff]
  %v2555 = vld [vmem:[%s5 + $0x100] sm:$0xff]
  %v2556 = vld [vmem:[%s5 + $0x108] sm:$0xff]
  %v2557 = vld [vmem:[%s5 + $0x110] sm:$0xff]
  %v2558 = vld [vmem:[%s5 + $0x118] sm:$0xff]
  %v2559 = vld [vmem:[%s5 + $0x120] sm:$0xff]
  %v2560 = vld [vmem:[%s5 + $0x128] sm:$0xff]
  %v2561 = vld [vmem:[%s5 + $0x130] sm:$0xff]
  %v2562 = vld [vmem:[%s5 + $0x138] sm:$0xff]
  %v2563 = vld [vmem:[%s5 + $0x140] sm:$0xff]
  %v2564 = vld [vmem:[%s5 + $0x148] sm:$0xff]
  %v2565 = vld [vmem:[%s5 + $0x150] sm:$0xff]
  %v2566 = vld [vmem:[%s5 + $0x158] sm:$0xff]
  %v2567 = vld [vmem:[%s5 + $0x160] sm:$0xff]
  %v2568 = vld [vmem:[%s5 + $0x168] sm:$0xff]
  %v2569 = vld [vmem:[%s5 + $0x170] sm:$0xff]
  %v2570 = vld [vmem:[%s5 + $0x178] sm:$0xff]
  %v2571 = vld [vmem:[%s5 + $0x180] sm:$0xff]
  %v2572 = vld [vmem:[%s5 + $0x188] sm:$0xff]
  %v2573 = vld [vmem:[%s5 + $0x190] sm:$0xff]
  %v2574 = vld [vmem:[%s5 + $0x198] sm:$0xff]
  %v2575 = vld [vmem:[%s5 + $0x1a0] sm:$0xff]
  %v2576 = vld [vmem:[%s5 + $0x1a8] sm:$0xff]
  %v2577 = vld [vmem:[%s5 + $0x1b0] sm:$0xff]
  %v2578 = vld [vmem:[%s5 + $0x1b8] sm:$0xff]
  %v2579 = vld [vmem:[%s5 + $0x1c0] sm:$0xff]
  %v2580 = vld [vmem:[%s5 + $0x1c8] sm:$0xff]
  %v2581 = vld [vmem:[%s5 + $0x1d0] sm:$0xff]
  %v2582 = vld [vmem:[%s5 + $0x1d8] sm:$0xff]
  %v2583 = vld [vmem:[%s5 + $0x1e0] sm:$0xff]
  %v2584 = vld [vmem:[%s5 + $0x1e8] sm:$0xff]
  %v2585 = vld [vmem:[%s5 + $0x1f0] sm:$0xff]
  %v2586 = vld [vmem:[%s5 + $0x1f8] sm:$0xff]
  %2587 = vmatprep.subr.mxu0 %v2524
  %2588 = vmatpush1.msra.mxu0 %v2523
  %2589 = vmatprep.subr.mxu0 %v2526
  %2590 = vmatpush1.msra.mxu0 %v2525
  %2591 = vmatprep.subr.mxu0 %v2528
  %2592 = vmatpush1.msra.mxu0 %v2527
  %2593 = vmatprep.subr.mxu0 %v2530
  %2594 = vmatpush1.msra.mxu0 %v2529
  %2595 = vmatprep.subr.mxu0 %v2532
  %2596 = vmatpush1.msra.mxu0 %v2531
  %2597 = vmatprep.subr.mxu0 %v2534
  %2598 = vmatpush1.msra.mxu0 %v2533
  %2599 = vmatprep.subr.mxu0 %v2536
  %2600 = vmatpush1.msra.mxu0 %v2535
  %2601 = vmatprep.subr.mxu0 %v2538
  %2602 = vmatpush1.msra.mxu0 %v2537
  %2603 = vmatprep.subr.mxu0 %v2540
  %2604 = vmatpush1.msra.mxu0 %v2539
  %2605 = vmatprep.subr.mxu0 %v2542
  %2606 = vmatpush1.msra.mxu0 %v2541
  %2607 = vmatprep.subr.mxu0 %v2544
  %2608 = vmatpush1.msra.mxu0 %v2543
  %2609 = vmatprep.subr.mxu0 %v2546
  %2610 = vmatpush1.msra.mxu0 %v2545
  %2611 = vmatprep.subr.mxu0 %v2548
  %2612 = vmatpush1.msra.mxu0 %v2547
  %2613 = vmatprep.subr.mxu0 %v2550
  %2614 = vmatpush1.msra.mxu0 %v2549
  %2615 = vmatprep.subr.mxu0 %v2552
  %2616 = vmatpush1.msra.mxu0 %v2551
  %2617 = vmatprep.subr.mxu0 %v2554
  %2618 = vmatpush1.msra.mxu0 %v2553
  %2619 = vmatprep.subr.mxu0 %v2556
  %2620 = vmatpush1.msra.mxu0 %v2555
  %2621 = vmatprep.subr.mxu0 %v2558
  %2622 = vmatpush1.msra.mxu0 %v2557
  %2623 = vmatprep.subr.mxu0 %v2560
  %2624 = vmatpush1.msra.mxu0 %v2559
  %2625 = vmatprep.subr.mxu0 %v2562
  %2626 = vmatpush1.msra.mxu0 %v2561
  %2627 = vmatprep.subr.mxu0 %v2564
  %2628 = vmatpush1.msra.mxu0 %v2563
  %2629 = vmatprep.subr.mxu0 %v2566
  %2630 = vmatpush1.msra.mxu0 %v2565
  %2631 = vmatprep.subr.mxu0 %v2568
  %2632 = vmatpush1.msra.mxu0 %v2567
  %2633 = vmatprep.subr.mxu0 %v2570
  %2634 = vmatpush1.msra.mxu0 %v2569
  %2635 = vmatprep.subr.mxu0 %v2572
  %2636 = vmatpush1.msra.mxu0 %v2571
  %2637 = vmatprep.subr.mxu0 %v2574
  %2638 = vmatpush1.msra.mxu0 %v2573
  %2639 = vmatprep.subr.mxu0 %v2576
  %2640 = vmatpush1.msra.mxu0 %v2575
  %2641 = vmatprep.subr.mxu0 %v2578
  %2642 = vmatpush1.msra.mxu0 %v2577
  %2643 = vmatprep.subr.mxu0 %v2580
  %2644 = vmatpush1.msra.mxu0 %v2579
  %2645 = vmatprep.subr.mxu0 %v2582
  %2646 = vmatpush1.msra.mxu0 %v2581
  %2647 = vmatprep.subr.mxu0 %v2584
  %2648 = vmatpush1.msra.mxu0 %v2583
  %2649 = vmatprep.subr.mxu0 %v2586
  %2650 = vmatpush1.msra.mxu0 %v2585
  %2651 = vmatprep.mubr.f32.mxu0 %v2522
  %2652 = vmatmul.mubr.f32.gmra.mrb[0].mxu0 %v2509
  %v2653 = vpop.f32.mrb[0].mxu0
  %v2654 = vadd.f32 0.0, %v2653
  %v2655 = vpop.f32.mrb[0].mxu0
  %v2656 = vadd.f32 0.0, %v2655
  %2657 = vdwg.mxu0
  %v2658 = vmul.f32 %v2654, %v2654
  %v2659 = vsub.f32 %v2656, %v2658
  %v2660 = vmax.f32 %v2659, 0.0
  %v2661 = vadd.f32 %v2660, 1e-05
  %v2662 = vrsqrt.pop %v2661
  %v2663 = vld [vmem:[%s11] sm:$0x1]
  %v2664 = vmul.f32 %v2662, %v2663
  %v2665 = vld [vmem:[%s11 + $0x1] sm:$0x1]
  %v2666 = vmul.f32 %v2654, %v2664
  %v2667 = vsub.f32 %v2665, %v2666
  %v2668 = vlaneseq
  %v2669 = vshrl.u32 %v2668, 7
  %v2670 = vsub.s32 0, %v2669
  %v2671 = vrot.slane %v2664, %v2670
  %v2672 = vmul.f32 %v2487, %v2671
  %v2673 = vmul.f32 %v2490, %v2671
  %v2674 = vmul.f32 %v2495, %v2671
  %v2675 = vmul.f32 %v2498, %v2671
  %v2676 = vlaneseq
  %v2677 = vshrl.u32 %v2676, 7
  %v2678 = vsub.s32 0, %v2677
  %v2679 = vrot.slane %v2667, %v2678
  %v2680 = vadd.f32 %v2672, %v2679
  %v2681 = vadd.f32 %v2673, %v2679
  %v2682 = vadd.f32 %v2674, %v2679
  %v2683 = vadd.f32 %v2675, %v2679
  %v2684 = vadd.f32 %v2006, %v2680
  %v2685 = vadd.f32 %v2007, %v2681
  %v2686 = vadd.f32 %v2008, %v2682
  %v2687 = vadd.f32 %v2009, %v2683
  %v2688 = vadd.f32 %v2684, %v1194
  %v2689 = vadd.f32 %v2685, %v1195
  %v2690 = vadd.f32 %v2686, %v1196
  %v2691 = vadd.f32 %v2687, %v1197
  %v2692 = vtanh.pop %v2688
  %v2693 = vtanh.pop %v2689
  %v2694 = vtanh.pop %v2690
  %v2695 = vtanh.pop %v2691
  %v2696 = vld [vmem:[%s12] sm:$0xf]
  %v2697 = vld [vmem:[%s12 + $0x4] sm:$0xf]
  %v2698 = vld [vmem:[%s12 + $0x8] sm:$0xf]
  %v2699 = vld [vmem:[%s12 + $0xc] sm:$0xf]
  %v2700 = vld [vmem:[%s12 + $0x10] sm:$0xf]
  %v2701 = vld [vmem:[%s12 + $0x14] sm:$0xf]
  %v2702 = vld [vmem:[%s12 + $0x18] sm:$0xf]
  %v2703 = vld [vmem:[%s12 + $0x1c] sm:$0xf]
  %v2704 = vld [vmem:[%s12 + $0x20] sm:$0xf]
  %v2705 = vld [vmem:[%s12 + $0x24] sm:$0xf]
  %v2706 = vld [vmem:[%s12 + $0x28] sm:$0xf]
  %v2707 = vld [vmem:[%s12 + $0x2c] sm:$0xf]
  %v2708 = vld [vmem:[%s12 + $0x30] sm:$0xf]
  %v2709 = vld [vmem:[%s12 + $0x34] sm:$0xf]
  %v2710 = vld [vmem:[%s12 + $0x38] sm:$0xf]
  %v2711 = vld [vmem:[%s12 + $0x3c] sm:$0xf]
  %v2712 = vld [vmem:[%s12 + $0x40] sm:$0xf]
  %v2713 = vld [vmem:[%s12 + $0x44] sm:$0xf]
  %v2714 = vld [vmem:[%s12 + $0x48] sm:$0xf]
  %v2715 = vld [vmem:[%s12 + $0x4c] sm:$0xf]
  %v2716 = vld [vmem:[%s12 + $0x50] sm:$0xf]
  %v2717 = vld [vmem:[%s12 + $0x54] sm:$0xf]
  %v2718 = vld [vmem:[%s12 + $0x58] sm:$0xf]
  %v2719 = vld [vmem:[%s12 + $0x5c] sm:$0xf]
  %v2720 = vld [vmem:[%s12 + $0x60] sm:$0xf]
  %v2721 = vld [vmem:[%s12 + $0x64] sm:$0xf]
  %v2722 = vld [vmem:[%s12 + $0x68] sm:$0xf]
  %v2723 = vld [vmem:[%s12 + $0x6c] sm:$0xf]
  %v2724 = vld [vmem:[%s12 + $0x70] sm:$0xf]
  %v2725 = vld [vmem:[%s12 + $0x74] sm:$0xf]
  %v2726 = vld [vmem:[%s12 + $0x78] sm:$0xf]
  %v2727 = vld [vmem:[%s12 + $0x7c] sm:$0xf]
  %v2728 = vld [vmem:[%s12 + $0x80] sm:$0xf]
  %v2729 = vld [vmem:[%s12 + $0x84] sm:$0xf]
  %v2730 = vld [vmem:[%s12 + $0x88] sm:$0xf]
  %v2731 = vld [vmem:[%s12 + $0x8c] sm:$0xf]
  %v2732 = vld [vmem:[%s12 + $0x90] sm:$0xf]
  %v2733 = vld [vmem:[%s12 + $0x94] sm:$0xf]
  %v2734 = vld [vmem:[%s12 + $0x98] sm:$0xf]
  %v2735 = vld [vmem:[%s12 + $0x9c] sm:$0xf]
  %v2736 = vld [vmem:[%s12 + $0xa0] sm:$0xf]
  %v2737 = vld [vmem:[%s12 + $0xa4] sm:$0xf]
  %v2738 = vld [vmem:[%s12 + $0xa8] sm:$0xf]
  %v2739 = vld [vmem:[%s12 + $0xac] sm:$0xf]
  %v2740 = vld [vmem:[%s12 + $0xb0] sm:$0xf]
  %v2741 = vld [vmem:[%s12 + $0xb4] sm:$0xf]
  %v2742 = vld [vmem:[%s12 + $0xb8] sm:$0xf]
  %v2743 = vld [vmem:[%s12 + $0xbc] sm:$0xf]
  %v2792 = vunpack.c.l.b16 %v2696
  %v2793 = vunpack.c.l.b16 %v2697
  %v2794 = vunpack.c.l.b16 %v2698
  %v2795 = vunpack.c.l.b16 %v2699
  %v2796 = vunpack.c.l.b16 %v2700
  %v2797 = vunpack.c.l.b16 %v2701
  %v2798 = vunpack.c.l.b16 %v2702
  %v2799 = vunpack.c.l.b16 %v2703
  %v2800 = vunpack.c.l.b16 %v2704
  %v2801 = vunpack.c.l.b16 %v2705
  %v2802 = vunpack.c.l.b16 %v2706
  %v2803 = vunpack.c.l.b16 %v2707
  %v2804 = vunpack.c.l.b16 %v2708
  %v2805 = vunpack.c.l.b16 %v2709
  %v2806 = vunpack.c.l.b16 %v2710
  %v2807 = vunpack.c.l.b16 %v2711
  %v2808 = vunpack.c.l.b16 %v2712
  %v2809 = vunpack.c.l.b16 %v2713
  %v2810 = vunpack.c.l.b16 %v2714
  %v2811 = vunpack.c.l.b16 %v2715
  %v2812 = vunpack.c.l.b16 %v2716
  %v2813 = vunpack.c.l.b16 %v2717
  %v2814 = vunpack.c.l.b16 %v2718
  %v2815 = vunpack.c.l.b16 %v2719
  %v2816 = vunpack.c.l.b16 %v2720
  %v2817 = vunpack.c.l.b16 %v2721
  %v2818 = vunpack.c.l.b16 %v2722
  %v2819 = vunpack.c.l.b16 %v2723
  %v2820 = vunpack.c.l.b16 %v2724
  %v2821 = vunpack.c.l.b16 %v2725
  %v2822 = vunpack.c.l.b16 %v2726
  %v2823 = vunpack.c.l.b16 %v2727
  %v2824 = vunpack.c.l.b16 %v2728
  %v2825 = vunpack.c.l.b16 %v2729
  %v2826 = vunpack.c.l.b16 %v2730
  %v2827 = vunpack.c.l.b16 %v2731
  %v2828 = vunpack.c.l.b16 %v2732
  %v2829 = vunpack.c.l.b16 %v2733
  %v2830 = vunpack.c.l.b16 %v2734
  %v2831 = vunpack.c.l.b16 %v2735
  %v2832 = vunpack.c.l.b16 %v2736
  %v2833 = vunpack.c.l.b16 %v2737
  %v2834 = vunpack.c.l.b16 %v2738
  %v2835 = vunpack.c.l.b16 %v2739
  %v2836 = vunpack.c.l.b16 %v2740
  %v2837 = vunpack.c.l.b16 %v2741
  %v2838 = vunpack.c.l.b16 %v2742
  %v2839 = vunpack.c.l.b16 %v2743
  %v2840 = vpack.c.b16 %v2793, %v2792
  %v2841 = vpack.c.b16 %v2795, %v2794
  %v2842 = vpack.c.b16 %v2797, %v2796
  %v2843 = vpack.c.b16 %v2799, %v2798
  %v2844 = vpack.c.b16 %v2801, %v2800
  %v2845 = vpack.c.b16 %v2803, %v2802
  %v2846 = vpack.c.b16 %v2805, %v2804
  %v2847 = vpack.c.b16 %v2807, %v2806
  %v2848 = vpack.c.b16 %v2809, %v2808
  %v2849 = vpack.c.b16 %v2811, %v2810
  %v2850 = vpack.c.b16 %v2813, %v2812
  %v2851 = vpack.c.b16 %v2815, %v2814
  %v2852 = vpack.c.b16 %v2817, %v2816
  %v2853 = vpack.c.b16 %v2819, %v2818
  %v2854 = vpack.c.b16 %v2821, %v2820
  %v2855 = vpack.c.b16 %v2823, %v2822
  %v2856 = vpack.c.b16 %v2825, %v2824
  %v2857 = vpack.c.b16 %v2827, %v2826
  %v2858 = vpack.c.b16 %v2829, %v2828
  %v2859 = vpack.c.b16 %v2831, %v2830
  %v2860 = vpack.c.b16 %v2833, %v2832
  %v2861 = vpack.c.b16 %v2835, %v2834
  %v2862 = vpack.c.b16 %v2837, %v2836
  %v2863 = vpack.c.b16 %v2839, %v2838
  %2888 = vmatprep.subr.bf16.mxu0 0
  %2889 = vmatpush1.bf16.msra.mxu0 %v2840
  %2890 = vmatprep.subr.bf16.mxu0 0
  %2891 = vmatpush1.bf16.msra.mxu0 %v2841
  %2892 = vmatprep.subr.bf16.mxu0 0
  %2893 = vmatpush1.bf16.msra.mxu0 %v2842
  %2894 = vmatprep.subr.bf16.mxu0 0
  %2895 = vmatpush1.bf16.msra.mxu0 %v2843
  %2896 = vmatprep.subr.bf16.mxu0 0
  %2897 = vmatpush1.bf16.msra.mxu0 %v2844
  %2898 = vmatprep.subr.bf16.mxu0 0
  %2899 = vmatpush1.bf16.msra.mxu0 %v2845
  %2900 = vmatprep.subr.bf16.mxu0 0
  %2901 = vmatpush1.bf16.msra.mxu0 %v2846
  %2902 = vmatprep.subr.bf16.mxu0 0
  %2903 = vmatpush1.bf16.msra.mxu0 %v2847
  %2904 = vmatprep.subr.bf16.mxu0 0
  %2905 = vmatpush1.bf16.msra.mxu0 %v2848
  %2906 = vmatprep.subr.bf16.mxu0 0
  %2907 = vmatpush1.bf16.msra.mxu0 %v2849
  %2908 = vmatprep.subr.bf16.mxu0 0
  %2909 = vmatpush1.bf16.msra.mxu0 %v2850
  %2910 = vmatprep.subr.bf16.mxu0 0
  %2911 = vmatpush1.bf16.msra.mxu0 %v2851
  %2912 = vmatprep.subr.bf16.mxu0 0
  %2913 = vmatpush1.bf16.msra.mxu0 %v2852
  %2914 = vmatprep.subr.bf16.mxu0 0
  %2915 = vmatpush1.bf16.msra.mxu0 %v2853
  %2916 = vmatprep.subr.bf16.mxu0 0
  %2917 = vmatpush1.bf16.msra.mxu0 %v2854
  %2918 = vmatprep.subr.bf16.mxu0 0
  %2919 = vmatpush1.bf16.msra.mxu0 %v2855
  %2920 = vmatprep.mubr.bf16.mxu0 %v163
  %2921 = vmatmul.mubr.bf16.gmra.mrb[0].mxu0 %v162
  %v2922 = vpop.f32.mrb[0].mxu0
  %v2923 = vadd.f32 0.0, %v2922
  %v2924 = vpop.f32.mrb[0].mxu0
  %v2925 = vpop.f32.mrb[0].mxu0
  %v2926 = vadd.f32 0.0, %v2925
  %v2927 = vpop.f32.mrb[0].mxu0
  %2928 = vmatprep.mubr.bf16.mxu0 %v166
  %2929 = vmatmul.mubr.bf16.gmra.mrb[0].mxu0 %v165
  %v2930 = vpop.f32.mrb[0].mxu0
  %v2931 = vadd.f32 0.0, %v2930
  %v2932 = vpop.f32.mrb[0].mxu0
  %v2933 = vpop.f32.mrb[0].mxu0
  %v2934 = vadd.f32 0.0, %v2933
  %v2935 = vpop.f32.mrb[0].mxu0
  %2936 = vdwg.mxu0
  %2937 = vmatprep.subr.bf16.mxu0 0
  %2938 = vmatpush1.bf16.msra.mxu0 %v2856
  %2939 = vmatprep.subr.bf16.mxu0 0
  %2940 = vmatpush1.bf16.msra.mxu0 %v2857
  %2941 = vmatprep.subr.bf16.mxu0 0
  %2942 = vmatpush1.bf16.msra.mxu0 %v2858
  %2943 = vmatprep.subr.bf16.mxu0 0
  %2944 = vmatpush1.bf16.msra.mxu0 %v2859
  %2945 = vmatprep.subr.bf16.mxu0 0
  %2946 = vmatpush1.bf16.msra.mxu0 %v2860
  %2947 = vmatprep.subr.bf16.mxu0 0
  %2948 = vmatpush1.bf16.msra.mxu0 %v2861
  %2949 = vmatprep.subr.bf16.mxu0 0
  %2950 = vmatpush1.bf16.msra.mxu0 %v2862
  %2951 = vmatprep.subr.bf16.mxu0 0
  %2952 = vmatpush1.bf16.msra.mxu0 %v2863
  %2953 = vmatprep.subr.bf16.mxu0 0
  %2954 = vmatpush1.bf16.msra.mxu0 0
  %2955 = vmatprep.subr.bf16.mxu0 0
  %2956 = vmatpush1.bf16.msra.mxu0 0
  %2957 = vmatprep.subr.bf16.mxu0 0
  %2958 = vmatpush1.bf16.msra.mxu0 0
  %2959 = vmatprep.subr.bf16.mxu0 0
  %2960 = vmatpush1.bf16.msra.mxu0 0
  %2961 = vmatprep.subr.bf16.mxu0 0
  %2962 = vmatpush1.bf16.msra.mxu0 0
  %2963 = vmatprep.subr.bf16.mxu0 0
  %2964 = vmatpush1.bf16.msra.mxu0 0
  %2965 = vmatprep.subr.bf16.mxu0 0
  %2966 = vmatpush1.bf16.msra.mxu0 0
  %2967 = vmatprep.subr.bf16.mxu0 0
  %2968 = vmatpush1.bf16.msra.mxu0 0
  %2969 = vmatprep.mubr.bf16.mxu0 0
  %2970 = vmatmul.mubr.bf16.gmra.mrb[0].mxu0 %v164
  %v2971 = vpop.f32.mrb[0].mxu0
  %v2972 = vadd.f32 %v2923, %v2971
  %v2973 = vpop.f32.mrb[0].mxu0
  %v2974 = vpop.f32.mrb[0].mxu0
  %v2975 = vadd.f32 %v2926, %v2974
  %v2976 = vpop.f32.mrb[0].mxu0
  %2977 = vmatprep.mubr.bf16.mxu0 0
  %2978 = vmatmul.mubr.bf16.gmra.mrb[0].mxu0 %v167
  %v2979 = vpop.f32.mrb[0].mxu0
  %v2980 = vadd.f32 %v2931, %v2979
  %v2981 = vpop.f32.mrb[0].mxu0
  %v2982 = vpop.f32.mrb[0].mxu0
  %v2983 = vadd.f32 %v2934, %v2982
  %v2984 = vpop.f32.mrb[0].mxu0
  %2985 = vdwg.mxu0
  %v2986 = vadd.f32 %v2972, %v2975
  %v2987 = vadd.f32 %v2986, %v2980
  %v2988 = vadd.f32 %v2987, %v2983
  %v2989 = vrot.slane %v2988, 4
  %v2990 = vadd.f32 %v2988, %v2989
  %v2991 = vrot.slane %v2990, 2
  %v2992 = vadd.f32 %v2990, %v2991
  %v2993 = vrot.slane %v2992, 1
  %v2994 = vadd.f32 %v2992, %v2993
  %v2995 = vmul.f32 %v2972, %v2972
  %v2996 = vmul.f32 %v2975, %v2975
  %v2997 = vmul.f32 %v2980, %v2980
  %v2998 = vmul.f32 %v2983, %v2983
  %v2999 = vadd.f32 %v2995, %v2996
  %v3000 = vadd.f32 %v2999, %v2997
  %v3001 = vadd.f32 %v3000, %v2998
  %v3002 = vrot.slane %v3001, 4
  %v3003 = vadd.f32 %v3001, %v3002
  %v3004 = vrot.slane %v3003, 2
  %v3005 = vadd.f32 %v3003, %v3004
  %v3006 = vrot.slane %v3005, 1
  %v3007 = vadd.f32 %v3005, %v3006
  %3008 = vmatprep.subr.mxu0 %v2524
  %3009 = vmatpush1.msra.mxu0 %v2523
  %3010 = vmatprep.subr.mxu0 %v2526
  %3011 = vmatpush1.msra.mxu0 %v2525
  %3012 = vmatprep.subr.mxu0 %v2528
  %3013 = vmatpush1.msra.mxu0 %v2527
  %3014 = vmatprep.subr.mxu0 %v2530
  %3015 = vmatpush1.msra.mxu0 %v2529
  %3016 = vmatprep.subr.mxu0 %v2532
  %3017 = vmatpush1.msra.mxu0 %v2531
  %3018 = vmatprep.subr.mxu0 %v2534
  %3019 = vmatpush1.msra.mxu0 %v2533
  %3020 = vmatprep.subr.mxu0 %v2536
  %3021 = vmatpush1.msra.mxu0 %v2535
  %3022 = vmatprep.subr.mxu0 %v2538
  %3023 = vmatpush1.msra.mxu0 %v2537
  %3024 = vmatprep.subr.mxu0 %v2540
  %3025 = vmatpush1.msra.mxu0 %v2539
  %3026 = vmatprep.subr.mxu0 %v2542
  %3027 = vmatpush1.msra.mxu0 %v2541
  %3028 = vmatprep.subr.mxu0 %v2544
  %3029 = vmatpush1.msra.mxu0 %v2543
  %3030 = vmatprep.subr.mxu0 %v2546
  %3031 = vmatpush1.msra.mxu0 %v2545
  %3032 = vmatprep.subr.mxu0 %v2548
  %3033 = vmatpush1.msra.mxu0 %v2547
  %3034 = vmatprep.subr.mxu0 %v2550
  %3035 = vmatpush1.msra.mxu0 %v2549
  %3036 = vmatprep.subr.mxu0 %v2552
  %3037 = vmatpush1.msra.mxu0 %v2551
  %3038 = vmatprep.subr.mxu0 %v2554
  %3039 = vmatpush1.msra.mxu0 %v2553
  %3040 = vmatprep.subr.mxu0 %v2556
  %3041 = vmatpush1.msra.mxu0 %v2555
  %3042 = vmatprep.subr.mxu0 %v2558
  %3043 = vmatpush1.msra.mxu0 %v2557
  %3044 = vmatprep.subr.mxu0 %v2560
  %3045 = vmatpush1.msra.mxu0 %v2559
  %3046 = vmatprep.subr.mxu0 %v2562
  %3047 = vmatpush1.msra.mxu0 %v2561
  %3048 = vmatprep.subr.mxu0 %v2564
  %3049 = vmatpush1.msra.mxu0 %v2563
  %3050 = vmatprep.subr.mxu0 %v2566
  %3051 = vmatpush1.msra.mxu0 %v2565
  %3052 = vmatprep.subr.mxu0 %v2568
  %3053 = vmatpush1.msra.mxu0 %v2567
  %3054 = vmatprep.subr.mxu0 %v2570
  %3055 = vmatpush1.msra.mxu0 %v2569
  %3056 = vmatprep.subr.mxu0 %v2572
  %3057 = vmatpush1.msra.mxu0 %v2571
  %3058 = vmatprep.subr.mxu0 %v2574
  %3059 = vmatpush1.msra.mxu0 %v2573
  %3060 = vmatprep.subr.mxu0 %v2576
  %3061 = vmatpush1.msra.mxu0 %v2575
  %3062 = vmatprep.subr.mxu0 %v2578
  %3063 = vmatpush1.msra.mxu0 %v2577
  %3064 = vmatprep.subr.mxu0 %v2580
  %3065 = vmatpush1.msra.mxu0 %v2579
  %3066 = vmatprep.subr.mxu0 %v2582
  %3067 = vmatpush1.msra.mxu0 %v2581
  %3068 = vmatprep.subr.mxu0 %v2584
  %3069 = vmatpush1.msra.mxu0 %v2583
  %3070 = vmatprep.subr.mxu0 %v2586
  %3071 = vmatpush1.msra.mxu0 %v2585
  %3072 = vmatprep.mubr.f32.mxu0 %v3007
  %3073 = vmatmul.mubr.f32.gmra.mrb[0].mxu0 %v2994
  %v3074 = vpop.f32.mrb[0].mxu0
  %v3075 = vadd.f32 0.0, %v3074
  %v3076 = vpop.f32.mrb[0].mxu0
  %v3077 = vadd.f32 0.0, %v3076
  %3078 = vdwg.mxu0
  %v3079 = vmul.f32 %v3075, %v3075
  %v3080 = vsub.f32 %v3077, %v3079
  %v3081 = vmax.f32 %v3080, 0.0
  %v3082 = vadd.f32 %v3081, 1e-05
  %v3083 = vrsqrt.pop %v3082
  %v3084 = vld [vmem:[%s13] sm:$0x1]
  %v3085 = vmul.f32 %v3083, %v3084
  %v3086 = vld [vmem:[%s13 + $0x1] sm:$0x1]
  %v3087 = vmul.f32 %v3075, %v3085
  %v3088 = vsub.f32 %v3086, %v3087
  %v3089 = vlaneseq
  %v3090 = vshrl.u32 %v3089, 7
  %v3091 = vsub.s32 0, %v3090
  %v3092 = vrot.slane %v3085, %v3091
  %v3093 = vmul.f32 %v2972, %v3092
  %v3094 = vmul.f32 %v2975, %v3092
  %v3095 = vmul.f32 %v2980, %v3092
  %v3096 = vmul.f32 %v2983, %v3092
  %v3097 = vlaneseq
  %v3098 = vshrl.u32 %v3097, 7
  %v3099 = vsub.s32 0, %v3098
  %v3100 = vrot.slane %v3088, %v3099
  %v3101 = vadd.f32 %v3093, %v3100
  %v3102 = vadd.f32 %v3094, %v3100
  %v3103 = vadd.f32 %v3095, %v3100
  %v3104 = vadd.f32 %v3096, %v3100
  %v3105 = vadd.f32 %v3101, 0.0
  %v3106 = vadd.f32 %v3102, 0.0
  %v3107 = vadd.f32 %v3103, 0.0
  %v3108 = vadd.f32 %v3104, 0.0
  %v3109 = vld [vmem:[%s14] sm:$0xf]
  %v3110 = vld [vmem:[%s14 + $0x4] sm:$0xf]
  %v3111 = vld [vmem:[%s14 + $0x8] sm:$0xf]
  %v3112 = vld [vmem:[%s14 + $0xc] sm:$0xf]
  %v3113 = vld [vmem:[%s14 + $0x10] sm:$0xf]
  %v3114 = vld [vmem:[%s14 + $0x14] sm:$0xf]
  %v3115 = vld [vmem:[%s14 + $0x18] sm:$0xf]
  %v3116 = vld [vmem:[%s14 + $0x1c] sm:$0xf]
  %v3117 = vld [vmem:[%s14 + $0x20] sm:$0xf]
  %v3118 = vld [vmem:[%s14 + $0x24] sm:$0xf]
  %v3119 = vld [vmem:[%s14 + $0x28] sm:$0xf]
  %v3120 = vld [vmem:[%s14 + $0x2c] sm:$0xf]
  %v3121 = vld [vmem:[%s14 + $0x30] sm:$0xf]
  %v3122 = vld [vmem:[%s14 + $0x34] sm:$0xf]
  %v3123 = vld [vmem:[%s14 + $0x38] sm:$0xf]
  %v3124 = vld [vmem:[%s14 + $0x3c] sm:$0xf]
  %v3125 = vld [vmem:[%s14 + $0x40] sm:$0xf]
  %v3126 = vld [vmem:[%s14 + $0x44] sm:$0xf]
  %v3127 = vld [vmem:[%s14 + $0x48] sm:$0xf]
  %v3128 = vld [vmem:[%s14 + $0x4c] sm:$0xf]
  %v3129 = vld [vmem:[%s14 + $0x50] sm:$0xf]
  %v3130 = vld [vmem:[%s14 + $0x54] sm:$0xf]
  %v3131 = vld [vmem:[%s14 + $0x58] sm:$0xf]
  %v3132 = vld [vmem:[%s14 + $0x5c] sm:$0xf]
  %v3133 = vld [vmem:[%s14 + $0x60] sm:$0xf]
  %v3134 = vld [vmem:[%s14 + $0x64] sm:$0xf]
  %v3135 = vld [vmem:[%s14 + $0x68] sm:$0xf]
  %v3136 = vld [vmem:[%s14 + $0x6c] sm:$0xf]
  %v3137 = vld [vmem:[%s14 + $0x70] sm:$0xf]
  %v3138 = vld [vmem:[%s14 + $0x74] sm:$0xf]
  %v3139 = vld [vmem:[%s14 + $0x78] sm:$0xf]
  %v3140 = vld [vmem:[%s14 + $0x7c] sm:$0xf]
  %v3141 = vld [vmem:[%s14 + $0x80] sm:$0xf]
  %v3142 = vld [vmem:[%s14 + $0x84] sm:$0xf]
  %v3143 = vld [vmem:[%s14 + $0x88] sm:$0xf]
  %v3144 = vld [vmem:[%s14 + $0x8c] sm:$0xf]
  %v3145 = vld [vmem:[%s14 + $0x90] sm:$0xf]
  %v3146 = vld [vmem:[%s14 + $0x94] sm:$0xf]
  %v3147 = vld [vmem:[%s14 + $0x98] sm:$0xf]
  %v3148 = vld [vmem:[%s14 + $0x9c] sm:$0xf]
  %v3149 = vld [vmem:[%s14 + $0xa0] sm:$0xf]
  %v3150 = vld [vmem:[%s14 + $0xa4] sm:$0xf]
  %v3151 = vld [vmem:[%s14 + $0xa8] sm:$0xf]
  %v3152 = vld [vmem:[%s14 + $0xac] sm:$0xf]
  %v3153 = vld [vmem:[%s14 + $0xb0] sm:$0xf]
  %v3154 = vld [vmem:[%s14 + $0xb4] sm:$0xf]
  %v3155 = vld [vmem:[%s14 + $0xb8] sm:$0xf]
  %v3156 = vld [vmem:[%s14 + $0xbc] sm:$0xf]
  %v3205 = vunpack.c.l.b16 %v3109
  %v3206 = vunpack.c.l.b16 %v3110
  %v3207 = vunpack.c.l.b16 %v3111
  %v3208 = vunpack.c.l.b16 %v3112
  %v3209 = vunpack.c.l.b16 %v3113
  %v3210 = vunpack.c.l.b16 %v3114
  %v3211 = vunpack.c.l.b16 %v3115
  %v3212 = vunpack.c.l.b16 %v3116
  %v3213 = vunpack.c.l.b16 %v3117
  %v3214 = vunpack.c.l.b16 %v3118
  %v3215 = vunpack.c.l.b16 %v3119
  %v3216 = vunpack.c.l.b16 %v3120
  %v3217 = vunpack.c.l.b16 %v3121
  %v3218 = vunpack.c.l.b16 %v3122
  %v3219 = vunpack.c.l.b16 %v3123
  %v3220 = vunpack.c.l.b16 %v3124
  %v3221 = vunpack.c.l.b16 %v3125
  %v3222 = vunpack.c.l.b16 %v3126
  %v3223 = vunpack.c.l.b16 %v3127
  %v3224 = vunpack.c.l.b16 %v3128
  %v3225 = vunpack.c.l.b16 %v3129
  %v3226 = vunpack.c.l.b16 %v3130
  %v3227 = vunpack.c.l.b16 %v3131
  %v3228 = vunpack.c.l.b16 %v3132
  %v3229 = vunpack.c.l.b16 %v3133
  %v3230 = vunpack.c.l.b16 %v3134
  %v3231 = vunpack.c.l.b16 %v3135
  %v3232 = vunpack.c.l.b16 %v3136
  %v3233 = vunpack.c.l.b16 %v3137
  %v3234 = vunpack.c.l.b16 %v3138
  %v3235 = vunpack.c.l.b16 %v3139
  %v3236 = vunpack.c.l.b16 %v3140
  %v3237 = vunpack.c.l.b16 %v3141
  %v3238 = vunpack.c.l.b16 %v3142
  %v3239 = vunpack.c.l.b16 %v3143
  %v3240 = vunpack.c.l.b16 %v3144
  %v3241 = vunpack.c.l.b16 %v3145
  %v3242 = vunpack.c.l.b16 %v3146
  %v3243 = vunpack.c.l.b16 %v3147
  %v3244 = vunpack.c.l.b16 %v3148
  %v3245 = vunpack.c.l.b16 %v3149
  %v3246 = vunpack.c.l.b16 %v3150
  %v3247 = vunpack.c.l.b16 %v3151
  %v3248 = vunpack.c.l.b16 %v3152
  %v3249 = vunpack.c.l.b16 %v3153
  %v3250 = vunpack.c.l.b16 %v3154
  %v3251 = vunpack.c.l.b16 %v3155
  %v3252 = vunpack.c.l.b16 %v3156
  %v3253 = vpack.c.b16 %v3206, %v3205
  %v3254 = vpack.c.b16 %v3208, %v3207
  %v3255 = vpack.c.b16 %v3210, %v3209
  %v3256 = vpack.c.b16 %v3212, %v3211
  %v3257 = vpack.c.b16 %v3214, %v3213
  %v3258 = vpack.c.b16 %v3216, %v3215
  %v3259 = vpack.c.b16 %v3218, %v3217
  %v3260 = vpack.c.b16 %v3220, %v3219
  %v3261 = vpack.c.b16 %v3222, %v3221
  %v3262 = vpack.c.b16 %v3224, %v3223
  %v3263 = vpack.c.b16 %v3226, %v3225
  %v3264 = vpack.c.b16 %v3228, %v3227
  %v3265 = vpack.c.b16 %v3230, %v3229
  %v3266 = vpack.c.b16 %v3232, %v3231
  %v3267 = vpack.c.b16 %v3234, %v3233
  %v3268 = vpack.c.b16 %v3236, %v3235
  %v3269 = vpack.c.b16 %v3238, %v3237
  %v3270 = vpack.c.b16 %v3240, %v3239
  %v3271 = vpack.c.b16 %v3242, %v3241
  %v3272 = vpack.c.b16 %v3244, %v3243
  %v3273 = vpack.c.b16 %v3246, %v3245
  %v3274 = vpack.c.b16 %v3248, %v3247
  %v3275 = vpack.c.b16 %v3250, %v3249
  %v3276 = vpack.c.b16 %v3252, %v3251
  %3301 = vmatprep.subr.bf16.mxu0 0
  %3302 = vmatpush1.bf16.msra.mxu0 %v3253
  %3303 = vmatprep.subr.bf16.mxu0 0
  %3304 = vmatpush1.bf16.msra.mxu0 %v3254
  %3305 = vmatprep.subr.bf16.mxu0 0
  %3306 = vmatpush1.bf16.msra.mxu0 %v3255
  %3307 = vmatprep.subr.bf16.mxu0 0
  %3308 = vmatpush1.bf16.msra.mxu0 %v3256
  %3309 = vmatprep.subr.bf16.mxu0 0
  %3310 = vmatpush1.bf16.msra.mxu0 %v3257
  %3311 = vmatprep.subr.bf16.mxu0 0
  %3312 = vmatpush1.bf16.msra.mxu0 %v3258
  %3313 = vmatprep.subr.bf16.mxu0 0
  %3314 = vmatpush1.bf16.msra.mxu0 %v3259
  %3315 = vmatprep.subr.bf16.mxu0 0
  %3316 = vmatpush1.bf16.msra.mxu0 %v3260
  %3317 = vmatprep.subr.bf16.mxu0 0
  %3318 = vmatpush1.bf16.msra.mxu0 %v3261
  %3319 = vmatprep.subr.bf16.mxu0 0
  %3320 = vmatpush1.bf16.msra.mxu0 %v3262
  %3321 = vmatprep.subr.bf16.mxu0 0
  %3322 = vmatpush1.bf16.msra.mxu0 %v3263
  %3323 = vmatprep.subr.bf16.mxu0 0
  %3324 = vmatpush1.bf16.msra.mxu0 %v3264
  %3325 = vmatprep.subr.bf16.mxu0 0
  %3326 = vmatpush1.bf16.msra.mxu0 %v3265
  %3327 = vmatprep.subr.bf16.mxu0 0
  %3328 = vmatpush1.bf16.msra.mxu0 %v3266
  %3329 = vmatprep.subr.bf16.mxu0 0
  %3330 = vmatpush1.bf16.msra.mxu0 %v3267
  %3331 = vmatprep.subr.bf16.mxu0 0
  %3332 = vmatpush1.bf16.msra.mxu0 %v3268
  %3333 = vmatprep.mubr.bf16.mxu0 %v2206
  %3334 = vmatmul.mubr.bf16.gmra.mrb[0].mxu0 %v2205
  %v3335 = vpop.f32.mrb[0].mxu0
  %v3336 = vadd.f32 0.0, %v3335
  %v3337 = vpop.f32.mrb[0].mxu0
  %v3338 = vpop.f32.mrb[0].mxu0
  %v3339 = vadd.f32 0.0, %v3338
  %v3340 = vpop.f32.mrb[0].mxu0
  %3341 = vmatprep.mubr.bf16.mxu0 %v2209
  %3342 = vmatmul.mubr.bf16.gmra.mrb[0].mxu0 %v2208
  %v3343 = vpop.f32.mrb[0].mxu0
  %v3344 = vadd.f32 0.0, %v3343
  %v3345 = vpop.f32.mrb[0].mxu0
  %v3346 = vpop.f32.mrb[0].mxu0
  %v3347 = vadd.f32 0.0, %v3346
  %v3348 = vpop.f32.mrb[0].mxu0
  %3349 = vdwg.mxu0
  %3350 = vmatprep.subr.bf16.mxu0 0
  %3351 = vmatpush1.bf16.msra.mxu0 %v3269
  %3352 = vmatprep.subr.bf16.mxu0 0
  %3353 = vmatpush1.bf16.msra.mxu0 %v3270
  %3354 = vmatprep.subr.bf16.mxu0 0
  %3355 = vmatpush1.bf16.msra.mxu0 %v3271
  %3356 = vmatprep.subr.bf16.mxu0 0
  %3357 = vmatpush1.bf16.msra.mxu0 %v3272
  %3358 = vmatprep.subr.bf16.mxu0 0
  %3359 = vmatpush1.bf16.msra.mxu0 %v3273
  %3360 = vmatprep.subr.bf16.mxu0 0
  %3361 = vmatpush1.bf16.msra.mxu0 %v3274
  %3362 = vmatprep.subr.bf16.mxu0 0
  %3363 = vmatpush1.bf16.msra.mxu0 %v3275
  %3364 = vmatprep.subr.bf16.mxu0 0
  %3365 = vmatpush1.bf16.msra.mxu0 %v3276
  %3366 = vmatprep.subr.bf16.mxu0 0
  %3367 = vmatpush1.bf16.msra.mxu0 0
  %3368 = vmatprep.subr.bf16.mxu0 0
  %3369 = vmatpush1.bf16.msra.mxu0 0
  %3370 = vmatprep.subr.bf16.mxu0 0
  %3371 = vmatpush1.bf16.msra.mxu0 0
  %3372 = vmatprep.subr.bf16.mxu0 0
  %3373 = vmatpush1.bf16.msra.mxu0 0
  %3374 = vmatprep.subr.bf16.mxu0 0
  %3375 = vmatpush1.bf16.msra.mxu0 0
  %3376 = vmatprep.subr.bf16.mxu0 0
  %3377 = vmatpush1.bf16.msra.mxu0 0
  %3378 = vmatprep.subr.bf16.mxu0 0
  %3379 = vmatpush1.bf16.msra.mxu0 0
  %3380 = vmatprep.subr.bf16.mxu0 0
  %3381 = vmatpush1.bf16.msra.mxu0 0
  %3382 = vmatprep.mubr.bf16.mxu0 0
  %3383 = vmatmul.mubr.bf16.gmra.mrb[0].mxu0 %v2207
  %v3384 = vpop.f32.mrb[0].mxu0
  %v3385 = vadd.f32 %v3336, %v3384
  %v3386 = vpop.f32.mrb[0].mxu0
  %v3387 = vpop.f32.mrb[0].mxu0
  %v3388 = vadd.f32 %v3339, %v3387
  %v3389 = vpop.f32.mrb[0].mxu0
  %3390 = vmatprep.mubr.bf16.mxu0 0
  %3391 = vmatmul.mubr.bf16.gmra.mrb[0].mxu0 %v2210
  %v3392 = vpop.f32.mrb[0].mxu0
  %v3393 = vadd.f32 %v3344, %v3392
  %v3394 = vpop.f32.mrb[0].mxu0
  %v3395 = vpop.f32.mrb[0].mxu0
  %v3396 = vadd.f32 %v3347, %v3395
  %v3397 = vpop.f32.mrb[0].mxu0
  %3398 = vdwg.mxu0
  %v3399 = vadd.f32 %v3385, %v3388
  %v3400 = vadd.f32 %v3399, %v3393
  %v3401 = vadd.f32 %v3400, %v3396
  %v3402 = vrot.slane %v3401, 4
  %v3403 = vadd.f32 %v3401, %v3402
  %v3404 = vrot.slane %v3403, 2
  %v3405 = vadd.f32 %v3403, %v3404
  %v3406 = vrot.slane %v3405, 1
  %v3407 = vadd.f32 %v3405, %v3406
  %v3408 = vmul.f32 %v3385, %v3385
  %v3409 = vmul.f32 %v3388, %v3388
  %v3410 = vmul.f32 %v3393, %v3393
  %v3411 = vmul.f32 %v3396, %v3396
  %v3412 = vadd.f32 %v3408, %v3409
  %v3413 = vadd.f32 %v3412, %v3410
  %v3414 = vadd.f32 %v3413, %v3411
  %v3415 = vrot.slane %v3414, 4
  %v3416 = vadd.f32 %v3414, %v3415
  %v3417 = vrot.slane %v3416, 2
  %v3418 = vadd.f32 %v3416, %v3417
  %v3419 = vrot.slane %v3418, 1
  %v3420 = vadd.f32 %v3418, %v3419
  %3421 = vmatprep.subr.mxu0 %v2524
  %3422 = vmatpush1.msra.mxu0 %v2523
  %3423 = vmatprep.subr.mxu0 %v2526
  %3424 = vmatpush1.msra.mxu0 %v2525
  %3425 = vmatprep.subr.mxu0 %v2528
  %3426 = vmatpush1.msra.mxu0 %v2527
  %3427 = vmatprep.subr.mxu0 %v2530
  %3428 = vmatpush1.msra.mxu0 %v2529
  %3429 = vmatprep.subr.mxu0 %v2532
  %3430 = vmatpush1.msra.mxu0 %v2531
  %3431 = vmatprep.subr.mxu0 %v2534
  %3432 = vmatpush1.msra.mxu0 %v2533
  %3433 = vmatprep.subr.mxu0 %v2536
  %3434 = vmatpush1.msra.mxu0 %v2535
  %3435 = vmatprep.subr.mxu0 %v2538
  %3436 = vmatpush1.msra.mxu0 %v2537
  %3437 = vmatprep.subr.mxu0 %v2540
  %3438 = vmatpush1.msra.mxu0 %v2539
  %3439 = vmatprep.subr.mxu0 %v2542
  %3440 = vmatpush1.msra.mxu0 %v2541
  %3441 = vmatprep.subr.mxu0 %v2544
  %3442 = vmatpush1.msra.mxu0 %v2543
  %3443 = vmatprep.subr.mxu0 %v2546
  %3444 = vmatpush1.msra.mxu0 %v2545
  %3445 = vmatprep.subr.mxu0 %v2548
  %3446 = vmatpush1.msra.mxu0 %v2547
  %3447 = vmatprep.subr.mxu0 %v2550
  %3448 = vmatpush1.msra.mxu0 %v2549
  %3449 = vmatprep.subr.mxu0 %v2552
  %3450 = vmatpush1.msra.mxu0 %v2551
  %3451 = vmatprep.subr.mxu0 %v2554
  %3452 = vmatpush1.msra.mxu0 %v2553
  %3453 = vmatprep.subr.mxu0 %v2556
  %3454 = vmatpush1.msra.mxu0 %v2555
  %3455 = vmatprep.subr.mxu0 %v2558
  %3456 = vmatpush1.msra.mxu0 %v2557
  %3457 = vmatprep.subr.mxu0 %v2560
  %3458 = vmatpush1.msra.mxu0 %v2559
  %3459 = vmatprep.subr.mxu0 %v2562
  %3460 = vmatpush1.msra.mxu0 %v2561
  %3461 = vmatprep.subr.mxu0 %v2564
  %3462 = vmatpush1.msra.mxu0 %v2563
  %3463 = vmatprep.subr.mxu0 %v2566
  %3464 = vmatpush1.msra.mxu0 %v2565
  %3465 = vmatprep.subr.mxu0 %v2568
  %3466 = vmatpush1.msra.mxu0 %v2567
  %3467 = vmatprep.subr.mxu0 %v2570
  %3468 = vmatpush1.msra.mxu0 %v2569
  %3469 = vmatprep.subr.mxu0 %v2572
  %3470 = vmatpush1.msra.mxu0 %v2571
  %3471 = vmatprep.subr.mxu0 %v2574
  %3472 = vmatpush1.msra.mxu0 %v2573
  %3473 = vmatprep.subr.mxu0 %v2576
  %3474 = vmatpush1.msra.mxu0 %v2575
  %3475 = vmatprep.subr.mxu0 %v2578
  %3476 = vmatpush1.msra.mxu0 %v2577
  %3477 = vmatprep.subr.mxu0 %v2580
  %3478 = vmatpush1.msra.mxu0 %v2579
  %3479 = vmatprep.subr.mxu0 %v2582
  %3480 = vmatpush1.msra.mxu0 %v2581
  %3481 = vmatprep.subr.mxu0 %v2584
  %3482 = vmatpush1.msra.mxu0 %v2583
  %3483 = vmatprep.subr.mxu0 %v2586
  %3484 = vmatpush1.msra.mxu0 %v2585
  %3485 = vmatprep.mubr.f32.mxu0 %v3420
  %3486 = vmatmul.mubr.f32.gmra.mrb[0].mxu0 %v3407
  %v3487 = vpop.f32.mrb[0].mxu0
  %v3488 = vadd.f32 0.0, %v3487
  %v3489 = vpop.f32.mrb[0].mxu0
  %v3490 = vadd.f32 0.0, %v3489
  %3491 = vdwg.mxu0
  %v3492 = vmul.f32 %v3488, %v3488
  %v3493 = vsub.f32 %v3490, %v3492
  %v3494 = vmax.f32 %v3493, 0.0
  %v3495 = vadd.f32 %v3494, 1e-05
  %v3496 = vrsqrt.pop %v3495
  %v3497 = vld [vmem:[%s15] sm:$0x1]
  %v3498 = vmul.f32 %v3496, %v3497
  %v3499 = vld [vmem:[%s15 + $0x1] sm:$0x1]
  %v3500 = vmul.f32 %v3488, %v3498
  %v3501 = vsub.f32 %v3499, %v3500
  %v3502 = vlaneseq
  %v3503 = vshrl.u32 %v3502, 7
  %v3504 = vsub.s32 0, %v3503
  %v3505 = vrot.slane %v3498, %v3504
  %v3506 = vmul.f32 %v3385, %v3505
  %v3507 = vmul.f32 %v3388, %v3505
  %v3508 = vmul.f32 %v3393, %v3505
  %v3509 = vmul.f32 %v3396, %v3505
  %v3510 = vlaneseq
  %v3511 = vshrl.u32 %v3510, 7
  %v3512 = vsub.s32 0, %v3511
  %v3513 = vrot.slane %v3501, %v3512
  %v3514 = vadd.f32 %v3506, %v3513
  %v3515 = vadd.f32 %v3507, %v3513
  %v3516 = vadd.f32 %v3508, %v3513
  %v3517 = vadd.f32 %v3509, %v3513
  %v3518 = vadd.f32 %v3105, %v3514
  %v3519 = vadd.f32 %v3106, %v3515
  %v3520 = vadd.f32 %v3107, %v3516
  %v3521 = vadd.f32 %v3108, %v3517
  %3522 = vmatprep.subr.mxu0 0.0
  %3523 = vmatpush1.msra.mxu0 %v2692
  %3524 = vmatprep.subr.mxu0 0.0
  %3525 = vmatpush1.msra.mxu0 %v2693
  %3526 = vmatprep.subr.mxu0 0.0
  %3527 = vmatpush1.msra.mxu0 %v2694
  %3528 = vmatprep.subr.mxu0 0.0
  %3529 = vmatpush1.msra.mxu0 %v2695
  %3530 = vmatprep.subr.mxu0 0.0
  %3531 = vmatpush1.msra.mxu0 0.0
  %3532 = vmatprep.subr.mxu0 0.0
  %3533 = vmatpush1.msra.mxu0 0.0
  %3534 = vmatprep.subr.mxu0 0.0
  %3535 = vmatpush1.msra.mxu0 0.0
  %3536 = vmatprep.subr.mxu0 0.0
  %3537 = vmatpush1.msra.mxu0 0.0
  %3538 = vmatprep.subr.mxu0 0.0
  %3539 = vmatpush1.msra.mxu0 0.0
  %3540 = vmatprep.subr.mxu0 0.0
  %3541 = vmatpush1.msra.mxu0 0.0
  %3542 = vmatprep.subr.mxu0 0.0
  %3543 = vmatpush1.msra.mxu0 0.0
  %3544 = vmatprep.subr.mxu0 0.0
  %3545 = vmatpush1.msra.mxu0 0.0
  %3546 = vmatprep.subr.mxu0 0.0
  %3547 = vmatpush1.msra.mxu0 0.0
  %3548 = vmatprep.subr.mxu0 0.0
  %3549 = vmatpush1.msra.mxu0 0.0
  %3550 = vmatprep.subr.mxu0 0.0
  %3551 = vmatpush1.msra.mxu0 0.0
  %3552 = vmatprep.subr.mxu0 0.0
  %3553 = vmatpush1.msra.mxu0 0.0
  %3554 = vmatprep.subr.mxu0 0.0
  %3555 = vmatpush1.msra.mxu0 0.0
  %3556 = vmatprep.subr.mxu0 0.0
  %3557 = vmatpush1.msra.mxu0 0.0
  %3558 = vmatprep.subr.mxu0 0.0
  %3559 = vmatpush1.msra.mxu0 0.0
  %3560 = vmatprep.subr.mxu0 0.0
  %3561 = vmatpush1.msra.mxu0 0.0
  %3562 = vmatprep.subr.mxu0 0.0
  %3563 = vmatpush1.msra.mxu0 0.0
  %3564 = vmatprep.subr.mxu0 0.0
  %3565 = vmatpush1.msra.mxu0 0.0
  %3566 = vmatprep.subr.mxu0 0.0
  %3567 = vmatpush1.msra.mxu0 0.0
  %3568 = vmatprep.subr.mxu0 0.0
  %3569 = vmatpush1.msra.mxu0 0.0
  %3570 = vmatprep.subr.mxu0 0.0
  %3571 = vmatpush1.msra.mxu0 0.0
  %3572 = vmatprep.subr.mxu0 0.0
  %3573 = vmatpush1.msra.mxu0 0.0
  %3574 = vmatprep.subr.mxu0 0.0
  %3575 = vmatpush1.msra.mxu0 0.0
  %3576 = vmatprep.subr.mxu0 0.0
  %3577 = vmatpush1.msra.mxu0 0.0
  %3578 = vmatprep.subr.mxu0 0.0
  %3579 = vmatpush1.msra.mxu0 0.0
  %3580 = vmatprep.subr.mxu0 0.0
  %3581 = vmatpush1.msra.mxu0 0.0
  %3582 = vmatprep.subr.mxu0 0.0
  %3583 = vmatpush1.msra.mxu0 0.0
  %3584 = vmatprep.subr.mxu0 0.0
  %3585 = vmatpush1.msra.mxu0 0.0
  %3586 = vmatprep.mubr.f32.mxu0 0.0
  %3587 = vmatmul.mubr.f32.gmra.mrb[0].mxu0 %v2012
  %v3588 = vpop.f32.mrb[0].mxu0
  %v3589 = vadd.f32 0.0, %v3588
  %v3590 = vpop.f32.mrb[0].mxu0
  %3591 = vmatprep.mubr.f32.mxu0 0.0
  %3592 = vmatmul.mubr.f32.gmra.mrb[0].mxu0 %v2015
  %v3593 = vpop.f32.mrb[0].mxu0
  %v3594 = vadd.f32 0.0, %v3593
  %v3595 = vpop.f32.mrb[0].mxu0
  %3596 = vmatprep.mubr.f32.mxu0 0.0
  %3597 = vmatmul.mubr.f32.gmra.mrb[0].mxu0 %v2018
  %v3598 = vpop.f32.mrb[0].mxu0
  %v3599 = vadd.f32 0.0, %v3598
  %v3600 = vpop.f32.mrb[0].mxu0
  %3601 = vmatprep.mubr.f32.mxu0 0.0
  %3602 = vmatmul.mubr.f32.gmra.mrb[0].mxu0 %v2021
  %v3603 = vpop.f32.mrb[0].mxu0
  %v3604 = vadd.f32 0.0, %v3603
  %v3605 = vpop.f32.mrb[0].mxu0
  %3606 = vdwg.mxu0
  %3607 = vmatprep.subr.mxu0 0.0
  %3608 = vmatpush1.msra.mxu0 %v2692
  %3609 = vmatprep.subr.mxu0 0.0
  %3610 = vmatpush1.msra.mxu0 %v2693
  %3611 = vmatprep.subr.mxu0 0.0
  %3612 = vmatpush1.msra.mxu0 %v2694
  %3613 = vmatprep.subr.mxu0 0.0
  %3614 = vmatpush1.msra.mxu0 %v2695
  %3615 = vmatprep.subr.mxu0 0.0
  %3616 = vmatpush1.msra.mxu0 0.0
  %3617 = vmatprep.subr.mxu0 0.0
  %3618 = vmatpush1.msra.mxu0 0.0
  %3619 = vmatprep.subr.mxu0 0.0
  %3620 = vmatpush1.msra.mxu0 0.0
  %3621 = vmatprep.subr.mxu0 0.0
  %3622 = vmatpush1.msra.mxu0 0.0
  %3623 = vmatprep.subr.mxu0 0.0
  %3624 = vmatpush1.msra.mxu0 0.0
  %3625 = vmatprep.subr.mxu0 0.0
  %3626 = vmatpush1.msra.mxu0 0.0
  %3627 = vmatprep.subr.mxu0 0.0
  %3628 = vmatpush1.msra.mxu0 0.0
  %3629 = vmatprep.subr.mxu0 0.0
  %3630 = vmatpush1.msra.mxu0 0.0
  %3631 = vmatprep.subr.mxu0 0.0
  %3632 = vmatpush1.msra.mxu0 0.0
  %3633 = vmatprep.subr.mxu0 0.0
  %3634 = vmatpush1.msra.mxu0 0.0
  %3635 = vmatprep.subr.mxu0 0.0
  %3636 = vmatpush1.msra.mxu0 0.0
  %3637 = vmatprep.subr.mxu0 0.0
  %3638 = vmatpush1.msra.mxu0 0.0
  %3639 = vmatprep.subr.mxu0 0.0
  %3640 = vmatpush1.msra.mxu0 0.0
  %3641 = vmatprep.subr.mxu0 0.0
  %3642 = vmatpush1.msra.mxu0 0.0
  %3643 = vmatprep.subr.mxu0 0.0
  %3644 = vmatpush1.msra.mxu0 0.0
  %3645 = vmatprep.subr.mxu0 0.0
  %3646 = vmatpush1.msra.mxu0 0.0
  %3647 = vmatprep.subr.mxu0 0.0
  %3648 = vmatpush1.msra.mxu0 0.0
  %3649 = vmatprep.subr.mxu0 0.0
  %3650 = vmatpush1.msra.mxu0 0.0
  %3651 = vmatprep.subr.mxu0 0.0
  %3652 = vmatpush1.msra.mxu0 0.0
  %3653 = vmatprep.subr.mxu0 0.0
  %3654 = vmatpush1.msra.mxu0 0.0
  %3655 = vmatprep.subr.mxu0 0.0
  %3656 = vmatpush1.msra.mxu0 0.0
  %3657 = vmatprep.subr.mxu0 0.0
  %3658 = vmatpush1.msra.mxu0 0.0
  %3659 = vmatprep.subr.mxu0 0.0
  %3660 = vmatpush1.msra.mxu0 0.0
  %3661 = vmatprep.subr.mxu0 0.0
  %3662 = vmatpush1.msra.mxu0 0.0
  %3663 = vmatprep.subr.mxu0 0.0
  %3664 = vmatpush1.msra.mxu0 0.0
  %3665 = vmatprep.subr.mxu0 0.0
  %3666 = vmatpush1.msra.mxu0 0.0
  %3667 = vmatprep.subr.mxu0 0.0
  %3668 = vmatpush1.msra.mxu0 0.0
  %3669 = vmatprep.subr.mxu0 0.0
  %3670 = vmatpush1.msra.mxu0 0.0
  %3671 = vmatprep.mubr.f32.mxu0 0.0
  %3672 = vmatmul.mubr.f32.gmra.mrb[0].mxu0 %v2109
  %v3673 = vpop.f32.mrb[0].mxu0
  %v3674 = vadd.f32 0.0, %v3673
  %v3675 = vpop.f32.mrb[0].mxu0
  %3676 = vmatprep.mubr.f32.mxu0 0.0
  %3677 = vmatmul.mubr.f32.gmra.mrb[0].mxu0 %v2112
  %v3678 = vpop.f32.mrb[0].mxu0
  %v3679 = vadd.f32 0.0, %v3678
  %v3680 = vpop.f32.mrb[0].mxu0
  %3681 = vmatprep.mubr.f32.mxu0 0.0
  %3682 = vmatmul.mubr.f32.gmra.mrb[0].mxu0 %v2115
  %v3683 = vpop.f32.mrb[0].mxu0
  %v3684 = vadd.f32 0.0, %v3683
  %v3685 = vpop.f32.mrb[0].mxu0
  %3686 = vmatprep.mubr.f32.mxu0 0.0
  %3687 = vmatmul.mubr.f32.gmra.mrb[0].mxu0 %v2118
  %v3688 = vpop.f32.mrb[0].mxu0
  %v3689 = vadd.f32 0.0, %v3688
  %v3690 = vpop.f32.mrb[0].mxu0
  %3691 = vdwg.mxu0
  %v3692 = vpack.c.bf16 %v3594, %v3589
  %v3693 = vpack.c.bf16 %v2693, %v2692
  %v3694 = vpack.c.bf16 %v3679, %v3674
  %v3695 = vpack.c.bf16 %v3604, %v3599
  %v3696 = vpack.c.bf16 %v2695, %v2694
  %v3697 = vpack.c.bf16 %v3689, %v3684
  %v3698 = vld [vmem:[%s16] sm:$0xf]
  %v3699 = vld [vmem:[%s16 + $0x4] sm:$0xf]
  %v3700 = vld [vmem:[%s16 + $0x8] sm:$0xf]
  %v3701 = vld [vmem:[%s16 + $0xc] sm:$0xf]
  %v3702 = vld [vmem:[%s16 + $0x10] sm:$0xf]
  %v3703 = vld [vmem:[%s16 + $0x14] sm:$0xf]
  %v3704 = vld [vmem:[%s16 + $0x18] sm:$0xf]
  %v3705 = vld [vmem:[%s16 + $0x1c] sm:$0xf]
  %v3706 = vld [vmem:[%s16 + $0x20] sm:$0xf]
  %v3707 = vld [vmem:[%s16 + $0x24] sm:$0xf]
  %v3708 = vld [vmem:[%s16 + $0x28] sm:$0xf]
  %v3709 = vld [vmem:[%s16 + $0x2c] sm:$0xf]
  %v3710 = vld [vmem:[%s16 + $0x30] sm:$0xf]
  %v3711 = vld [vmem:[%s16 + $0x34] sm:$0xf]
  %v3712 = vld [vmem:[%s16 + $0x38] sm:$0xf]
  %v3713 = vld [vmem:[%s16 + $0x3c] sm:$0xf]
  %v3714 = vld [vmem:[%s16 + $0x40] sm:$0xf]
  %v3715 = vld [vmem:[%s16 + $0x44] sm:$0xf]
  %v3716 = vld [vmem:[%s16 + $0x48] sm:$0xf]
  %v3717 = vld [vmem:[%s16 + $0x4c] sm:$0xf]
  %v3718 = vld [vmem:[%s16 + $0x50] sm:$0xf]
  %v3719 = vld [vmem:[%s16 + $0x54] sm:$0xf]
  %v3720 = vld [vmem:[%s16 + $0x58] sm:$0xf]
  %v3721 = vld [vmem:[%s16 + $0x5c] sm:$0xf]
  %v3722 = vld [vmem:[%s16 + $0x60] sm:$0xf]
  %v3723 = vld [vmem:[%s16 + $0x64] sm:$0xf]
  %v3724 = vld [vmem:[%s16 + $0x68] sm:$0xf]
  %v3725 = vld [vmem:[%s16 + $0x6c] sm:$0xf]
  %v3726 = vld [vmem:[%s16 + $0x70] sm:$0xf]
  %v3727 = vld [vmem:[%s16 + $0x74] sm:$0xf]
  %v3728 = vld [vmem:[%s16 + $0x78] sm:$0xf]
  %v3729 = vld [vmem:[%s16 + $0x7c] sm:$0xf]
  %v3730 = vld [vmem:[%s16 + $0x80] sm:$0xf]
  %v3731 = vld [vmem:[%s16 + $0x84] sm:$0xf]
  %v3732 = vld [vmem:[%s16 + $0x88] sm:$0xf]
  %v3733 = vld [vmem:[%s16 + $0x8c] sm:$0xf]
  %v3734 = vld [vmem:[%s16 + $0x90] sm:$0xf]
  %v3735 = vld [vmem:[%s16 + $0x94] sm:$0xf]
  %v3736 = vld [vmem:[%s16 + $0x98] sm:$0xf]
  %v3737 = vld [vmem:[%s16 + $0x9c] sm:$0xf]
  %v3738 = vld [vmem:[%s16 + $0xa0] sm:$0xf]
  %v3739 = vld [vmem:[%s16 + $0xa4] sm:$0xf]
  %v3740 = vld [vmem:[%s16 + $0xa8] sm:$0xf]
  %v3741 = vld [vmem:[%s16 + $0xac] sm:$0xf]
  %v3742 = vld [vmem:[%s16 + $0xb0] sm:$0xf]
  %v3743 = vld [vmem:[%s16 + $0xb4] sm:$0xf]
  %v3744 = vld [vmem:[%s16 + $0xb8] sm:$0xf]
  %v3745 = vld [vmem:[%s16 + $0xbc] sm:$0xf]
  %v3794 = vunpack.c.l.b16 %v3698
  %v3795 = vunpack.c.l.b16 %v3699
  %v3796 = vunpack.c.l.b16 %v3700
  %v3797 = vunpack.c.l.b16 %v3701
  %v3798 = vunpack.c.l.b16 %v3702
  %v3799 = vunpack.c.l.b16 %v3703
  %v3800 = vunpack.c.l.b16 %v3704
  %v3801 = vunpack.c.l.b16 %v3705
  %v3802 = vunpack.c.l.b16 %v3706
  %v3803 = vunpack.c.l.b16 %v3707
  %v3804 = vunpack.c.l.b16 %v3708
  %v3805 = vunpack.c.l.b16 %v3709
  %v3806 = vunpack.c.l.b16 %v3710
  %v3807 = vunpack.c.l.b16 %v3711
  %v3808 = vunpack.c.l.b16 %v3712
  %v3809 = vunpack.c.l.b16 %v3713
  %v3810 = vunpack.c.l.b16 %v3714
  %v3811 = vunpack.c.l.b16 %v3715
  %v3812 = vunpack.c.l.b16 %v3716
  %v3813 = vunpack.c.l.b16 %v3717
  %v3814 = vunpack.c.l.b16 %v3718
  %v3815 = vunpack.c.l.b16 %v3719
  %v3816 = vunpack.c.l.b16 %v3720
  %v3817 = vunpack.c.l.b16 %v3721
  %v3818 = vunpack.c.l.b16 %v3722
  %v3819 = vunpack.c.l.b16 %v3723
  %v3820 = vunpack.c.l.b16 %v3724
  %v3821 = vunpack.c.l.b16 %v3725
  %v3822 = vunpack.c.l.b16 %v3726
  %v3823 = vunpack.c.l.b16 %v3727
  %v3824 = vunpack.c.l.b16 %v3728
  %v3825 = vunpack.c.l.b16 %v3729
  %v3826 = vunpack.c.l.b16 %v3730
  %v3827 = vunpack.c.l.b16 %v3731
  %v3828 = vunpack.c.l.b16 %v3732
  %v3829 = vunpack.c.l.b16 %v3733
  %v3830 = vunpack.c.l.b16 %v3734
  %v3831 = vunpack.c.l.b16 %v3735
  %v3832 = vunpack.c.l.b16 %v3736
  %v3833 = vunpack.c.l.b16 %v3737
  %v3834 = vunpack.c.l.b16 %v3738
  %v3835 = vunpack.c.l.b16 %v3739
  %v3836 = vunpack.c.l.b16 %v3740
  %v3837 = vunpack.c.l.b16 %v3741
  %v3838 = vunpack.c.l.b16 %v3742
  %v3839 = vunpack.c.l.b16 %v3743
  %v3840 = vunpack.c.l.b16 %v3744
  %v3841 = vunpack.c.l.b16 %v3745
  %v3842 = vpack.c.b16 %v3795, %v3794
  %v3843 = vpack.c.b16 %v3797, %v3796
  %v3844 = vpack.c.b16 %v3799, %v3798
  %v3845 = vpack.c.b16 %v3801, %v3800
  %v3846 = vpack.c.b16 %v3803, %v3802
  %v3847 = vpack.c.b16 %v3805, %v3804
  %v3848 = vpack.c.b16 %v3807, %v3806
  %v3849 = vpack.c.b16 %v3809, %v3808
  %v3850 = vpack.c.b16 %v3811, %v3810
  %v3851 = vpack.c.b16 %v3813, %v3812
  %v3852 = vpack.c.b16 %v3815, %v3814
  %v3853 = vpack.c.b16 %v3817, %v3816
  %v3854 = vpack.c.b16 %v3819, %v3818
  %v3855 = vpack.c.b16 %v3821, %v3820
  %v3856 = vpack.c.b16 %v3823, %v3822
  %v3857 = vpack.c.b16 %v3825, %v3824
  %v3858 = vpack.c.b16 %v3827, %v3826
  %v3859 = vpack.c.b16 %v3829, %v3828
  %v3860 = vpack.c.b16 %v3831, %v3830
  %v3861 = vpack.c.b16 %v3833, %v3832
  %v3862 = vpack.c.b16 %v3835, %v3834
  %v3863 = vpack.c.b16 %v3837, %v3836
  %v3864 = vpack.c.b16 %v3839, %v3838
  %v3865 = vpack.c.b16 %v3841, %v3840
  %3890 = vmatprep.subr.bf16.mxu0 0
  %3891 = vmatpush1.bf16.msra.mxu0 %v3842
  %3892 = vmatprep.subr.bf16.mxu0 0
  %3893 = vmatpush1.bf16.msra.mxu0 %v3843
  %3894 = vmatprep.subr.bf16.mxu0 0
  %3895 = vmatpush1.bf16.msra.mxu0 %v3844
  %3896 = vmatprep.subr.bf16.mxu0 0
  %3897 = vmatpush1.bf16.msra.mxu0 %v3845
  %3898 = vmatprep.subr.bf16.mxu0 0
  %3899 = vmatpush1.bf16.msra.mxu0 %v3846
  %3900 = vmatprep.subr.bf16.mxu0 0
  %3901 = vmatpush1.bf16.msra.mxu0 %v3847
  %3902 = vmatprep.subr.bf16.mxu0 0
  %3903 = vmatpush1.bf16.msra.mxu0 %v3848
  %3904 = vmatprep.subr.bf16.mxu0 0
  %3905 = vmatpush1.bf16.msra.mxu0 %v3849
  %3906 = vmatprep.subr.bf16.mxu0 0
  %3907 = vmatpush1.bf16.msra.mxu0 %v3850
  %3908 = vmatprep.subr.bf16.mxu0 0
  %3909 = vmatpush1.bf16.msra.mxu0 %v3851
  %3910 = vmatprep.subr.bf16.mxu0 0
  %3911 = vmatpush1.bf16.msra.mxu0 %v3852
  %3912 = vmatprep.subr.bf16.mxu0 0
  %3913 = vmatpush1.bf16.msra.mxu0 %v3853
  %3914 = vmatprep.subr.bf16.mxu0 0
  %3915 = vmatpush1.bf16.msra.mxu0 %v3854
  %3916 = vmatprep.subr.bf16.mxu0 0
  %3917 = vmatpush1.bf16.msra.mxu0 %v3855
  %3918 = vmatprep.subr.bf16.mxu0 0
  %3919 = vmatpush1.bf16.msra.mxu0 %v3856
  %3920 = vmatprep.subr.bf16.mxu0 0
  %3921 = vmatpush1.bf16.msra.mxu0 %v3857
  %3922 = vmatprep.mubr.bf16.mxu0 %v3693
  %3923 = vmatmul.mubr.bf16.gmra.mrb[0].mxu0 %v3692
  %v3924 = vpop.f32.mrb[0].mxu0
  %v3925 = vadd.f32 0.0, %v3924
  %v3926 = vpop.f32.mrb[0].mxu0
  %v3927 = vpop.f32.mrb[0].mxu0
  %v3928 = vadd.f32 0.0, %v3927
  %v3929 = vpop.f32.mrb[0].mxu0
  %3930 = vmatprep.mubr.bf16.mxu0 %v3696
  %3931 = vmatmul.mubr.bf16.gmra.mrb[0].mxu0 %v3695
  %v3932 = vpop.f32.mrb[0].mxu0
  %v3933 = vadd.f32 0.0, %v3932
  %v3934 = vpop.f32.mrb[0].mxu0
  %v3935 = vpop.f32.mrb[0].mxu0
  %v3936 = vadd.f32 0.0, %v3935
  %v3937 = vpop.f32.mrb[0].mxu0
  %3938 = vdwg.mxu0
  %3939 = vmatprep.subr.bf16.mxu0 0
  %3940 = vmatpush1.bf16.msra.mxu0 %v3858
  %3941 = vmatprep.subr.bf16.mxu0 0
  %3942 = vmatpush1.bf16.msra.mxu0 %v3859
  %3943 = vmatprep.subr.bf16.mxu0 0
  %3944 = vmatpush1.bf16.msra.mxu0 %v3860
  %3945 = vmatprep.subr.bf16.mxu0 0
  %3946 = vmatpush1.bf16.msra.mxu0 %v3861
  %3947 = vmatprep.subr.bf16.mxu0 0
  %3948 = vmatpush1.bf16.msra.mxu0 %v3862
  %3949 = vmatprep.subr.bf16.mxu0 0
  %3950 = vmatpush1.bf16.msra.mxu0 %v3863
  %3951 = vmatprep.subr.bf16.mxu0 0
  %3952 = vmatpush1.bf16.msra.mxu0 %v3864
  %3953 = vmatprep.subr.bf16.mxu0 0
  %3954 = vmatpush1.bf16.msra.mxu0 %v3865
  %3955 = vmatprep.subr.bf16.mxu0 0
  %3956 = vmatpush1.bf16.msra.mxu0 0
  %3957 = vmatprep.subr.bf16.mxu0 0
  %3958 = vmatpush1.bf16.msra.mxu0 0
  %3959 = vmatprep.subr.bf16.mxu0 0
  %3960 = vmatpush1.bf16.msra.mxu0 0
  %3961 = vmatprep.subr.bf16.mxu0 0
  %3962 = vmatpush1.bf16.msra.mxu0 0
  %3963 = vmatprep.subr.bf16.mxu0 0
  %3964 = vmatpush1.bf16.msra.mxu0 0
  %3965 = vmatprep.subr.bf16.mxu0 0
  %3966 = vmatpush1.bf16.msra.mxu0 0
  %3967 = vmatprep.subr.bf16.mxu0 0
  %3968 = vmatpush1.bf16.msra.mxu0 0
  %3969 = vmatprep.subr.bf16.mxu0 0
  %3970 = vmatpush1.bf16.msra.mxu0 0
  %3971 = vmatprep.mubr.bf16.mxu0 0
  %3972 = vmatmul.mubr.bf16.gmra.mrb[0].mxu0 %v3694
  %v3973 = vpop.f32.mrb[0].mxu0
  %v3974 = vadd.f32 %v3925, %v3973
  %v3975 = vpop.f32.mrb[0].mxu0
  %v3976 = vpop.f32.mrb[0].mxu0
  %v3977 = vadd.f32 %v3928, %v3976
  %v3978 = vpop.f32.mrb[0].mxu0
  %3979 = vmatprep.mubr.bf16.mxu0 0
  %3980 = vmatmul.mubr.bf16.gmra.mrb[0].mxu0 %v3697
  %v3981 = vpop.f32.mrb[0].mxu0
  %v3982 = vadd.f32 %v3933, %v3981
  %v3983 = vpop.f32.mrb[0].mxu0
  %v3984 = vpop.f32.mrb[0].mxu0
  %v3985 = vadd.f32 %v3936, %v3984
  %v3986 = vpop.f32.mrb[0].mxu0
  %3987 = vdwg.mxu0
  %v3988 = vadd.f32 %v3974, %v3977
  %v3989 = vadd.f32 %v3988, %v3982
  %v3990 = vadd.f32 %v3989, %v3985
  %v3991 = vrot.slane %v3990, 4
  %v3992 = vadd.f32 %v3990, %v3991
  %v3993 = vrot.slane %v3992, 2
  %v3994 = vadd.f32 %v3992, %v3993
  %v3995 = vrot.slane %v3994, 1
  %v3996 = vadd.f32 %v3994, %v3995
  %v3997 = vmul.f32 %v3974, %v3974
  %v3998 = vmul.f32 %v3977, %v3977
  %v3999 = vmul.f32 %v3982, %v3982
  %v4000 = vmul.f32 %v3985, %v3985
  %v4001 = vadd.f32 %v3997, %v3998
  %v4002 = vadd.f32 %v4001, %v3999
  %v4003 = vadd.f32 %v4002, %v4000
  %v4004 = vrot.slane %v4003, 4
  %v4005 = vadd.f32 %v4003, %v4004
  %v4006 = vrot.slane %v4005, 2
  %v4007 = vadd.f32 %v4005, %v4006
  %v4008 = vrot.slane %v4007, 1
  %v4009 = vadd.f32 %v4007, %v4008
  %4010 = vmatprep.subr.mxu0 %v2524
  %4011 = vmatpush1.msra.mxu0 %v2523
  %4012 = vmatprep.subr.mxu0 %v2526
  %4013 = vmatpush1.msra.mxu0 %v2525
  %4014 = vmatprep.subr.mxu0 %v2528
  %4015 = vmatpush1.msra.mxu0 %v2527
  %4016 = vmatprep.subr.mxu0 %v2530
  %4017 = vmatpush1.msra.mxu0 %v2529
  %4018 = vmatprep.subr.mxu0 %v2532
  %4019 = vmatpush1.msra.mxu0 %v2531
  %4020 = vmatprep.subr.mxu0 %v2534
  %4021 = vmatpush1.msra.mxu0 %v2533
  %4022 = vmatprep.subr.mxu0 %v2536
  %4023 = vmatpush1.msra.mxu0 %v2535
  %4024 = vmatprep.subr.mxu0 %v2538
  %4025 = vmatpush1.msra.mxu0 %v2537
  %4026 = vmatprep.subr.mxu0 %v2540
  %4027 = vmatpush1.msra.mxu0 %v2539
  %4028 = vmatprep.subr.mxu0 %v2542
  %4029 = vmatpush1.msra.mxu0 %v2541
  %4030 = vmatprep.subr.mxu0 %v2544
  %4031 = vmatpush1.msra.mxu0 %v2543
  %4032 = vmatprep.subr.mxu0 %v2546
  %4033 = vmatpush1.msra.mxu0 %v2545
  %4034 = vmatprep.subr.mxu0 %v2548
  %4035 = vmatpush1.msra.mxu0 %v2547
  %4036 = vmatprep.subr.mxu0 %v2550
  %4037 = vmatpush1.msra.mxu0 %v2549
  %4038 = vmatprep.subr.mxu0 %v2552
  %4039 = vmatpush1.msra.mxu0 %v2551
  %4040 = vmatprep.subr.mxu0 %v2554
  %4041 = vmatpush1.msra.mxu0 %v2553
  %4042 = vmatprep.subr.mxu0 %v2556
  %4043 = vmatpush1.msra.mxu0 %v2555
  %4044 = vmatprep.subr.mxu0 %v2558
  %4045 = vmatpush1.msra.mxu0 %v2557
  %4046 = vmatprep.subr.mxu0 %v2560
  %4047 = vmatpush1.msra.mxu0 %v2559
  %4048 = vmatprep.subr.mxu0 %v2562
  %4049 = vmatpush1.msra.mxu0 %v2561
  %4050 = vmatprep.subr.mxu0 %v2564
  %4051 = vmatpush1.msra.mxu0 %v2563
  %4052 = vmatprep.subr.mxu0 %v2566
  %4053 = vmatpush1.msra.mxu0 %v2565
  %4054 = vmatprep.subr.mxu0 %v2568
  %4055 = vmatpush1.msra.mxu0 %v2567
  %4056 = vmatprep.subr.mxu0 %v2570
  %4057 = vmatpush1.msra.mxu0 %v2569
  %4058 = vmatprep.subr.mxu0 %v2572
  %4059 = vmatpush1.msra.mxu0 %v2571
  %4060 = vmatprep.subr.mxu0 %v2574
  %4061 = vmatpush1.msra.mxu0 %v2573
  %4062 = vmatprep.subr.mxu0 %v2576
  %4063 = vmatpush1.msra.mxu0 %v2575
  %4064 = vmatprep.subr.mxu0 %v2578
  %4065 = vmatpush1.msra.mxu0 %v2577
  %4066 = vmatprep.subr.mxu0 %v2580
  %4067 = vmatpush1.msra.mxu0 %v2579
  %4068 = vmatprep.subr.mxu0 %v2582
  %4069 = vmatpush1.msra.mxu0 %v2581
  %4070 = vmatprep.subr.mxu0 %v2584
  %4071 = vmatpush1.msra.mxu0 %v2583
  %4072 = vmatprep.subr.mxu0 %v2586
  %4073 = vmatpush1.msra.mxu0 %v2585
  %4074 = vmatprep.mubr.f32.mxu0 %v4009
  %4075 = vmatmul.mubr.f32.gmra.mrb[0].mxu0 %v3996
  %v4076 = vpop.f32.mrb[0].mxu0
  %v4077 = vadd.f32 0.0, %v4076
  %v4078 = vpop.f32.mrb[0].mxu0
  %v4079 = vadd.f32 0.0, %v4078
  %4080 = vdwg.mxu0
  %v4081 = vmul.f32 %v4077, %v4077
  %v4082 = vsub.f32 %v4079, %v4081
  %v4083 = vmax.f32 %v4082, 0.0
  %v4084 = vadd.f32 %v4083, 1e-05
  %v4085 = vrsqrt.pop %v4084
  %v4086 = vld [vmem:[%s17] sm:$0x1]
  %v4087 = vmul.f32 %v4085, %v4086
  %v4088 = vld [vmem:[%s17 + $0x1] sm:$0x1]
  %v4089 = vmul.f32 %v4077, %v4087
  %v4090 = vsub.f32 %v4088, %v4089
  %v4091 = vlaneseq
  %v4092 = vshrl.u32 %v4091, 7
  %v4093 = vsub.s32 0, %v4092
  %v4094 = vrot.slane %v4087, %v4093
  %v4095 = vmul.f32 %v3974, %v4094
  %v4096 = vmul.f32 %v3977, %v4094
  %v4097 = vmul.f32 %v3982, %v4094
  %v4098 = vmul.f32 %v3985, %v4094
  %v4099 = vlaneseq
  %v4100 = vshrl.u32 %v4099, 7
  %v4101 = vsub.s32 0, %v4100
  %v4102 = vrot.slane %v4090, %v4101
  %v4103 = vadd.f32 %v4095, %v4102
  %v4104 = vadd.f32 %v4096, %v4102
  %v4105 = vadd.f32 %v4097, %v4102
  %v4106 = vadd.f32 %v4098, %v4102
  %v4107 = vadd.f32 %v3518, %v4103
  %v4108 = vadd.f32 %v3519, %v4104
  %v4109 = vadd.f32 %v3520, %v4105
  %v4110 = vadd.f32 %v3521, %v4106
  %v4111 = vtanh.pop %v4107
  %v4112 = vtanh.pop %v4108
  %v4113 = vtanh.pop %v4109
  %v4114 = vtanh.pop %v4110
  %v4115 = vld [vmem:[%s18] sm:$0xf]
  %v4116 = vld [vmem:[%s18 + $0x4] sm:$0xf]
  %v4117 = vld [vmem:[%s18 + $0x8] sm:$0xf]
  %v4118 = vld [vmem:[%s18 + $0xc] sm:$0xf]
  %v4119 = vld [vmem:[%s18 + $0x10] sm:$0xf]
  %v4120 = vld [vmem:[%s18 + $0x14] sm:$0xf]
  %v4121 = vld [vmem:[%s18 + $0x18] sm:$0xf]
  %v4122 = vld [vmem:[%s18 + $0x1c] sm:$0xf]
  %v4123 = vld [vmem:[%s18 + $0x20] sm:$0xf]
  %v4124 = vld [vmem:[%s18 + $0x24] sm:$0xf]
  %v4125 = vld [vmem:[%s18 + $0x28] sm:$0xf]
  %v4126 = vld [vmem:[%s18 + $0x2c] sm:$0xf]
  %v4127 = vld [vmem:[%s18 + $0x30] sm:$0xf]
  %v4128 = vld [vmem:[%s18 + $0x34] sm:$0xf]
  %v4129 = vld [vmem:[%s18 + $0x38] sm:$0xf]
  %v4130 = vld [vmem:[%s18 + $0x3c] sm:$0xf]
  %v4131 = vld [vmem:[%s18 + $0x40] sm:$0xf]
  %v4132 = vld [vmem:[%s18 + $0x44] sm:$0xf]
  %v4133 = vld [vmem:[%s18 + $0x48] sm:$0xf]
  %v4134 = vld [vmem:[%s18 + $0x4c] sm:$0xf]
  %v4135 = vld [vmem:[%s18 + $0x50] sm:$0xf]
  %v4136 = vld [vmem:[%s18 + $0x54] sm:$0xf]
  %v4137 = vld [vmem:[%s18 + $0x58] sm:$0xf]
  %v4138 = vld [vmem:[%s18 + $0x5c] sm:$0xf]
  %v4139 = vld [vmem:[%s18 + $0x60] sm:$0xf]
  %v4140 = vld [vmem:[%s18 + $0x64] sm:$0xf]
  %v4141 = vld [vmem:[%s18 + $0x68] sm:$0xf]
  %v4142 = vld [vmem:[%s18 + $0x6c] sm:$0xf]
  %v4143 = vld [vmem:[%s18 + $0x70] sm:$0xf]
  %v4144 = vld [vmem:[%s18 + $0x74] sm:$0xf]
  %v4145 = vld [vmem:[%s18 + $0x78] sm:$0xf]
  %v4146 = vld [vmem:[%s18 + $0x7c] sm:$0xf]
  %v4147 = vld [vmem:[%s18 + $0x80] sm:$0xf]
  %v4148 = vld [vmem:[%s18 + $0x84] sm:$0xf]
  %v4149 = vld [vmem:[%s18 + $0x88] sm:$0xf]
  %v4150 = vld [vmem:[%s18 + $0x8c] sm:$0xf]
  %v4151 = vld [vmem:[%s18 + $0x90] sm:$0xf]
  %v4152 = vld [vmem:[%s18 + $0x94] sm:$0xf]
  %v4153 = vld [vmem:[%s18 + $0x98] sm:$0xf]
  %v4154 = vld [vmem:[%s18 + $0x9c] sm:$0xf]
  %v4155 = vld [vmem:[%s18 + $0xa0] sm:$0xf]
  %v4156 = vld [vmem:[%s18 + $0xa4] sm:$0xf]
  %v4157 = vld [vmem:[%s18 + $0xa8] sm:$0xf]
  %v4158 = vld [vmem:[%s18 + $0xac] sm:$0xf]
  %v4159 = vld [vmem:[%s18 + $0xb0] sm:$0xf]
  %v4160 = vld [vmem:[%s18 + $0xb4] sm:$0xf]
  %v4161 = vld [vmem:[%s18 + $0xb8] sm:$0xf]
  %v4162 = vld [vmem:[%s18 + $0xbc] sm:$0xf]
  %v4211 = vunpack.c.l.b16 %v4115
  %v4212 = vunpack.c.l.b16 %v4116
  %v4213 = vunpack.c.l.b16 %v4117
  %v4214 = vunpack.c.l.b16 %v4118
  %v4215 = vunpack.c.l.b16 %v4119
  %v4216 = vunpack.c.l.b16 %v4120
  %v4217 = vunpack.c.l.b16 %v4121
  %v4218 = vunpack.c.l.b16 %v4122
  %v4219 = vunpack.c.l.b16 %v4123
  %v4220 = vunpack.c.l.b16 %v4124
  %v4221 = vunpack.c.l.b16 %v4125
  %v4222 = vunpack.c.l.b16 %v4126
  %v4223 = vunpack.c.l.b16 %v4127
  %v4224 = vunpack.c.l.b16 %v4128
  %v4225 = vunpack.c.l.b16 %v4129
  %v4226 = vunpack.c.l.b16 %v4130
  %v4227 = vunpack.c.l.b16 %v4131
  %v4228 = vunpack.c.l.b16 %v4132
  %v4229 = vunpack.c.l.b16 %v4133
  %v4230 = vunpack.c.l.b16 %v4134
  %v4231 = vunpack.c.l.b16 %v4135
  %v4232 = vunpack.c.l.b16 %v4136
  %v4233 = vunpack.c.l.b16 %v4137
  %v4234 = vunpack.c.l.b16 %v4138
  %v4235 = vunpack.c.l.b16 %v4139
  %v4236 = vunpack.c.l.b16 %v4140
  %v4237 = vunpack.c.l.b16 %v4141
  %v4238 = vunpack.c.l.b16 %v4142
  %v4239 = vunpack.c.l.b16 %v4143
  %v4240 = vunpack.c.l.b16 %v4144
  %v4241 = vunpack.c.l.b16 %v4145
  %v4242 = vunpack.c.l.b16 %v4146
  %v4243 = vunpack.c.l.b16 %v4147
  %v4244 = vunpack.c.l.b16 %v4148
  %v4245 = vunpack.c.l.b16 %v4149
  %v4246 = vunpack.c.l.b16 %v4150
  %v4247 = vunpack.c.l.b16 %v4151
  %v4248 = vunpack.c.l.b16 %v4152
  %v4249 = vunpack.c.l.b16 %v4153
  %v4250 = vunpack.c.l.b16 %v4154
  %v4251 = vunpack.c.l.b16 %v4155
  %v4252 = vunpack.c.l.b16 %v4156
  %v4253 = vunpack.c.l.b16 %v4157
  %v4254 = vunpack.c.l.b16 %v4158
  %v4255 = vunpack.c.l.b16 %v4159
  %v4256 = vunpack.c.l.b16 %v4160
  %v4257 = vunpack.c.l.b16 %v4161
  %v4258 = vunpack.c.l.b16 %v4162
  %v4259 = vpack.c.b16 %v4212, %v4211
  %v4260 = vpack.c.b16 %v4214, %v4213
  %v4261 = vpack.c.b16 %v4216, %v4215
  %v4262 = vpack.c.b16 %v4218, %v4217
  %v4263 = vpack.c.b16 %v4220, %v4219
  %v4264 = vpack.c.b16 %v4222, %v4221
  %v4265 = vpack.c.b16 %v4224, %v4223
  %v4266 = vpack.c.b16 %v4226, %v4225
  %v4267 = vpack.c.b16 %v4228, %v4227
  %v4268 = vpack.c.b16 %v4230, %v4229
  %v4269 = vpack.c.b16 %v4232, %v4231
  %v4270 = vpack.c.b16 %v4234, %v4233
  %v4271 = vpack.c.b16 %v4236, %v4235
  %v4272 = vpack.c.b16 %v4238, %v4237
  %v4273 = vpack.c.b16 %v4240, %v4239
  %v4274 = vpack.c.b16 %v4242, %v4241
  %v4275 = vpack.c.b16 %v4244, %v4243
  %v4276 = vpack.c.b16 %v4246, %v4245
  %v4277 = vpack.c.b16 %v4248, %v4247
  %v4278 = vpack.c.b16 %v4250, %v4249
  %v4279 = vpack.c.b16 %v4252, %v4251
  %v4280 = vpack.c.b16 %v4254, %v4253
  %v4281 = vpack.c.b16 %v4256, %v4255
  %v4282 = vpack.c.b16 %v4258, %v4257
  %4307 = vmatprep.subr.bf16.mxu0 0
  %4308 = vmatpush1.bf16.msra.mxu0 %v4259
  %4309 = vmatprep.subr.bf16.mxu0 0
  %4310 = vmatpush1.bf16.msra.mxu0 %v4260
  %4311 = vmatprep.subr.bf16.mxu0 0
  %4312 = vmatpush1.bf16.msra.mxu0 %v4261
  %4313 = vmatprep.subr.bf16.mxu0 0
  %4314 = vmatpush1.bf16.msra.mxu0 %v4262
  %4315 = vmatprep.subr.bf16.mxu0 0
  %4316 = vmatpush1.bf16.msra.mxu0 %v4263
  %4317 = vmatprep.subr.bf16.mxu0 0
  %4318 = vmatpush1.bf16.msra.mxu0 %v4264
  %4319 = vmatprep.subr.bf16.mxu0 0
  %4320 = vmatpush1.bf16.msra.mxu0 %v4265
  %4321 = vmatprep.subr.bf16.mxu0 0
  %4322 = vmatpush1.bf16.msra.mxu0 %v4266
  %4323 = vmatprep.subr.bf16.mxu0 0
  %4324 = vmatpush1.bf16.msra.mxu0 %v4267
  %4325 = vmatprep.subr.bf16.mxu0 0
  %4326 = vmatpush1.bf16.msra.mxu0 %v4268
  %4327 = vmatprep.subr.bf16.mxu0 0
  %4328 = vmatpush1.bf16.msra.mxu0 %v4269
  %4329 = vmatprep.subr.bf16.mxu0 0
  %4330 = vmatpush1.bf16.msra.mxu0 %v4270
  %4331 = vmatprep.subr.bf16.mxu0 0
  %4332 = vmatpush1.bf16.msra.mxu0 %v4271
  %4333 = vmatprep.subr.bf16.mxu0 0
  %4334 = vmatpush1.bf16.msra.mxu0 %v4272
  %4335 = vmatprep.subr.bf16.mxu0 0
  %4336 = vmatpush1.bf16.msra.mxu0 %v4273
  %4337 = vmatprep.subr.bf16.mxu0 0
  %4338 = vmatpush1.bf16.msra.mxu0 %v4274
  %4339 = vmatprep.mubr.bf16.mxu0 %v163
  %4340 = vmatmul.mubr.bf16.gmra.mrb[0].mxu0 %v162
  %v4341 = vpop.f32.mrb[0].mxu0
  %v4342 = vadd.f32 0.0, %v4341
  %v4343 = vpop.f32.mrb[0].mxu0
  %v4344 = vpop.f32.mrb[0].mxu0
  %v4345 = vadd.f32 0.0, %v4344
  %v4346 = vpop.f32.mrb[0].mxu0
  %4347 = vmatprep.mubr.bf16.mxu0 %v166
  %4348 = vmatmul.mubr.bf16.gmra.mrb[0].mxu0 %v165
  %v4349 = vpop.f32.mrb[0].mxu0
  %v4350 = vadd.f32 0.0, %v4349
  %v4351 = vpop.f32.mrb[0].mxu0
  %v4352 = vpop.f32.mrb[0].mxu0
  %v4353 = vadd.f32 0.0, %v4352
  %v4354 = vpop.f32.mrb[0].mxu0
  %4355 = vdwg.mxu0
  %4356 = vmatprep.subr.bf16.mxu0 0
  %4357 = vmatpush1.bf16.msra.mxu0 %v4275
  %4358 = vmatprep.subr.bf16.mxu0 0
  %4359 = vmatpush1.bf16.msra.mxu0 %v4276
  %4360 = vmatprep.subr.bf16.mxu0 0
  %4361 = vmatpush1.bf16.msra.mxu0 %v4277
  %4362 = vmatprep.subr.bf16.mxu0 0
  %4363 = vmatpush1.bf16.msra.mxu0 %v4278
  %4364 = vmatprep.subr.bf16.mxu0 0
  %4365 = vmatpush1.bf16.msra.mxu0 %v4279
  %4366 = vmatprep.subr.bf16.mxu0 0
  %4367 = vmatpush1.bf16.msra.mxu0 %v4280
  %4368 = vmatprep.subr.bf16.mxu0 0
  %4369 = vmatpush1.bf16.msra.mxu0 %v4281
  %4370 = vmatprep.subr.bf16.mxu0 0
  %4371 = vmatpush1.bf16.msra.mxu0 %v4282
  %4372 = vmatprep.subr.bf16.mxu0 0
  %4373 = vmatpush1.bf16.msra.mxu0 0
  %4374 = vmatprep.subr.bf16.mxu0 0
  %4375 = vmatpush1.bf16.msra.mxu0 0
  %4376 = vmatprep.subr.bf16.mxu0 0
  %4377 = vmatpush1.bf16.msra.mxu0 0
  %4378 = vmatprep.subr.bf16.mxu0 0
  %4379 = vmatpush1.bf16.msra.mxu0 0
  %4380 = vmatprep.subr.bf16.mxu0 0
  %4381 = vmatpush1.bf16.msra.mxu0 0
  %4382 = vmatprep.subr.bf16.mxu0 0
  %4383 = vmatpush1.bf16.msra.mxu0 0
  %4384 = vmatprep.subr.bf16.mxu0 0
  %4385 = vmatpush1.bf16.msra.mxu0 0
  %4386 = vmatprep.subr.bf16.mxu0 0
  %4387 = vmatpush1.bf16.msra.mxu0 0
  %4388 = vmatprep.mubr.bf16.mxu0 0
  %4389 = vmatmul.mubr.bf16.gmra.mrb[0].mxu0 %v164
  %v4390 = vpop.f32.mrb[0].mxu0
  %v4391 = vadd.f32 %v4342, %v4390
  %v4392 = vpop.f32.mrb[0].mxu0
  %v4393 = vpop.f32.mrb[0].mxu0
  %v4394 = vadd.f32 %v4345, %v4393
  %v4395 = vpop.f32.mrb[0].mxu0
  %4396 = vmatprep.mubr.bf16.mxu0 0
  %4397 = vmatmul.mubr.bf16.gmra.mrb[0].mxu0 %v167
  %v4398 = vpop.f32.mrb[0].mxu0
  %v4399 = vadd.f32 %v4350, %v4398
  %v4400 = vpop.f32.mrb[0].mxu0
  %v4401 = vpop.f32.mrb[0].mxu0
  %v4402 = vadd.f32 %v4353, %v4401
  %v4403 = vpop.f32.mrb[0].mxu0
  %4404 = vdwg.mxu0
  %v4405 = vadd.f32 %v4391, %v4394
  %v4406 = vadd.f32 %v4405, %v4399
  %v4407 = vadd.f32 %v4406, %v4402
  %v4408 = vrot.slane %v4407, 4
  %v4409 = vadd.f32 %v4407, %v4408
  %v4410 = vrot.slane %v4409, 2
  %v4411 = vadd.f32 %v4409, %v4410
  %v4412 = vrot.slane %v4411, 1
  %v4413 = vadd.f32 %v4411, %v4412
  %v4414 = vmul.f32 %v4391, %v4391
  %v4415 = vmul.f32 %v4394, %v4394
  %v4416 = vmul.f32 %v4399, %v4399
  %v4417 = vmul.f32 %v4402, %v4402
  %v4418 = vadd.f32 %v4414, %v4415
  %v4419 = vadd.f32 %v4418, %v4416
  %v4420 = vadd.f32 %v4419, %v4417
  %v4421 = vrot.slane %v4420, 4
  %v4422 = vadd.f32 %v4420, %v4421
  %v4423 = vrot.slane %v4422, 2
  %v4424 = vadd.f32 %v4422, %v4423
  %v4425 = vrot.slane %v4424, 1
  %v4426 = vadd.f32 %v4424, %v4425
  %4427 = vmatprep.subr.mxu0 %v2524
  %4428 = vmatpush1.msra.mxu0 %v2523
  %4429 = vmatprep.subr.mxu0 %v2526
  %4430 = vmatpush1.msra.mxu0 %v2525
  %4431 = vmatprep.subr.mxu0 %v2528
  %4432 = vmatpush1.msra.mxu0 %v2527
  %4433 = vmatprep.subr.mxu0 %v2530
  %4434 = vmatpush1.msra.mxu0 %v2529
  %4435 = vmatprep.subr.mxu0 %v2532
  %4436 = vmatpush1.msra.mxu0 %v2531
  %4437 = vmatprep.subr.mxu0 %v2534
  %4438 = vmatpush1.msra.mxu0 %v2533
  %4439 = vmatprep.subr.mxu0 %v2536
  %4440 = vmatpush1.msra.mxu0 %v2535
  %4441 = vmatprep.subr.mxu0 %v2538
  %4442 = vmatpush1.msra.mxu0 %v2537
  %4443 = vmatprep.subr.mxu0 %v2540
  %4444 = vmatpush1.msra.mxu0 %v2539
  %4445 = vmatprep.subr.mxu0 %v2542
  %4446 = vmatpush1.msra.mxu0 %v2541
  %4447 = vmatprep.subr.mxu0 %v2544
  %4448 = vmatpush1.msra.mxu0 %v2543
  %4449 = vmatprep.subr.mxu0 %v2546
  %4450 = vmatpush1.msra.mxu0 %v2545
  %4451 = vmatprep.subr.mxu0 %v2548
  %4452 = vmatpush1.msra.mxu0 %v2547
  %4453 = vmatprep.subr.mxu0 %v2550
  %4454 = vmatpush1.msra.mxu0 %v2549
  %4455 = vmatprep.subr.mxu0 %v2552
  %4456 = vmatpush1.msra.mxu0 %v2551
  %4457 = vmatprep.subr.mxu0 %v2554
  %4458 = vmatpush1.msra.mxu0 %v2553
  %4459 = vmatprep.subr.mxu0 %v2556
  %4460 = vmatpush1.msra.mxu0 %v2555
  %4461 = vmatprep.subr.mxu0 %v2558
  %4462 = vmatpush1.msra.mxu0 %v2557
  %4463 = vmatprep.subr.mxu0 %v2560
  %4464 = vmatpush1.msra.mxu0 %v2559
  %4465 = vmatprep.subr.mxu0 %v2562
  %4466 = vmatpush1.msra.mxu0 %v2561
  %4467 = vmatprep.subr.mxu0 %v2564
  %4468 = vmatpush1.msra.mxu0 %v2563
  %4469 = vmatprep.subr.mxu0 %v2566
  %4470 = vmatpush1.msra.mxu0 %v2565
  %4471 = vmatprep.subr.mxu0 %v2568
  %4472 = vmatpush1.msra.mxu0 %v2567
  %4473 = vmatprep.subr.mxu0 %v2570
  %4474 = vmatpush1.msra.mxu0 %v2569
  %4475 = vmatprep.subr.mxu0 %v2572
  %4476 = vmatpush1.msra.mxu0 %v2571
  %4477 = vmatprep.subr.mxu0 %v2574
  %4478 = vmatpush1.msra.mxu0 %v2573
  %4479 = vmatprep.subr.mxu0 %v2576
  %4480 = vmatpush1.msra.mxu0 %v2575
  %4481 = vmatprep.subr.mxu0 %v2578
  %4482 = vmatpush1.msra.mxu0 %v2577
  %4483 = vmatprep.subr.mxu0 %v2580
  %4484 = vmatpush1.msra.mxu0 %v2579
  %4485 = vmatprep.subr.mxu0 %v2582
  %4486 = vmatpush1.msra.mxu0 %v2581
  %4487 = vmatprep.subr.mxu0 %v2584
  %4488 = vmatpush1.msra.mxu0 %v2583
  %4489 = vmatprep.subr.mxu0 %v2586
  %4490 = vmatpush1.msra.mxu0 %v2585
  %4491 = vmatprep.mubr.f32.mxu0 %v4426
  %4492 = vmatmul.mubr.f32.gmra.mrb[0].mxu0 %v4413
  %v4493 = vpop.f32.mrb[0].mxu0
  %v4494 = vadd.f32 0.0, %v4493
  %v4495 = vpop.f32.mrb[0].mxu0
  %v4496 = vadd.f32 0.0, %v4495
  %4497 = vdwg.mxu0
  %v4498 = vmul.f32 %v4494, %v4494
  %v4499 = vsub.f32 %v4496, %v4498
  %v4500 = vmax.f32 %v4499, 0.0
  %v4501 = vadd.f32 %v4500, 1e-05
  %v4502 = vrsqrt.pop %v4501
  %v4503 = vld [vmem:[%s19] sm:$0x1]
  %v4504 = vmul.f32 %v4502, %v4503
  %v4505 = vld [vmem:[%s19 + $0x1] sm:$0x1]
  %v4506 = vmul.f32 %v4494, %v4504
  %v4507 = vsub.f32 %v4505, %v4506
  %v4508 = vlaneseq
  %v4509 = vshrl.u32 %v4508, 7
  %v4510 = vsub.s32 0, %v4509
  %v4511 = vrot.slane %v4504, %v4510
  %v4512 = vmul.f32 %v4391, %v4511
  %v4513 = vmul.f32 %v4394, %v4511
  %v4514 = vmul.f32 %v4399, %v4511
  %v4515 = vmul.f32 %v4402, %v4511
  %v4516 = vlaneseq
  %v4517 = vshrl.u32 %v4516, 7
  %v4518 = vsub.s32 0, %v4517
  %v4519 = vrot.slane %v4507, %v4518
  %v4520 = vadd.f32 %v4512, %v4519
  %v4521 = vadd.f32 %v4513, %v4519
  %v4522 = vadd.f32 %v4514, %v4519
  %v4523 = vadd.f32 %v4515, %v4519
  %v4524 = vadd.f32 %v4520, 0.0
  %v4525 = vadd.f32 %v4521, 0.0
  %v4526 = vadd.f32 %v4522, 0.0
  %v4527 = vadd.f32 %v4523, 0.0
  %v4528 = vld [vmem:[%s20] sm:$0xf]
  %v4529 = vld [vmem:[%s20 + $0x4] sm:$0xf]
  %v4530 = vld [vmem:[%s20 + $0x8] sm:$0xf]
  %v4531 = vld [vmem:[%s20 + $0xc] sm:$0xf]
  %v4532 = vld [vmem:[%s20 + $0x10] sm:$0xf]
  %v4533 = vld [vmem:[%s20 + $0x14] sm:$0xf]
  %v4534 = vld [vmem:[%s20 + $0x18] sm:$0xf]
  %v4535 = vld [vmem:[%s20 + $0x1c] sm:$0xf]
  %v4536 = vld [vmem:[%s20 + $0x20] sm:$0xf]
  %v4537 = vld [vmem:[%s20 + $0x24] sm:$0xf]
  %v4538 = vld [vmem:[%s20 + $0x28] sm:$0xf]
  %v4539 = vld [vmem:[%s20 + $0x2c] sm:$0xf]
  %v4540 = vld [vmem:[%s20 + $0x30] sm:$0xf]
  %v4541 = vld [vmem:[%s20 + $0x34] sm:$0xf]
  %v4542 = vld [vmem:[%s20 + $0x38] sm:$0xf]
  %v4543 = vld [vmem:[%s20 + $0x3c] sm:$0xf]
  %v4544 = vld [vmem:[%s20 + $0x40] sm:$0xf]
  %v4545 = vld [vmem:[%s20 + $0x44] sm:$0xf]
  %v4546 = vld [vmem:[%s20 + $0x48] sm:$0xf]
  %v4547 = vld [vmem:[%s20 + $0x4c] sm:$0xf]
  %v4548 = vld [vmem:[%s20 + $0x50] sm:$0xf]
  %v4549 = vld [vmem:[%s20 + $0x54] sm:$0xf]
  %v4550 = vld [vmem:[%s20 + $0x58] sm:$0xf]
  %v4551 = vld [vmem:[%s20 + $0x5c] sm:$0xf]
  %v4552 = vld [vmem:[%s20 + $0x60] sm:$0xf]
  %v4553 = vld [vmem:[%s20 + $0x64] sm:$0xf]
  %v4554 = vld [vmem:[%s20 + $0x68] sm:$0xf]
  %v4555 = vld [vmem:[%s20 + $0x6c] sm:$0xf]
  %v4556 = vld [vmem:[%s20 + $0x70] sm:$0xf]
  %v4557 = vld [vmem:[%s20 + $0x74] sm:$0xf]
  %v4558 = vld [vmem:[%s20 + $0x78] sm:$0xf]
  %v4559 = vld [vmem:[%s20 + $0x7c] sm:$0xf]
  %v4560 = vld [vmem:[%s20 + $0x80] sm:$0xf]
  %v4561 = vld [vmem:[%s20 + $0x84] sm:$0xf]
  %v4562 = vld [vmem:[%s20 + $0x88] sm:$0xf]
  %v4563 = vld [vmem:[%s20 + $0x8c] sm:$0xf]
  %v4564 = vld [vmem:[%s20 + $0x90] sm:$0xf]
  %v4565 = vld [vmem:[%s20 + $0x94] sm:$0xf]
  %v4566 = vld [vmem:[%s20 + $0x98] sm:$0xf]
  %v4567 = vld [vmem:[%s20 + $0x9c] sm:$0xf]
  %v4568 = vld [vmem:[%s20 + $0xa0] sm:$0xf]
  %v4569 = vld [vmem:[%s20 + $0xa4] sm:$0xf]
  %v4570 = vld [vmem:[%s20 + $0xa8] sm:$0xf]
  %v4571 = vld [vmem:[%s20 + $0xac] sm:$0xf]
  %v4572 = vld [vmem:[%s20 + $0xb0] sm:$0xf]
  %v4573 = vld [vmem:[%s20 + $0xb4] sm:$0xf]
  %v4574 = vld [vmem:[%s20 + $0xb8] sm:$0xf]
  %v4575 = vld [vmem:[%s20 + $0xbc] sm:$0xf]
  %v4624 = vunpack.c.l.b16 %v4528
  %v4625 = vunpack.c.l.b16 %v4529
  %v4626 = vunpack.c.l.b16 %v4530
  %v4627 = vunpack.c.l.b16 %v4531
  %v4628 = vunpack.c.l.b16 %v4532
  %v4629 = vunpack.c.l.b16 %v4533
  %v4630 = vunpack.c.l.b16 %v4534
  %v4631 = vunpack.c.l.b16 %v4535
  %v4632 = vunpack.c.l.b16 %v4536
  %v4633 = vunpack.c.l.b16 %v4537
  %v4634 = vunpack.c.l.b16 %v4538
  %v4635 = vunpack.c.l.b16 %v4539
  %v4636 = vunpack.c.l.b16 %v4540
  %v4637 = vunpack.c.l.b16 %v4541
  %v4638 = vunpack.c.l.b16 %v4542
  %v4639 = vunpack.c.l.b16 %v4543
  %v4640 = vunpack.c.l.b16 %v4544
  %v4641 = vunpack.c.l.b16 %v4545
  %v4642 = vunpack.c.l.b16 %v4546
  %v4643 = vunpack.c.l.b16 %v4547
  %v4644 = vunpack.c.l.b16 %v4548
  %v4645 = vunpack.c.l.b16 %v4549
  %v4646 = vunpack.c.l.b16 %v4550
  %v4647 = vunpack.c.l.b16 %v4551
  %v4648 = vunpack.c.l.b16 %v4552
  %v4649 = vunpack.c.l.b16 %v4553
  %v4650 = vunpack.c.l.b16 %v4554
  %v4651 = vunpack.c.l.b16 %v4555
  %v4652 = vunpack.c.l.b16 %v4556
  %v4653 = vunpack.c.l.b16 %v4557
  %v4654 = vunpack.c.l.b16 %v4558
  %v4655 = vunpack.c.l.b16 %v4559
  %v4656 = vunpack.c.l.b16 %v4560
  %v4657 = vunpack.c.l.b16 %v4561
  %v4658 = vunpack.c.l.b16 %v4562
  %v4659 = vunpack.c.l.b16 %v4563
  %v4660 = vunpack.c.l.b16 %v4564
  %v4661 = vunpack.c.l.b16 %v4565
  %v4662 = vunpack.c.l.b16 %v4566
  %v4663 = vunpack.c.l.b16 %v4567
  %v4664 = vunpack.c.l.b16 %v4568
  %v4665 = vunpack.c.l.b16 %v4569
  %v4666 = vunpack.c.l.b16 %v4570
  %v4667 = vunpack.c.l.b16 %v4571
  %v4668 = vunpack.c.l.b16 %v4572
  %v4669 = vunpack.c.l.b16 %v4573
  %v4670 = vunpack.c.l.b16 %v4574
  %v4671 = vunpack.c.l.b16 %v4575
  %v4672 = vpack.c.b16 %v4625, %v4624
  %v4673 = vpack.c.b16 %v4627, %v4626
  %v4674 = vpack.c.b16 %v4629, %v4628
  %v4675 = vpack.c.b16 %v4631, %v4630
  %v4676 = vpack.c.b16 %v4633, %v4632
  %v4677 = vpack.c.b16 %v4635, %v4634
  %v4678 = vpack.c.b16 %v4637, %v4636
  %v4679 = vpack.c.b16 %v4639, %v4638
  %v4680 = vpack.c.b16 %v4641, %v4640
  %v4681 = vpack.c.b16 %v4643, %v4642
  %v4682 = vpack.c.b16 %v4645, %v4644
  %v4683 = vpack.c.b16 %v4647, %v4646
  %v4684 = vpack.c.b16 %v4649, %v4648
  %v4685 = vpack.c.b16 %v4651, %v4650
  %v4686 = vpack.c.b16 %v4653, %v4652
  %v4687 = vpack.c.b16 %v4655, %v4654
  %v4688 = vpack.c.b16 %v4657, %v4656
  %v4689 = vpack.c.b16 %v4659, %v4658
  %v4690 = vpack.c.b16 %v4661, %v4660
  %v4691 = vpack.c.b16 %v4663, %v4662
  %v4692 = vpack.c.b16 %v4665, %v4664
  %v4693 = vpack.c.b16 %v4667, %v4666
  %v4694 = vpack.c.b16 %v4669, %v4668
  %v4695 = vpack.c.b16 %v4671, %v4670
  %4720 = vmatprep.subr.bf16.mxu0 0
  %4721 = vmatpush1.bf16.msra.mxu0 %v4672
  %4722 = vmatprep.subr.bf16.mxu0 0
  %4723 = vmatpush1.bf16.msra.mxu0 %v4673
  %4724 = vmatprep.subr.bf16.mxu0 0
  %4725 = vmatpush1.bf16.msra.mxu0 %v4674
  %4726 = vmatprep.subr.bf16.mxu0 0
  %4727 = vmatpush1.bf16.msra.mxu0 %v4675
  %4728 = vmatprep.subr.bf16.mxu0 0
  %4729 = vmatpush1.bf16.msra.mxu0 %v4676
  %4730 = vmatprep.subr.bf16.mxu0 0
  %4731 = vmatpush1.bf16.msra.mxu0 %v4677
  %4732 = vmatprep.subr.bf16.mxu0 0
  %4733 = vmatpush1.bf16.msra.mxu0 %v4678
  %4734 = vmatprep.subr.bf16.mxu0 0
  %4735 = vmatpush1.bf16.msra.mxu0 %v4679
  %4736 = vmatprep.subr.bf16.mxu0 0
  %4737 = vmatpush1.bf16.msra.mxu0 %v4680
  %4738 = vmatprep.subr.bf16.mxu0 0
  %4739 = vmatpush1.bf16.msra.mxu0 %v4681
  %4740 = vmatprep.subr.bf16.mxu0 0
  %4741 = vmatpush1.bf16.msra.mxu0 %v4682
  %4742 = vmatprep.subr.bf16.mxu0 0
  %4743 = vmatpush1.bf16.msra.mxu0 %v4683
  %4744 = vmatprep.subr.bf16.mxu0 0
  %4745 = vmatpush1.bf16.msra.mxu0 %v4684
  %4746 = vmatprep.subr.bf16.mxu0 0
  %4747 = vmatpush1.bf16.msra.mxu0 %v4685
  %4748 = vmatprep.subr.bf16.mxu0 0
  %4749 = vmatpush1.bf16.msra.mxu0 %v4686
  %4750 = vmatprep.subr.bf16.mxu0 0
  %4751 = vmatpush1.bf16.msra.mxu0 %v4687
  %4752 = vmatprep.mubr.bf16.mxu0 %v3693
  %4753 = vmatmul.mubr.bf16.gmra.mrb[0].mxu0 %v3692
  %v4754 = vpop.f32.mrb[0].mxu0
  %v4755 = vadd.f32 0.0, %v4754
  %v4756 = vpop.f32.mrb[0].mxu0
  %v4757 = vpop.f32.mrb[0].mxu0
  %v4758 = vadd.f32 0.0, %v4757
  %v4759 = vpop.f32.mrb[0].mxu0
  %4760 = vmatprep.mubr.bf16.mxu0 %v3696
  %4761 = vmatmul.mubr.bf16.gmra.mrb[0].mxu0 %v3695
  %v4762 = vpop.f32.mrb[0].mxu0
  %v4763 = vadd.f32 0.0, %v4762
  %v4764 = vpop.f32.mrb[0].mxu0
  %v4765 = vpop.f32.mrb[0].mxu0
  %v4766 = vadd.f32 0.0, %v4765
  %v4767 = vpop.f32.mrb[0].mxu0
  %4768 = vdwg.mxu0
  %4769 = vmatprep.subr.bf16.mxu0 0
  %4770 = vmatpush1.bf16.msra.mxu0 %v4688
  %4771 = vmatprep.subr.bf16.mxu0 0
  %4772 = vmatpush1.bf16.msra.mxu0 %v4689
  %4773 = vmatprep.subr.bf16.mxu0 0
  %4774 = vmatpush1.bf16.msra.mxu0 %v4690
  %4775 = vmatprep.subr.bf16.mxu0 0
  %4776 = vmatpush1.bf16.msra.mxu0 %v4691
  %4777 = vmatprep.subr.bf16.mxu0 0
  %4778 = vmatpush1.bf16.msra.mxu0 %v4692
  %4779 = vmatprep.subr.bf16.mxu0 0
  %4780 = vmatpush1.bf16.msra.mxu0 %v4693
  %4781 = vmatprep.subr.bf16.mxu0 0
  %4782 = vmatpush1.bf16.msra.mxu0 %v4694
  %4783 = vmatprep.subr.bf16.mxu0 0
  %4784 = vmatpush1.bf16.msra.mxu0 %v4695
  %4785 = vmatprep.subr.bf16.mxu0 0
  %4786 = vmatpush1.bf16.msra.mxu0 0
  %4787 = vmatprep.subr.bf16.mxu0 0
  %4788 = vmatpush1.bf16.msra.mxu0 0
  %4789 = vmatprep.subr.bf16.mxu0 0
  %4790 = vmatpush1.bf16.msra.mxu0 0
  %4791 = vmatprep.subr.bf16.mxu0 0
  %4792 = vmatpush1.bf16.msra.mxu0 0
  %4793 = vmatprep.subr.bf16.mxu0 0
  %4794 = vmatpush1.bf16.msra.mxu0 0
  %4795 = vmatprep.subr.bf16.mxu0 0
  %4796 = vmatpush1.bf16.msra.mxu0 0
  %4797 = vmatprep.subr.bf16.mxu0 0
  %4798 = vmatpush1.bf16.msra.mxu0 0
  %4799 = vmatprep.subr.bf16.mxu0 0
  %4800 = vmatpush1.bf16.msra.mxu0 0
  %4801 = vmatprep.mubr.bf16.mxu0 0
  %4802 = vmatmul.mubr.bf16.gmra.mrb[0].mxu0 %v3694
  %v4803 = vpop.f32.mrb[0].mxu0
  %v4804 = vadd.f32 %v4755, %v4803
  %v4805 = vpop.f32.mrb[0].mxu0
  %v4806 = vpop.f32.mrb[0].mxu0
  %v4807 = vadd.f32 %v4758, %v4806
  %v4808 = vpop.f32.mrb[0].mxu0
  %4809 = vmatprep.mubr.bf16.mxu0 0
  %4810 = vmatmul.mubr.bf16.gmra.mrb[0].mxu0 %v3697
  %v4811 = vpop.f32.mrb[0].mxu0
  %v4812 = vadd.f32 %v4763, %v4811
  %v4813 = vpop.f32.mrb[0].mxu0
  %v4814 = vpop.f32.mrb[0].mxu0
  %v4815 = vadd.f32 %v4766, %v4814
  %v4816 = vpop.f32.mrb[0].mxu0
  %4817 = vdwg.mxu0
  %v4818 = vadd.f32 %v4804, %v4807
  %v4819 = vadd.f32 %v4818, %v4812
  %v4820 = vadd.f32 %v4819, %v4815
  %v4821 = vrot.slane %v4820, 4
  %v4822 = vadd.f32 %v4820, %v4821
  %v4823 = vrot.slane %v4822, 2
  %v4824 = vadd.f32 %v4822, %v4823
  %v4825 = vrot.slane %v4824, 1
  %v4826 = vadd.f32 %v4824, %v4825
  %v4827 = vmul.f32 %v4804, %v4804
  %v4828 = vmul.f32 %v4807, %v4807
  %v4829 = vmul.f32 %v4812, %v4812
  %v4830 = vmul.f32 %v4815, %v4815
  %v4831 = vadd.f32 %v4827, %v4828
  %v4832 = vadd.f32 %v4831, %v4829
  %v4833 = vadd.f32 %v4832, %v4830
  %v4834 = vrot.slane %v4833, 4
  %v4835 = vadd.f32 %v4833, %v4834
  %v4836 = vrot.slane %v4835, 2
  %v4837 = vadd.f32 %v4835, %v4836
  %v4838 = vrot.slane %v4837, 1
  %v4839 = vadd.f32 %v4837, %v4838
  %4840 = vmatprep.subr.mxu0 %v2524
  %4841 = vmatpush1.msra.mxu0 %v2523
  %4842 = vmatprep.subr.mxu0 %v2526
  %4843 = vmatpush1.msra.mxu0 %v2525
  %4844 = vmatprep.subr.mxu0 %v2528
  %4845 = vmatpush1.msra.mxu0 %v2527
  %4846 = vmatprep.subr.mxu0 %v2530
  %4847 = vmatpush1.msra.mxu0 %v2529
  %4848 = vmatprep.subr.mxu0 %v2532
  %4849 = vmatpush1.msra.mxu0 %v2531
  %4850 = vmatprep.subr.mxu0 %v2534
  %4851 = vmatpush1.msra.mxu0 %v2533
  %4852 = vmatprep.subr.mxu0 %v2536
  %4853 = vmatpush1.msra.mxu0 %v2535
  %4854 = vmatprep.subr.mxu0 %v2538
  %4855 = vmatpush1.msra.mxu0 %v2537
  %4856 = vmatprep.subr.mxu0 %v2540
  %4857 = vmatpush1.msra.mxu0 %v2539
  %4858 = vmatprep.subr.mxu0 %v2542
  %4859 = vmatpush1.msra.mxu0 %v2541
  %4860 = vmatprep.subr.mxu0 %v2544
  %4861 = vmatpush1.msra.mxu0 %v2543
  %4862 = vmatprep.subr.mxu0 %v2546
  %4863 = vmatpush1.msra.mxu0 %v2545
  %4864 = vmatprep.subr.mxu0 %v2548
  %4865 = vmatpush1.msra.mxu0 %v2547
  %4866 = vmatprep.subr.mxu0 %v2550
  %4867 = vmatpush1.msra.mxu0 %v2549
  %4868 = vmatprep.subr.mxu0 %v2552
  %4869 = vmatpush1.msra.mxu0 %v2551
  %4870 = vmatprep.subr.mxu0 %v2554
  %4871 = vmatpush1.msra.mxu0 %v2553
  %4872 = vmatprep.subr.mxu0 %v2556
  %4873 = vmatpush1.msra.mxu0 %v2555
  %4874 = vmatprep.subr.mxu0 %v2558
  %4875 = vmatpush1.msra.mxu0 %v2557
  %4876 = vmatprep.subr.mxu0 %v2560
  %4877 = vmatpush1.msra.mxu0 %v2559
  %4878 = vmatprep.subr.mxu0 %v2562
  %4879 = vmatpush1.msra.mxu0 %v2561
  %4880 = vmatprep.subr.mxu0 %v2564
  %4881 = vmatpush1.msra.mxu0 %v2563
  %4882 = vmatprep.subr.mxu0 %v2566
  %4883 = vmatpush1.msra.mxu0 %v2565
  %4884 = vmatprep.subr.mxu0 %v2568
  %4885 = vmatpush1.msra.mxu0 %v2567
  %4886 = vmatprep.subr.mxu0 %v2570
  %4887 = vmatpush1.msra.mxu0 %v2569
  %4888 = vmatprep.subr.mxu0 %v2572
  %4889 = vmatpush1.msra.mxu0 %v2571
  %4890 = vmatprep.subr.mxu0 %v2574
  %4891 = vmatpush1.msra.mxu0 %v2573
  %4892 = vmatprep.subr.mxu0 %v2576
  %4893 = vmatpush1.msra.mxu0 %v2575
  %4894 = vmatprep.subr.mxu0 %v2578
  %4895 = vmatpush1.msra.mxu0 %v2577
  %4896 = vmatprep.subr.mxu0 %v2580
  %4897 = vmatpush1.msra.mxu0 %v2579
  %4898 = vmatprep.subr.mxu0 %v2582
  %4899 = vmatpush1.msra.mxu0 %v2581
  %4900 = vmatprep.subr.mxu0 %v2584
  %4901 = vmatpush1.msra.mxu0 %v2583
  %4902 = vmatprep.subr.mxu0 %v2586
  %4903 = vmatpush1.msra.mxu0 %v2585
  %4904 = vmatprep.mubr.f32.mxu0 %v4839
  %4905 = vmatmul.mubr.f32.gmra.mrb[0].mxu0 %v4826
  %v4906 = vpop.f32.mrb[0].mxu0
  %v4907 = vadd.f32 0.0, %v4906
  %v4908 = vpop.f32.mrb[0].mxu0
  %v4909 = vadd.f32 0.0, %v4908
  %4910 = vdwg.mxu0
  %v4911 = vmul.f32 %v4907, %v4907
  %v4912 = vsub.f32 %v4909, %v4911
  %v4913 = vmax.f32 %v4912, 0.0
  %v4914 = vadd.f32 %v4913, 1e-05
  %v4915 = vrsqrt.pop %v4914
  %v4916 = vld [vmem:[%s21] sm:$0x1]
  %v4917 = vmul.f32 %v4915, %v4916
  %v4918 = vld [vmem:[%s21 + $0x1] sm:$0x1]
  %v4919 = vmul.f32 %v4907, %v4917
  %v4920 = vsub.f32 %v4918, %v4919
  %v4921 = vlaneseq
  %v4922 = vshrl.u32 %v4921, 7
  %v4923 = vsub.s32 0, %v4922
  %v4924 = vrot.slane %v4917, %v4923
  %v4925 = vmul.f32 %v4804, %v4924
  %v4926 = vmul.f32 %v4807, %v4924
  %v4927 = vmul.f32 %v4812, %v4924
  %v4928 = vmul.f32 %v4815, %v4924
  %v4929 = vlaneseq
  %v4930 = vshrl.u32 %v4929, 7
  %v4931 = vsub.s32 0, %v4930
  %v4932 = vrot.slane %v4920, %v4931
  %v4933 = vadd.f32 %v4925, %v4932
  %v4934 = vadd.f32 %v4926, %v4932
  %v4935 = vadd.f32 %v4927, %v4932
  %v4936 = vadd.f32 %v4928, %v4932
  %v4937 = vadd.f32 %v4524, %v4933
  %v4938 = vadd.f32 %v4525, %v4934
  %v4939 = vadd.f32 %v4526, %v4935
  %v4940 = vadd.f32 %v4527, %v4936
  %4941 = vmatprep.subr.mxu0 0.0
  %4942 = vmatpush1.msra.mxu0 %v4111
  %4943 = vmatprep.subr.mxu0 0.0
  %4944 = vmatpush1.msra.mxu0 %v4112
  %4945 = vmatprep.subr.mxu0 0.0
  %4946 = vmatpush1.msra.mxu0 %v4113
  %4947 = vmatprep.subr.mxu0 0.0
  %4948 = vmatpush1.msra.mxu0 %v4114
  %4949 = vmatprep.subr.mxu0 0.0
  %4950 = vmatpush1.msra.mxu0 0.0
  %4951 = vmatprep.subr.mxu0 0.0
  %4952 = vmatpush1.msra.mxu0 0.0
  %4953 = vmatprep.subr.mxu0 0.0
  %4954 = vmatpush1.msra.mxu0 0.0
  %4955 = vmatprep.subr.mxu0 0.0
  %4956 = vmatpush1.msra.mxu0 0.0
  %4957 = vmatprep.subr.mxu0 0.0
  %4958 = vmatpush1.msra.mxu0 0.0
  %4959 = vmatprep.subr.mxu0 0.0
  %4960 = vmatpush1.msra.mxu0 0.0
  %4961 = vmatprep.subr.mxu0 0.0
  %4962 = vmatpush1.msra.mxu0 0.0
  %4963 = vmatprep.subr.mxu0 0.0
  %4964 = vmatpush1.msra.mxu0 0.0
  %4965 = vmatprep.subr.mxu0 0.0
  %4966 = vmatpush1.msra.mxu0 0.0
  %4967 = vmatprep.subr.mxu0 0.0
  %4968 = vmatpush1.msra.mxu0 0.0
  %4969 = vmatprep.subr.mxu0 0.0
  %4970 = vmatpush1.msra.mxu0 0.0
  %4971 = vmatprep.subr.mxu0 0.0
  %4972 = vmatpush1.msra.mxu0 0.0
  %4973 = vmatprep.subr.mxu0 0.0
  %4974 = vmatpush1.msra.mxu0 0.0
  %4975 = vmatprep.subr.mxu0 0.0
  %4976 = vmatpush1.msra.mxu0 0.0
  %4977 = vmatprep.subr.mxu0 0.0
  %4978 = vmatpush1.msra.mxu0 0.0
  %4979 = vmatprep.subr.mxu0 0.0
  %4980 = vmatpush1.msra.mxu0 0.0
  %4981 = vmatprep.subr.mxu0 0.0
  %4982 = vmatpush1.msra.mxu0 0.0
  %4983 = vmatprep.subr.mxu0 0.0
  %4984 = vmatpush1.msra.mxu0 0.0
  %4985 = vmatprep.subr.mxu0 0.0
  %4986 = vmatpush1.msra.mxu0 0.0
  %4987 = vmatprep.subr.mxu0 0.0
  %4988 = vmatpush1.msra.mxu0 0.0
  %4989 = vmatprep.subr.mxu0 0.0
  %4990 = vmatpush1.msra.mxu0 0.0
  %4991 = vmatprep.subr.mxu0 0.0
  %4992 = vmatpush1.msra.mxu0 0.0
  %4993 = vmatprep.subr.mxu0 0.0
  %4994 = vmatpush1.msra.mxu0 0.0
  %4995 = vmatprep.subr.mxu0 0.0
  %4996 = vmatpush1.msra.mxu0 0.0
  %4997 = vmatprep.subr.mxu0 0.0
  %4998 = vmatpush1.msra.mxu0 0.0
  %4999 = vmatprep.subr.mxu0 0.0
  %5000 = vmatpush1.msra.mxu0 0.0
  %5001 = vmatprep.subr.mxu0 0.0
  %5002 = vmatpush1.msra.mxu0 0.0
  %5003 = vmatprep.subr.mxu0 0.0
  %5004 = vmatpush1.msra.mxu0 0.0
  %5005 = vmatprep.mubr.f32.mxu0 0.0
  %5006 = vmatmul.mubr.f32.gmra.mrb[0].mxu0 %v2012
  %v5007 = vpop.f32.mrb[0].mxu0
  %v5008 = vadd.f32 0.0, %v5007
  %v5009 = vpop.f32.mrb[0].mxu0
  %5010 = vmatprep.mubr.f32.mxu0 0.0
  %5011 = vmatmul.mubr.f32.gmra.mrb[0].mxu0 %v2015
  %v5012 = vpop.f32.mrb[0].mxu0
  %v5013 = vadd.f32 0.0, %v5012
  %v5014 = vpop.f32.mrb[0].mxu0
  %5015 = vmatprep.mubr.f32.mxu0 0.0
  %5016 = vmatmul.mubr.f32.gmra.mrb[0].mxu0 %v2018
  %v5017 = vpop.f32.mrb[0].mxu0
  %v5018 = vadd.f32 0.0, %v5017
  %v5019 = vpop.f32.mrb[0].mxu0
  %5020 = vmatprep.mubr.f32.mxu0 0.0
  %5021 = vmatmul.mubr.f32.gmra.mrb[0].mxu0 %v2021
  %v5022 = vpop.f32.mrb[0].mxu0
  %v5023 = vadd.f32 0.0, %v5022
  %v5024 = vpop.f32.mrb[0].mxu0
  %5025 = vdwg.mxu0
  %5026 = vmatprep.subr.mxu0 0.0
  %5027 = vmatpush1.msra.mxu0 %v4111
  %5028 = vmatprep.subr.mxu0 0.0
  %5029 = vmatpush1.msra.mxu0 %v4112
  %5030 = vmatprep.subr.mxu0 0.0
  %5031 = vmatpush1.msra.mxu0 %v4113
  %5032 = vmatprep.subr.mxu0 0.0
  %5033 = vmatpush1.msra.mxu0 %v4114
  %5034 = vmatprep.subr.mxu0 0.0
  %5035 = vmatpush1.msra.mxu0 0.0
  %5036 = vmatprep.subr.mxu0 0.0
  %5037 = vmatpush1.msra.mxu0 0.0
  %5038 = vmatprep.subr.mxu0 0.0
  %5039 = vmatpush1.msra.mxu0 0.0
  %5040 = vmatprep.subr.mxu0 0.0
  %5041 = vmatpush1.msra.mxu0 0.0
  %5042 = vmatprep.subr.mxu0 0.0
  %5043 = vmatpush1.msra.mxu0 0.0
  %5044 = vmatprep.subr.mxu0 0.0
  %5045 = vmatpush1.msra.mxu0 0.0
  %5046 = vmatprep.subr.mxu0 0.0
  %5047 = vmatpush1.msra.mxu0 0.0
  %5048 = vmatprep.subr.mxu0 0.0
  %5049 = vmatpush1.msra.mxu0 0.0
  %5050 = vmatprep.subr.mxu0 0.0
  %5051 = vmatpush1.msra.mxu0 0.0
  %5052 = vmatprep.subr.mxu0 0.0
  %5053 = vmatpush1.msra.mxu0 0.0
  %5054 = vmatprep.subr.mxu0 0.0
  %5055 = vmatpush1.msra.mxu0 0.0
  %5056 = vmatprep.subr.mxu0 0.0
  %5057 = vmatpush1.msra.mxu0 0.0
  %5058 = vmatprep.subr.mxu0 0.0
  %5059 = vmatpush1.msra.mxu0 0.0
  %5060 = vmatprep.subr.mxu0 0.0
  %5061 = vmatpush1.msra.mxu0 0.0
  %5062 = vmatprep.subr.mxu0 0.0
  %5063 = vmatpush1.msra.mxu0 0.0
  %5064 = vmatprep.subr.mxu0 0.0
  %5065 = vmatpush1.msra.mxu0 0.0
  %5066 = vmatprep.subr.mxu0 0.0
  %5067 = vmatpush1.msra.mxu0 0.0
  %5068 = vmatprep.subr.mxu0 0.0
  %5069 = vmatpush1.msra.mxu0 0.0
  %5070 = vmatprep.subr.mxu0 0.0
  %5071 = vmatpush1.msra.mxu0 0.0
  %5072 = vmatprep.subr.mxu0 0.0
  %5073 = vmatpush1.msra.mxu0 0.0
  %5074 = vmatprep.subr.mxu0 0.0
  %5075 = vmatpush1.msra.mxu0 0.0
  %5076 = vmatprep.subr.mxu0 0.0
  %5077 = vmatpush1.msra.mxu0 0.0
  %5078 = vmatprep.subr.mxu0 0.0
  %5079 = vmatpush1.msra.mxu0 0.0
  %5080 = vmatprep.subr.mxu0 0.0
  %5081 = vmatpush1.msra.mxu0 0.0
  %5082 = vmatprep.subr.mxu0 0.0
  %5083 = vmatpush1.msra.mxu0 0.0
  %5084 = vmatprep.subr.mxu0 0.0
  %5085 = vmatpush1.msra.mxu0 0.0
  %5086 = vmatprep.subr.mxu0 0.0
  %5087 = vmatpush1.msra.mxu0 0.0
  %5088 = vmatprep.subr.mxu0 0.0
  %5089 = vmatpush1.msra.mxu0 0.0
  %5090 = vmatprep.mubr.f32.mxu0 0.0
  %5091 = vmatmul.mubr.f32.gmra.mrb[0].mxu0 %v2109
  %v5092 = vpop.f32.mrb[0].mxu0
  %v5093 = vadd.f32 0.0, %v5092
  %v5094 = vpop.f32.mrb[0].mxu0
  %5095 = vmatprep.mubr.f32.mxu0 0.0
  %5096 = vmatmul.mubr.f32.gmra.mrb[0].mxu0 %v2112
  %v5097 = vpop.f32.mrb[0].mxu0
  %v5098 = vadd.f32 0.0, %v5097
  %v5099 = vpop.f32.mrb[0].mxu0
  %5100 = vmatprep.mubr.f32.mxu0 0.0
  %5101 = vmatmul.mubr.f32.gmra.mrb[0].mxu0 %v2115
  %v5102 = vpop.f32.mrb[0].mxu0
  %v5103 = vadd.f32 0.0, %v5102
  %v5104 = vpop.f32.mrb[0].mxu0
  %5105 = vmatprep.mubr.f32.mxu0 0.0
  %5106 = vmatmul.mubr.f32.gmra.mrb[0].mxu0 %v2118
  %v5107 = vpop.f32.mrb[0].mxu0
  %v5108 = vadd.f32 0.0, %v5107
  %v5109 = vpop.f32.mrb[0].mxu0
  %5110 = vdwg.mxu0
  %v5111 = vpack.c.bf16 %v5013, %v5008
  %v5112 = vpack.c.bf16 %v4112, %v4111
  %v5113 = vpack.c.bf16 %v5098, %v5093
  %v5114 = vpack.c.bf16 %v5023, %v5018
  %v5115 = vpack.c.bf16 %v4114, %v4113
  %v5116 = vpack.c.bf16 %v5108, %v5103
  %v5117 = vld [vmem:[%s22] sm:$0xff]
  %v5118 = vld [vmem:[%s22 + $0x8] sm:$0xff]
  %v5119 = vld [vmem:[%s22 + $0x10] sm:$0xff]
  %v5120 = vld [vmem:[%s22 + $0x18] sm:$0xff]
  %v5121 = vld [vmem:[%s22 + $0x20] sm:$0xff]
  %v5122 = vld [vmem:[%s22 + $0x28] sm:$0xff]
  %v5123 = vld [vmem:[%s22 + $0x30] sm:$0xff]
  %v5124 = vld [vmem:[%s22 + $0x38] sm:$0xff]
  %v5125 = vld [vmem:[%s22 + $0x40] sm:$0xff]
  %v5126 = vld [vmem:[%s22 + $0x48] sm:$0xff]
  %v5127 = vld [vmem:[%s22 + $0x50] sm:$0xff]
  %v5128 = vld [vmem:[%s22 + $0x58] sm:$0xff]
  %v5129 = vld [vmem:[%s22 + $0x60] sm:$0xff]
  %v5130 = vld [vmem:[%s22 + $0x68] sm:$0xff]
  %v5131 = vld [vmem:[%s22 + $0x70] sm:$0xff]
  %v5132 = vld [vmem:[%s22 + $0x78] sm:$0xff]
  %v5133 = vld [vmem:[%s22 + $0x80] sm:$0xff]
  %v5134 = vld [vmem:[%s22 + $0x88] sm:$0xff]
  %v5135 = vld [vmem:[%s22 + $0x90] sm:$0xff]
  %v5136 = vld [vmem:[%s22 + $0x98] sm:$0xff]
  %v5137 = vld [vmem:[%s22 + $0xa0] sm:$0xff]
  %v5138 = vld [vmem:[%s22 + $0xa8] sm:$0xff]
  %v5139 = vld [vmem:[%s22 + $0xb0] sm:$0xff]
  %v5140 = vld [vmem:[%s22 + $0xb8] sm:$0xff]
  %v5141 = vld [vmem:[%s22 + $0xc0] sm:$0xff]
  %v5142 = vld [vmem:[%s22 + $0xc8] sm:$0xff]
  %v5143 = vld [vmem:[%s22 + $0xd0] sm:$0xff]
  %v5144 = vld [vmem:[%s22 + $0xd8] sm:$0xff]
  %v5145 = vld [vmem:[%s22 + $0xe0] sm:$0xff]
  %v5146 = vld [vmem:[%s22 + $0xe8] sm:$0xff]
  %v5147 = vld [vmem:[%s22 + $0xf0] sm:$0xff]
  %v5148 = vld [vmem:[%s22 + $0xf8] sm:$0xff]
  %v5149 = vld [vmem:[%s22 + $0x100] sm:$0xff]
  %v5150 = vld [vmem:[%s22 + $0x108] sm:$0xff]
  %v5151 = vld [vmem:[%s22 + $0x110] sm:$0xff]
  %v5152 = vld [vmem:[%s22 + $0x118] sm:$0xff]
  %v5153 = vld [vmem:[%s22 + $0x120] sm:$0xff]
  %v5154 = vld [vmem:[%s22 + $0x128] sm:$0xff]
  %v5155 = vld [vmem:[%s22 + $0x130] sm:$0xff]
  %v5156 = vld [vmem:[%s22 + $0x138] sm:$0xff]
  %v5157 = vld [vmem:[%s22 + $0x140] sm:$0xff]
  %v5158 = vld [vmem:[%s22 + $0x148] sm:$0xff]
  %v5159 = vld [vmem:[%s22 + $0x150] sm:$0xff]
  %v5160 = vld [vmem:[%s22 + $0x158] sm:$0xff]
  %v5161 = vld [vmem:[%s22 + $0x160] sm:$0xff]
  %v5162 = vld [vmem:[%s22 + $0x168] sm:$0xff]
  %v5163 = vld [vmem:[%s22 + $0x170] sm:$0xff]
  %v5164 = vld [vmem:[%s22 + $0x178] sm:$0xff]
  %v5213 = vunpack.c.l.b16 %v5117
  %v5214 = vunpack.c.h.b16 %v5117
  %v5215 = vunpack.c.l.b16 %v5118
  %v5216 = vunpack.c.h.b16 %v5118
  %v5217 = vunpack.c.l.b16 %v5119
  %v5218 = vunpack.c.h.b16 %v5119
  %v5219 = vunpack.c.l.b16 %v5120
  %v5220 = vunpack.c.h.b16 %v5120
  %v5221 = vunpack.c.l.b16 %v5121
  %v5222 = vunpack.c.h.b16 %v5121
  %v5223 = vunpack.c.l.b16 %v5122
  %v5224 = vunpack.c.h.b16 %v5122
  %v5225 = vunpack.c.l.b16 %v5123
  %v5226 = vunpack.c.h.b16 %v5123
  %v5227 = vunpack.c.l.b16 %v5124
  %v5228 = vunpack.c.h.b16 %v5124
  %v5229 = vunpack.c.l.b16 %v5125
  %v5230 = vunpack.c.h.b16 %v5125
  %v5231 = vunpack.c.l.b16 %v5126
  %v5232 = vunpack.c.h.b16 %v5126
  %v5233 = vunpack.c.l.b16 %v5127
  %v5234 = vunpack.c.h.b16 %v5127
  %v5235 = vunpack.c.l.b16 %v5128
  %v5236 = vunpack.c.h.b16 %v5128
  %v5237 = vunpack.c.l.b16 %v5129
  %v5238 = vunpack.c.h.b16 %v5129
  %v5239 = vunpack.c.l.b16 %v5130
  %v5240 = vunpack.c.h.b16 %v5130
  %v5241 = vunpack.c.l.b16 %v5131
  %v5242 = vunpack.c.h.b16 %v5131
  %v5243 = vunpack.c.l.b16 %v5132
  %v5244 = vunpack.c.h.b16 %v5132
  %v5245 = vunpack.c.l.b16 %v5133
  %v5246 = vunpack.c.h.b16 %v5133
  %v5247 = vunpack.c.l.b16 %v5134
  %v5248 = vunpack.c.h.b16 %v5134
  %v5249 = vunpack.c.l.b16 %v5135
  %v5250 = vunpack.c.h.b16 %v5135
  %v5251 = vunpack.c.l.b16 %v5136
  %v5252 = vunpack.c.h.b16 %v5136
  %v5253 = vunpack.c.l.b16 %v5137
  %v5254 = vunpack.c.h.b16 %v5137
  %v5255 = vunpack.c.l.b16 %v5138
  %v5256 = vunpack.c.h.b16 %v5138
  %v5257 = vunpack.c.l.b16 %v5139
  %v5258 = vunpack.c.h.b16 %v5139
  %v5259 = vunpack.c.l.b16 %v5140
  %v5260 = vunpack.c.h.b16 %v5140
  %v5261 = vunpack.c.l.b16 %v5141
  %v5262 = vunpack.c.h.b16 %v5141
  %v5263 = vunpack.c.l.b16 %v5142
  %v5264 = vunpack.c.h.b16 %v5142
  %v5265 = vunpack.c.l.b16 %v5143
  %v5266 = vunpack.c.h.b16 %v5143
  %v5267 = vunpack.c.l.b16 %v5144
  %v5268 = vunpack.c.h.b16 %v5144
  %v5269 = vunpack.c.l.b16 %v5145
  %v5270 = vunpack.c.h.b16 %v5145
  %v5271 = vunpack.c.l.b16 %v5146
  %v5272 = vunpack.c.h.b16 %v5146
  %v5273 = vunpack.c.l.b16 %v5147
  %v5274 = vunpack.c.h.b16 %v5147
  %v5275 = vunpack.c.l.b16 %v5148
  %v5276 = vunpack.c.h.b16 %v5148
  %v5277 = vunpack.c.l.b16 %v5149
  %v5278 = vunpack.c.h.b16 %v5149
  %v5279 = vunpack.c.l.b16 %v5150
  %v5280 = vunpack.c.h.b16 %v5150
  %v5281 = vunpack.c.l.b16 %v5151
  %v5282 = vunpack.c.h.b16 %v5151
  %v5283 = vunpack.c.l.b16 %v5152
  %v5284 = vunpack.c.h.b16 %v5152
  %v5285 = vunpack.c.l.b16 %v5153
  %v5286 = vunpack.c.h.b16 %v5153
  %v5287 = vunpack.c.l.b16 %v5154
  %v5288 = vunpack.c.h.b16 %v5154
  %v5289 = vunpack.c.l.b16 %v5155
  %v5290 = vunpack.c.h.b16 %v5155
  %v5291 = vunpack.c.l.b16 %v5156
  %v5292 = vunpack.c.h.b16 %v5156
  %v5293 = vunpack.c.l.b16 %v5157
  %v5294 = vunpack.c.h.b16 %v5157
  %v5295 = vunpack.c.l.b16 %v5158
  %v5296 = vunpack.c.h.b16 %v5158
  %v5297 = vunpack.c.l.b16 %v5159
  %v5298 = vunpack.c.h.b16 %v5159
  %v5299 = vunpack.c.l.b16 %v5160
  %v5300 = vunpack.c.h.b16 %v5160
  %v5301 = vunpack.c.l.b16 %v5161
  %v5302 = vunpack.c.h.b16 %v5161
  %v5303 = vunpack.c.l.b16 %v5162
  %v5304 = vunpack.c.h.b16 %v5162
  %v5305 = vunpack.c.l.b16 %v5163
  %v5306 = vunpack.c.h.b16 %v5163
  %v5307 = vunpack.c.l.b16 %v5164
  %v5308 = vunpack.c.h.b16 %v5164
  %v5309 = vpack.c.b16 %v5215, %v5213
  %v5310 = vpack.c.b16 %v5216, %v5214
  %v5311 = vpack.c.b16 %v5219, %v5217
  %v5312 = vpack.c.b16 %v5220, %v5218
  %v5313 = vpack.c.b16 %v5223, %v5221
  %v5314 = vpack.c.b16 %v5224, %v5222
  %v5315 = vpack.c.b16 %v5227, %v5225
  %v5316 = vpack.c.b16 %v5228, %v5226
  %v5317 = vpack.c.b16 %v5231, %v5229
  %v5318 = vpack.c.b16 %v5232, %v5230
  %v5319 = vpack.c.b16 %v5235, %v5233
  %v5320 = vpack.c.b16 %v5236, %v5234
  %v5321 = vpack.c.b16 %v5239, %v5237
  %v5322 = vpack.c.b16 %v5240, %v5238
  %v5323 = vpack.c.b16 %v5243, %v5241
  %v5324 = vpack.c.b16 %v5244, %v5242
  %v5325 = vpack.c.b16 %v5247, %v5245
  %v5326 = vpack.c.b16 %v5248, %v5246
  %v5327 = vpack.c.b16 %v5251, %v5249
  %v5328 = vpack.c.b16 %v5252, %v5250
  %v5329 = vpack.c.b16 %v5255, %v5253
  %v5330 = vpack.c.b16 %v5256, %v5254
  %v5331 = vpack.c.b16 %v5259, %v5257
  %v5332 = vpack.c.b16 %v5260, %v5258
  %v5333 = vpack.c.b16 %v5263, %v5261
  %v5334 = vpack.c.b16 %v5264, %v5262
  %v5335 = vpack.c.b16 %v5267, %v5265
  %v5336 = vpack.c.b16 %v5268, %v5266
  %v5337 = vpack.c.b16 %v5271, %v5269
  %v5338 = vpack.c.b16 %v5272, %v5270
  %v5339 = vpack.c.b16 %v5275, %v5273
  %v5340 = vpack.c.b16 %v5276, %v5274
  %v5341 = vpack.c.b16 %v5279, %v5277
  %v5342 = vpack.c.b16 %v5280, %v5278
  %v5343 = vpack.c.b16 %v5283, %v5281
  %v5344 = vpack.c.b16 %v5284, %v5282
  %v5345 = vpack.c.b16 %v5287, %v5285
  %v5346 = vpack.c.b16 %v5288, %v5286
  %v5347 = vpack.c.b16 %v5291, %v5289
  %v5348 = vpack.c.b16 %v5292, %v5290
  %v5349 = vpack.c.b16 %v5295, %v5293
  %v5350 = vpack.c.b16 %v5296, %v5294
  %v5351 = vpack.c.b16 %v5299, %v5297
  %v5352 = vpack.c.b16 %v5300, %v5298
  %v5353 = vpack.c.b16 %v5303, %v5301
  %v5354 = vpack.c.b16 %v5304, %v5302
  %v5355 = vpack.c.b16 %v5307, %v5305
  %v5356 = vpack.c.b16 %v5308, %v5306
  %5405 = vmatprep.subr.bf16.mxu0 %v5310
  %5406 = vmatpush1.bf16.msra.mxu0 %v5309
  %5407 = vmatprep.subr.bf16.mxu0 %v5312
  %5408 = vmatpush1.bf16.msra.mxu0 %v5311
  %5409 = vmatprep.subr.bf16.mxu0 %v5314
  %5410 = vmatpush1.bf16.msra.mxu0 %v5313
  %5411 = vmatprep.subr.bf16.mxu0 %v5316
  %5412 = vmatpush1.bf16.msra.mxu0 %v5315
  %5413 = vmatprep.subr.bf16.mxu0 %v5318
  %5414 = vmatpush1.bf16.msra.mxu0 %v5317
  %5415 = vmatprep.subr.bf16.mxu0 %v5320
  %5416 = vmatpush1.bf16.msra.mxu0 %v5319
  %5417 = vmatprep.subr.bf16.mxu0 %v5322
  %5418 = vmatpush1.bf16.msra.mxu0 %v5321
  %5419 = vmatprep.subr.bf16.mxu0 %v5324
  %5420 = vmatpush1.bf16.msra.mxu0 %v5323
  %5421 = vmatprep.subr.bf16.mxu0 %v5326
  %5422 = vmatpush1.bf16.msra.mxu0 %v5325
  %5423 = vmatprep.subr.bf16.mxu0 %v5328
  %5424 = vmatpush1.bf16.msra.mxu0 %v5327
  %5425 = vmatprep.subr.bf16.mxu0 %v5330
  %5426 = vmatpush1.bf16.msra.mxu0 %v5329
  %5427 = vmatprep.subr.bf16.mxu0 %v5332
  %5428 = vmatpush1.bf16.msra.mxu0 %v5331
  %5429 = vmatprep.subr.bf16.mxu0 %v5334
  %5430 = vmatpush1.bf16.msra.mxu0 %v5333
  %5431 = vmatprep.subr.bf16.mxu0 %v5336
  %5432 = vmatpush1.bf16.msra.mxu0 %v5335
  %5433 = vmatprep.subr.bf16.mxu0 %v5338
  %5434 = vmatpush1.bf16.msra.mxu0 %v5337
  %5435 = vmatprep.subr.bf16.mxu0 %v5340
  %5436 = vmatpush1.bf16.msra.mxu0 %v5339
  %5437 = vmatprep.mubr.bf16.mxu0 %v5112
  %5438 = vmatmul.mubr.bf16.gmra.mrb[0].mxu0 %v5111
  %v5439 = vpop.f32.mrb[0].mxu0
  %v5440 = vadd.f32 0.0, %v5439
  %v5441 = vpop.f32.mrb[0].mxu0
  %v5442 = vadd.f32 0.0, %v5441
  %v5443 = vpop.f32.mrb[0].mxu0
  %v5444 = vadd.f32 0.0, %v5443
  %v5445 = vpop.f32.mrb[0].mxu0
  %v5446 = vadd.f32 0.0, %v5445
  %5447 = vmatprep.mubr.bf16.mxu0 %v5115
  %5448 = vmatmul.mubr.bf16.gmra.mrb[0].mxu0 %v5114
  %v5449 = vpop.f32.mrb[0].mxu0
  %v5450 = vadd.f32 0.0, %v5449
  %v5451 = vpop.f32.mrb[0].mxu0
  %v5452 = vadd.f32 0.0, %v5451
  %v5453 = vpop.f32.mrb[0].mxu0
  %v5454 = vadd.f32 0.0, %v5453
  %v5455 = vpop.f32.mrb[0].mxu0
  %v5456 = vadd.f32 0.0, %v5455
  %5457 = vdwg.mxu0
  %5458 = vmatprep.subr.bf16.mxu0 %v5342
  %5459 = vmatpush1.bf16.msra.mxu0 %v5341
  %5460 = vmatprep.subr.bf16.mxu0 %v5344
  %5461 = vmatpush1.bf16.msra.mxu0 %v5343
  %5462 = vmatprep.subr.bf16.mxu0 %v5346
  %5463 = vmatpush1.bf16.msra.mxu0 %v5345
  %5464 = vmatprep.subr.bf16.mxu0 %v5348
  %5465 = vmatpush1.bf16.msra.mxu0 %v5347
  %5466 = vmatprep.subr.bf16.mxu0 %v5350
  %5467 = vmatpush1.bf16.msra.mxu0 %v5349
  %5468 = vmatprep.subr.bf16.mxu0 %v5352
  %5469 = vmatpush1.bf16.msra.mxu0 %v5351
  %5470 = vmatprep.subr.bf16.mxu0 %v5354
  %5471 = vmatpush1.bf16.msra.mxu0 %v5353
  %5472 = vmatprep.subr.bf16.mxu0 %v5356
  %5473 = vmatpush1.bf16.msra.mxu0 %v5355
  %5474 = vmatprep.subr.bf16.mxu0 0
  %5475 = vmatpush1.bf16.msra.mxu0 0
  %5476 = vmatprep.subr.bf16.mxu0 0
  %5477 = vmatpush1.bf16.msra.mxu0 0
  %5478 = vmatprep.subr.bf16.mxu0 0
  %5479 = vmatpush1.bf16.msra.mxu0 0
  %5480 = vmatprep.subr.bf16.mxu0 0
  %5481 = vmatpush1.bf16.msra.mxu0 0
  %5482 = vmatprep.subr.bf16.mxu0 0
  %5483 = vmatpush1.bf16.msra.mxu0 0
  %5484 = vmatprep.subr.bf16.mxu0 0
  %5485 = vmatpush1.bf16.msra.mxu0 0
  %5486 = vmatprep.subr.bf16.mxu0 0
  %5487 = vmatpush1.bf16.msra.mxu0 0
  %5488 = vmatprep.subr.bf16.mxu0 0
  %5489 = vmatpush1.bf16.msra.mxu0 0
  %5490 = vmatprep.mubr.bf16.mxu0 0
  %5491 = vmatmul.mubr.bf16.gmra.mrb[0].mxu0 %v5113
  %v5492 = vpop.f32.mrb[0].mxu0
  %v5493 = vadd.f32 %v5440, %v5492
  %v5494 = vpop.f32.mrb[0].mxu0
  %v5495 = vadd.f32 %v5442, %v5494
  %v5496 = vpop.f32.mrb[0].mxu0
  %v5497 = vadd.f32 %v5444, %v5496
  %v5498 = vpop.f32.mrb[0].mxu0
  %v5499 = vadd.f32 %v5446, %v5498
  %5500 = vmatprep.mubr.bf16.mxu0 0
  %5501 = vmatmul.mubr.bf16.gmra.mrb[0].mxu0 %v5116
  %v5502 = vpop.f32.mrb[0].mxu0
  %v5503 = vadd.f32 %v5450, %v5502
  %v5504 = vpop.f32.mrb[0].mxu0
  %v5505 = vadd.f32 %v5452, %v5504
  %v5506 = vpop.f32.mrb[0].mxu0
  %v5507 = vadd.f32 %v5454, %v5506
  %v5508 = vpop.f32.mrb[0].mxu0
  %v5509 = vadd.f32 %v5456, %v5508
  %5510 = vdwg.mxu0
  %v5511 = vadd.f32 %v5493, %v5497
  %v5512 = vadd.f32 %v5511, %v5503
  %v5513 = vadd.f32 %v5512, %v5507
  %v5514 = vrot.slane %v5513, 4
  %v5515 = vadd.f32 %v5513, %v5514
  %v5516 = vrot.slane %v5515, 2
  %v5517 = vadd.f32 %v5515, %v5516
  %v5518 = vrot.slane %v5517, 1
  %v5519 = vadd.f32 %v5517, %v5518
  %v5520 = vadd.f32 %v5495, %v5499
  %v5521 = vadd.f32 %v5520, %v5505
  %v5522 = vadd.f32 %v5521, %v5509
  %v5523 = vrot.slane %v5522, 4
  %v5524 = vadd.f32 %v5522, %v5523
  %v5525 = vrot.slane %v5524, 2
  %v5526 = vadd.f32 %v5524, %v5525
  %v5527 = vrot.slane %v5526, 1
  %v5528 = vadd.f32 %v5526, %v5527
  %v5529 = vmul.f32 %v5493, %v5493
  %v5530 = vmul.f32 %v5495, %v5495
  %v5531 = vmul.f32 %v5497, %v5497
  %v5532 = vmul.f32 %v5499, %v5499
  %v5533 = vmul.f32 %v5503, %v5503
  %v5534 = vmul.f32 %v5505, %v5505
  %v5535 = vmul.f32 %v5507, %v5507
  %v5536 = vmul.f32 %v5509, %v5509
  %v5537 = vadd.f32 %v5529, %v5531
  %v5538 = vadd.f32 %v5537, %v5533
  %v5539 = vadd.f32 %v5538, %v5535
  %v5540 = vrot.slane %v5539, 4
  %v5541 = vadd.f32 %v5539, %v5540
  %v5542 = vrot.slane %v5541, 2
  %v5543 = vadd.f32 %v5541, %v5542
  %v5544 = vrot.slane %v5543, 1
  %v5545 = vadd.f32 %v5543, %v5544
  %v5546 = vadd.f32 %v5530, %v5532
  %v5547 = vadd.f32 %v5546, %v5534
  %v5548 = vadd.f32 %v5547, %v5536
  %v5549 = vrot.slane %v5548, 4
  %v5550 = vadd.f32 %v5548, %v5549
  %v5551 = vrot.slane %v5550, 2
  %v5552 = vadd.f32 %v5550, %v5551
  %v5553 = vrot.slane %v5552, 1
  %v5554 = vadd.f32 %v5552, %v5553
  %5555 = vmatprep.subr.mxu0 %v565
  %5556 = vmatpush1.msra.mxu0 %v564
  %5557 = vmatprep.subr.mxu0 %v569
  %5558 = vmatpush1.msra.mxu0 %v568
  %5559 = vmatprep.subr.mxu0 %v573
  %5560 = vmatpush1.msra.mxu0 %v572
  %5561 = vmatprep.subr.mxu0 %v577
  %5562 = vmatpush1.msra.mxu0 %v576
  %5563 = vmatprep.subr.mxu0 %v581
  %5564 = vmatpush1.msra.mxu0 %v580
  %5565 = vmatprep.subr.mxu0 %v585
  %5566 = vmatpush1.msra.mxu0 %v584
  %5567 = vmatprep.subr.mxu0 %v589
  %5568 = vmatpush1.msra.mxu0 %v588
  %5569 = vmatprep.subr.mxu0 %v593
  %5570 = vmatpush1.msra.mxu0 %v592
  %5571 = vmatprep.subr.mxu0 %v597
  %5572 = vmatpush1.msra.mxu0 %v596
  %5573 = vmatprep.subr.mxu0 %v601
  %5574 = vmatpush1.msra.mxu0 %v600
  %5575 = vmatprep.subr.mxu0 %v605
  %5576 = vmatpush1.msra.mxu0 %v604
  %5577 = vmatprep.subr.mxu0 %v609
  %5578 = vmatpush1.msra.mxu0 %v608
  %5579 = vmatprep.subr.mxu0 %v613
  %5580 = vmatpush1.msra.mxu0 %v612
  %5581 = vmatprep.subr.mxu0 %v617
  %5582 = vmatpush1.msra.mxu0 %v616
  %5583 = vmatprep.subr.mxu0 %v621
  %5584 = vmatpush1.msra.mxu0 %v620
  %5585 = vmatprep.subr.mxu0 %v625
  %5586 = vmatpush1.msra.mxu0 %v624
  %5587 = vmatprep.subr.mxu0 %v629
  %5588 = vmatpush1.msra.mxu0 %v628
  %5589 = vmatprep.subr.mxu0 %v633
  %5590 = vmatpush1.msra.mxu0 %v632
  %5591 = vmatprep.subr.mxu0 %v637
  %5592 = vmatpush1.msra.mxu0 %v636
  %5593 = vmatprep.subr.mxu0 %v641
  %5594 = vmatpush1.msra.mxu0 %v640
  %5595 = vmatprep.subr.mxu0 %v645
  %5596 = vmatpush1.msra.mxu0 %v644
  %5597 = vmatprep.subr.mxu0 %v649
  %5598 = vmatpush1.msra.mxu0 %v648
  %5599 = vmatprep.subr.mxu0 %v653
  %5600 = vmatpush1.msra.mxu0 %v652
  %5601 = vmatprep.subr.mxu0 %v657
  %5602 = vmatpush1.msra.mxu0 %v656
  %5603 = vmatprep.subr.mxu0 %v661
  %5604 = vmatpush1.msra.mxu0 %v660
  %5605 = vmatprep.subr.mxu0 %v665
  %5606 = vmatpush1.msra.mxu0 %v664
  %5607 = vmatprep.subr.mxu0 %v669
  %5608 = vmatpush1.msra.mxu0 %v668
  %5609 = vmatprep.subr.mxu0 %v673
  %5610 = vmatpush1.msra.mxu0 %v672
  %5611 = vmatprep.subr.mxu0 %v677
  %5612 = vmatpush1.msra.mxu0 %v676
  %5613 = vmatprep.subr.mxu0 %v681
  %5614 = vmatpush1.msra.mxu0 %v680
  %5615 = vmatprep.subr.mxu0 %v685
  %5616 = vmatpush1.msra.mxu0 %v684
  %5617 = vmatprep.subr.mxu0 %v689
  %5618 = vmatpush1.msra.mxu0 %v688
  %5619 = vmatprep.mubr.f32.mxu0 %v5528
  %5620 = vmatmul.mubr.f32.gmra.mrb[0].mxu0 %v5519
  %v5621 = vpop.f32.mrb[0].mxu0
  %v5622 = vadd.f32 0.0, %v5621
  %v5623 = vpop.f32.mrb[0].mxu0
  %v5624 = vadd.f32 0.0, %v5623
  %5625 = vdwg.mxu0
  %5626 = vmatprep.subr.mxu0 %v693
  %5627 = vmatpush1.msra.mxu0 %v692
  %5628 = vmatprep.subr.mxu0 %v697
  %5629 = vmatpush1.msra.mxu0 %v696
  %5630 = vmatprep.subr.mxu0 %v701
  %5631 = vmatpush1.msra.mxu0 %v700
  %5632 = vmatprep.subr.mxu0 %v705
  %5633 = vmatpush1.msra.mxu0 %v704
  %5634 = vmatprep.subr.mxu0 %v709
  %5635 = vmatpush1.msra.mxu0 %v708
  %5636 = vmatprep.subr.mxu0 %v713
  %5637 = vmatpush1.msra.mxu0 %v712
  %5638 = vmatprep.subr.mxu0 %v717
  %5639 = vmatpush1.msra.mxu0 %v716
  %5640 = vmatprep.subr.mxu0 %v721
  %5641 = vmatpush1.msra.mxu0 %v720
  %5642 = vmatprep.subr.mxu0 %v725
  %5643 = vmatpush1.msra.mxu0 %v724
  %5644 = vmatprep.subr.mxu0 %v729
  %5645 = vmatpush1.msra.mxu0 %v728
  %5646 = vmatprep.subr.mxu0 %v733
  %5647 = vmatpush1.msra.mxu0 %v732
  %5648 = vmatprep.subr.mxu0 %v737
  %5649 = vmatpush1.msra.mxu0 %v736
  %5650 = vmatprep.subr.mxu0 %v741
  %5651 = vmatpush1.msra.mxu0 %v740
  %5652 = vmatprep.subr.mxu0 %v745
  %5653 = vmatpush1.msra.mxu0 %v744
  %5654 = vmatprep.subr.mxu0 %v749
  %5655 = vmatpush1.msra.mxu0 %v748
  %5656 = vmatprep.subr.mxu0 %v753
  %5657 = vmatpush1.msra.mxu0 %v752
  %5658 = vmatprep.subr.mxu0 %v757
  %5659 = vmatpush1.msra.mxu0 %v756
  %5660 = vmatprep.subr.mxu0 %v761
  %5661 = vmatpush1.msra.mxu0 %v760
  %5662 = vmatprep.subr.mxu0 %v765
  %5663 = vmatpush1.msra.mxu0 %v764
  %5664 = vmatprep.subr.mxu0 %v769
  %5665 = vmatpush1.msra.mxu0 %v768
  %5666 = vmatprep.subr.mxu0 %v773
  %5667 = vmatpush1.msra.mxu0 %v772
  %5668 = vmatprep.subr.mxu0 %v777
  %5669 = vmatpush1.msra.mxu0 %v776
  %5670 = vmatprep.subr.mxu0 %v781
  %5671 = vmatpush1.msra.mxu0 %v780
  %5672 = vmatprep.subr.mxu0 %v785
  %5673 = vmatpush1.msra.mxu0 %v784
  %5674 = vmatprep.subr.mxu0 %v789
  %5675 = vmatpush1.msra.mxu0 %v788
  %5676 = vmatprep.subr.mxu0 %v793
  %5677 = vmatpush1.msra.mxu0 %v792
  %5678 = vmatprep.subr.mxu0 %v797
  %5679 = vmatpush1.msra.mxu0 %v796
  %5680 = vmatprep.subr.mxu0 %v801
  %5681 = vmatpush1.msra.mxu0 %v800
  %5682 = vmatprep.subr.mxu0 %v805
  %5683 = vmatpush1.msra.mxu0 %v804
  %5684 = vmatprep.subr.mxu0 %v809
  %5685 = vmatpush1.msra.mxu0 %v808
  %5686 = vmatprep.subr.mxu0 %v813
  %5687 = vmatpush1.msra.mxu0 %v812
  %5688 = vmatprep.subr.mxu0 %v817
  %5689 = vmatpush1.msra.mxu0 %v816
  %5690 = vmatprep.mubr.f32.mxu0 %v5554
  %5691 = vmatmul.mubr.f32.gmra.mrb[0].mxu0 %v5545
  %v5692 = vpop.f32.mrb[0].mxu0
  %v5693 = vadd.f32 %v5622, %v5692
  %v5694 = vpop.f32.mrb[0].mxu0
  %v5695 = vadd.f32 %v5624, %v5694
  %5696 = vdwg.mxu0
  %5697 = vmatprep.subr.mxu0 %v567
  %5698 = vmatpush1.msra.mxu0 %v566
  %5699 = vmatprep.subr.mxu0 %v571
  %5700 = vmatpush1.msra.mxu0 %v570
  %5701 = vmatprep.subr.mxu0 %v575
  %5702 = vmatpush1.msra.mxu0 %v574
  %5703 = vmatprep.subr.mxu0 %v579
  %5704 = vmatpush1.msra.mxu0 %v578
  %5705 = vmatprep.subr.mxu0 %v583
  %5706 = vmatpush1.msra.mxu0 %v582
  %5707 = vmatprep.subr.mxu0 %v587
  %5708 = vmatpush1.msra.mxu0 %v586
  %5709 = vmatprep.subr.mxu0 %v591
  %5710 = vmatpush1.msra.mxu0 %v590
  %5711 = vmatprep.subr.mxu0 %v595
  %5712 = vmatpush1.msra.mxu0 %v594
  %5713 = vmatprep.subr.mxu0 %v599
  %5714 = vmatpush1.msra.mxu0 %v598
  %5715 = vmatprep.subr.mxu0 %v603
  %5716 = vmatpush1.msra.mxu0 %v602
  %5717 = vmatprep.subr.mxu0 %v607
  %5718 = vmatpush1.msra.mxu0 %v606
  %5719 = vmatprep.subr.mxu0 %v611
  %5720 = vmatpush1.msra.mxu0 %v610
  %5721 = vmatprep.subr.mxu0 %v615
  %5722 = vmatpush1.msra.mxu0 %v614
  %5723 = vmatprep.subr.mxu0 %v619
  %5724 = vmatpush1.msra.mxu0 %v618
  %5725 = vmatprep.subr.mxu0 %v623
  %5726 = vmatpush1.msra.mxu0 %v622
  %5727 = vmatprep.subr.mxu0 %v627
  %5728 = vmatpush1.msra.mxu0 %v626
  %5729 = vmatprep.subr.mxu0 %v631
  %5730 = vmatpush1.msra.mxu0 %v630
  %5731 = vmatprep.subr.mxu0 %v635
  %5732 = vmatpush1.msra.mxu0 %v634
  %5733 = vmatprep.subr.mxu0 %v639
  %5734 = vmatpush1.msra.mxu0 %v638
  %5735 = vmatprep.subr.mxu0 %v643
  %5736 = vmatpush1.msra.mxu0 %v642
  %5737 = vmatprep.subr.mxu0 %v647
  %5738 = vmatpush1.msra.mxu0 %v646
  %5739 = vmatprep.subr.mxu0 %v651
  %5740 = vmatpush1.msra.mxu0 %v650
  %5741 = vmatprep.subr.mxu0 %v655
  %5742 = vmatpush1.msra.mxu0 %v654
  %5743 = vmatprep.subr.mxu0 %v659
  %5744 = vmatpush1.msra.mxu0 %v658
  %5745 = vmatprep.subr.mxu0 %v663
  %5746 = vmatpush1.msra.mxu0 %v662
  %5747 = vmatprep.subr.mxu0 %v667
  %5748 = vmatpush1.msra.mxu0 %v666
  %5749 = vmatprep.subr.mxu0 %v671
  %5750 = vmatpush1.msra.mxu0 %v670
  %5751 = vmatprep.subr.mxu0 %v675
  %5752 = vmatpush1.msra.mxu0 %v674
  %5753 = vmatprep.subr.mxu0 %v679
  %5754 = vmatpush1.msra.mxu0 %v678
  %5755 = vmatprep.subr.mxu0 %v683
  %5756 = vmatpush1.msra.mxu0 %v682
  %5757 = vmatprep.subr.mxu0 %v687
  %5758 = vmatpush1.msra.mxu0 %v686
  %5759 = vmatprep.subr.mxu0 %v691
  %5760 = vmatpush1.msra.mxu0 %v690
  %5761 = vmatprep.mubr.f32.mxu0 %v5528
  %5762 = vmatmul.mubr.f32.gmra.mrb[0].mxu0 %v5519
  %v5763 = vpop.f32.mrb[0].mxu0
  %v5764 = vadd.f32 0.0, %v5763
  %v5765 = vpop.f32.mrb[0].mxu0
  %v5766 = vadd.f32 0.0, %v5765
  %5767 = vdwg.mxu0
  %5768 = vmatprep.subr.mxu0 %v695
  %5769 = vmatpush1.msra.mxu0 %v694
  %5770 = vmatprep.subr.mxu0 %v699
  %5771 = vmatpush1.msra.mxu0 %v698
  %5772 = vmatprep.subr.mxu0 %v703
  %5773 = vmatpush1.msra.mxu0 %v702
  %5774 = vmatprep.subr.mxu0 %v707
  %5775 = vmatpush1.msra.mxu0 %v706
  %5776 = vmatprep.subr.mxu0 %v711
  %5777 = vmatpush1.msra.mxu0 %v710
  %5778 = vmatprep.subr.mxu0 %v715
  %5779 = vmatpush1.msra.mxu0 %v714
  %5780 = vmatprep.subr.mxu0 %v719
  %5781 = vmatpush1.msra.mxu0 %v718
  %5782 = vmatprep.subr.mxu0 %v723
  %5783 = vmatpush1.msra.mxu0 %v722
  %5784 = vmatprep.subr.mxu0 %v727
  %5785 = vmatpush1.msra.mxu0 %v726
  %5786 = vmatprep.subr.mxu0 %v731
  %5787 = vmatpush1.msra.mxu0 %v730
  %5788 = vmatprep.subr.mxu0 %v735
  %5789 = vmatpush1.msra.mxu0 %v734
  %5790 = vmatprep.subr.mxu0 %v739
  %5791 = vmatpush1.msra.mxu0 %v738
  %5792 = vmatprep.subr.mxu0 %v743
  %5793 = vmatpush1.msra.mxu0 %v742
  %5794 = vmatprep.subr.mxu0 %v747
  %5795 = vmatpush1.msra.mxu0 %v746
  %5796 = vmatprep.subr.mxu0 %v751
  %5797 = vmatpush1.msra.mxu0 %v750
  %5798 = vmatprep.subr.mxu0 %v755
  %5799 = vmatpush1.msra.mxu0 %v754
  %5800 = vmatprep.subr.mxu0 %v759
  %5801 = vmatpush1.msra.mxu0 %v758
  %5802 = vmatprep.subr.mxu0 %v763
  %5803 = vmatpush1.msra.mxu0 %v762
  %5804 = vmatprep.subr.mxu0 %v767
  %5805 = vmatpush1.msra.mxu0 %v766
  %5806 = vmatprep.subr.mxu0 %v771
  %5807 = vmatpush1.msra.mxu0 %v770
  %5808 = vmatprep.subr.mxu0 %v775
  %5809 = vmatpush1.msra.mxu0 %v774
  %5810 = vmatprep.subr.mxu0 %v779
  %5811 = vmatpush1.msra.mxu0 %v778
  %5812 = vmatprep.subr.mxu0 %v783
  %5813 = vmatpush1.msra.mxu0 %v782
  %5814 = vmatprep.subr.mxu0 %v787
  %5815 = vmatpush1.msra.mxu0 %v786
  %5816 = vmatprep.subr.mxu0 %v791
  %5817 = vmatpush1.msra.mxu0 %v790
  %5818 = vmatprep.subr.mxu0 %v795
  %5819 = vmatpush1.msra.mxu0 %v794
  %5820 = vmatprep.subr.mxu0 %v799
  %5821 = vmatpush1.msra.mxu0 %v798
  %5822 = vmatprep.subr.mxu0 %v803
  %5823 = vmatpush1.msra.mxu0 %v802
  %5824 = vmatprep.subr.mxu0 %v807
  %5825 = vmatpush1.msra.mxu0 %v806
  %5826 = vmatprep.subr.mxu0 %v811
  %5827 = vmatpush1.msra.mxu0 %v810
  %5828 = vmatprep.subr.mxu0 %v815
  %5829 = vmatpush1.msra.mxu0 %v814
  %5830 = vmatprep.subr.mxu0 %v819
  %5831 = vmatpush1.msra.mxu0 %v818
  %5832 = vmatprep.mubr.f32.mxu0 %v5554
  %5833 = vmatmul.mubr.f32.gmra.mrb[0].mxu0 %v5545
  %v5834 = vpop.f32.mrb[0].mxu0
  %v5835 = vadd.f32 %v5764, %v5834
  %v5836 = vpop.f32.mrb[0].mxu0
  %v5837 = vadd.f32 %v5766, %v5836
  %5838 = vdwg.mxu0
  %v5839 = vmul.f32 %v5693, %v5693
  %v5840 = vmul.f32 %v5695, %v5695
  %v5841 = vsub.f32 %v5835, %v5839
  %v5842 = vsub.f32 %v5837, %v5840
  %v5843 = vmax.f32 %v5841, 0.0
  %v5844 = vmax.f32 %v5842, 0.0
  %v5845 = vadd.f32 %v5843, 1e-05
  %v5846 = vadd.f32 %v5844, 1e-05
  %v5847 = vrsqrt.pop %v5845
  %v5848 = vrsqrt.pop %v5846
  %v5849 = vld [vmem:[%s23] ss:$2 sm:$0x3]
  %v5851 = vlaneseq
  %v5852 = vshrl.u32 %v5851, 7
  %v5853 = vsub.s32 0, %v5852
  %v5854 = vrot.slane %v5849, %v5853
  %v5855 = vlaneseq
  %v5856 = vshrl.u32 %v5855, 7
  %v5857 = vsub.s32 1, %v5856
  %v5858 = vrot.slane %v5849, %v5857
  %v5861 = vmul.f32 %v5847, %v5854
  %v5862 = vmul.f32 %v5848, %v5858
  %s5863 = scalar_lea.vmem %s23, 1
  %v5864 = vld [vmem:[%s5863] ss:$2 sm:$0x3]
  %v5865 = vmul.f32 %v5693, %v5861
  %v5866 = vmul.f32 %v5695, %v5862
  %v5869 = vcombine.low %v5865, %v5866
  %v5871 = vunpack.c.l.s4 1966171168
  %v5872 = vunpack.c.0.s8 %v5871
  %v5873 = vlaneseq
  %v5874 = vshrl.u32 %v5873, 7
  %v5875 = vsub.s32 %v5872, %v5874
  %v5876 = vrot.slane %v5869, %v5875
  %v5878 = vunpack.c.l.s4 1966171168
  %v5879 = vunpack.c.0.s8 %v5878
  %v5880 = vlaneseq
  %v5881 = vshrl.u32 %v5880, 7
  %v5882 = vsub.s32 %v5879, %v5881
  %v5883 = vrot.slane %v5876, %v5882
  %v5885 = vsub.f32 %v5864, %v5883
  %v5886 = vlaneseq
  %v5887 = vshrl.u32 %v5886, 7
  %v5888 = vsub.s32 0, %v5887
  %v5889 = vrot.slane %v5861, %v5888
  %v5890 = vlaneseq
  %v5891 = vshrl.u32 %v5890, 7
  %v5892 = vsub.s32 0, %v5891
  %v5893 = vrot.slane %v5862, %v5892
  %v5894 = vmul.f32 %v5493, %v5889
  %v5895 = vmul.f32 %v5495, %v5893
  %v5896 = vmul.f32 %v5497, %v5889
  %v5897 = vmul.f32 %v5499, %v5893
  %v5898 = vmul.f32 %v5503, %v5889
  %v5899 = vmul.f32 %v5505, %v5893
  %v5900 = vmul.f32 %v5507, %v5889
  %v5901 = vmul.f32 %v5509, %v5893
  %v5903 = vlaneseq
  %v5904 = vshrl.u32 %v5903, 7
  %v5905 = vsub.s32 0, %v5904
  %v5906 = vrot.slane %v5885, %v5905
  %v5907 = vlaneseq
  %v5908 = vshrl.u32 %v5907, 7
  %v5909 = vsub.s32 1, %v5908
  %v5910 = vrot.slane %v5885, %v5909
  %v5913 = vadd.f32 %v5894, %v5906
  %v5914 = vadd.f32 %v5895, %v5910
  %v5915 = vadd.f32 %v5896, %v5906
  %v5916 = vadd.f32 %v5897, %v5910
  %v5917 = vadd.f32 %v5898, %v5906
  %v5918 = vadd.f32 %v5899, %v5910
  %v5919 = vadd.f32 %v5900, %v5906
  %v5920 = vadd.f32 %v5901, %v5910
  %v5921 = vadd.f32 %v4937, %v5913
  %v5922 = vadd.f32 %v4938, %v5915
  %v5923 = vadd.f32 %v4939, %v5917
  %v5924 = vadd.f32 %v4940, %v5919
  %v5925 = vadd.f32 %v5921, %v5914
  %v5926 = vadd.f32 %v5922, %v5916
  %v5927 = vadd.f32 %v5923, %v5918
  %v5928 = vadd.f32 %v5924, %v5920
  %v5929 = vadd.f32 %v5925, %v2692
  %v5930 = vadd.f32 %v5926, %v2693
  %v5931 = vadd.f32 %v5927, %v2694
  %v5932 = vadd.f32 %v5928, %v2695
  %v5933 = vadd.f32 %v5929, %v1194
  %v5934 = vadd.f32 %v5930, %v1195
  %v5935 = vadd.f32 %v5931, %v1196
  %v5936 = vadd.f32 %v5932, %v1197
  %v5937 = vtanh.pop %v5933
  %v5938 = vtanh.pop %v5934
  %v5939 = vtanh.pop %v5935
  %v5940 = vtanh.pop %v5936
  %5941 = vst [vmem:[%s24] sm:$0xff] %v5937
  %5942 = vst [vmem:[%s24 + $0x8] sm:$0xff] %v5938
  %5943 = vst [vmem:[%s24 + $0x10] sm:$0xff] %v5939
  %5944 = vst [vmem:[%s24 + $0x18] sm:$0xff] %v5940
  // Predicated region
  $region98: #{group_explore_forward.1} parent=0 // pred_check
    _
  $region99: #{group_explore_forward.1} parent=0 // pred_check_branch
    %5946 = sbr.rel (0) target = $region101
  $region100: #{group_explore_forward.1} parent=0 // pred_region
    _
  $region101: #{group_explore_forward.1} parent=0 // pred_fallthru
    _
  // Predicated region
  $region102: #{group_explore_forward.1} parent=0 // pred_check
    _
  $region103: #{group_explore_forward.1} parent=0 // pred_check_branch
    %5948 = sbr.rel (0) target = $region105
  $region104: #{group_explore_forward.1} parent=0 // pred_region
    _
  $region105: #{group_explore_forward.1} parent=0 // pred_fallthru
    _

</llo_original>
